<compile_context>
chip_gen: v7x
topology: tpu7x:2x2x1
jax: 0.10.0
libtpu: 0.0.40
codegen_flags: <defaults>
</compile_context>

<pallas_src>
import functools
import math

import jax
import jax.numpy as jnp
from jax.experimental import pallas as pl
from jax.experimental.pallas import tpu as pltpu


def _round_up(x, m):
    return (x + m - 1) // m * m


def bn_fold(bn, eps=1e-3):
    # OpenPCDet/OpenCOOD use eps=1e-3 for both the PFN BatchNorm1d and the
    # backbone BatchNorm2d.
    gamma, beta, mean, var = bn
    s = gamma / jnp.sqrt(var + eps)
    return s, beta - mean * s


# ----------------------------------------------------------------------------
# PFN: Linear(10->64, folded BN) + ReLU + max over points, per pillar tile.
# TODO(synk): at production point-cloud sizes, transpose so the pillar axis is
#             lane-dense (Fin=10 on lanes wastes VMEM); fine at toy scale.
# ----------------------------------------------------------------------------
def _pfn_kernel(x_ref, w_ref, b_ref, o_ref, *, npts):
    tpn = x_ref.shape[0]
    cout = o_ref.shape[-1]
    y = jnp.dot(x_ref[...], w_ref[...], preferred_element_type=jnp.float32)
    y = jnp.maximum(y + b_ref[...], 0.0)
    o_ref[...] = jnp.max(y.reshape(tpn // npts, npts, cout), axis=1).astype(o_ref.dtype)


def pfn_forward(feats, w_bf16, bias_f32, *, tile_p=512):
    P, Np, Fin = feats.shape
    Cout = w_bf16.shape[1]
    tile_p = min(tile_p, _round_up(P, 8))
    Pp = _round_up(P, tile_p)
    feats_p = jnp.pad(feats, ((0, Pp - P), (0, 0), (0, 0)))
    x2d = feats_p.reshape(Pp * Np, Fin).astype(jnp.bfloat16)
    out = pl.pallas_call(
        functools.partial(_pfn_kernel, npts=Np),
        out_shape=jax.ShapeDtypeStruct((Pp, Cout), jnp.bfloat16),
        grid=(Pp // tile_p,),
        in_specs=[
            pl.BlockSpec((tile_p * Np, Fin), lambda i: (i, 0)),
            pl.BlockSpec((Fin, Cout), lambda i: (0, 0)),
            pl.BlockSpec((1, Cout), lambda i: (0, 0)),
        ],
        out_specs=pl.BlockSpec((tile_p, Cout), lambda i: (i, 0)),
        compiler_params=pltpu.CompilerParams(dimension_semantics=("parallel",)),
    )(x2d, w_bf16, bias_f32)
    return out[:P]


# ----------------------------------------------------------------------------
# Fused BEV backbone: conv3x3(s2)+conv3x3(s1), conv3x3(s2)+conv3x3(s1),
# deconv(1x1), deconv(2x2 s2), channel concat.  One kernel per cav; all
# intermediates live in VMEM.
# TODO(synk): production BEV maps (~500x500) need spatial (halo-row) tiling of
#             this kernel for v7x's 64 MiB VMEM; at 16x16 everything fits.
# ----------------------------------------------------------------------------
def _backbone_kernel(x_ref, w00_ref, b00_ref, w01_ref, b01_ref, sel_ref,
                     w10_ref, b10_ref, w11_ref, b11_ref,
                     wd0_ref, bd0_ref, wd1_ref, bd1_ref, perm_ref,
                     o_ref, pad0_ref, pad1_ref, *, H1, W1, H2, W2):
    Cin = x_ref.shape[-1]
    C0 = w00_ref.shape[1]
    C1 = w10_ref.shape[1]

    def gather9(ref, h, w, c):
        # one lane-dense (h*w, 9*c) operand: 9 unit-stride tap slices along K
        return jnp.concatenate(
            [ref[dy:dy + h, dx:dx + w, :].reshape(h * w, c)
             for dy in range(3) for dx in range(3)], axis=-1)

    # ---- block 0 / conv0 (stride 2) straight from the 4-phase padded canvas ----
    cat = jnp.concatenate(
        [x_ref[0, (dy % 2) * 2 + (dx % 2),
               dy // 2:dy // 2 + H1, dx // 2:dx // 2 + W1, :].reshape(H1 * W1, Cin)
         for dy in range(3) for dx in range(3)], axis=-1)                 # (H1*W1, 9*Cin)
    y = jnp.dot(cat, w00_ref[...], preferred_element_type=jnp.float32)
    y = jnp.maximum(y + b00_ref[...], 0.0)                                # (H1*W1, C0)

    pad0_ref[...] = jnp.zeros(pad0_ref.shape, pad0_ref.dtype)
    pad0_ref[1:1 + H1, 1:1 + W1, :] = y.reshape(H1, W1, C0).astype(pad0_ref.dtype)

    # ---- block 0 / conv1 (stride 1) ----
    cat = gather9(pad0_ref, H1, W1, C0)
    x0 = jnp.dot(cat, w01_ref[...], preferred_element_type=jnp.float32)
    x0 = jnp.maximum(x0 + b01_ref[...], 0.0)                              # (H1*W1, C0)

    # ---- block 1 / conv0 (stride 2): stride-1 tap gather + 0/1 row-selection ----
    pad0_ref[1:1 + H1, 1:1 + W1, :] = x0.reshape(H1, W1, C0).astype(pad0_ref.dtype)
    cat = gather9(pad0_ref, H1, W1, C0)                                   # (H1*W1, 9*C0)
    cat = jnp.dot(sel_ref[...], cat, preferred_element_type=jnp.float32)  # (H2*W2, 9*C0)
    y = jnp.dot(cat.astype(jnp.bfloat16), w10_ref[...],
                preferred_element_type=jnp.float32)
    y = jnp.maximum(y + b10_ref[...], 0.0)                                # (H2*W2, C1)

    pad1_ref[...] = jnp.zeros(pad1_ref.shape, pad1_ref.dtype)
    pad1_ref[1:1 + H2, 1:1 + W2, :] = y.reshape(H2, W2, C1).astype(pad1_ref.dtype)

    # ---- block 1 / conv1 (stride 1) ----
    cat = gather9(pad1_ref, H2, W2, C1)
    x1 = jnp.dot(cat, w11_ref[...], preferred_element_type=jnp.float32)
    x1 = jnp.maximum(x1 + b11_ref[...], 0.0)                              # (H2*W2, C1)

    # ---- deblock 0: ConvTranspose 1x1/s1 on x0 ----
    up0 = jnp.dot(x0.astype(jnp.bfloat16), wd0_ref[...],
                  preferred_element_type=jnp.float32)
    up0 = jnp.maximum(up0 + bd0_ref[...], 0.0)                            # (H1*W1, C1)

    # ---- deblock 1: ConvTranspose 2x2/s2 = matmul + constant row permutation ----
    y = jnp.dot(x1.astype(jnp.bfloat16), wd1_ref[...],
                preferred_element_type=jnp.float32)                       # (H2*W2, 4*C1)
    ycat = jnp.concatenate([y[:, k * C1:(k + 1) * C1] for k in range(4)], axis=0)
    up1 = jnp.dot(perm_ref[...], ycat, preferred_element_type=jnp.float32)
    up1 = jnp.maximum(up1 + bd1_ref[...], 0.0)                            # (H1*W1, C1)

    # lane-dense (H1*W1, 2*C1 = 256) output
    o_ref[0] = jnp.concatenate([up0, up1], axis=-1).astype(o_ref.dtype)


def backbone_forward(canvas_ph, pp, *, H0, W0):
    n_cav = canvas_ph.shape[0]
    H1, W1, H2, W2 = H0 // 2, W0 // 2, H0 // 4, W0 // 4
    Hq, Wq = (H0 + 2) // 2, (W0 + 2) // 2
    Cin = canvas_ph.shape[-1]
    C0 = pp['w00'].shape[1]
    C1 = pp['w10'].shape[1]
    kernel = functools.partial(_backbone_kernel, H1=H1, W1=W1, H2=H2, W2=W2)
    return pl.pallas_call(
        kernel,
        out_shape=jax.ShapeDtypeStruct((n_cav, H1 * W1, 2 * C1), jnp.bfloat16),
        grid=(n_cav,),
        in_specs=[
            pl.BlockSpec((1, 4, Hq, Wq, Cin), lambda n: (n, 0, 0, 0, 0)),
            pl.BlockSpec(pp['w00'].shape, lambda n: (0, 0)),
            pl.BlockSpec(pp['b00'].shape, lambda n: (0, 0)),
            pl.BlockSpec(pp['w01'].shape, lambda n: (0, 0)),
            pl.BlockSpec(pp['b01'].shape, lambda n: (0, 0)),
            pl.BlockSpec(pp['sel'].shape, lambda n: (0, 0)),
            pl.BlockSpec(pp['w10'].shape, lambda n: (0, 0)),
            pl.BlockSpec(pp['b10'].shape, lambda n: (0, 0)),
            pl.BlockSpec(pp['w11'].shape, lambda n: (0, 0)),
            pl.BlockSpec(pp['b11'].shape, lambda n: (0, 0)),
            pl.BlockSpec(pp['wd0'].shape, lambda n: (0, 0)),
            pl.BlockSpec(pp['bd0'].shape, lambda n: (0, 0)),
            pl.BlockSpec(pp['wd1'].shape, lambda n: (0, 0)),
            pl.BlockSpec(pp['bd1'].shape, lambda n: (0, 0)),
            pl.BlockSpec(pp['perm'].shape, lambda n: (0, 0)),
        ],
        out_specs=pl.BlockSpec((1, H1 * W1, 2 * C1), lambda n: (n, 0, 0)),
        scratch_shapes=[pltpu.VMEM((H1 + 2, W1 + 2, C0), jnp.bfloat16),
                        pltpu.VMEM((H2 + 2, W2 + 2, C1), jnp.bfloat16)],
        compiler_params=pltpu.CompilerParams(dimension_semantics=("parallel",)),
    )(canvas_ph, pp['w00'], pp['b00'], pp['w01'], pp['b01'], pp['sel'],
      pp['w10'], pp['b10'], pp['w11'], pp['b11'],
      pp['wd0'], pp['bd0'], pp['wd1'], pp['bd1'], pp['perm'])


# ----------------------------------------------------------------------------
# Agent-wise multi-head attention fused with q/k/v projections, wo/bo output
# projection and the cls|reg detection head.  Streams over agents (no
# (L,THW,C) intermediates), f32 softmax, bf16 MXU operands.
# ----------------------------------------------------------------------------
def _fusion_head_kernel(ego_ref, feat_ref, nb_ref, wq_ref, bq_ref, wk_ref, bk_ref,
                        wv_ref, bv_ref, seg_ref, segt_ref, wo_ref, bo_ref,
                        wh_ref, bh_ref, head_ref, attn_ref, *, scale):
    thw, C = ego_ref.shape[1], ego_ref.shape[2]
    L = feat_ref.shape[1]

    q = jnp.dot(ego_ref[0], wq_ref[...], preferred_element_type=jnp.float32)
    q = q + bq_ref[...]                                              # (thw, C) f32

    # pass 1: per-agent per-head scores (head-sum done as a lane-dense 0/1 matmul)
    scores = []
    for l in range(L):
        f_l = feat_ref[0, l]                                         # (thw, C) bf16
        k_l = jnp.dot(f_l, wk_ref[...], preferred_element_type=jnp.float32)
        k_l = k_l + bk_ref[...]
        s_l = jnp.dot(q * k_l, seg_ref[...],
                      preferred_element_type=jnp.float32) * scale + nb_ref[0, l]
        scores.append(s_l)                                           # (thw, heads)
    s = jnp.stack(scores, axis=0)                                    # (L, thw, heads)

    m = jnp.max(s, axis=0)
    e = jnp.exp(s - m[None])
    denom = jnp.sum(e, axis=0)
    attn = e * pl.reciprocal(denom, approx=True)[None]               # (L, thw, heads)
    attn_ref[0] = attn

    # pass 2: weighted sum over agents (attention weights re-read from VMEM output)
    ctx = jnp.zeros((thw, C), jnp.float32)
    for l in range(L):
        f_l = feat_ref[0, l]
        v_l = jnp.dot(f_l, wv_ref[...], preferred_element_type=jnp.float32)
        v_l = v_l + bv_ref[...]
        w_l = jnp.dot(attn_ref[0, l], segt_ref[...],
                      preferred_element_type=jnp.float32)            # (thw, C)
        ctx = ctx + w_l * v_l

    fused = jnp.dot(ctx.astype(jnp.bfloat16), wo_ref[...],
                    preferred_element_type=jnp.float32) + bo_ref[...]
    # detection head fused into the epilogue (lane-padded to 128 -> unmasked stores)
    head = jnp.dot(fused.astype(jnp.bfloat16), wh_ref[...],
                   preferred_element_type=jnp.float32) + bh_ref[...]
    head_ref[0] = head


def fusion_head_forward(ego, feats, nb, pp, *, heads, dim_head, thw=64):
    B, HW, C = ego.shape
    L = feats.shape[1]
    n_head_out = pp['wh'].shape[1]
    thw = min(thw, HW)
    if HW % thw:
        thw = HW
    kernel = functools.partial(_fusion_head_kernel, scale=1.0 / math.sqrt(dim_head))
    return pl.pallas_call(
        kernel,
        out_shape=(jax.ShapeDtypeStruct((B, HW, n_head_out), jnp.float32),
                   jax.ShapeDtypeStruct((B, L, HW, heads), jnp.float32)),
        grid=(B, HW // thw),
        in_specs=[
            pl.BlockSpec((1, thw, C), lambda b, t: (b, t, 0)),
            pl.BlockSpec((1, L, thw, C), lambda b, t: (b, 0, t, 0)),
            pl.BlockSpec((1, L, 1, 1), lambda b, t: (b, 0, 0, 0)),
            pl.BlockSpec((C, C), lambda b, t: (0, 0)),        # wq
            pl.BlockSpec((1, C), lambda b, t: (0, 0)),        # bq
            pl.BlockSpec((C, C), lambda b, t: (0, 0)),        # wk
            pl.BlockSpec((1, C), lambda b, t: (0, 0)),        # bk
            pl.BlockSpec((C, C), lambda b, t: (0, 0)),        # wv
            pl.BlockSpec((1, C), lambda b, t: (0, 0)),        # bv
            pl.BlockSpec((C, heads), lambda b, t: (0, 0)),    # seg
            pl.BlockSpec((heads, C), lambda b, t: (0, 0)),    # segt
            pl.BlockSpec((C, C), lambda b, t: (0, 0)),        # wo
            pl.BlockSpec((1, C), lambda b, t: (0, 0)),        # bo
            pl.BlockSpec((C, n_head_out), lambda b, t: (0, 0)),
            pl.BlockSpec((1, n_head_out), lambda b, t: (0, 0)),
        ],
        out_specs=(pl.BlockSpec((1, thw, n_head_out), lambda b, t: (b, t, 0)),
                   pl.BlockSpec((1, L, thw, heads), lambda b, t: (b, 0, t, 0))),
        compiler_params=pltpu.CompilerParams(
            dimension_semantics=("parallel", "parallel")),
    )(ego, feats, nb, pp['wq'], pp['bq'], pp['wk'], pp['bk'], pp['wv'], pp['bv'],
      pp['seg'], pp['segt'], pp['wo'], pp['bo'], pp['wh'], pp['bh'])


# ----------------------------------------------------------------------------
# One-time weight preparation (hoisted out of the per-forward path).
# ----------------------------------------------------------------------------
def _fold_conv3x3(w, bn, eps=1e-3):
    # torch (Cout, Cin, 3, 3) -> (9*Cin, Cout) with BN scale folded; tap-major rows.
    s, b = bn_fold(bn, eps)
    cout, cin = w.shape[0], w.shape[1]
    wmat = jnp.transpose(w, (2, 3, 1, 0)) * s[None, None, None, :]
    return (wmat.reshape(9 * cin, cout).astype(jnp.bfloat16),
            b.reshape(1, cout).astype(jnp.float32))


def prepare_params(p, *, anchor_num, heads, dim_head, H1, W1, H2, W2):
    out = {}
    # PFN: Linear(10, 64, bias=False) + BN1d folded
    s, b = bn_fold(p['pfn_bn'])
    out['pfn_w'] = (p['pfn_w'] * s[None, :]).astype(jnp.bfloat16)
    out['pfn_b'] = b.reshape(1, -1).astype(jnp.float32)
    # backbone 3x3 convs
    out['w00'], out['b00'] = _fold_conv3x3(p['blk0_conv0_w'], p['blk0_bn0'])
    out['w01'], out['b01'] = _fold_conv3x3(p['blk0_conv1_w'], p['blk0_bn1'])
    out['w10'], out['b10'] = _fold_conv3x3(p['blk1_conv0_w'], p['blk1_bn0'])
    out['w11'], out['b11'] = _fold_conv3x3(p['blk1_conv1_w'], p['blk1_bn1'])
    # deblocks (ConvTranspose, torch layout (Cin, Cout, k, k))
    s0, bb0 = bn_fold(p['de0_bn'])
    out['wd0'] = (p['de0_w'][:, :, 0, 0] * s0[None, :]).astype(jnp.bfloat16)
    out['bd0'] = bb0.reshape(1, -1).astype(jnp.float32)
    s1, bb1 = bn_fold(p['de1_bn'])
    wd1 = p['de1_w'] * s1[None, :, None, None]
    wd1 = jnp.concatenate([wd1[:, :, a, bb] for a in range(2) for bb in range(2)],
                          axis=1)                                     # (Cin, 4*Cout)
    out['wd1'] = wd1.astype(jnp.bfloat16)
    out['bd1'] = bb1.reshape(1, -1).astype(jnp.float32)
    # constant stride-2 row-selection matrix and deconv pixel-shuffle permutation
    rows = jnp.arange(H2 * W2)
    cols = (rows // W2) * 2 * W1 + (rows % W2) * 2
    sel = jnp.zeros((H2 * W2, H1 * W1), jnp.float32).at[rows, cols].set(1.0)
    out['sel'] = sel.astype(jnp.bfloat16)
    i_i, j_i, a_i, b_i = jnp.meshgrid(jnp.arange(H2), jnp.arange(W2),
                                      jnp.arange(2), jnp.arange(2), indexing='ij')
    dst = (2 * i_i + a_i) * W1 + 2 * j_i + b_i
    src = (a_i * 2 + b_i) * (H2 * W2) + i_i * W2 + j_i
    out['perm'] = jnp.zeros((H1 * W1, H1 * W1), jnp.float32).at[
        dst.ravel(), src.ravel()].set(1.0)
    # AgentWiseFusion projections + head-segment matrices
    C = heads * dim_head
    out['wq'] = p['wq'].astype(jnp.bfloat16); out['bq'] = p['bq'].reshape(1, C).astype(jnp.float32)
    out['wk'] = p['wk'].astype(jnp.bfloat16); out['bk'] = p['bk'].reshape(1, C).astype(jnp.float32)
    out['wv'] = p['wv'].astype(jnp.bfloat16); out['bv'] = p['bv'].reshape(1, C).astype(jnp.float32)
    out['wo'] = p['wo'].astype(jnp.bfloat16); out['bo'] = p['bo'].reshape(1, C).astype(jnp.float32)
    seg = jnp.repeat(jnp.eye(heads, dtype=jnp.float32), dim_head, axis=0)  # (C, heads)
    out['seg'] = seg
    out['segt'] = seg.T
    # detection head: fused cls|reg 1x1 convs, lane-padded to a multiple of 128
    n_out = anchor_num + 7 * anchor_num
    n_pad = _round_up(n_out, 128)
    wh = jnp.concatenate([p['cls_w'].reshape(anchor_num, C).T,
                          p['reg_w'].reshape(7 * anchor_num, C).T], axis=1)
    bh = jnp.concatenate([p['cls_b'], p['reg_b']], axis=0)
    out['wh'] = jnp.pad(wh, ((0, 0), (0, n_pad - n_out))).astype(jnp.bfloat16)
    out['bh'] = jnp.pad(bh, (0, n_pad - n_out)).reshape(1, n_pad).astype(jnp.float32)
    return out


# ----------------------------------------------------------------------------
# Full forward pass
# ----------------------------------------------------------------------------
def forward(pp, voxel_features, voxel_coords, voxel_num_points, record_len, *,
            grid_size, voxel_size, lidar_range, max_cav, heads, dim_head, n_cav,
            anchor_num):
    nx, ny, nz = grid_size
    vx, vy, vz = voxel_size
    x_off = vx / 2.0 + lidar_range[0]
    y_off = vy / 2.0 + lidar_range[1]
    z_off = vz / 2.0 + lidar_range[2]

    P, NPTS, _ = voxel_features.shape
    cf = voxel_coords.astype(jnp.float32)                  # (batch_idx, z, y, x)
    num_pts = jnp.maximum(voxel_num_points.astype(jnp.float32), 1.0)

    # ---- PillarVFE feature augmentation (glue) ----
    pts_xyz = voxel_features[:, :, :3]
    points_mean = jnp.sum(pts_xyz, axis=1, keepdims=True) / num_pts[:, None, None]
    f_cluster = pts_xyz - points_mean
    f_center = jnp.stack([
        voxel_features[:, :, 0] - (cf[:, 3:4] * vx + x_off),
        voxel_features[:, :, 1] - (cf[:, 2:3] * vy + y_off),
        voxel_features[:, :, 2] - (cf[:, 1:2] * vz + z_off),
    ], axis=-1)
    feats = jnp.concatenate([voxel_features, f_cluster, f_center], axis=-1)  # (P,NPTS,10)
    mask = (jnp.arange(NPTS)[None, :] < voxel_num_points[:, None]).astype(jnp.float32)
    feats = feats * mask[:, :, None]

    # ---- PFN (Pallas) ----
    pillar_features = pfn_forward(feats, pp['pfn_w'], pp['pfn_b'])     # (P, 64) bf16

    # ---- PointPillarScatter into a zero-padded, 4-phase canvas (glue scatter) ----
    Hq, Wq = (ny + 2) // 2, (nx + 2) // 2
    yc = voxel_coords[:, 2] + 1
    xc = voxel_coords[:, 3] + 1
    bidx = voxel_coords[:, 0]
    flat = ((((bidx * 2 + yc % 2) * 2 + xc % 2) * Hq + yc // 2) * Wq + xc // 2
            ).astype(jnp.int32)
    Cpf = pillar_features.shape[1]
    canvas = jnp.zeros((n_cav * 4 * Hq * Wq, Cpf), jnp.bfloat16)
    canvas = canvas.at[flat].set(pillar_features)
    canvas_ph = canvas.reshape(n_cav, 4, Hq, Wq, Cpf)

    # ---- fused BaseBEVBackbone (Pallas) ----
    spatial_2d = backbone_forward(canvas_ph, pp, H0=ny, W0=nx)   # (n_cav, HW, 256) bf16
    H1, W1 = ny // 2, nx // 2
    HW = H1 * W1
    B = record_len.shape[0]
    L = max_cav

    # ---- regroup by record_len (glue, data-dependent gather) ----
    offsets = jnp.concatenate([jnp.zeros((1,), jnp.int32),
                               jnp.cumsum(record_len)[:-1].astype(jnp.int32)])
    idx = offsets[:, None] + jnp.arange(L, dtype=jnp.int32)[None, :]
    valid = jnp.arange(L)[None, :] < record_len[:, None]
    idx = jnp.where(valid, idx, offsets[:, None])
    feats_g = spatial_2d[idx]                                    # (B, L, HW, C)
    ego = spatial_2d[offsets]                                    # (B, HW, C)
    nb = jnp.where(valid, 0.0, -1e9).astype(jnp.float32).reshape(B, L, 1, 1)

    # ---- AgentWiseFusion + detection heads (Pallas, fused) ----
    # TODO(synk): dropout(0.1) inside AgentWiseFusion is an eval-mode no-op.
    head_out, attn = fusion_head_forward(ego, feats_g, nb, pp,
                                         heads=heads, dim_head=dim_head)
    attn = jnp.transpose(attn, (0, 3, 2, 1))                     # (B, heads, HW, L)
    psm = jnp.transpose(head_out[:, :, :anchor_num].reshape(B, H1, W1, anchor_num),
                        (0, 3, 1, 2))
    rm = jnp.transpose(
        head_out[:, :, anchor_num:anchor_num + 7 * anchor_num].reshape(
            B, H1, W1, 7 * anchor_num), (0, 3, 1, 2))
    return {'psm': psm, 'rm': rm, 'attn': attn}


# ----------------------------------------------------------------------------
# Deterministic parameter init (shapes implied by the module's __init__)
# ----------------------------------------------------------------------------
def init_params(key, anchor_num=2):
    ks = jax.random.split(key, 32)

    def w(i, shape, scale=0.05):
        return jax.random.normal(ks[i], shape, jnp.float32) * scale

    def bn(c):  # (gamma, beta, running_mean, running_var) at torch defaults
        return (jnp.ones((c,), jnp.float32), jnp.zeros((c,), jnp.float32),
                jnp.zeros((c,), jnp.float32), jnp.ones((c,), jnp.float32))

    return {
        'pfn_w': w(0, (10, 64), 0.1), 'pfn_bn': bn(64),
        'blk0_conv0_w': w(1, (64, 64, 3, 3)),  'blk0_bn0': bn(64),
        'blk0_conv1_w': w(2, (64, 64, 3, 3)),  'blk0_bn1': bn(64),
        'blk1_conv0_w': w(3, (128, 64, 3, 3)), 'blk1_bn0': bn(128),
        'blk1_conv1_w': w(4, (128, 128, 3, 3)), 'blk1_bn1': bn(128),
        'de0_w': w(5, (64, 128, 1, 1)),  'de0_bn': bn(128),
        'de1_w': w(6, (128, 128, 2, 2)), 'de1_bn': bn(128),
        'wq': w(7, (256, 256)),  'bq': w(8, (256,)),
        'wk': w(9, (256, 256)),  'bk': w(10, (256,)),
        'wv': w(11, (256, 256)), 'bv': w(12, (256,)),
        'wo': w(13, (256, 256)), 'bo': w(14, (256,)),
        'cls_w': w(15, (anchor_num, 256, 1, 1)),     'cls_b': w(16, (anchor_num,)),
        'reg_w': w(17, (7 * anchor_num, 256, 1, 1)), 'reg_b': w(18, (7 * anchor_num,)),
    }


# ----------------------------------------------------------------------------
if __name__ == "__main__":
    key = jax.random.PRNGKey(0)
    k_noise, k_npts, k_int, k_param = jax.random.split(key, 4)

    # small synthetic configuration
    max_cav = 2
    record_len = jnp.array([2, 1], dtype=jnp.int32)   # 2 samples: 2 cavs + 1 cav
    n_cav = 3
    nx, ny, nz = 16, 16, 1
    voxel_size = (0.4, 0.4, 4.0)
    lidar_range = (0.0, -3.2, -3.0, 6.4, 3.2, 1.0)
    NPTS = 8
    pillars_per_cav = 16
    P = n_cav * pillars_per_cav
    anchor_num = 2
    heads, dim_head = 8, 32

    # voxel coords (batch, z, y, x) with distinct BEV cells per cav
    flat_pos = (jnp.arange(pillars_per_cav, dtype=jnp.int32) * 7) % (nx * ny)
    ys = flat_pos // nx
    xs = flat_pos % nx
    coords = [jnp.stack([jnp.full_like(ys, c), jnp.zeros_like(ys), ys, xs], axis=1)
              for c in range(n_cav)]
    voxel_coords = jnp.concatenate(coords, axis=0)                   # (P, 4)

    voxel_num_points = jax.random.randint(k_npts, (P,), 1, NPTS + 1)  # (P,)

    # points near each voxel center + random intensity, padded points zeroed
    x_off = voxel_size[0] / 2 + lidar_range[0]
    y_off = voxel_size[1] / 2 + lidar_range[1]
    z_off = voxel_size[2] / 2 + lidar_range[2]
    cf = voxel_coords.astype(jnp.float32)
    centers = jnp.stack([cf[:, 3] * voxel_size[0] + x_off,
                         cf[:, 2] * voxel_size[1] + y_off,
                         cf[:, 1] * voxel_size[2] + z_off], axis=-1)
    noise = jax.random.normal(k_noise, (P, NPTS, 3)) * 0.1
    intensity = jax.random.uniform(k_int, (P, NPTS, 1))
    pts = jnp.concatenate([centers[:, None, :] + noise, intensity], axis=-1)
    pad_mask = (jnp.arange(NPTS)[None, :] < voxel_num_points[:, None]).astype(jnp.float32)
    voxel_features = pts * pad_mask[:, :, None]                      # (P, NPTS, 4)

    params = init_params(k_param, anchor_num=anchor_num)
    # one-time weight preparation (BN folding, layout, bf16 casts, constants)
    prepped = prepare_params(params, anchor_num=anchor_num, heads=heads,
                             dim_head=dim_head, H1=ny // 2, W1=nx // 2,
                             H2=ny // 4, W2=nx // 4)

    fwd = jax.jit(functools.partial(
        forward, grid_size=(nx, ny, nz), voxel_size=voxel_size,
        lidar_range=lidar_range, max_cav=max_cav, heads=heads, dim_head=dim_head,
        n_cav=n_cav, anchor_num=anchor_num))
    out = fwd(prepped, voxel_features, voxel_coords, voxel_num_points, record_len)
    jax.block_until_ready(out)

    assert out['psm'].shape == (2, anchor_num, 8, 8)
    assert out['rm'].shape == (2, 7 * anchor_num, 8, 8)
    assert out['attn'].shape == (2, heads, 64, max_cav)
    assert bool(jnp.all(jnp.isfinite(out['psm']))) and bool(jnp.all(jnp.isfinite(out['rm'])))
    print("KERNEL_OK")
</pallas_src>

<mosaic_0001>
module attributes {stable_mosaic.version = 11 : i64} {
  func.func @_pfn_kernel(%arg0: i32, %arg1: memref<384x10xbf16, #tpu.memory_space<vmem>>, %arg2: memref<10x64xbf16, #tpu.memory_space<vmem>>, %arg3: memref<1x64xf32, #tpu.memory_space<vmem>>, %arg4: memref<48x64xbf16, #tpu.memory_space<vmem>>) attributes {dimension_semantics = [#tpu.dimension_semantics<parallel>], iteration_bounds = array<i64: 1>, scalar_prefetch = 0 : i64, scratch_operands = 0 : i64, tpu.core_type = #tpu.core_type<tc>, window_params = [{transform_indices = @transform_0, window_bounds = array<i64: 384, 10>}, {pipeline_mode = #tpu.pipeline_mode<synchronous>, transform_indices = @transform_1, window_bounds = array<i64: 10, 64>}, {pipeline_mode = #tpu.pipeline_mode<synchronous>, transform_indices = @transform_2, window_bounds = array<i64: 1, 64>}, {transform_indices = @transform_3, window_bounds = array<i64: 48, 64>}]} {
    %c0 = arith.constant 0 : index
    %c0_0 = arith.constant 0 : index
    %0 = vector.load %arg1[%c0, %c0_0] : memref<384x10xbf16, #tpu.memory_space<vmem>>, vector<384x10xbf16>
    %c0_1 = arith.constant 0 : index
    %c0_2 = arith.constant 0 : index
    %1 = vector.load %arg2[%c0_1, %c0_2] : memref<10x64xbf16, #tpu.memory_space<vmem>>, vector<10x64xbf16>
    %cst = arith.constant dense<0.000000e+00> : vector<384x64xf32>
    %2 = tpu.matmul %0, %1, %cst {dimension_numbers = #tpu.dot_dimension_numbers<[1], [0], [0], [1], [0, 0, 1, 1], [], []>} : vector<384x10xbf16>, vector<10x64xbf16>, vector<384x64xf32> -> vector<384x64xf32>
    %c0_3 = arith.constant 0 : index
    %c0_4 = arith.constant 0 : index
    %3 = vector.load %arg3[%c0_3, %c0_4] : memref<1x64xf32, #tpu.memory_space<vmem>>, vector<1x64xf32>
    %4 = vector.broadcast %3 : vector<1x64xf32> to vector<384x64xf32>
    %5 = arith.addf %2, %4 : vector<384x64xf32>
    %cst_5 = arith.constant 0.000000e+00 : f32
    %6 = vector.broadcast %cst_5 : f32 to vector<384x64xf32>
    %7 = arith.maximumf %5, %6 : vector<384x64xf32>
    %8 = vector.shape_cast %7 : vector<384x64xf32> to vector<48x8x64xf32>
    %cst_6 = arith.constant dense<0xFF800000> : vector<48x64xf32>
    %9 = vector.multi_reduction <maximumf>, %8, %cst_6 [1] : vector<48x8x64xf32> to vector<48x64xf32>
    %10 = arith.truncf %9 : vector<48x64xf32> to vector<48x64xbf16>
    %c0_7 = arith.constant 0 : index
    %c0_8 = arith.constant 0 : index
    %11 = vector.load %arg4[%c0_7, %c0_8] : memref<48x64xbf16, #tpu.memory_space<vmem>>, vector<48x64xbf16>
    tpu.vector_store %arg4[%c0_7, %c0_8], %10 {strides = array<i32>} : memref<48x64xbf16, #tpu.memory_space<vmem>>, vector<48x64xbf16>,
    return
  }
  func.func @transform_0(%arg0: i32) -> (i32, i32) {
    %c0_i32 = arith.constant 0 : i32
    %c0_i32_0 = arith.constant 0 : i32
    return %arg0, %c0_i32 : i32, i32
  }
  func.func @transform_1(%arg0: i32) -> (i32, i32) {
    %c0_i32 = arith.constant 0 : i32
    %c0_i32_0 = arith.constant 0 : i32
    %c0_i32_1 = arith.constant 0 : i32
    return %c0_i32, %c0_i32_0 : i32, i32
  }
  func.func @transform_2(%arg0: i32) -> (i32, i32) {
    %c0_i32 = arith.constant 0 : i32
    %c0_i32_0 = arith.constant 0 : i32
    %c0_i32_1 = arith.constant 0 : i32
    return %c0_i32, %c0_i32_0 : i32, i32
  }
  func.func @transform_3(%arg0: i32) -> (i32, i32) {
    %c0_i32 = arith.constant 0 : i32
    %c0_i32_0 = arith.constant 0 : i32
    return %arg0, %c0_i32 : i32, i32
  }
}

module attributes {stable_mosaic.version = 11 : i64} {
  func.func @_backbone_kernel(%arg0: i32, %arg1: memref<1x4x9x9x64xbf16, #tpu.memory_space<vmem>>, %arg2: memref<576x64xbf16, #tpu.memory_space<vmem>>, %arg3: memref<1x64xf32, #tpu.memory_space<vmem>>, %arg4: memref<576x64xbf16, #tpu.memory_space<vmem>>, %arg5: memref<1x64xf32, #tpu.memory_space<vmem>>, %arg6: memref<16x64xbf16, #tpu.memory_space<vmem>>, %arg7: memref<576x128xbf16, #tpu.memory_space<vmem>>, %arg8: memref<1x128xf32, #tpu.memory_space<vmem>>, %arg9: memref<1152x128xbf16, #tpu.memory_space<vmem>>, %arg10: memref<1x128xf32, #tpu.memory_space<vmem>>, %arg11: memref<64x128xbf16, #tpu.memory_space<vmem>>, %arg12: memref<1x128xf32, #tpu.memory_space<vmem>>, %arg13: memref<128x512xbf16, #tpu.memory_space<vmem>>, %arg14: memref<1x128xf32, #tpu.memory_space<vmem>>, %arg15: memref<64x64xf32, #tpu.memory_space<vmem>>, %arg16: memref<1x64x256xbf16, #tpu.memory_space<vmem>>, %arg17: memref<10x10x64xbf16, #tpu.memory_space<vmem>>, %arg18: memref<6x6x128xbf16, #tpu.memory_space<vmem>>) attributes {dimension_semantics = [#tpu.dimension_semantics<parallel>], iteration_bounds = array<i64: 3>, scalar_prefetch = 0 : i64, scratch_operands = 2 : i64, tpu.core_type = #tpu.core_type<tc>, window_params = [{transform_indices = @transform_0, window_bounds = array<i64: 1, 4, 9, 9, 64>}, {pipeline_mode = #tpu.pipeline_mode<synchronous>, transform_indices = @transform_1, window_bounds = array<i64: 576, 64>}, {pipeline_mode = #tpu.pipeline_mode<synchronous>, transform_indices = @transform_2, window_bounds = array<i64: 1, 64>}, {pipeline_mode = #tpu.pipeline_mode<synchronous>, transform_indices = @transform_3, window_bounds = array<i64: 576, 64>}, {pipeline_mode = #tpu.pipeline_mode<synchronous>, transform_indices = @transform_4, window_bounds = array<i64: 1, 64>}, {pipeline_mode = #tpu.pipeline_mode<synchronous>, transform_indices = @transform_5, window_bounds = array<i64: 16, 64>}, {pipeline_mode = #tpu.pipeline_mode<synchronous>, transform_indices = @transform_6, window_bounds = array<i64: 576, 128>}, {pipeline_mode = #tpu.pipeline_mode<synchronous>, transform_indices = @transform_7, window_bounds = array<i64: 1, 128>}, {pipeline_mode = #tpu.pipeline_mode<synchronous>, transform_indices = @transform_8, window_bounds = array<i64: 1152, 128>}, {pipeline_mode = #tpu.pipeline_mode<synchronous>, transform_indices = @transform_9, window_bounds = array<i64: 1, 128>}, {pipeline_mode = #tpu.pipeline_mode<synchronous>, transform_indices = @transform_10, window_bounds = array<i64: 64, 128>}, {pipeline_mode = #tpu.pipeline_mode<synchronous>, transform_indices = @transform_11, window_bounds = array<i64: 1, 128>}, {pipeline_mode = #tpu.pipeline_mode<synchronous>, transform_indices = @transform_12, window_bounds = array<i64: 128, 512>}, {pipeline_mode = #tpu.pipeline_mode<synchronous>, transform_indices = @transform_13, window_bounds = array<i64: 1, 128>}, {pipeline_mode = #tpu.pipeline_mode<synchronous>, transform_indices = @transform_14, window_bounds = array<i64: 64, 64>}, {transform_indices = @transform_15, window_bounds = array<i64: 1, 64, 256>}]} {
    %c0 = arith.constant 0 : index
    %c0_0 = arith.constant 0 : index
    %c0_1 = arith.constant 0 : index
    %c0_2 = arith.constant 0 : index
    %c0_3 = arith.constant 0 : index
    %0 = vector.load %arg1[%c0, %c0_0, %c0_1, %c0_2, %c0_3] : memref<1x4x9x9x64xbf16, #tpu.memory_space<vmem>>, vector<1x1x8x8x64xbf16>
    %1 = vector.shape_cast %0 : vector<1x1x8x8x64xbf16> to vector<8x8x64xbf16>
    %2 = vector.shape_cast %1 : vector<8x8x64xbf16> to vector<64x64xbf16>
    %c0_4 = arith.constant 0 : index
    %c1 = arith.constant 1 : index
    %c0_5 = arith.constant 0 : index
    %c0_6 = arith.constant 0 : index
    %c0_7 = arith.constant 0 : index
    %3 = vector.load %arg1[%c0_4, %c1, %c0_5, %c0_6, %c0_7] : memref<1x4x9x9x64xbf16, #tpu.memory_space<vmem>>, vector<1x1x8x8x64xbf16>
    %4 = vector.shape_cast %3 : vector<1x1x8x8x64xbf16> to vector<8x8x64xbf16>
    %5 = vector.shape_cast %4 : vector<8x8x64xbf16> to vector<64x64xbf16>
    %c0_8 = arith.constant 0 : index
    %c0_9 = arith.constant 0 : index
    %c0_10 = arith.constant 0 : index
    %c1_11 = arith.constant 1 : index
    %c0_12 = arith.constant 0 : index
    %6 = vector.load %arg1[%c0_8, %c0_9, %c0_10, %c1_11, %c0_12] : memref<1x4x9x9x64xbf16, #tpu.memory_space<vmem>>, vector<1x1x8x8x64xbf16>
    %7 = vector.shape_cast %6 : vector<1x1x8x8x64xbf16> to vector<8x8x64xbf16>
    %8 = vector.shape_cast %7 : vector<8x8x64xbf16> to vector<64x64xbf16>
    %c0_13 = arith.constant 0 : index
    %c2 = arith.constant 2 : index
    %c0_14 = arith.constant 0 : index
    %c0_15 = arith.constant 0 : index
    %c0_16 = arith.constant 0 : index
    %9 = vector.load %arg1[%c0_13, %c2, %c0_14, %c0_15, %c0_16] : memref<1x4x9x9x64xbf16, #tpu.memory_space<vmem>>, vector<1x1x8x8x64xbf16>
    %10 = vector.shape_cast %9 : vector<1x1x8x8x64xbf16> to vector<8x8x64xbf16>
    %11 = vector.shape_cast %10 : vector<8x8x64xbf16> to vector<64x64xbf16>
    %c0_17 = arith.constant 0 : index
    %c3 = arith.constant 3 : index
    %c0_18 = arith.constant 0 : index
    %c0_19 = arith.constant 0 : index
    %c0_20 = arith.constant 0 : index
    %12 = vector.load %arg1[%c0_17, %c3, %c0_18, %c0_19, %c0_20] : memref<1x4x9x9x64xbf16, #tpu.memory_space<vmem>>, vector<1x1x8x8x64xbf16>
    %13 = vector.shape_cast %12 : vector<1x1x8x8x64xbf16> to vector<8x8x64xbf16>
    %14 = vector.shape_cast %13 : vector<8x8x64xbf16> to vector<64x64xbf16>
    %c0_21 = arith.constant 0 : index
    %c2_22 = arith.constant 2 : index
    %c0_23 = arith.constant 0 : index
    %c1_24 = arith.constant 1 : index
    %c0_25 = arith.constant 0 : index
    %15 = vector.load %arg1[%c0_21, %c2_22, %c0_23, %c1_24, %c0_25] : memref<1x4x9x9x64xbf16, #tpu.memory_space<vmem>>, vector<1x1x8x8x64xbf16>
    %16 = vector.shape_cast %15 : vector<1x1x8x8x64xbf16> to vector<8x8x64xbf16>
    %17 = vector.shape_cast %16 : vector<8x8x64xbf16> to vector<64x64xbf16>
    %c0_26 = arith.constant 0 : index
    %c0_27 = arith.constant 0 : index
    %c1_28 = arith.constant 1 : index
    %c0_29 = arith.constant 0 : index
    %c0_30 = arith.constant 0 : index
    %18 = vector.load %arg1[%c0_26, %c0_27, %c1_28, %c0_29, %c0_30] : memref<1x4x9x9x64xbf16, #tpu.memory_space<vmem>>, vector<1x1x8x8x64xbf16>
    %19 = vector.shape_cast %18 : vector<1x1x8x8x64xbf16> to vector<8x8x64xbf16>
    %20 = vector.shape_cast %19 : vector<8x8x64xbf16> to vector<64x64xbf16>
    %c0_31 = arith.constant 0 : index
    %c1_32 = arith.constant 1 : index
    %c1_33 = arith.constant 1 : index
    %c0_34 = arith.constant 0 : index
    %c0_35 = arith.constant 0 : index
    %21 = vector.load %arg1[%c0_31, %c1_32, %c1_33, %c0_34, %c0_35] : memref<1x4x9x9x64xbf16, #tpu.memory_space<vmem>>, vector<1x1x8x8x64xbf16>
    %22 = vector.shape_cast %21 : vector<1x1x8x8x64xbf16> to vector<8x8x64xbf16>
    %23 = vector.shape_cast %22 : vector<8x8x64xbf16> to vector<64x64xbf16>
    %c0_36 = arith.constant 0 : index
    %c0_37 = arith.constant 0 : index
    %c1_38 = arith.constant 1 : index
    %c1_39 = arith.constant 1 : index
    %c0_40 = arith.constant 0 : index
    %24 = vector.load %arg1[%c0_36, %c0_37, %c1_38, %c1_39, %c0_40] : memref<1x4x9x9x64xbf16, #tpu.memory_space<vmem>>, vector<1x1x8x8x64xbf16>
    %25 = vector.shape_cast %24 : vector<1x1x8x8x64xbf16> to vector<8x8x64xbf16>
    %26 = vector.shape_cast %25 : vector<8x8x64xbf16> to vector<64x64xbf16>
    %27 = tpu.concatenate %2, %5, %8, %11, %14, %17, %20, %23, %26 in 1 : vector<64x64xbf16>, vector<64x64xbf16>, vector<64x64xbf16>, vector<64x64xbf16>, vector<64x64xbf16>, vector<64x64xbf16>, vector<64x64xbf16>, vector<64x64xbf16>, vector<64x64xbf16> -> vector<64x576xbf16>
    %c0_41 = arith.constant 0 : index
    %c0_42 = arith.constant 0 : index
    %28 = vector.load %arg2[%c0_41, %c0_42] : memref<576x64xbf16, #tpu.memory_space<vmem>>, vector<576x64xbf16>
    %cst = arith.constant dense<0.000000e+00> : vector<64x64xf32>
    %29 = tpu.matmul %27, %28, %cst {dimension_numbers = #tpu.dot_dimension_numbers<[1], [0], [0], [1], [0, 0, 1, 1], [], []>} : vector<64x576xbf16>, vector<576x64xbf16>, vector<64x64xf32> -> vector<64x64xf32>
    %c0_43 = arith.constant 0 : index
    %c0_44 = arith.constant 0 : index
    %30 = vector.load %arg3[%c0_43, %c0_44] : memref<1x64xf32, #tpu.memory_space<vmem>>, vector<1x64xf32>
    %31 = vector.broadcast %30 : vector<1x64xf32> to vector<64x64xf32>
    %32 = arith.addf %29, %31 : vector<64x64xf32>
    %cst_45 = arith.constant 0.000000e+00 : f32
    %33 = vector.broadcast %cst_45 : f32 to vector<64x64xf32>
    %34 = arith.maximumf %32, %33 : vector<64x64xf32>
    %cst_46 = arith.constant 0.000000e+00 : bf16
    %35 = vector.broadcast %cst_46 : bf16 to vector<10x10x64xbf16>
    %c0_47 = arith.constant 0 : index
    %c0_48 = arith.constant 0 : index
    %c0_49 = arith.constant 0 : index
    %36 = vector.load %arg17[%c0_47, %c0_48, %c0_49] : memref<10x10x64xbf16, #tpu.memory_space<vmem>>, vector<10x10x64xbf16>
    tpu.vector_store %arg17[%c0_47, %c0_48, %c0_49], %35 {strides = array<i32>} : memref<10x10x64xbf16, #tpu.memory_space<vmem>>, vector<10x10x64xbf16>,
    %37 = vector.shape_cast %34 : vector<64x64xf32> to vector<8x8x64xf32>
    %38 = arith.truncf %37 : vector<8x8x64xf32> to vector<8x8x64xbf16>
    %c1_50 = arith.constant 1 : index
    %c1_51 = arith.constant 1 : index
    %c0_52 = arith.constant 0 : index
    %39 = vector.load %arg17[%c1_50, %c1_51, %c0_52] : memref<10x10x64xbf16, #tpu.memory_space<vmem>>, vector<8x8x64xbf16>
    tpu.vector_store %arg17[%c1_50, %c1_51, %c0_52], %38 {strides = array<i32>} : memref<10x10x64xbf16, #tpu.memory_space<vmem>>, vector<8x8x64xbf16>,
    %c0_53 = arith.constant 0 : index
    %c0_54 = arith.constant 0 : index
    %c0_55 = arith.constant 0 : index
    %40 = vector.load %arg17[%c0_53, %c0_54, %c0_55] : memref<10x10x64xbf16, #tpu.memory_space<vmem>>, vector<8x8x64xbf16>
    %41 = vector.shape_cast %40 : vector<8x8x64xbf16> to vector<64x64xbf16>
    %c0_56 = arith.constant 0 : index
    %c1_57 = arith.constant 1 : index
    %c0_58 = arith.constant 0 : index
    %42 = vector.load %arg17[%c0_56, %c1_57, %c0_58] : memref<10x10x64xbf16, #tpu.memory_space<vmem>>, vector<8x8x64xbf16>
    %43 = vector.shape_cast %42 : vector<8x8x64xbf16> to vector<64x64xbf16>
    %c0_59 = arith.constant 0 : index
    %c2_60 = arith.constant 2 : index
    %c0_61 = arith.constant 0 : index
    %44 = vector.load %arg17[%c0_59, %c2_60, %c0_61] : memref<10x10x64xbf16, #tpu.memory_space<vmem>>, vector<8x8x64xbf16>
    %45 = vector.shape_cast %44 : vector<8x8x64xbf16> to vector<64x64xbf16>
    %c1_62 = arith.constant 1 : index
    %c0_63 = arith.constant 0 : index
    %c0_64 = arith.constant 0 : index
    %46 = vector.load %arg17[%c1_62, %c0_63, %c0_64] : memref<10x10x64xbf16, #tpu.memory_space<vmem>>, vector<8x8x64xbf16>
    %47 = vector.shape_cast %46 : vector<8x8x64xbf16> to vector<64x64xbf16>
    %c1_65 = arith.constant 1 : index
    %c1_66 = arith.constant 1 : index
    %c0_67 = arith.constant 0 : index
    %48 = vector.load %arg17[%c1_65, %c1_66, %c0_67] : memref<10x10x64xbf16, #tpu.memory_space<vmem>>, vector<8x8x64xbf16>
    %49 = vector.shape_cast %48 : vector<8x8x64xbf16> to vector<64x64xbf16>
    %c1_68 = arith.constant 1 : index
    %c2_69 = arith.constant 2 : index
    %c0_70 = arith.constant 0 : index
    %50 = vector.load %arg17[%c1_68, %c2_69, %c0_70] : memref<10x10x64xbf16, #tpu.memory_space<vmem>>, vector<8x8x64xbf16>
    %51 = vector.shape_cast %50 : vector<8x8x64xbf16> to vector<64x64xbf16>
    %c2_71 = arith.constant 2 : index
    %c0_72 = arith.constant 0 : index
    %c0_73 = arith.constant 0 : index
    %52 = vector.load %arg17[%c2_71, %c0_72, %c0_73] : memref<10x10x64xbf16, #tpu.memory_space<vmem>>, vector<8x8x64xbf16>
    %53 = vector.shape_cast %52 : vector<8x8x64xbf16> to vector<64x64xbf16>
    %c2_74 = arith.constant 2 : index
    %c1_75 = arith.constant 1 : index
    %c0_76 = arith.constant 0 : index
    %54 = vector.load %arg17[%c2_74, %c1_75, %c0_76] : memref<10x10x64xbf16, #tpu.memory_space<vmem>>, vector<8x8x64xbf16>
    %55 = vector.shape_cast %54 : vector<8x8x64xbf16> to vector<64x64xbf16>
    %c2_77 = arith.constant 2 : index
    %c2_78 = arith.constant 2 : index
    %c0_79 = arith.constant 0 : index
    %56 = vector.load %arg17[%c2_77, %c2_78, %c0_79] : memref<10x10x64xbf16, #tpu.memory_space<vmem>>, vector<8x8x64xbf16>
    %57 = vector.shape_cast %56 : vector<8x8x64xbf16> to vector<64x64xbf16>
    %58 = tpu.concatenate %41, %43, %45, %47, %49, %51, %53, %55, %57 in 1 : vector<64x64xbf16>, vector<64x64xbf16>, vector<64x64xbf16>, vector<64x64xbf16>, vector<64x64xbf16>, vector<64x64xbf16>, vector<64x64xbf16>, vector<64x64xbf16>, vector<64x64xbf16> -> vector<64x576xbf16>
    %c0_80 = arith.constant 0 : index
    %c0_81 = arith.constant 0 : index
    %59 = vector.load %arg4[%c0_80, %c0_81] : memref<576x64xbf16, #tpu.memory_space<vmem>>, vector<576x64xbf16>
    %cst_82 = arith.constant dense<0.000000e+00> : vector<64x64xf32>
    %60 = tpu.matmul %58, %59, %cst_82 {dimension_numbers = #tpu.dot_dimension_numbers<[1], [0], [0], [1], [0, 0, 1, 1], [], []>} : vector<64x576xbf16>, vector<576x64xbf16>, vector<64x64xf32> -> vector<64x64xf32>
    %c0_83 = arith.constant 0 : index
    %c0_84 = arith.constant 0 : index
    %61 = vector.load %arg5[%c0_83, %c0_84] : memref<1x64xf32, #tpu.memory_space<vmem>>, vector<1x64xf32>
    %62 = vector.broadcast %61 : vector<1x64xf32> to vector<64x64xf32>
    %63 = arith.addf %60, %62 : vector<64x64xf32>
    %cst_85 = arith.constant 0.000000e+00 : f32
    %64 = vector.broadcast %cst_85 : f32 to vector<64x64xf32>
    %65 = arith.maximumf %63, %64 : vector<64x64xf32>
    %66 = vector.shape_cast %65 : vector<64x64xf32> to vector<8x8x64xf32>
    %67 = arith.truncf %66 : vector<8x8x64xf32> to vector<8x8x64xbf16>
    %c1_86 = arith.constant 1 : index
    %c1_87 = arith.constant 1 : index
    %c0_88 = arith.constant 0 : index
    %68 = vector.load %arg17[%c1_86, %c1_87, %c0_88] : memref<10x10x64xbf16, #tpu.memory_space<vmem>>, vector<8x8x64xbf16>
    tpu.vector_store %arg17[%c1_86, %c1_87, %c0_88], %67 {strides = array<i32>} : memref<10x10x64xbf16, #tpu.memory_space<vmem>>, vector<8x8x64xbf16>,
    %c0_89 = arith.constant 0 : index
    %c0_90 = arith.constant 0 : index
    %c0_91 = arith.constant 0 : index
    %69 = vector.load %arg17[%c0_89, %c0_90, %c0_91] : memref<10x10x64xbf16, #tpu.memory_space<vmem>>, vector<8x8x64xbf16>
    %70 = vector.shape_cast %69 : vector<8x8x64xbf16> to vector<64x64xbf16>
    %c0_92 = arith.constant 0 : index
    %c1_93 = arith.constant 1 : index
    %c0_94 = arith.constant 0 : index
    %71 = vector.load %arg17[%c0_92, %c1_93, %c0_94] : memref<10x10x64xbf16, #tpu.memory_space<vmem>>, vector<8x8x64xbf16>
    %72 = vector.shape_cast %71 : vector<8x8x64xbf16> to vector<64x64xbf16>
    %c0_95 = arith.constant 0 : index
    %c2_96 = arith.constant 2 : index
    %c0_97 = arith.constant 0 : index
    %73 = vector.load %arg17[%c0_95, %c2_96, %c0_97] : memref<10x10x64xbf16, #tpu.memory_space<vmem>>, vector<8x8x64xbf16>
    %74 = vector.shape_cast %73 : vector<8x8x64xbf16> to vector<64x64xbf16>
    %c1_98 = arith.constant 1 : index
    %c0_99 = arith.constant 0 : index
    %c0_100 = arith.constant 0 : index
    %75 = vector.load %arg17[%c1_98, %c0_99, %c0_100] : memref<10x10x64xbf16, #tpu.memory_space<vmem>>, vector<8x8x64xbf16>
    %76 = vector.shape_cast %75 : vector<8x8x64xbf16> to vector<64x64xbf16>
    %c1_101 = arith.constant 1 : index
    %c1_102 = arith.constant 1 : index
    %c0_103 = arith.constant 0 : index
    %77 = vector.load %arg17[%c1_101, %c1_102, %c0_103] : memref<10x10x64xbf16, #tpu.memory_space<vmem>>, vector<8x8x64xbf16>
    %78 = vector.shape_cast %77 : vector<8x8x64xbf16> to vector<64x64xbf16>
    %c1_104 = arith.constant 1 : index
    %c2_105 = arith.constant 2 : index
    %c0_106 = arith.constant 0 : index
    %79 = vector.load %arg17[%c1_104, %c2_105, %c0_106] : memref<10x10x64xbf16, #tpu.memory_space<vmem>>, vector<8x8x64xbf16>
    %80 = vector.shape_cast %79 : vector<8x8x64xbf16> to vector<64x64xbf16>
    %c2_107 = arith.constant 2 : index
    %c0_108 = arith.constant 0 : index
    %c0_109 = arith.constant 0 : index
    %81 = vector.load %arg17[%c2_107, %c0_108, %c0_109] : memref<10x10x64xbf16, #tpu.memory_space<vmem>>, vector<8x8x64xbf16>
    %82 = vector.shape_cast %81 : vector<8x8x64xbf16> to vector<64x64xbf16>
    %c2_110 = arith.constant 2 : index
    %c1_111 = arith.constant 1 : index
    %c0_112 = arith.constant 0 : index
    %83 = vector.load %arg17[%c2_110, %c1_111, %c0_112] : memref<10x10x64xbf16, #tpu.memory_space<vmem>>, vector<8x8x64xbf16>
    %84 = vector.shape_cast %83 : vector<8x8x64xbf16> to vector<64x64xbf16>
    %c2_113 = arith.constant 2 : index
    %c2_114 = arith.constant 2 : index
    %c0_115 = arith.constant 0 : index
    %85 = vector.load %arg17[%c2_113, %c2_114, %c0_115] : memref<10x10x64xbf16, #tpu.memory_space<vmem>>, vector<8x8x64xbf16>
    %86 = vector.shape_cast %85 : vector<8x8x64xbf16> to vector<64x64xbf16>
    %87 = tpu.concatenate %70, %72, %74, %76, %78, %80, %82, %84, %86 in 1 : vector<64x64xbf16>, vector<64x64xbf16>, vector<64x64xbf16>, vector<64x64xbf16>, vector<64x64xbf16>, vector<64x64xbf16>, vector<64x64xbf16>, vector<64x64xbf16>, vector<64x64xbf16> -> vector<64x576xbf16>
    %c0_116 = arith.constant 0 : index
    %c0_117 = arith.constant 0 : index
    %88 = vector.load %arg6[%c0_116, %c0_117] : memref<16x64xbf16, #tpu.memory_space<vmem>>, vector<16x64xbf16>
    %cst_118 = arith.constant dense<0.000000e+00> : vector<16x576xf32>
    %89 = tpu.matmul %88, %87, %cst_118 {dimension_numbers = #tpu.dot_dimension_numbers<[1], [0], [0], [1], [0, 0, 1, 1], [], []>} : vector<16x64xbf16>, vector<64x576xbf16>, vector<16x576xf32> -> vector<16x576xf32>
    %90 = arith.truncf %89 : vector<16x576xf32> to vector<16x576xbf16>
    %c0_119 = arith.constant 0 : index
    %c0_120 = arith.constant 0 : index
    %91 = vector.load %arg7[%c0_119, %c0_120] : memref<576x128xbf16, #tpu.memory_space<vmem>>, vector<576x128xbf16>
    %cst_121 = arith.constant dense<0.000000e+00> : vector<16x128xf32>
    %92 = tpu.matmul %90, %91, %cst_121 {dimension_numbers = #tpu.dot_dimension_numbers<[1], [0], [0], [1], [0, 0, 1, 1], [], []>} : vector<16x576xbf16>, vector<576x128xbf16>, vector<16x128xf32> -> vector<16x128xf32>
    %c0_122 = arith.constant 0 : index
    %c0_123 = arith.constant 0 : index
    %93 = vector.load %arg8[%c0_122, %c0_123] : memref<1x128xf32, #tpu.memory_space<vmem>>, vector<1x128xf32>
    %94 = vector.broadcast %93 : vector<1x128xf32> to vector<16x128xf32>
    %95 = arith.addf %92, %94 : vector<16x128xf32>
    %cst_124 = arith.constant 0.000000e+00 : f32
    %96 = vector.broadcast %cst_124 : f32 to vector<16x128xf32>
    %97 = arith.maximumf %95, %96 : vector<16x128xf32>
    %cst_125 = arith.constant 0.000000e+00 : bf16
    %98 = vector.broadcast %cst_125 : bf16 to vector<6x6x128xbf16>
    %c0_126 = arith.constant 0 : index
    %c0_127 = arith.constant 0 : index
    %c0_128 = arith.constant 0 : index
    %99 = vector.load %arg18[%c0_126, %c0_127, %c0_128] : memref<6x6x128xbf16, #tpu.memory_space<vmem>>, vector<6x6x128xbf16>
    tpu.vector_store %arg18[%c0_126, %c0_127, %c0_128], %98 {strides = array<i32>} : memref<6x6x128xbf16, #tpu.memory_space<vmem>>, vector<6x6x128xbf16>,
    %100 = vector.shape_cast %97 : vector<16x128xf32> to vector<4x4x128xf32>
    %101 = arith.truncf %100 : vector<4x4x128xf32> to vector<4x4x128xbf16>
    %c1_129 = arith.constant 1 : index
    %c1_130 = arith.constant 1 : index
    %c0_131 = arith.constant 0 : index
    %102 = vector.load %arg18[%c1_129, %c1_130, %c0_131] : memref<6x6x128xbf16, #tpu.memory_space<vmem>>, vector<4x4x128xbf16>
    tpu.vector_store %arg18[%c1_129, %c1_130, %c0_131], %101 {strides = array<i32>} : memref<6x6x128xbf16, #tpu.memory_space<vmem>>, vector<4x4x128xbf16>,
    %c0_132 = arith.constant 0 : index
    %c0_133 = arith.constant 0 : index
    %c0_134 = arith.constant 0 : index
    %103 = vector.load %arg18[%c0_132, %c0_133, %c0_134] : memref<6x6x128xbf16, #tpu.memory_space<vmem>>, vector<4x4x128xbf16>
    %104 = vector.shape_cast %103 : vector<4x4x128xbf16> to vector<16x128xbf16>
    %c0_135 = arith.constant 0 : index
    %c1_136 = arith.constant 1 : index
    %c0_137 = arith.constant 0 : index
    %105 = vector.load %arg18[%c0_135, %c1_136, %c0_137] : memref<6x6x128xbf16, #tpu.memory_space<vmem>>, vector<4x4x128xbf16>
    %106 = vector.shape_cast %105 : vector<4x4x128xbf16> to vector<16x128xbf16>
    %c0_138 = arith.constant 0 : index
    %c2_139 = arith.constant 2 : index
    %c0_140 = arith.constant 0 : index
    %107 = vector.load %arg18[%c0_138, %c2_139, %c0_140] : memref<6x6x128xbf16, #tpu.memory_space<vmem>>, vector<4x4x128xbf16>
    %108 = vector.shape_cast %107 : vector<4x4x128xbf16> to vector<16x128xbf16>
    %c1_141 = arith.constant 1 : index
    %c0_142 = arith.constant 0 : index
    %c0_143 = arith.constant 0 : index
    %109 = vector.load %arg18[%c1_141, %c0_142, %c0_143] : memref<6x6x128xbf16, #tpu.memory_space<vmem>>, vector<4x4x128xbf16>
    %110 = vector.shape_cast %109 : vector<4x4x128xbf16> to vector<16x128xbf16>
    %c1_144 = arith.constant 1 : index
    %c1_145 = arith.constant 1 : index
    %c0_146 = arith.constant 0 : index
    %111 = vector.load %arg18[%c1_144, %c1_145, %c0_146] : memref<6x6x128xbf16, #tpu.memory_space<vmem>>, vector<4x4x128xbf16>
    %112 = vector.shape_cast %111 : vector<4x4x128xbf16> to vector<16x128xbf16>
    %c1_147 = arith.constant 1 : index
    %c2_148 = arith.constant 2 : index
    %c0_149 = arith.constant 0 : index
    %113 = vector.load %arg18[%c1_147, %c2_148, %c0_149] : memref<6x6x128xbf16, #tpu.memory_space<vmem>>, vector<4x4x128xbf16>
    %114 = vector.shape_cast %113 : vector<4x4x128xbf16> to vector<16x128xbf16>
    %c2_150 = arith.constant 2 : index
    %c0_151 = arith.constant 0 : index
    %c0_152 = arith.constant 0 : index
    %115 = vector.load %arg18[%c2_150, %c0_151, %c0_152] : memref<6x6x128xbf16, #tpu.memory_space<vmem>>, vector<4x4x128xbf16>
    %116 = vector.shape_cast %115 : vector<4x4x128xbf16> to vector<16x128xbf16>
    %c2_153 = arith.constant 2 : index
    %c1_154 = arith.constant 1 : index
    %c0_155 = arith.constant 0 : index
    %117 = vector.load %arg18[%c2_153, %c1_154, %c0_155] : memref<6x6x128xbf16, #tpu.memory_space<vmem>>, vector<4x4x128xbf16>
    %118 = vector.shape_cast %117 : vector<4x4x128xbf16> to vector<16x128xbf16>
    %c2_156 = arith.constant 2 : index
    %c2_157 = arith.constant 2 : index
    %c0_158 = arith.constant 0 : index
    %119 = vector.load %arg18[%c2_156, %c2_157, %c0_158] : memref<6x6x128xbf16, #tpu.memory_space<vmem>>, vector<4x4x128xbf16>
    %120 = vector.shape_cast %119 : vector<4x4x128xbf16> to vector<16x128xbf16>
    %121 = tpu.concatenate %104, %106, %108, %110, %112, %114, %116, %118, %120 in 1 : vector<16x128xbf16>, vector<16x128xbf16>, vector<16x128xbf16>, vector<16x128xbf16>, vector<16x128xbf16>, vector<16x128xbf16>, vector<16x128xbf16>, vector<16x128xbf16>, vector<16x128xbf16> -> vector<16x1152xbf16>
    %c0_159 = arith.constant 0 : index
    %c0_160 = arith.constant 0 : index
    %122 = vector.load %arg9[%c0_159, %c0_160] : memref<1152x128xbf16, #tpu.memory_space<vmem>>, vector<1152x128xbf16>
    %cst_161 = arith.constant dense<0.000000e+00> : vector<16x128xf32>
    %123 = tpu.matmul %121, %122, %cst_161 {dimension_numbers = #tpu.dot_dimension_numbers<[1], [0], [0], [1], [0, 0, 1, 1], [], []>} : vector<16x1152xbf16>, vector<1152x128xbf16>, vector<16x128xf32> -> vector<16x128xf32>
    %c0_162 = arith.constant 0 : index
    %c0_163 = arith.constant 0 : index
    %124 = vector.load %arg10[%c0_162, %c0_163] : memref<1x128xf32, #tpu.memory_space<vmem>>, vector<1x128xf32>
    %125 = vector.broadcast %124 : vector<1x128xf32> to vector<16x128xf32>
    %126 = arith.addf %123, %125 : vector<16x128xf32>
    %cst_164 = arith.constant 0.000000e+00 : f32
    %127 = vector.broadcast %cst_164 : f32 to vector<16x128xf32>
    %128 = arith.maximumf %126, %127 : vector<16x128xf32>
    %129 = arith.truncf %65 : vector<64x64xf32> to vector<64x64xbf16>
    %c0_165 = arith.constant 0 : index
    %c0_166 = arith.constant 0 : index
    %130 = vector.load %arg11[%c0_165, %c0_166] : memref<64x128xbf16, #tpu.memory_space<vmem>>, vector<64x128xbf16>
    %cst_167 = arith.constant dense<0.000000e+00> : vector<64x128xf32>
    %131 = tpu.matmul %129, %130, %cst_167 {dimension_numbers = #tpu.dot_dimension_numbers<[1], [0], [0], [1], [0, 0, 1, 1], [], []>} : vector<64x64xbf16>, vector<64x128xbf16>, vector<64x128xf32> -> vector<64x128xf32>
    %c0_168 = arith.constant 0 : index
    %c0_169 = arith.constant 0 : index
    %132 = vector.load %arg12[%c0_168, %c0_169] : memref<1x128xf32, #tpu.memory_space<vmem>>, vector<1x128xf32>
    %133 = vector.broadcast %132 : vector<1x128xf32> to vector<64x128xf32>
    %134 = arith.addf %131, %133 : vector<64x128xf32>
    %cst_170 = arith.constant 0.000000e+00 : f32
    %135 = vector.broadcast %cst_170 : f32 to vector<64x128xf32>
    %136 = arith.maximumf %134, %135 : vector<64x128xf32>
    %137 = arith.truncf %128 : vector<16x128xf32> to vector<16x128xbf16>
    %c0_171 = arith.constant 0 : index
    %c0_172 = arith.constant 0 : index
    %138 = vector.load %arg13[%c0_171, %c0_172] : memref<128x512xbf16, #tpu.memory_space<vmem>>, vector<128x512xbf16>
    %cst_173 = arith.constant dense<0.000000e+00> : vector<16x512xf32>
    %139 = tpu.matmul %137, %138, %cst_173 {dimension_numbers = #tpu.dot_dimension_numbers<[1], [0], [0], [1], [0, 0, 1, 1], [], []>} : vector<16x128xbf16>, vector<128x512xbf16>, vector<16x512xf32> -> vector<16x512xf32>
    %140 = vector.extract_strided_slice %139 {offsets = [0, 0], sizes = [16, 128], strides = [1, 1]} : vector<16x512xf32> to vector<16x128xf32>
    %141 = vector.extract_strided_slice %139 {offsets = [0, 128], sizes = [16, 128], strides = [1, 1]} : vector<16x512xf32> to vector<16x128xf32>
    %142 = vector.extract_strided_slice %139 {offsets = [0, 256], sizes = [16, 128], strides = [1, 1]} : vector<16x512xf32> to vector<16x128xf32>
    %143 = vector.extract_strided_slice %139 {offsets = [0, 384], sizes = [16, 128], strides = [1, 1]} : vector<16x512xf32> to vector<16x128xf32>
    %144 = tpu.concatenate %140, %141, %142, %143 in 0 : vector<16x128xf32>, vector<16x128xf32>, vector<16x128xf32>, vector<16x128xf32> -> vector<64x128xf32>
    %c0_174 = arith.constant 0 : index
    %c0_175 = arith.constant 0 : index
    %145 = vector.load %arg15[%c0_174, %c0_175] : memref<64x64xf32, #tpu.memory_space<vmem>>, vector<64x64xf32>
    %cst_176 = arith.constant dense<0.000000e+00> : vector<64x128xf32>
    %146 = tpu.matmul %145, %144, %cst_176 {dimension_numbers = #tpu.dot_dimension_numbers<[1], [0], [0], [1], [0, 0, 1, 1], [], []>} : vector<64x64xf32>, vector<64x128xf32>, vector<64x128xf32> -> vector<64x128xf32>
    %c0_177 = arith.constant 0 : index
    %c0_178 = arith.constant 0 : index
    %147 = vector.load %arg14[%c0_177, %c0_178] : memref<1x128xf32, #tpu.memory_space<vmem>>, vector<1x128xf32>
    %148 = vector.broadcast %147 : vector<1x128xf32> to vector<64x128xf32>
    %149 = arith.addf %146, %148 : vector<64x128xf32>
    %cst_179 = arith.constant 0.000000e+00 : f32
    %150 = vector.broadcast %cst_179 : f32 to vector<64x128xf32>
    %151 = arith.maximumf %149, %150 : vector<64x128xf32>
    %152 = tpu.concatenate %136, %151 in 1 : vector<64x128xf32>, vector<64x128xf32> -> vector<64x256xf32>
    %153 = arith.truncf %152 : vector<64x256xf32> to vector<64x256xbf16>
    %c0_180 = arith.constant 0 : index
    %c0_181 = arith.constant 0 : index
    %c0_182 = arith.constant 0 : index
    %154 = vector.load %arg16[%c0_180, %c0_181, %c0_182] : memref<1x64x256xbf16, #tpu.memory_space<vmem>>, vector<1x64x256xbf16>
    %155 = vector.shape_cast %154 : vector<1x64x256xbf16> to vector<64x256xbf16>
    %156 = vector.shape_cast %153 : vector<64x256xbf16> to vector<1x64x256xbf16>
    tpu.vector_store %arg16[%c0_180, %c0_181, %c0_182], %156 {strides = array<i32>} : memref<1x64x256xbf16, #tpu.memory_space<vmem>>, vector<1x64x256xbf16>,
    return
  }
  func.func @transform_0(%arg0: i32) -> (i32, i32, i32, i32, i32) {
    %c0_i32 = arith.constant 0 : i32
    %c0_i32_0 = arith.constant 0 : i32
    %c0_i32_1 = arith.constant 0 : i32
    %c0_i32_2 = arith.constant 0 : i32
    %c0_i32_3 = arith.constant 0 : i32
    return %arg0, %c0_i32, %c0_i32_0, %c0_i32_1, %c0_i32_2 : i32, i32, i32, i32, i32
  }
  func.func @transform_1(%arg0: i32) -> (i32, i32) {
    %c0_i32 = arith.constant 0 : i32
    %c0_i32_0 = arith.constant 0 : i32
    %c0_i32_1 = arith.constant 0 : i32
    return %c0_i32, %c0_i32_0 : i32, i32
  }
  func.func @transform_2(%arg0: i32) -> (i32, i32) {
    %c0_i32 = arith.constant 0 : i32
    %c0_i32_0 = arith.constant 0 : i32
    %c0_i32_1 = arith.constant 0 : i32
    return %c0_i32, %c0_i32_0 : i32, i32
  }
  func.func @transform_3(%arg0: i32) -> (i32, i32) {
    %c0_i32 = arith.constant 0 : i32
    %c0_i32_0 = arith.constant 0 : i32
    %c0_i32_1 = arith.constant 0 : i32
    return %c0_i32, %c0_i32_0 : i32, i32
  }
  func.func @transform_4(%arg0: i32) -> (i32, i32) {
    %c0_i32 = arith.constant 0 : i32
    %c0_i32_0 = arith.constant 0 : i32
    %c0_i32_1 = arith.constant 0 : i32
    return %c0_i32, %c0_i32_0 : i32, i32
  }
  func.func @transform_5(%arg0: i32) -> (i32, i32) {
    %c0_i32 = arith.constant 0 : i32
    %c0_i32_0 = arith.constant 0 : i32
    %c0_i32_1 = arith.constant 0 : i32
    return %c0_i32, %c0_i32_0 : i32, i32
  }
  func.func @transform_6(%arg0: i32) -> (i32, i32) {
    %c0_i32 = arith.constant 0 : i32
    %c0_i32_0 = arith.constant 0 : i32
    %c0_i32_1 = arith.constant 0 : i32
    return %c0_i32, %c0_i32_0 : i32, i32
  }
  func.func @transform_7(%arg0: i32) -> (i32, i32) {
    %c0_i32 = arith.constant 0 : i32
    %c0_i32_0 = arith.constant 0 : i32
    %c0_i32_1 = arith.constant 0 : i32
    return %c0_i32, %c0_i32_0 : i32, i32
  }
  func.func @transform_8(%arg0: i32) -> (i32, i32) {
    %c0_i32 = arith.constant 0 : i32
    %c0_i32_0 = arith.constant 0 : i32
    %c0_i32_1 = arith.constant 0 : i32
    return %c0_i32, %c0_i32_0 : i32, i32
  }
  func.func @transform_9(%arg0: i32) -> (i32, i32) {
    %c0_i32 = arith.constant 0 : i32
    %c0_i32_0 = arith.constant 0 : i32
    %c0_i32_1 = arith.constant 0 : i32
    return %c0_i32, %c0_i32_0 : i32, i32
  }
  func.func @transform_10(%arg0: i32) -> (i32, i32) {
    %c0_i32 = arith.constant 0 : i32
    %c0_i32_0 = arith.constant 0 : i32
    %c0_i32_1 = arith.constant 0 : i32
    return %c0_i32, %c0_i32_0 : i32, i32
  }
  func.func @transform_11(%arg0: i32) -> (i32, i32) {
    %c0_i32 = arith.constant 0 : i32
    %c0_i32_0 = arith.constant 0 : i32
    %c0_i32_1 = arith.constant 0 : i32
    return %c0_i32, %c0_i32_0 : i32, i32
  }
  func.func @transform_12(%arg0: i32) -> (i32, i32) {
    %c0_i32 = arith.constant 0 : i32
    %c0_i32_0 = arith.constant 0 : i32
    %c0_i32_1 = arith.constant 0 : i32
    return %c0_i32, %c0_i32_0 : i32, i32
  }
  func.func @transform_13(%arg0: i32) -> (i32, i32) {
    %c0_i32 = arith.constant 0 : i32
    %c0_i32_0 = arith.constant 0 : i32
    %c0_i32_1 = arith.constant 0 : i32
    return %c0_i32, %c0_i32_0 : i32, i32
  }
  func.func @transform_14(%arg0: i32) -> (i32, i32) {
    %c0_i32 = arith.constant 0 : i32
    %c0_i32_0 = arith.constant 0 : i32
    %c0_i32_1 = arith.constant 0 : i32
    return %c0_i32, %c0_i32_0 : i32, i32
  }
  func.func @transform_15(%arg0: i32) -> (i32, i32, i32) {
    %c0_i32 = arith.constant 0 : i32
    %c0_i32_0 = arith.constant 0 : i32
    %c0_i32_1 = arith.constant 0 : i32
    return %arg0, %c0_i32, %c0_i32_0 : i32, i32, i32
  }
}

module attributes {stable_mosaic.version = 11 : i64} {
  func.func @_fusion_head_kernel(%arg0: i32, %arg1: i32, %arg2: memref<1x64x256xbf16, #tpu.memory_space<vmem>>, %arg3: memref<1x2x64x256xbf16, #tpu.memory_space<vmem>>, %arg4: memref<1x2x1x1xf32, #tpu.memory_space<vmem>>, %arg5: memref<256x256xbf16, #tpu.memory_space<vmem>>, %arg6: memref<1x256xf32, #tpu.memory_space<vmem>>, %arg7: memref<256x256xbf16, #tpu.memory_space<vmem>>, %arg8: memref<1x256xf32, #tpu.memory_space<vmem>>, %arg9: memref<256x256xbf16, #tpu.memory_space<vmem>>, %arg10: memref<1x256xf32, #tpu.memory_space<vmem>>, %arg11: memref<256x8xf32, #tpu.memory_space<vmem>>, %arg12: memref<8x256xf32, #tpu.memory_space<vmem>>, %arg13: memref<256x256xbf16, #tpu.memory_space<vmem>>, %arg14: memref<1x256xf32, #tpu.memory_space<vmem>>, %arg15: memref<256x128xbf16, #tpu.memory_space<vmem>>, %arg16: memref<1x128xf32, #tpu.memory_space<vmem>>, %arg17: memref<1x64x128xf32, #tpu.memory_space<vmem>>, %arg18: memref<1x2x64x8xf32, #tpu.memory_space<vmem>>) attributes {dimension_semantics = [#tpu.dimension_semantics<parallel>, #tpu.dimension_semantics<parallel>], iteration_bounds = array<i64: 2, 1>, scalar_prefetch = 0 : i64, scratch_operands = 0 : i64, tpu.core_type = #tpu.core_type<tc>, window_params = [{transform_indices = @transform_0, window_bounds = array<i64: 1, 64, 256>}, {transform_indices = @transform_1, window_bounds = array<i64: 1, 2, 64, 256>}, {transform_indices = @transform_2, window_bounds = array<i64: 1, 2, 1, 1>}, {pipeline_mode = #tpu.pipeline_mode<synchronous>, transform_indices = @transform_3, window_bounds = array<i64: 256, 256>}, {pipeline_mode = #tpu.pipeline_mode<synchronous>, transform_indices = @transform_4, window_bounds = array<i64: 1, 256>}, {pipeline_mode = #tpu.pipeline_mode<synchronous>, transform_indices = @transform_5, window_bounds = array<i64: 256, 256>}, {pipeline_mode = #tpu.pipeline_mode<synchronous>, transform_indices = @transform_6, window_bounds = array<i64: 1, 256>}, {pipeline_mode = #tpu.pipeline_mode<synchronous>, transform_indices = @transform_7, window_bounds = array<i64: 256, 256>}, {pipeline_mode = #tpu.pipeline_mode<synchronous>, transform_indices = @transform_8, window_bounds = array<i64: 1, 256>}, {pipeline_mode = #tpu.pipeline_mode<synchronous>, transform_indices = @transform_9, window_bounds = array<i64: 256, 8>}, {pipeline_mode = #tpu.pipeline_mode<synchronous>, transform_indices = @transform_10, window_bounds = array<i64: 8, 256>}, {pipeline_mode = #tpu.pipeline_mode<synchronous>, transform_indices = @transform_11, window_bounds = array<i64: 256, 256>}, {pipeline_mode = #tpu.pipeline_mode<synchronous>, transform_indices = @transform_12, window_bounds = array<i64: 1, 256>}, {pipeline_mode = #tpu.pipeline_mode<synchronous>, transform_indices = @transform_13, window_bounds = array<i64: 256, 128>}, {pipeline_mode = #tpu.pipeline_mode<synchronous>, transform_indices = @transform_14, window_bounds = array<i64: 1, 128>}, {transform_indices = @transform_15, window_bounds = array<i64: 1, 64, 128>}, {transform_indices = @transform_16, window_bounds = array<i64: 1, 2, 64, 8>}]} {
    %c0 = arith.constant 0 : index
    %c0_0 = arith.constant 0 : index
    %c0_1 = arith.constant 0 : index
    %0 = vector.load %arg2[%c0, %c0_0, %c0_1] : memref<1x64x256xbf16, #tpu.memory_space<vmem>>, vector<1x64x256xbf16>
    %1 = vector.shape_cast %0 : vector<1x64x256xbf16> to vector<64x256xbf16>
    %c0_2 = arith.constant 0 : index
    %c0_3 = arith.constant 0 : index
    %2 = vector.load %arg5[%c0_2, %c0_3] : memref<256x256xbf16, #tpu.memory_space<vmem>>, vector<256x256xbf16>
    %cst = arith.constant dense<0.000000e+00> : vector<64x256xf32>
    %3 = tpu.matmul %1, %2, %cst {dimension_numbers = #tpu.dot_dimension_numbers<[1], [0], [0], [1], [0, 0, 1, 1], [], []>} : vector<64x256xbf16>, vector<256x256xbf16>, vector<64x256xf32> -> vector<64x256xf32>
    %c0_4 = arith.constant 0 : index
    %c0_5 = arith.constant 0 : index
    %4 = vector.load %arg6[%c0_4, %c0_5] : memref<1x256xf32, #tpu.memory_space<vmem>>, vector<1x256xf32>
    %5 = vector.broadcast %4 : vector<1x256xf32> to vector<64x256xf32>
    %6 = arith.addf %3, %5 : vector<64x256xf32>
    %c0_6 = arith.constant 0 : index
    %c0_7 = arith.constant 0 : index
    %c0_8 = arith.constant 0 : index
    %c0_9 = arith.constant 0 : index
    %7 = vector.load %arg3[%c0_6, %c0_7, %c0_8, %c0_9] : memref<1x2x64x256xbf16, #tpu.memory_space<vmem>>, vector<1x1x64x256xbf16>
    %8 = vector.shape_cast %7 : vector<1x1x64x256xbf16> to vector<64x256xbf16>
    %c0_10 = arith.constant 0 : index
    %c0_11 = arith.constant 0 : index
    %9 = vector.load %arg7[%c0_10, %c0_11] : memref<256x256xbf16, #tpu.memory_space<vmem>>, vector<256x256xbf16>
    %cst_12 = arith.constant dense<0.000000e+00> : vector<64x256xf32>
    %10 = tpu.matmul %8, %9, %cst_12 {dimension_numbers = #tpu.dot_dimension_numbers<[1], [0], [0], [1], [0, 0, 1, 1], [], []>} : vector<64x256xbf16>, vector<256x256xbf16>, vector<64x256xf32> -> vector<64x256xf32>
    %c0_13 = arith.constant 0 : index
    %c0_14 = arith.constant 0 : index
    %11 = vector.load %arg8[%c0_13, %c0_14] : memref<1x256xf32, #tpu.memory_space<vmem>>, vector<1x256xf32>
    %12 = vector.broadcast %11 : vector<1x256xf32> to vector<64x256xf32>
    %13 = arith.addf %10, %12 : vector<64x256xf32>
    %14 = arith.mulf %6, %13 : vector<64x256xf32>
    %c0_15 = arith.constant 0 : index
    %c0_16 = arith.constant 0 : index
    %15 = vector.load %arg11[%c0_15, %c0_16] : memref<256x8xf32, #tpu.memory_space<vmem>>, vector<256x8xf32>
    %cst_17 = arith.constant dense<0.000000e+00> : vector<64x8xf32>
    %16 = tpu.matmul %14, %15, %cst_17 {dimension_numbers = #tpu.dot_dimension_numbers<[1], [0], [0], [1], [0, 0, 1, 1], [], []>} : vector<64x256xf32>, vector<256x8xf32>, vector<64x8xf32> -> vector<64x8xf32>
    %cst_18 = arith.constant 0.176776692 : f32
    %17 = vector.broadcast %cst_18 : f32 to vector<64x8xf32>
    %18 = arith.mulf %16, %17 : vector<64x8xf32>
    %c0_19 = arith.constant 0 : index
    %c0_20 = arith.constant 0 : index
    %c0_21 = arith.constant 0 : index
    %c0_22 = arith.constant 0 : index
    %19 = vector.load %arg4[%c0_19, %c0_20, %c0_21, %c0_22] : memref<1x2x1x1xf32, #tpu.memory_space<vmem>>, vector<1x1x1x1xf32>
    %20 = vector.shape_cast %19 : vector<1x1x1x1xf32> to vector<1x1xf32>
    %21 = vector.broadcast %20 : vector<1x1xf32> to vector<64x8xf32>
    %22 = arith.addf %18, %21 : vector<64x8xf32>
    %c0_23 = arith.constant 0 : index
    %c1 = arith.constant 1 : index
    %c0_24 = arith.constant 0 : index
    %c0_25 = arith.constant 0 : index
    %23 = vector.load %arg3[%c0_23, %c1, %c0_24, %c0_25] : memref<1x2x64x256xbf16, #tpu.memory_space<vmem>>, vector<1x1x64x256xbf16>
    %24 = vector.shape_cast %23 : vector<1x1x64x256xbf16> to vector<64x256xbf16>
    %c0_26 = arith.constant 0 : index
    %c0_27 = arith.constant 0 : index
    %25 = vector.load %arg7[%c0_26, %c0_27] : memref<256x256xbf16, #tpu.memory_space<vmem>>, vector<256x256xbf16>
    %cst_28 = arith.constant dense<0.000000e+00> : vector<64x256xf32>
    %26 = tpu.matmul %24, %25, %cst_28 {dimension_numbers = #tpu.dot_dimension_numbers<[1], [0], [0], [1], [0, 0, 1, 1], [], []>} : vector<64x256xbf16>, vector<256x256xbf16>, vector<64x256xf32> -> vector<64x256xf32>
    %c0_29 = arith.constant 0 : index
    %c0_30 = arith.constant 0 : index
    %27 = vector.load %arg8[%c0_29, %c0_30] : memref<1x256xf32, #tpu.memory_space<vmem>>, vector<1x256xf32>
    %28 = vector.broadcast %27 : vector<1x256xf32> to vector<64x256xf32>
    %29 = arith.addf %26, %28 : vector<64x256xf32>
    %30 = arith.mulf %6, %29 : vector<64x256xf32>
    %c0_31 = arith.constant 0 : index
    %c0_32 = arith.constant 0 : index
    %31 = vector.load %arg11[%c0_31, %c0_32] : memref<256x8xf32, #tpu.memory_space<vmem>>, vector<256x8xf32>
    %cst_33 = arith.constant dense<0.000000e+00> : vector<64x8xf32>
    %32 = tpu.matmul %30, %31, %cst_33 {dimension_numbers = #tpu.dot_dimension_numbers<[1], [0], [0], [1], [0, 0, 1, 1], [], []>} : vector<64x256xf32>, vector<256x8xf32>, vector<64x8xf32> -> vector<64x8xf32>
    %cst_34 = arith.constant 0.176776692 : f32
    %33 = vector.broadcast %cst_34 : f32 to vector<64x8xf32>
    %34 = arith.mulf %32, %33 : vector<64x8xf32>
    %c0_35 = arith.constant 0 : index
    %c1_36 = arith.constant 1 : index
    %c0_37 = arith.constant 0 : index
    %c0_38 = arith.constant 0 : index
    %35 = vector.load %arg4[%c0_35, %c1_36, %c0_37, %c0_38] : memref<1x2x1x1xf32, #tpu.memory_space<vmem>>, vector<1x1x1x1xf32>
    %36 = vector.shape_cast %35 : vector<1x1x1x1xf32> to vector<1x1xf32>
    %37 = vector.broadcast %36 : vector<1x1xf32> to vector<64x8xf32>
    %38 = arith.addf %34, %37 : vector<64x8xf32>
    %39 = vector.shape_cast %22 : vector<64x8xf32> to vector<1x64x8xf32>
    %40 = vector.shape_cast %38 : vector<64x8xf32> to vector<1x64x8xf32>
    %41 = tpu.concatenate %39, %40 in 0 : vector<1x64x8xf32>, vector<1x64x8xf32> -> vector<2x64x8xf32>
    %cst_39 = arith.constant dense<0xFF800000> : vector<64x8xf32>
    %42 = vector.multi_reduction <maximumf>, %41, %cst_39 [0] : vector<2x64x8xf32> to vector<64x8xf32>
    %43 = vector.shape_cast %42 : vector<64x8xf32> to vector<1x64x8xf32>
    %44 = vector.broadcast %43 : vector<1x64x8xf32> to vector<2x64x8xf32>
    %45 = arith.subf %41, %44 : vector<2x64x8xf32>
    %46 = math.exp %45 : vector<2x64x8xf32>
    %cst_40 = arith.constant dense<0.000000e+00> : vector<64x8xf32>
    %47 = vector.multi_reduction <add>, %46, %cst_40 [0] : vector<2x64x8xf32> to vector<64x8xf32>
    %48 = tpu.reciprocal %47 {approx = true} : vector<64x8xf32> -> vector<64x8xf32>
    %49 = vector.shape_cast %48 : vector<64x8xf32> to vector<1x64x8xf32>
    %50 = vector.broadcast %49 : vector<1x64x8xf32> to vector<2x64x8xf32>
    %51 = arith.mulf %46, %50 : vector<2x64x8xf32>
    %c0_41 = arith.constant 0 : index
    %c0_42 = arith.constant 0 : index
    %c0_43 = arith.constant 0 : index
    %c0_44 = arith.constant 0 : index
    %52 = vector.load %arg18[%c0_41, %c0_42, %c0_43, %c0_44] : memref<1x2x64x8xf32, #tpu.memory_space<vmem>>, vector<1x2x64x8xf32>
    %53 = vector.shape_cast %52 : vector<1x2x64x8xf32> to vector<2x64x8xf32>
    %54 = vector.shape_cast %51 : vector<2x64x8xf32> to vector<1x2x64x8xf32>
    tpu.vector_store %arg18[%c0_41, %c0_42, %c0_43, %c0_44], %54 {strides = array<i32>} : memref<1x2x64x8xf32, #tpu.memory_space<vmem>>, vector<1x2x64x8xf32>,
    %cst_45 = arith.constant 0.000000e+00 : f32
    %55 = vector.broadcast %cst_45 : f32 to vector<64x256xf32>
    %c0_46 = arith.constant 0 : index
    %c0_47 = arith.constant 0 : index
    %c0_48 = arith.constant 0 : index
    %c0_49 = arith.constant 0 : index
    %56 = vector.load %arg3[%c0_46, %c0_47, %c0_48, %c0_49] : memref<1x2x64x256xbf16, #tpu.memory_space<vmem>>, vector<1x1x64x256xbf16>
    %57 = vector.shape_cast %56 : vector<1x1x64x256xbf16> to vector<64x256xbf16>
    %c0_50 = arith.constant 0 : index
    %c0_51 = arith.constant 0 : index
    %58 = vector.load %arg9[%c0_50, %c0_51] : memref<256x256xbf16, #tpu.memory_space<vmem>>, vector<256x256xbf16>
    %cst_52 = arith.constant dense<0.000000e+00> : vector<64x256xf32>
    %59 = tpu.matmul %57, %58, %cst_52 {dimension_numbers = #tpu.dot_dimension_numbers<[1], [0], [0], [1], [0, 0, 1, 1], [], []>} : vector<64x256xbf16>, vector<256x256xbf16>, vector<64x256xf32> -> vector<64x256xf32>
    %c0_53 = arith.constant 0 : index
    %c0_54 = arith.constant 0 : index
    %60 = vector.load %arg10[%c0_53, %c0_54] : memref<1x256xf32, #tpu.memory_space<vmem>>, vector<1x256xf32>
    %61 = vector.broadcast %60 : vector<1x256xf32> to vector<64x256xf32>
    %62 = arith.addf %59, %61 : vector<64x256xf32>
    %c0_55 = arith.constant 0 : index
    %c0_56 = arith.constant 0 : index
    %c0_57 = arith.constant 0 : index
    %c0_58 = arith.constant 0 : index
    %63 = vector.load %arg18[%c0_55, %c0_56, %c0_57, %c0_58] : memref<1x2x64x8xf32, #tpu.memory_space<vmem>>, vector<1x1x64x8xf32>
    %64 = vector.shape_cast %63 : vector<1x1x64x8xf32> to vector<64x8xf32>
    %c0_59 = arith.constant 0 : index
    %c0_60 = arith.constant 0 : index
    %65 = vector.load %arg12[%c0_59, %c0_60] : memref<8x256xf32, #tpu.memory_space<vmem>>, vector<8x256xf32>
    %cst_61 = arith.constant dense<0.000000e+00> : vector<64x256xf32>
    %66 = tpu.matmul %64, %65, %cst_61 {dimension_numbers = #tpu.dot_dimension_numbers<[1], [0], [0], [1], [0, 0, 1, 1], [], []>} : vector<64x8xf32>, vector<8x256xf32>, vector<64x256xf32> -> vector<64x256xf32>
    %67 = arith.mulf %66, %62 : vector<64x256xf32>
    %68 = arith.addf %55, %67 : vector<64x256xf32>
    %c0_62 = arith.constant 0 : index
    %c1_63 = arith.constant 1 : index
    %c0_64 = arith.constant 0 : index
    %c0_65 = arith.constant 0 : index
    %69 = vector.load %arg3[%c0_62, %c1_63, %c0_64, %c0_65] : memref<1x2x64x256xbf16, #tpu.memory_space<vmem>>, vector<1x1x64x256xbf16>
    %70 = vector.shape_cast %69 : vector<1x1x64x256xbf16> to vector<64x256xbf16>
    %c0_66 = arith.constant 0 : index
    %c0_67 = arith.constant 0 : index
    %71 = vector.load %arg9[%c0_66, %c0_67] : memref<256x256xbf16, #tpu.memory_space<vmem>>, vector<256x256xbf16>
    %cst_68 = arith.constant dense<0.000000e+00> : vector<64x256xf32>
    %72 = tpu.matmul %70, %71, %cst_68 {dimension_numbers = #tpu.dot_dimension_numbers<[1], [0], [0], [1], [0, 0, 1, 1], [], []>} : vector<64x256xbf16>, vector<256x256xbf16>, vector<64x256xf32> -> vector<64x256xf32>
    %c0_69 = arith.constant 0 : index
    %c0_70 = arith.constant 0 : index
    %73 = vector.load %arg10[%c0_69, %c0_70] : memref<1x256xf32, #tpu.memory_space<vmem>>, vector<1x256xf32>
    %74 = vector.broadcast %73 : vector<1x256xf32> to vector<64x256xf32>
    %75 = arith.addf %72, %74 : vector<64x256xf32>
    %c0_71 = arith.constant 0 : index
    %c1_72 = arith.constant 1 : index
    %c0_73 = arith.constant 0 : index
    %c0_74 = arith.constant 0 : index
    %76 = vector.load %arg18[%c0_71, %c1_72, %c0_73, %c0_74] : memref<1x2x64x8xf32, #tpu.memory_space<vmem>>, vector<1x1x64x8xf32>
    %77 = vector.shape_cast %76 : vector<1x1x64x8xf32> to vector<64x8xf32>
    %c0_75 = arith.constant 0 : index
    %c0_76 = arith.constant 0 : index
    %78 = vector.load %arg12[%c0_75, %c0_76] : memref<8x256xf32, #tpu.memory_space<vmem>>, vector<8x256xf32>
    %cst_77 = arith.constant dense<0.000000e+00> : vector<64x256xf32>
    %79 = tpu.matmul %77, %78, %cst_77 {dimension_numbers = #tpu.dot_dimension_numbers<[1], [0], [0], [1], [0, 0, 1, 1], [], []>} : vector<64x8xf32>, vector<8x256xf32>, vector<64x256xf32> -> vector<64x256xf32>
    %80 = arith.mulf %79, %75 : vector<64x256xf32>
    %81 = arith.addf %68, %80 : vector<64x256xf32>
    %82 = arith.truncf %81 : vector<64x256xf32> to vector<64x256xbf16>
    %c0_78 = arith.constant 0 : index
    %c0_79 = arith.constant 0 : index
    %83 = vector.load %arg13[%c0_78, %c0_79] : memref<256x256xbf16, #tpu.memory_space<vmem>>, vector<256x256xbf16>
    %cst_80 = arith.constant dense<0.000000e+00> : vector<64x256xf32>
    %84 = tpu.matmul %82, %83, %cst_80 {dimension_numbers = #tpu.dot_dimension_numbers<[1], [0], [0], [1], [0, 0, 1, 1], [], []>} : vector<64x256xbf16>, vector<256x256xbf16>, vector<64x256xf32> -> vector<64x256xf32>
    %c0_81 = arith.constant 0 : index
    %c0_82 = arith.constant 0 : index
    %85 = vector.load %arg14[%c0_81, %c0_82] : memref<1x256xf32, #tpu.memory_space<vmem>>, vector<1x256xf32>
    %86 = vector.broadcast %85 : vector<1x256xf32> to vector<64x256xf32>
    %87 = arith.addf %84, %86 : vector<64x256xf32>
    %88 = arith.truncf %87 : vector<64x256xf32> to vector<64x256xbf16>
    %c0_83 = arith.constant 0 : index
    %c0_84 = arith.constant 0 : index
    %89 = vector.load %arg15[%c0_83, %c0_84] : memref<256x128xbf16, #tpu.memory_space<vmem>>, vector<256x128xbf16>
    %cst_85 = arith.constant dense<0.000000e+00> : vector<64x128xf32>
    %90 = tpu.matmul %88, %89, %cst_85 {dimension_numbers = #tpu.dot_dimension_numbers<[1], [0], [0], [1], [0, 0, 1, 1], [], []>} : vector<64x256xbf16>, vector<256x128xbf16>, vector<64x128xf32> -> vector<64x128xf32>
    %c0_86 = arith.constant 0 : index
    %c0_87 = arith.constant 0 : index
    %91 = vector.load %arg16[%c0_86, %c0_87] : memref<1x128xf32, #tpu.memory_space<vmem>>, vector<1x128xf32>
    %92 = vector.broadcast %91 : vector<1x128xf32> to vector<64x128xf32>
    %93 = arith.addf %90, %92 : vector<64x128xf32>
    %c0_88 = arith.constant 0 : index
    %c0_89 = arith.constant 0 : index
    %c0_90 = arith.constant 0 : index
    %94 = vector.load %arg17[%c0_88, %c0_89, %c0_90] : memref<1x64x128xf32, #tpu.memory_space<vmem>>, vector<1x64x128xf32>
    %95 = vector.shape_cast %94 : vector<1x64x128xf32> to vector<64x128xf32>
    %96 = vector.shape_cast %93 : vector<64x128xf32> to vector<1x64x128xf32>
    tpu.vector_store %arg17[%c0_88, %c0_89, %c0_90], %96 {strides = array<i32>} : memref<1x64x128xf32, #tpu.memory_space<vmem>>, vector<1x64x128xf32>,
    return
  }
  func.func @transform_0(%arg0: i32, %arg1: i32) -> (i32, i32, i32) {
    %c0_i32 = arith.constant 0 : i32
    %c0_i32_0 = arith.constant 0 : i32
    return %arg0, %arg1, %c0_i32 : i32, i32, i32
  }
  func.func @transform_1(%arg0: i32, %arg1: i32) -> (i32, i32, i32, i32) {
    %c0_i32 = arith.constant 0 : i32
    %c0_i32_0 = arith.constant 0 : i32
    %c0_i32_1 = arith.constant 0 : i32
    return %arg0, %c0_i32, %arg1, %c0_i32_0 : i32, i32, i32, i32
  }
  func.func @transform_2(%arg0: i32, %arg1: i32) -> (i32, i32, i32, i32) {
    %c0_i32 = arith.constant 0 : i32
    %c0_i32_0 = arith.constant 0 : i32
    %c0_i32_1 = arith.constant 0 : i32
    %c0_i32_2 = arith.constant 0 : i32
    return %arg0, %c0_i32, %c0_i32_0, %c0_i32_1 : i32, i32, i32, i32
  }
  func.func @transform_3(%arg0: i32, %arg1: i32) -> (i32, i32) {
    %c0_i32 = arith.constant 0 : i32
    %c0_i32_0 = arith.constant 0 : i32
    %c0_i32_1 = arith.constant 0 : i32
    return %c0_i32, %c0_i32_0 : i32, i32
  }
  func.func @transform_4(%arg0: i32, %arg1: i32) -> (i32, i32) {
    %c0_i32 = arith.constant 0 : i32
    %c0_i32_0 = arith.constant 0 : i32
    %c0_i32_1 = arith.constant 0 : i32
    return %c0_i32, %c0_i32_0 : i32, i32
  }
  func.func @transform_5(%arg0: i32, %arg1: i32) -> (i32, i32) {
    %c0_i32 = arith.constant 0 : i32
    %c0_i32_0 = arith.constant 0 : i32
    %c0_i32_1 = arith.constant 0 : i32
    return %c0_i32, %c0_i32_0 : i32, i32
  }
  func.func @transform_6(%arg0: i32, %arg1: i32) -> (i32, i32) {
    %c0_i32 = arith.constant 0 : i32
    %c0_i32_0 = arith.constant 0 : i32
    %c0_i32_1 = arith.constant 0 : i32
    return %c0_i32, %c0_i32_0 : i32, i32
  }
  func.func @transform_7(%arg0: i32, %arg1: i32) -> (i32, i32) {
    %c0_i32 = arith.constant 0 : i32
    %c0_i32_0 = arith.constant 0 : i32
    %c0_i32_1 = arith.constant 0 : i32
    return %c0_i32, %c0_i32_0 : i32, i32
  }
  func.func @transform_8(%arg0: i32, %arg1: i32) -> (i32, i32) {
    %c0_i32 = arith.constant 0 : i32
    %c0_i32_0 = arith.constant 0 : i32
    %c0_i32_1 = arith.constant 0 : i32
    return %c0_i32, %c0_i32_0 : i32, i32
  }
  func.func @transform_9(%arg0: i32, %arg1: i32) -> (i32, i32) {
    %c0_i32 = arith.constant 0 : i32
    %c0_i32_0 = arith.constant 0 : i32
    %c0_i32_1 = arith.constant 0 : i32
    return %c0_i32, %c0_i32_0 : i32, i32
  }
  func.func @transform_10(%arg0: i32, %arg1: i32) -> (i32, i32) {
    %c0_i32 = arith.constant 0 : i32
    %c0_i32_0 = arith.constant 0 : i32
    %c0_i32_1 = arith.constant 0 : i32
    return %c0_i32, %c0_i32_0 : i32, i32
  }
  func.func @transform_11(%arg0: i32, %arg1: i32) -> (i32, i32) {
    %c0_i32 = arith.constant 0 : i32
    %c0_i32_0 = arith.constant 0 : i32
    %c0_i32_1 = arith.constant 0 : i32
    return %c0_i32, %c0_i32_0 : i32, i32
  }
  func.func @transform_12(%arg0: i32, %arg1: i32) -> (i32, i32) {
    %c0_i32 = arith.constant 0 : i32
    %c0_i32_0 = arith.constant 0 : i32
    %c0_i32_1 = arith.constant 0 : i32
    return %c0_i32, %c0_i32_0 : i32, i32
  }
  func.func @transform_13(%arg0: i32, %arg1: i32) -> (i32, i32) {
    %c0_i32 = arith.constant 0 : i32
    %c0_i32_0 = arith.constant 0 : i32
    %c0_i32_1 = arith.constant 0 : i32
    return %c0_i32, %c0_i32_0 : i32, i32
  }
  func.func @transform_14(%arg0: i32, %arg1: i32) -> (i32, i32) {
    %c0_i32 = arith.constant 0 : i32
    %c0_i32_0 = arith.constant 0 : i32
    %c0_i32_1 = arith.constant 0 : i32
    return %c0_i32, %c0_i32_0 : i32, i32
  }
  func.func @transform_15(%arg0: i32, %arg1: i32) -> (i32, i32, i32) {
    %c0_i32 = arith.constant 0 : i32
    %c0_i32_0 = arith.constant 0 : i32
    return %arg0, %arg1, %c0_i32 : i32, i32, i32
  }
  func.func @transform_16(%arg0: i32, %arg1: i32) -> (i32, i32, i32, i32) {
    %c0_i32 = arith.constant 0 : i32
    %c0_i32_0 = arith.constant 0 : i32
    %c0_i32_1 = arith.constant 0 : i32
    return %arg0, %c0_i32, %arg1, %c0_i32_0 : i32, i32, i32, i32
  }
}

</mosaic_0001>

<llo_original>
// kernel: forward.3
$region0: #{forward.3}
  #allocation0 [shape = 'u32[]', space=smem, size = 0x4, offset = 0x4, fixed_abs, tag = 'smem constant byte address 0x4 - core index']
  #allocation1 [shape = 'u32[144,128]{1,0:T(1,128)}', space=vmem, size = 0x12000, scoped, tag = 'internal scratch']
  %s0 = inlined_call_operand.vmem [shape: bf16[384,10], index: 0, kind: input, shape index: {}]
  %s1 = inlined_call_operand.vmem [shape: bf16[10,64], index: 1, kind: input, shape index: {}]
  %s2 = inlined_call_operand.vmem [shape: f32[1,64], index: 2, kind: input, shape index: {}]
  %s3 = inlined_call_operand.vmem [shape: bf16[48,64], index: 3, kind: output, shape index: {}]
  %s4 = sld [smem:[#allocation0]]
  $region22: #{forward.3} parent=0
    _
  %s6 = ssub.s32 1, %s4
  %s7 = scalar_select 0, %s6, %s4
  // Predicated region
  $region2: #{forward.3} parent=0 // pred_check
    _
  $region3: #{forward.3} parent=0 // pred_check_branch
    %9 = sbr.rel (0) target = $region5
  $region4: #{forward.3} parent=0 // pred_region
    _
  $region5: #{forward.3} parent=0 // pred_fallthru
    _
  // Predicated region
  $region6: #{forward.3} parent=0 // pred_check
    _
  $region7: #{forward.3} parent=0 // pred_check_branch
    %11 = sbr.rel (0) target = $region9
  $region8: #{forward.3} parent=0 // pred_region
    _
  $region9: #{forward.3} parent=0 // pred_fallthru
    _
  // Predicated region
  $region10: #{forward.3} parent=0 // pred_check
    _
  $region11: #{forward.3} parent=0 // pred_check_branch
    %13 = sbr.rel (0) target = $region13
  $region12: #{forward.3} parent=0 // pred_region
    _
  $region13: #{forward.3} parent=0 // pred_fallthru
    _
  %v15 = vld [vmem:[%s0] sm:$0xf]
  %v16 = vld [vmem:[%s0 + $0x4] sm:$0xf]
  %v17 = vld [vmem:[%s0 + $0x8] sm:$0xf]
  %v18 = vld [vmem:[%s0 + $0xc] sm:$0xf]
  %v19 = vld [vmem:[%s0 + $0x10] sm:$0xf]
  %v20 = vld [vmem:[%s0 + $0x14] sm:$0xf]
  %v21 = vld [vmem:[%s0 + $0x18] sm:$0xf]
  %v22 = vld [vmem:[%s0 + $0x1c] sm:$0xf]
  %v23 = vld [vmem:[%s0 + $0x20] sm:$0xf]
  %v24 = vld [vmem:[%s0 + $0x24] sm:$0xf]
  %v25 = vld [vmem:[%s0 + $0x28] sm:$0xf]
  %v26 = vld [vmem:[%s0 + $0x2c] sm:$0xf]
  %v27 = vld [vmem:[%s0 + $0x30] sm:$0xf]
  %v28 = vld [vmem:[%s0 + $0x34] sm:$0xf]
  %v29 = vld [vmem:[%s0 + $0x38] sm:$0xf]
  %v30 = vld [vmem:[%s0 + $0x3c] sm:$0xf]
  %v31 = vld [vmem:[%s0 + $0x40] sm:$0xf]
  %v32 = vld [vmem:[%s0 + $0x44] sm:$0xf]
  %v33 = vld [vmem:[%s0 + $0x48] sm:$0xf]
  %v34 = vld [vmem:[%s0 + $0x4c] sm:$0xf]
  %v35 = vld [vmem:[%s0 + $0x50] sm:$0xf]
  %v36 = vld [vmem:[%s0 + $0x54] sm:$0xf]
  %v37 = vld [vmem:[%s0 + $0x58] sm:$0xf]
  %v38 = vld [vmem:[%s0 + $0x5c] sm:$0xf]
  %v39 = vld [vmem:[%s0 + $0x60] sm:$0xf]
  %v40 = vld [vmem:[%s0 + $0x64] sm:$0xf]
  %v41 = vld [vmem:[%s0 + $0x68] sm:$0xf]
  %v42 = vld [vmem:[%s0 + $0x6c] sm:$0xf]
  %v43 = vld [vmem:[%s0 + $0x70] sm:$0xf]
  %v44 = vld [vmem:[%s0 + $0x74] sm:$0xf]
  %v45 = vld [vmem:[%s0 + $0x78] sm:$0xf]
  %v46 = vld [vmem:[%s0 + $0x7c] sm:$0xf]
  %v47 = vld [vmem:[%s0 + $0x80] sm:$0xf]
  %v48 = vld [vmem:[%s0 + $0x84] sm:$0xf]
  %v49 = vld [vmem:[%s0 + $0x88] sm:$0xf]
  %v50 = vld [vmem:[%s0 + $0x8c] sm:$0xf]
  %v51 = vld [vmem:[%s0 + $0x90] sm:$0xf]
  %v52 = vld [vmem:[%s0 + $0x94] sm:$0xf]
  %v53 = vld [vmem:[%s0 + $0x98] sm:$0xf]
  %v54 = vld [vmem:[%s0 + $0x9c] sm:$0xf]
  %v55 = vld [vmem:[%s0 + $0xa0] sm:$0xf]
  %v56 = vld [vmem:[%s0 + $0xa4] sm:$0xf]
  %v57 = vld [vmem:[%s0 + $0xa8] sm:$0xf]
  %v58 = vld [vmem:[%s0 + $0xac] sm:$0xf]
  %v59 = vld [vmem:[%s0 + $0xb0] sm:$0xf]
  %v60 = vld [vmem:[%s0 + $0xb4] sm:$0xf]
  %v61 = vld [vmem:[%s0 + $0xb8] sm:$0xf]
  %v62 = vld [vmem:[%s0 + $0xbc] sm:$0xf]
  %v63 = vld [vmem:[%s1] sm:$0xf]
  %v64 = vld [vmem:[%s1 + $0x4] sm:$0x1]
  %v65 = vld [vmem:[%s2] sm:$0x1]
  %v67 = vlaneseq
  %v68 = vshrl.u32 %v67, 7
  %v69 = vsub.s32 0, %v68
  %v70 = vrot.slane %v65, %v69
  %v120 = vunpack.c.l.b16 %v15
  %v121 = vunpack.c.l.b16 %v16
  %v122 = vunpack.c.l.b16 %v17
  %v123 = vunpack.c.l.b16 %v18
  %v124 = vunpack.c.l.b16 %v19
  %v125 = vunpack.c.l.b16 %v20
  %v126 = vunpack.c.l.b16 %v21
  %v127 = vunpack.c.l.b16 %v22
  %v128 = vunpack.c.l.b16 %v23
  %v129 = vunpack.c.l.b16 %v24
  %v130 = vunpack.c.l.b16 %v25
  %v131 = vunpack.c.l.b16 %v26
  %v132 = vunpack.c.l.b16 %v27
  %v133 = vunpack.c.l.b16 %v28
  %v134 = vunpack.c.l.b16 %v29
  %v135 = vunpack.c.l.b16 %v30
  %v136 = vunpack.c.l.b16 %v31
  %v137 = vunpack.c.l.b16 %v32
  %v138 = vunpack.c.l.b16 %v33
  %v139 = vunpack.c.l.b16 %v34
  %v140 = vunpack.c.l.b16 %v35
  %v141 = vunpack.c.l.b16 %v36
  %v142 = vunpack.c.l.b16 %v37
  %v143 = vunpack.c.l.b16 %v38
  %v144 = vunpack.c.l.b16 %v39
  %v145 = vunpack.c.l.b16 %v40
  %v146 = vunpack.c.l.b16 %v41
  %v147 = vunpack.c.l.b16 %v42
  %v148 = vunpack.c.l.b16 %v43
  %v149 = vunpack.c.l.b16 %v44
  %v150 = vunpack.c.l.b16 %v45
  %v151 = vunpack.c.l.b16 %v46
  %v152 = vunpack.c.l.b16 %v47
  %v153 = vunpack.c.l.b16 %v48
  %v154 = vunpack.c.l.b16 %v49
  %v155 = vunpack.c.l.b16 %v50
  %v156 = vunpack.c.l.b16 %v51
  %v157 = vunpack.c.l.b16 %v52
  %v158 = vunpack.c.l.b16 %v53
  %v159 = vunpack.c.l.b16 %v54
  %v160 = vunpack.c.l.b16 %v55
  %v161 = vunpack.c.l.b16 %v56
  %v162 = vunpack.c.l.b16 %v57
  %v163 = vunpack.c.l.b16 %v58
  %v164 = vunpack.c.l.b16 %v59
  %v165 = vunpack.c.l.b16 %v60
  %v166 = vunpack.c.l.b16 %v61
  %v167 = vunpack.c.l.b16 %v62
  %v168 = vpack.c.b16 %v121, %v120
  %v169 = vpack.c.b16 %v123, %v122
  %v170 = vpack.c.b16 %v125, %v124
  %v171 = vpack.c.b16 %v127, %v126
  %v172 = vpack.c.b16 %v129, %v128
  %v173 = vpack.c.b16 %v131, %v130
  %v174 = vpack.c.b16 %v133, %v132
  %v175 = vpack.c.b16 %v135, %v134
  %v176 = vpack.c.b16 %v137, %v136
  %v177 = vpack.c.b16 %v139, %v138
  %v178 = vpack.c.b16 %v141, %v140
  %v179 = vpack.c.b16 %v143, %v142
  %v180 = vpack.c.b16 %v145, %v144
  %v181 = vpack.c.b16 %v147, %v146
  %v182 = vpack.c.b16 %v149, %v148
  %v183 = vpack.c.b16 %v151, %v150
  %v184 = vpack.c.b16 %v153, %v152
  %v185 = vpack.c.b16 %v155, %v154
  %v186 = vpack.c.b16 %v157, %v156
  %v187 = vpack.c.b16 %v159, %v158
  %v188 = vpack.c.b16 %v161, %v160
  %v189 = vpack.c.b16 %v163, %v162
  %v190 = vpack.c.b16 %v165, %v164
  %v191 = vpack.c.b16 %v167, %v166
  %v194 = vunpack.c.l.b16 %v63
  %v195 = vunpack.c.l.b16 %v64
  %v196 = vpack.c.b16 %v195, %v194
  %vm197 = vcmask 80896
  %v199 = vsel %vm197, %v168, 0
  %v202 = vsel %vm197, %v169, 0
  %v205 = vsel %vm197, %v170, 0
  %v208 = vsel %vm197, %v171, 0
  %v211 = vsel %vm197, %v172, 0
  %v214 = vsel %vm197, %v173, 0
  %v217 = vsel %vm197, %v174, 0
  %v220 = vsel %vm197, %v175, 0
  %v223 = vsel %vm197, %v176, 0
  %v226 = vsel %vm197, %v177, 0
  %v229 = vsel %vm197, %v178, 0
  %v232 = vsel %vm197, %v179, 0
  %v235 = vsel %vm197, %v180, 0
  %v238 = vsel %vm197, %v181, 0
  %v241 = vsel %vm197, %v182, 0
  %v244 = vsel %vm197, %v183, 0
  %v247 = vsel %vm197, %v184, 0
  %v250 = vsel %vm197, %v185, 0
  %v253 = vsel %vm197, %v186, 0
  %v256 = vsel %vm197, %v187, 0
  %v259 = vsel %vm197, %v188, 0
  %v262 = vsel %vm197, %v189, 0
  %v265 = vsel %vm197, %v190, 0
  %v268 = vsel %vm197, %v191, 0
  %vm270 = vcmask 1044480
  %v272 = vsel %vm270, %v196, 0
  %274 = vmatprep.subr.bf16.mxu0 0
  %275 = vmatpush1.bf16.msra.mxu0 %v272
  %276 = vmatprep.subr.bf16.mxu0 0
  %277 = vmatpush1.bf16.msra.mxu0 0
  %278 = vmatprep.subr.bf16.mxu0 0
  %279 = vmatpush1.bf16.msra.mxu0 0
  %280 = vmatprep.subr.bf16.mxu0 0
  %281 = vmatpush1.bf16.msra.mxu0 0
  %282 = vmatprep.subr.bf16.mxu0 0
  %283 = vmatpush1.bf16.msra.mxu0 0
  %284 = vmatprep.subr.bf16.mxu0 0
  %285 = vmatpush1.bf16.msra.mxu0 0
  %286 = vmatprep.subr.bf16.mxu0 0
  %287 = vmatpush1.bf16.msra.mxu0 0
  %288 = vmatprep.subr.bf16.mxu0 0
  %289 = vmatpush1.bf16.msra.mxu0 0
  %290 = vmatprep.subr.bf16.mxu0 0
  %291 = vmatpush1.bf16.msra.mxu0 0
  %292 = vmatprep.subr.bf16.mxu0 0
  %293 = vmatpush1.bf16.msra.mxu0 0
  %294 = vmatprep.subr.bf16.mxu0 0
  %295 = vmatpush1.bf16.msra.mxu0 0
  %296 = vmatprep.subr.bf16.mxu0 0
  %297 = vmatpush1.bf16.msra.mxu0 0
  %298 = vmatprep.subr.bf16.mxu0 0
  %299 = vmatpush1.bf16.msra.mxu0 0
  %300 = vmatprep.subr.bf16.mxu0 0
  %301 = vmatpush1.bf16.msra.mxu0 0
  %302 = vmatprep.subr.bf16.mxu0 0
  %303 = vmatpush1.bf16.msra.mxu0 0
  %304 = vmatprep.subr.bf16.mxu0 0
  %305 = vmatpush1.bf16.msra.mxu0 0
  %306 = vmatprep.mubr.bf16.mxu0 0
  %307 = vmatmul.mubr.bf16.gmra.mrb[0].mxu0 %v199
  %v308 = vpop.f32.mrb[0].mxu0
  %v309 = vadd.f32 %v70, %v308
  %v310 = vpop.f32.mrb[0].mxu0
  %v311 = vpop.f32.mrb[0].mxu0
  %v312 = vadd.f32 %v70, %v311
  %v313 = vpop.f32.mrb[0].mxu0
  %314 = vmatprep.mubr.bf16.mxu0 0
  %315 = vmatmul.mubr.bf16.gmra.mrb[0].mxu0 %v202
  %v316 = vpop.f32.mrb[0].mxu0
  %v317 = vadd.f32 %v70, %v316
  %v318 = vpop.f32.mrb[0].mxu0
  %v319 = vpop.f32.mrb[0].mxu0
  %v320 = vadd.f32 %v70, %v319
  %v321 = vpop.f32.mrb[0].mxu0
  %322 = vmatprep.mubr.bf16.mxu0 0
  %323 = vmatmul.mubr.bf16.gmra.mrb[0].mxu0 %v205
  %v324 = vpop.f32.mrb[0].mxu0
  %v325 = vadd.f32 %v70, %v324
  %v326 = vpop.f32.mrb[0].mxu0
  %v327 = vpop.f32.mrb[0].mxu0
  %v328 = vadd.f32 %v70, %v327
  %v329 = vpop.f32.mrb[0].mxu0
  %330 = vmatprep.mubr.bf16.mxu0 0
  %331 = vmatmul.mubr.bf16.gmra.mrb[0].mxu0 %v208
  %v332 = vpop.f32.mrb[0].mxu0
  %v333 = vadd.f32 %v70, %v332
  %v334 = vpop.f32.mrb[0].mxu0
  %v335 = vpop.f32.mrb[0].mxu0
  %v336 = vadd.f32 %v70, %v335
  %v337 = vpop.f32.mrb[0].mxu0
  %338 = vmatprep.mubr.bf16.mxu0 0
  %339 = vmatmul.mubr.bf16.gmra.mrb[0].mxu0 %v211
  %v340 = vpop.f32.mrb[0].mxu0
  %v341 = vadd.f32 %v70, %v340
  %v342 = vpop.f32.mrb[0].mxu0
  %v343 = vpop.f32.mrb[0].mxu0
  %v344 = vadd.f32 %v70, %v343
  %v345 = vpop.f32.mrb[0].mxu0
  %346 = vmatprep.mubr.bf16.mxu0 0
  %347 = vmatmul.mubr.bf16.gmra.mrb[0].mxu0 %v214
  %v348 = vpop.f32.mrb[0].mxu0
  %v349 = vadd.f32 %v70, %v348
  %v350 = vpop.f32.mrb[0].mxu0
  %v351 = vpop.f32.mrb[0].mxu0
  %v352 = vadd.f32 %v70, %v351
  %v353 = vpop.f32.mrb[0].mxu0
  %354 = vmatprep.mubr.bf16.mxu0 0
  %355 = vmatmul.mubr.bf16.gmra.mrb[0].mxu0 %v217
  %v356 = vpop.f32.mrb[0].mxu0
  %v357 = vadd.f32 %v70, %v356
  %v358 = vpop.f32.mrb[0].mxu0
  %v359 = vpop.f32.mrb[0].mxu0
  %v360 = vadd.f32 %v70, %v359
  %v361 = vpop.f32.mrb[0].mxu0
  %362 = vmatprep.mubr.bf16.mxu0 0
  %363 = vmatmul.mubr.bf16.gmra.mrb[0].mxu0 %v220
  %v364 = vpop.f32.mrb[0].mxu0
  %v365 = vadd.f32 %v70, %v364
  %v366 = vpop.f32.mrb[0].mxu0
  %v367 = vpop.f32.mrb[0].mxu0
  %v368 = vadd.f32 %v70, %v367
  %v369 = vpop.f32.mrb[0].mxu0
  %370 = vmatprep.mubr.bf16.mxu0 0
  %371 = vmatmul.mubr.bf16.gmra.mrb[0].mxu0 %v223
  %v372 = vpop.f32.mrb[0].mxu0
  %v373 = vadd.f32 %v70, %v372
  %v374 = vpop.f32.mrb[0].mxu0
  %v375 = vpop.f32.mrb[0].mxu0
  %v376 = vadd.f32 %v70, %v375
  %v377 = vpop.f32.mrb[0].mxu0
  %378 = vmatprep.mubr.bf16.mxu0 0
  %379 = vmatmul.mubr.bf16.gmra.mrb[0].mxu0 %v226
  %v380 = vpop.f32.mrb[0].mxu0
  %v381 = vadd.f32 %v70, %v380
  %v382 = vpop.f32.mrb[0].mxu0
  %v383 = vpop.f32.mrb[0].mxu0
  %v384 = vadd.f32 %v70, %v383
  %v385 = vpop.f32.mrb[0].mxu0
  %386 = vmatprep.mubr.bf16.mxu0 0
  %387 = vmatmul.mubr.bf16.gmra.mrb[0].mxu0 %v229
  %v388 = vpop.f32.mrb[0].mxu0
  %v389 = vadd.f32 %v70, %v388
  %v390 = vpop.f32.mrb[0].mxu0
  %v391 = vpop.f32.mrb[0].mxu0
  %v392 = vadd.f32 %v70, %v391
  %v393 = vpop.f32.mrb[0].mxu0
  %394 = vmatprep.mubr.bf16.mxu0 0
  %395 = vmatmul.mubr.bf16.gmra.mrb[0].mxu0 %v232
  %v396 = vpop.f32.mrb[0].mxu0
  %v397 = vadd.f32 %v70, %v396
  %v398 = vpop.f32.mrb[0].mxu0
  %v399 = vpop.f32.mrb[0].mxu0
  %v400 = vadd.f32 %v70, %v399
  %v401 = vpop.f32.mrb[0].mxu0
  %402 = vmatprep.mubr.bf16.mxu0 0
  %403 = vmatmul.mubr.bf16.gmra.mrb[0].mxu0 %v235
  %v404 = vpop.f32.mrb[0].mxu0
  %v405 = vadd.f32 %v70, %v404
  %v406 = vpop.f32.mrb[0].mxu0
  %v407 = vpop.f32.mrb[0].mxu0
  %v408 = vadd.f32 %v70, %v407
  %v409 = vpop.f32.mrb[0].mxu0
  %410 = vmatprep.mubr.bf16.mxu0 0
  %411 = vmatmul.mubr.bf16.gmra.mrb[0].mxu0 %v238
  %v412 = vpop.f32.mrb[0].mxu0
  %v413 = vadd.f32 %v70, %v412
  %v414 = vpop.f32.mrb[0].mxu0
  %v415 = vpop.f32.mrb[0].mxu0
  %v416 = vadd.f32 %v70, %v415
  %v417 = vpop.f32.mrb[0].mxu0
  %418 = vmatprep.mubr.bf16.mxu0 0
  %419 = vmatmul.mubr.bf16.gmra.mrb[0].mxu0 %v241
  %v420 = vpop.f32.mrb[0].mxu0
  %v421 = vadd.f32 %v70, %v420
  %v422 = vpop.f32.mrb[0].mxu0
  %v423 = vpop.f32.mrb[0].mxu0
  %v424 = vadd.f32 %v70, %v423
  %v425 = vpop.f32.mrb[0].mxu0
  %426 = vmatprep.mubr.bf16.mxu0 0
  %427 = vmatmul.mubr.bf16.gmra.mrb[0].mxu0 %v244
  %v428 = vpop.f32.mrb[0].mxu0
  %v429 = vadd.f32 %v70, %v428
  %v430 = vpop.f32.mrb[0].mxu0
  %v431 = vpop.f32.mrb[0].mxu0
  %v432 = vadd.f32 %v70, %v431
  %v433 = vpop.f32.mrb[0].mxu0
  %434 = vmatprep.mubr.bf16.mxu0 0
  %435 = vmatmul.mubr.bf16.gmra.mrb[0].mxu0 %v247
  %v436 = vpop.f32.mrb[0].mxu0
  %v437 = vadd.f32 %v70, %v436
  %v438 = vpop.f32.mrb[0].mxu0
  %v439 = vpop.f32.mrb[0].mxu0
  %v440 = vadd.f32 %v70, %v439
  %v441 = vpop.f32.mrb[0].mxu0
  %442 = vmatprep.mubr.bf16.mxu0 0
  %443 = vmatmul.mubr.bf16.gmra.mrb[0].mxu0 %v250
  %v444 = vpop.f32.mrb[0].mxu0
  %v445 = vadd.f32 %v70, %v444
  %v446 = vpop.f32.mrb[0].mxu0
  %v447 = vpop.f32.mrb[0].mxu0
  %v448 = vadd.f32 %v70, %v447
  %v449 = vpop.f32.mrb[0].mxu0
  %450 = vmatprep.mubr.bf16.mxu0 0
  %451 = vmatmul.mubr.bf16.gmra.mrb[0].mxu0 %v253
  %v452 = vpop.f32.mrb[0].mxu0
  %v453 = vadd.f32 %v70, %v452
  %v454 = vpop.f32.mrb[0].mxu0
  %v455 = vpop.f32.mrb[0].mxu0
  %v456 = vadd.f32 %v70, %v455
  %v457 = vpop.f32.mrb[0].mxu0
  %458 = vmatprep.mubr.bf16.mxu0 0
  %459 = vmatmul.mubr.bf16.gmra.mrb[0].mxu0 %v256
  %v460 = vpop.f32.mrb[0].mxu0
  %v461 = vadd.f32 %v70, %v460
  %v462 = vpop.f32.mrb[0].mxu0
  %v463 = vpop.f32.mrb[0].mxu0
  %v464 = vadd.f32 %v70, %v463
  %v465 = vpop.f32.mrb[0].mxu0
  %466 = vmatprep.mubr.bf16.mxu0 0
  %467 = vmatmul.mubr.bf16.gmra.mrb[0].mxu0 %v259
  %v468 = vpop.f32.mrb[0].mxu0
  %v469 = vadd.f32 %v70, %v468
  %v470 = vpop.f32.mrb[0].mxu0
  %v471 = vpop.f32.mrb[0].mxu0
  %v472 = vadd.f32 %v70, %v471
  %v473 = vpop.f32.mrb[0].mxu0
  %474 = vmatprep.mubr.bf16.mxu0 0
  %475 = vmatmul.mubr.bf16.gmra.mrb[0].mxu0 %v262
  %v476 = vpop.f32.mrb[0].mxu0
  %v477 = vadd.f32 %v70, %v476
  %v478 = vpop.f32.mrb[0].mxu0
  %v479 = vpop.f32.mrb[0].mxu0
  %v480 = vadd.f32 %v70, %v479
  %v481 = vpop.f32.mrb[0].mxu0
  %482 = vmatprep.mubr.bf16.mxu0 0
  %483 = vmatmul.mubr.bf16.gmra.mrb[0].mxu0 %v265
  %v484 = vpop.f32.mrb[0].mxu0
  %v485 = vadd.f32 %v70, %v484
  %v486 = vpop.f32.mrb[0].mxu0
  %v487 = vpop.f32.mrb[0].mxu0
  %v488 = vadd.f32 %v70, %v487
  %v489 = vpop.f32.mrb[0].mxu0
  %490 = vmatprep.mubr.bf16.mxu0 0
  %491 = vmatmul.mubr.bf16.gmra.mrb[0].mxu0 %v268
  %v492 = vpop.f32.mrb[0].mxu0
  %v493 = vadd.f32 %v70, %v492
  %v494 = vpop.f32.mrb[0].mxu0
  %v495 = vpop.f32.mrb[0].mxu0
  %v496 = vadd.f32 %v70, %v495
  %v497 = vpop.f32.mrb[0].mxu0
  %498 = vdwg.mxu0
  %v499 = vmax.f32 %v309, 0.0
  %v500 = vmax.f32 %v312, 0.0
  %v501 = vmax.f32 %v317, 0.0
  %v502 = vmax.f32 %v320, 0.0
  %v503 = vmax.f32 %v325, 0.0
  %v504 = vmax.f32 %v328, 0.0
  %v505 = vmax.f32 %v333, 0.0
  %v506 = vmax.f32 %v336, 0.0
  %v507 = vmax.f32 %v341, 0.0
  %v508 = vmax.f32 %v344, 0.0
  %v509 = vmax.f32 %v349, 0.0
  %v510 = vmax.f32 %v352, 0.0
  %v511 = vmax.f32 %v357, 0.0
  %v512 = vmax.f32 %v360, 0.0
  %v513 = vmax.f32 %v365, 0.0
  %v514 = vmax.f32 %v368, 0.0
  %v515 = vmax.f32 %v373, 0.0
  %v516 = vmax.f32 %v376, 0.0
  %v517 = vmax.f32 %v381, 0.0
  %v518 = vmax.f32 %v384, 0.0
  %v519 = vmax.f32 %v389, 0.0
  %v520 = vmax.f32 %v392, 0.0
  %v521 = vmax.f32 %v397, 0.0
  %v522 = vmax.f32 %v400, 0.0
  %v523 = vmax.f32 %v405, 0.0
  %v524 = vmax.f32 %v408, 0.0
  %v525 = vmax.f32 %v413, 0.0
  %v526 = vmax.f32 %v416, 0.0
  %v527 = vmax.f32 %v421, 0.0
  %v528 = vmax.f32 %v424, 0.0
  %v529 = vmax.f32 %v429, 0.0
  %v530 = vmax.f32 %v432, 0.0
  %v531 = vmax.f32 %v437, 0.0
  %v532 = vmax.f32 %v440, 0.0
  %v533 = vmax.f32 %v445, 0.0
  %v534 = vmax.f32 %v448, 0.0
  %v535 = vmax.f32 %v453, 0.0
  %v536 = vmax.f32 %v456, 0.0
  %v537 = vmax.f32 %v461, 0.0
  %v538 = vmax.f32 %v464, 0.0
  %v539 = vmax.f32 %v469, 0.0
  %v540 = vmax.f32 %v472, 0.0
  %v541 = vmax.f32 %v477, 0.0
  %v542 = vmax.f32 %v480, 0.0
  %v543 = vmax.f32 %v485, 0.0
  %v544 = vmax.f32 %v488, 0.0
  %v545 = vmax.f32 %v493, 0.0
  %v546 = vmax.f32 %v496, 0.0
  %vm547 = vcmask 523264
  %v548 = vsel %vm547, %v499, -inf
  %v549 = vrot.slane %v548, 4
  %v550 = vmax.f32 %v548, %v549
  %v551 = vrot.slane %v550, 2
  %v552 = vmax.f32 %v550, %v551
  %v553 = vrot.slane %v552, 1
  %v554 = vmax.f32 %v552, %v553
  %v555 = vsel %vm547, %v500, -inf
  %v556 = vrot.slane %v555, 4
  %v557 = vmax.f32 %v555, %v556
  %v558 = vrot.slane %v557, 2
  %v559 = vmax.f32 %v557, %v558
  %v560 = vrot.slane %v559, 1
  %v561 = vmax.f32 %v559, %v560
  %v562 = vsel %vm547, %v501, -inf
  %v563 = vrot.slane %v562, 4
  %v564 = vmax.f32 %v562, %v563
  %v565 = vrot.slane %v564, 2
  %v566 = vmax.f32 %v564, %v565
  %v567 = vrot.slane %v566, 1
  %v568 = vmax.f32 %v566, %v567
  %v569 = vsel %vm547, %v502, -inf
  %v570 = vrot.slane %v569, 4
  %v571 = vmax.f32 %v569, %v570
  %v572 = vrot.slane %v571, 2
  %v573 = vmax.f32 %v571, %v572
  %v574 = vrot.slane %v573, 1
  %v575 = vmax.f32 %v573, %v574
  %v576 = vsel %vm547, %v503, -inf
  %v577 = vrot.slane %v576, 4
  %v578 = vmax.f32 %v576, %v577
  %v579 = vrot.slane %v578, 2
  %v580 = vmax.f32 %v578, %v579
  %v581 = vrot.slane %v580, 1
  %v582 = vmax.f32 %v580, %v581
  %v583 = vsel %vm547, %v504, -inf
  %v584 = vrot.slane %v583, 4
  %v585 = vmax.f32 %v583, %v584
  %v586 = vrot.slane %v585, 2
  %v587 = vmax.f32 %v585, %v586
  %v588 = vrot.slane %v587, 1
  %v589 = vmax.f32 %v587, %v588
  %v590 = vsel %vm547, %v505, -inf
  %v591 = vrot.slane %v590, 4
  %v592 = vmax.f32 %v590, %v591
  %v593 = vrot.slane %v592, 2
  %v594 = vmax.f32 %v592, %v593
  %v595 = vrot.slane %v594, 1
  %v596 = vmax.f32 %v594, %v595
  %v597 = vsel %vm547, %v506, -inf
  %v598 = vrot.slane %v597, 4
  %v599 = vmax.f32 %v597, %v598
  %v600 = vrot.slane %v599, 2
  %v601 = vmax.f32 %v599, %v600
  %v602 = vrot.slane %v601, 1
  %v603 = vmax.f32 %v601, %v602
  %v604 = vsel %vm547, %v507, -inf
  %v605 = vrot.slane %v604, 4
  %v606 = vmax.f32 %v604, %v605
  %v607 = vrot.slane %v606, 2
  %v608 = vmax.f32 %v606, %v607
  %v609 = vrot.slane %v608, 1
  %v610 = vmax.f32 %v608, %v609
  %v611 = vsel %vm547, %v508, -inf
  %v612 = vrot.slane %v611, 4
  %v613 = vmax.f32 %v611, %v612
  %v614 = vrot.slane %v613, 2
  %v615 = vmax.f32 %v613, %v614
  %v616 = vrot.slane %v615, 1
  %v617 = vmax.f32 %v615, %v616
  %v618 = vsel %vm547, %v509, -inf
  %v619 = vrot.slane %v618, 4
  %v620 = vmax.f32 %v618, %v619
  %v621 = vrot.slane %v620, 2
  %v622 = vmax.f32 %v620, %v621
  %v623 = vrot.slane %v622, 1
  %v624 = vmax.f32 %v622, %v623
  %v625 = vsel %vm547, %v510, -inf
  %v626 = vrot.slane %v625, 4
  %v627 = vmax.f32 %v625, %v626
  %v628 = vrot.slane %v627, 2
  %v629 = vmax.f32 %v627, %v628
  %v630 = vrot.slane %v629, 1
  %v631 = vmax.f32 %v629, %v630
  %v632 = vsel %vm547, %v511, -inf
  %v633 = vrot.slane %v632, 4
  %v634 = vmax.f32 %v632, %v633
  %v635 = vrot.slane %v634, 2
  %v636 = vmax.f32 %v634, %v635
  %v637 = vrot.slane %v636, 1
  %v638 = vmax.f32 %v636, %v637
  %v639 = vsel %vm547, %v512, -inf
  %v640 = vrot.slane %v639, 4
  %v641 = vmax.f32 %v639, %v640
  %v642 = vrot.slane %v641, 2
  %v643 = vmax.f32 %v641, %v642
  %v644 = vrot.slane %v643, 1
  %v645 = vmax.f32 %v643, %v644
  %v646 = vsel %vm547, %v513, -inf
  %v647 = vrot.slane %v646, 4
  %v648 = vmax.f32 %v646, %v647
  %v649 = vrot.slane %v648, 2
  %v650 = vmax.f32 %v648, %v649
  %v651 = vrot.slane %v650, 1
  %v652 = vmax.f32 %v650, %v651
  %v653 = vsel %vm547, %v514, -inf
  %v654 = vrot.slane %v653, 4
  %v655 = vmax.f32 %v653, %v654
  %v656 = vrot.slane %v655, 2
  %v657 = vmax.f32 %v655, %v656
  %v658 = vrot.slane %v657, 1
  %v659 = vmax.f32 %v657, %v658
  %v660 = vsel %vm547, %v515, -inf
  %v661 = vrot.slane %v660, 4
  %v662 = vmax.f32 %v660, %v661
  %v663 = vrot.slane %v662, 2
  %v664 = vmax.f32 %v662, %v663
  %v665 = vrot.slane %v664, 1
  %v666 = vmax.f32 %v664, %v665
  %v667 = vsel %vm547, %v516, -inf
  %v668 = vrot.slane %v667, 4
  %v669 = vmax.f32 %v667, %v668
  %v670 = vrot.slane %v669, 2
  %v671 = vmax.f32 %v669, %v670
  %v672 = vrot.slane %v671, 1
  %v673 = vmax.f32 %v671, %v672
  %v674 = vsel %vm547, %v517, -inf
  %v675 = vrot.slane %v674, 4
  %v676 = vmax.f32 %v674, %v675
  %v677 = vrot.slane %v676, 2
  %v678 = vmax.f32 %v676, %v677
  %v679 = vrot.slane %v678, 1
  %v680 = vmax.f32 %v678, %v679
  %v681 = vsel %vm547, %v518, -inf
  %v682 = vrot.slane %v681, 4
  %v683 = vmax.f32 %v681, %v682
  %v684 = vrot.slane %v683, 2
  %v685 = vmax.f32 %v683, %v684
  %v686 = vrot.slane %v685, 1
  %v687 = vmax.f32 %v685, %v686
  %v688 = vsel %vm547, %v519, -inf
  %v689 = vrot.slane %v688, 4
  %v690 = vmax.f32 %v688, %v689
  %v691 = vrot.slane %v690, 2
  %v692 = vmax.f32 %v690, %v691
  %v693 = vrot.slane %v692, 1
  %v694 = vmax.f32 %v692, %v693
  %v695 = vsel %vm547, %v520, -inf
  %v696 = vrot.slane %v695, 4
  %v697 = vmax.f32 %v695, %v696
  %v698 = vrot.slane %v697, 2
  %v699 = vmax.f32 %v697, %v698
  %v700 = vrot.slane %v699, 1
  %v701 = vmax.f32 %v699, %v700
  %v702 = vsel %vm547, %v521, -inf
  %v703 = vrot.slane %v702, 4
  %v704 = vmax.f32 %v702, %v703
  %v705 = vrot.slane %v704, 2
  %v706 = vmax.f32 %v704, %v705
  %v707 = vrot.slane %v706, 1
  %v708 = vmax.f32 %v706, %v707
  %v709 = vsel %vm547, %v522, -inf
  %v710 = vrot.slane %v709, 4
  %v711 = vmax.f32 %v709, %v710
  %v712 = vrot.slane %v711, 2
  %v713 = vmax.f32 %v711, %v712
  %v714 = vrot.slane %v713, 1
  %v715 = vmax.f32 %v713, %v714
  %v716 = vsel %vm547, %v523, -inf
  %v717 = vrot.slane %v716, 4
  %v718 = vmax.f32 %v716, %v717
  %v719 = vrot.slane %v718, 2
  %v720 = vmax.f32 %v718, %v719
  %v721 = vrot.slane %v720, 1
  %v722 = vmax.f32 %v720, %v721
  %v723 = vsel %vm547, %v524, -inf
  %v724 = vrot.slane %v723, 4
  %v725 = vmax.f32 %v723, %v724
  %v726 = vrot.slane %v725, 2
  %v727 = vmax.f32 %v725, %v726
  %v728 = vrot.slane %v727, 1
  %v729 = vmax.f32 %v727, %v728
  %v730 = vsel %vm547, %v525, -inf
  %v731 = vrot.slane %v730, 4
  %v732 = vmax.f32 %v730, %v731
  %v733 = vrot.slane %v732, 2
  %v734 = vmax.f32 %v732, %v733
  %v735 = vrot.slane %v734, 1
  %v736 = vmax.f32 %v734, %v735
  %v737 = vsel %vm547, %v526, -inf
  %v738 = vrot.slane %v737, 4
  %v739 = vmax.f32 %v737, %v738
  %v740 = vrot.slane %v739, 2
  %v741 = vmax.f32 %v739, %v740
  %v742 = vrot.slane %v741, 1
  %v743 = vmax.f32 %v741, %v742
  %v744 = vsel %vm547, %v527, -inf
  %v745 = vrot.slane %v744, 4
  %v746 = vmax.f32 %v744, %v745
  %v747 = vrot.slane %v746, 2
  %v748 = vmax.f32 %v746, %v747
  %v749 = vrot.slane %v748, 1
  %v750 = vmax.f32 %v748, %v749
  %v751 = vsel %vm547, %v528, -inf
  %v752 = vrot.slane %v751, 4
  %v753 = vmax.f32 %v751, %v752
  %v754 = vrot.slane %v753, 2
  %v755 = vmax.f32 %v753, %v754
  %v756 = vrot.slane %v755, 1
  %v757 = vmax.f32 %v755, %v756
  %v758 = vsel %vm547, %v529, -inf
  %v759 = vrot.slane %v758, 4
  %v760 = vmax.f32 %v758, %v759
  %v761 = vrot.slane %v760, 2
  %v762 = vmax.f32 %v760, %v761
  %v763 = vrot.slane %v762, 1
  %v764 = vmax.f32 %v762, %v763
  %v765 = vsel %vm547, %v530, -inf
  %v766 = vrot.slane %v765, 4
  %v767 = vmax.f32 %v765, %v766
  %v768 = vrot.slane %v767, 2
  %v769 = vmax.f32 %v767, %v768
  %v770 = vrot.slane %v769, 1
  %v771 = vmax.f32 %v769, %v770
  %v772 = vsel %vm547, %v531, -inf
  %v773 = vrot.slane %v772, 4
  %v774 = vmax.f32 %v772, %v773
  %v775 = vrot.slane %v774, 2
  %v776 = vmax.f32 %v774, %v775
  %v777 = vrot.slane %v776, 1
  %v778 = vmax.f32 %v776, %v777
  %v779 = vsel %vm547, %v532, -inf
  %v780 = vrot.slane %v779, 4
  %v781 = vmax.f32 %v779, %v780
  %v782 = vrot.slane %v781, 2
  %v783 = vmax.f32 %v781, %v782
  %v784 = vrot.slane %v783, 1
  %v785 = vmax.f32 %v783, %v784
  %v786 = vsel %vm547, %v533, -inf
  %v787 = vrot.slane %v786, 4
  %v788 = vmax.f32 %v786, %v787
  %v789 = vrot.slane %v788, 2
  %v790 = vmax.f32 %v788, %v789
  %v791 = vrot.slane %v790, 1
  %v792 = vmax.f32 %v790, %v791
  %v793 = vsel %vm547, %v534, -inf
  %v794 = vrot.slane %v793, 4
  %v795 = vmax.f32 %v793, %v794
  %v796 = vrot.slane %v795, 2
  %v797 = vmax.f32 %v795, %v796
  %v798 = vrot.slane %v797, 1
  %v799 = vmax.f32 %v797, %v798
  %v800 = vsel %vm547, %v535, -inf
  %v801 = vrot.slane %v800, 4
  %v802 = vmax.f32 %v800, %v801
  %v803 = vrot.slane %v802, 2
  %v804 = vmax.f32 %v802, %v803
  %v805 = vrot.slane %v804, 1
  %v806 = vmax.f32 %v804, %v805
  %v807 = vsel %vm547, %v536, -inf
  %v808 = vrot.slane %v807, 4
  %v809 = vmax.f32 %v807, %v808
  %v810 = vrot.slane %v809, 2
  %v811 = vmax.f32 %v809, %v810
  %v812 = vrot.slane %v811, 1
  %v813 = vmax.f32 %v811, %v812
  %v814 = vsel %vm547, %v537, -inf
  %v815 = vrot.slane %v814, 4
  %v816 = vmax.f32 %v814, %v815
  %v817 = vrot.slane %v816, 2
  %v818 = vmax.f32 %v816, %v817
  %v819 = vrot.slane %v818, 1
  %v820 = vmax.f32 %v818, %v819
  %v821 = vsel %vm547, %v538, -inf
  %v822 = vrot.slane %v821, 4
  %v823 = vmax.f32 %v821, %v822
  %v824 = vrot.slane %v823, 2
  %v825 = vmax.f32 %v823, %v824
  %v826 = vrot.slane %v825, 1
  %v827 = vmax.f32 %v825, %v826
  %v828 = vsel %vm547, %v539, -inf
  %v829 = vrot.slane %v828, 4
  %v830 = vmax.f32 %v828, %v829
  %v831 = vrot.slane %v830, 2
  %v832 = vmax.f32 %v830, %v831
  %v833 = vrot.slane %v832, 1
  %v834 = vmax.f32 %v832, %v833
  %v835 = vsel %vm547, %v540, -inf
  %v836 = vrot.slane %v835, 4
  %v837 = vmax.f32 %v835, %v836
  %v838 = vrot.slane %v837, 2
  %v839 = vmax.f32 %v837, %v838
  %v840 = vrot.slane %v839, 1
  %v841 = vmax.f32 %v839, %v840
  %v842 = vsel %vm547, %v541, -inf
  %v843 = vrot.slane %v842, 4
  %v844 = vmax.f32 %v842, %v843
  %v845 = vrot.slane %v844, 2
  %v846 = vmax.f32 %v844, %v845
  %v847 = vrot.slane %v846, 1
  %v848 = vmax.f32 %v846, %v847
  %v849 = vsel %vm547, %v542, -inf
  %v850 = vrot.slane %v849, 4
  %v851 = vmax.f32 %v849, %v850
  %v852 = vrot.slane %v851, 2
  %v853 = vmax.f32 %v851, %v852
  %v854 = vrot.slane %v853, 1
  %v855 = vmax.f32 %v853, %v854
  %v856 = vsel %vm547, %v543, -inf
  %v857 = vrot.slane %v856, 4
  %v858 = vmax.f32 %v856, %v857
  %v859 = vrot.slane %v858, 2
  %v860 = vmax.f32 %v858, %v859
  %v861 = vrot.slane %v860, 1
  %v862 = vmax.f32 %v860, %v861
  %v863 = vsel %vm547, %v544, -inf
  %v864 = vrot.slane %v863, 4
  %v865 = vmax.f32 %v863, %v864
  %v866 = vrot.slane %v865, 2
  %v867 = vmax.f32 %v865, %v866
  %v868 = vrot.slane %v867, 1
  %v869 = vmax.f32 %v867, %v868
  %v870 = vsel %vm547, %v545, -inf
  %v871 = vrot.slane %v870, 4
  %v872 = vmax.f32 %v870, %v871
  %v873 = vrot.slane %v872, 2
  %v874 = vmax.f32 %v872, %v873
  %v875 = vrot.slane %v874, 1
  %v876 = vmax.f32 %v874, %v875
  %v877 = vsel %vm547, %v546, -inf
  %v878 = vrot.slane %v877, 4
  %v879 = vmax.f32 %v877, %v878
  %v880 = vrot.slane %v879, 2
  %v881 = vmax.f32 %v879, %v880
  %v882 = vrot.slane %v881, 1
  %v883 = vmax.f32 %v881, %v882
  %v884 = vpack.c.bf16 %v554, %v554
  %v885 = vpack.c.bf16 %v561, %v561
  %v886 = vpack.c.bf16 %v568, %v568
  %v887 = vpack.c.bf16 %v575, %v575
  %v888 = vpack.c.bf16 %v582, %v582
  %v889 = vpack.c.bf16 %v589, %v589
  %v890 = vpack.c.bf16 %v596, %v596
  %v891 = vpack.c.bf16 %v603, %v603
  %v892 = vpack.c.bf16 %v610, %v610
  %v893 = vpack.c.bf16 %v617, %v617
  %v894 = vpack.c.bf16 %v624, %v624
  %v895 = vpack.c.bf16 %v631, %v631
  %v896 = vpack.c.bf16 %v638, %v638
  %v897 = vpack.c.bf16 %v645, %v645
  %v898 = vpack.c.bf16 %v652, %v652
  %v899 = vpack.c.bf16 %v659, %v659
  %v900 = vpack.c.bf16 %v666, %v666
  %v901 = vpack.c.bf16 %v673, %v673
  %v902 = vpack.c.bf16 %v680, %v680
  %v903 = vpack.c.bf16 %v687, %v687
  %v904 = vpack.c.bf16 %v694, %v694
  %v905 = vpack.c.bf16 %v701, %v701
  %v906 = vpack.c.bf16 %v708, %v708
  %v907 = vpack.c.bf16 %v715, %v715
  %v908 = vpack.c.bf16 %v722, %v722
  %v909 = vpack.c.bf16 %v729, %v729
  %v910 = vpack.c.bf16 %v736, %v736
  %v911 = vpack.c.bf16 %v743, %v743
  %v912 = vpack.c.bf16 %v750, %v750
  %v913 = vpack.c.bf16 %v757, %v757
  %v914 = vpack.c.bf16 %v764, %v764
  %v915 = vpack.c.bf16 %v771, %v771
  %v916 = vpack.c.bf16 %v778, %v778
  %v917 = vpack.c.bf16 %v785, %v785
  %v918 = vpack.c.bf16 %v792, %v792
  %v919 = vpack.c.bf16 %v799, %v799
  %v920 = vpack.c.bf16 %v806, %v806
  %v921 = vpack.c.bf16 %v813, %v813
  %v922 = vpack.c.bf16 %v820, %v820
  %v923 = vpack.c.bf16 %v827, %v827
  %v924 = vpack.c.bf16 %v834, %v834
  %v925 = vpack.c.bf16 %v841, %v841
  %v926 = vpack.c.bf16 %v848, %v848
  %v927 = vpack.c.bf16 %v855, %v855
  %v928 = vpack.c.bf16 %v862, %v862
  %v929 = vpack.c.bf16 %v869, %v869
  %v930 = vpack.c.bf16 %v876, %v876
  %v931 = vpack.c.bf16 %v883, %v883
  %v980 = vunpack.c.l.b16 %v884
  %v981 = vunpack.c.l.b16 %v885
  %v982 = vunpack.c.l.b16 %v886
  %v983 = vunpack.c.l.b16 %v887
  %v984 = vunpack.c.l.b16 %v888
  %v985 = vunpack.c.l.b16 %v889
  %v986 = vunpack.c.l.b16 %v890
  %v987 = vunpack.c.l.b16 %v891
  %v988 = vunpack.c.l.b16 %v892
  %v989 = vunpack.c.l.b16 %v893
  %v990 = vunpack.c.l.b16 %v894
  %v991 = vunpack.c.l.b16 %v895
  %v992 = vunpack.c.l.b16 %v896
  %v993 = vunpack.c.l.b16 %v897
  %v994 = vunpack.c.l.b16 %v898
  %v995 = vunpack.c.l.b16 %v899
  %v996 = vunpack.c.l.b16 %v900
  %v997 = vunpack.c.l.b16 %v901
  %v998 = vunpack.c.l.b16 %v902
  %v999 = vunpack.c.l.b16 %v903
  %v1000 = vunpack.c.l.b16 %v904
  %v1001 = vunpack.c.l.b16 %v905
  %v1002 = vunpack.c.l.b16 %v906
  %v1003 = vunpack.c.l.b16 %v907
  %v1004 = vunpack.c.l.b16 %v908
  %v1005 = vunpack.c.l.b16 %v909
  %v1006 = vunpack.c.l.b16 %v910
  %v1007 = vunpack.c.l.b16 %v911
  %v1008 = vunpack.c.l.b16 %v912
  %v1009 = vunpack.c.l.b16 %v913
  %v1010 = vunpack.c.l.b16 %v914
  %v1011 = vunpack.c.l.b16 %v915
  %v1012 = vunpack.c.l.b16 %v916
  %v1013 = vunpack.c.l.b16 %v917
  %v1014 = vunpack.c.l.b16 %v918
  %v1015 = vunpack.c.l.b16 %v919
  %v1016 = vunpack.c.l.b16 %v920
  %v1017 = vunpack.c.l.b16 %v921
  %v1018 = vunpack.c.l.b16 %v922
  %v1019 = vunpack.c.l.b16 %v923
  %v1020 = vunpack.c.l.b16 %v924
  %v1021 = vunpack.c.l.b16 %v925
  %v1022 = vunpack.c.l.b16 %v926
  %v1023 = vunpack.c.l.b16 %v927
  %v1024 = vunpack.c.l.b16 %v928
  %v1025 = vunpack.c.l.b16 %v929
  %v1026 = vunpack.c.l.b16 %v930
  %v1027 = vunpack.c.l.b16 %v931
  %v1028 = vpack.c.b16 %v980, %v980
  %v1029 = vpack.c.b16 %v981, %v981
  %v1030 = vpack.c.b16 %v982, %v982
  %v1031 = vpack.c.b16 %v983, %v983
  %v1032 = vpack.c.b16 %v984, %v984
  %v1033 = vpack.c.b16 %v985, %v985
  %v1034 = vpack.c.b16 %v986, %v986
  %v1035 = vpack.c.b16 %v987, %v987
  %v1036 = vpack.c.b16 %v988, %v988
  %v1037 = vpack.c.b16 %v989, %v989
  %v1038 = vpack.c.b16 %v990, %v990
  %v1039 = vpack.c.b16 %v991, %v991
  %v1040 = vpack.c.b16 %v992, %v992
  %v1041 = vpack.c.b16 %v993, %v993
  %v1042 = vpack.c.b16 %v994, %v994
  %v1043 = vpack.c.b16 %v995, %v995
  %v1044 = vpack.c.b16 %v996, %v996
  %v1045 = vpack.c.b16 %v997, %v997
  %v1046 = vpack.c.b16 %v998, %v998
  %v1047 = vpack.c.b16 %v999, %v999
  %v1048 = vpack.c.b16 %v1000, %v1000
  %v1049 = vpack.c.b16 %v1001, %v1001
  %v1050 = vpack.c.b16 %v1002, %v1002
  %v1051 = vpack.c.b16 %v1003, %v1003
  %v1052 = vpack.c.b16 %v1004, %v1004
  %v1053 = vpack.c.b16 %v1005, %v1005
  %v1054 = vpack.c.b16 %v1006, %v1006
  %v1055 = vpack.c.b16 %v1007, %v1007
  %v1056 = vpack.c.b16 %v1008, %v1008
  %v1057 = vpack.c.b16 %v1009, %v1009
  %v1058 = vpack.c.b16 %v1010, %v1010
  %v1059 = vpack.c.b16 %v1011, %v1011
  %v1060 = vpack.c.b16 %v1012, %v1012
  %v1061 = vpack.c.b16 %v1013, %v1013
  %v1062 = vpack.c.b16 %v1014, %v1014
  %v1063 = vpack.c.b16 %v1015, %v1015
  %v1064 = vpack.c.b16 %v1016, %v1016
  %v1065 = vpack.c.b16 %v1017, %v1017
  %v1066 = vpack.c.b16 %v1018, %v1018
  %v1067 = vpack.c.b16 %v1019, %v1019
  %v1068 = vpack.c.b16 %v1020, %v1020
  %v1069 = vpack.c.b16 %v1021, %v1021
  %v1070 = vpack.c.b16 %v1022, %v1022
  %v1071 = vpack.c.b16 %v1023, %v1023
  %v1072 = vpack.c.b16 %v1024, %v1024
  %v1073 = vpack.c.b16 %v1025, %v1025
  %v1074 = vpack.c.b16 %v1026, %v1026
  %v1075 = vpack.c.b16 %v1027, %v1027
  %v1076 = vunpack.c.l.b16 %v1028
  %v1077 = vunpack.c.l.b16 %v1029
  %v1078 = vunpack.c.l.b16 %v1030
  %v1079 = vunpack.c.l.b16 %v1031
  %v1080 = vunpack.c.l.b16 %v1032
  %v1081 = vunpack.c.l.b16 %v1033
  %v1082 = vunpack.c.l.b16 %v1034
  %v1083 = vunpack.c.l.b16 %v1035
  %v1084 = vunpack.c.l.b16 %v1036
  %v1085 = vunpack.c.l.b16 %v1037
  %v1086 = vunpack.c.l.b16 %v1038
  %v1087 = vunpack.c.l.b16 %v1039
  %v1088 = vunpack.c.l.b16 %v1040
  %v1089 = vunpack.c.l.b16 %v1041
  %v1090 = vunpack.c.l.b16 %v1042
  %v1091 = vunpack.c.l.b16 %v1043
  %v1092 = vunpack.c.l.b16 %v1044
  %v1093 = vunpack.c.l.b16 %v1045
  %v1094 = vunpack.c.l.b16 %v1046
  %v1095 = vunpack.c.l.b16 %v1047
  %v1096 = vunpack.c.l.b16 %v1048
  %v1097 = vunpack.c.l.b16 %v1049
  %v1098 = vunpack.c.l.b16 %v1050
  %v1099 = vunpack.c.l.b16 %v1051
  %v1100 = vunpack.c.l.b16 %v1052
  %v1101 = vunpack.c.l.b16 %v1053
  %v1102 = vunpack.c.l.b16 %v1054
  %v1103 = vunpack.c.l.b16 %v1055
  %v1104 = vunpack.c.l.b16 %v1056
  %v1105 = vunpack.c.l.b16 %v1057
  %v1106 = vunpack.c.l.b16 %v1058
  %v1107 = vunpack.c.l.b16 %v1059
  %v1108 = vunpack.c.l.b16 %v1060
  %v1109 = vunpack.c.l.b16 %v1061
  %v1110 = vunpack.c.l.b16 %v1062
  %v1111 = vunpack.c.l.b16 %v1063
  %v1112 = vunpack.c.l.b16 %v1064
  %v1113 = vunpack.c.l.b16 %v1065
  %v1114 = vunpack.c.l.b16 %v1066
  %v1115 = vunpack.c.l.b16 %v1067
  %v1116 = vunpack.c.l.b16 %v1068
  %v1117 = vunpack.c.l.b16 %v1069
  %v1118 = vunpack.c.l.b16 %v1070
  %v1119 = vunpack.c.l.b16 %v1071
  %v1120 = vunpack.c.l.b16 %v1072
  %v1121 = vunpack.c.l.b16 %v1073
  %v1122 = vunpack.c.l.b16 %v1074
  %v1123 = vunpack.c.l.b16 %v1075
  %vm1124 = vcmask 1041409
  %v1125 = vsel %vm1124, %v1077, %v1076
  %vm1126 = vcmask 1042434
  %v1127 = vsel %vm1126, %v1078, %v1125
  %vm1128 = vcmask 1043459
  %v1129 = vsel %vm1128, %v1079, %v1127
  %vm1130 = vcmask 1044484
  %v1131 = vsel %vm1130, %v1080, %v1129
  %vm1132 = vcmask 1045509
  %v1133 = vsel %vm1132, %v1081, %v1131
  %vm1134 = vcmask 1046534
  %v1135 = vsel %vm1134, %v1082, %v1133
  %vm1136 = vcmask 1047559
  %v1137 = vsel %vm1136, %v1083, %v1135
  %v1138 = vsel %vm1124, %v1085, %v1084
  %v1139 = vsel %vm1126, %v1086, %v1138
  %v1140 = vsel %vm1128, %v1087, %v1139
  %v1141 = vsel %vm1130, %v1088, %v1140
  %v1142 = vsel %vm1132, %v1089, %v1141
  %v1143 = vsel %vm1134, %v1090, %v1142
  %v1144 = vsel %vm1136, %v1091, %v1143
  %v1145 = vsel %vm1124, %v1093, %v1092
  %v1146 = vsel %vm1126, %v1094, %v1145
  %v1147 = vsel %vm1128, %v1095, %v1146
  %v1148 = vsel %vm1130, %v1096, %v1147
  %v1149 = vsel %vm1132, %v1097, %v1148
  %v1150 = vsel %vm1134, %v1098, %v1149
  %v1151 = vsel %vm1136, %v1099, %v1150
  %v1152 = vsel %vm1124, %v1101, %v1100
  %v1153 = vsel %vm1126, %v1102, %v1152
  %v1154 = vsel %vm1128, %v1103, %v1153
  %v1155 = vsel %vm1130, %v1104, %v1154
  %v1156 = vsel %vm1132, %v1105, %v1155
  %v1157 = vsel %vm1134, %v1106, %v1156
  %v1158 = vsel %vm1136, %v1107, %v1157
  %v1159 = vsel %vm1124, %v1109, %v1108
  %v1160 = vsel %vm1126, %v1110, %v1159
  %v1161 = vsel %vm1128, %v1111, %v1160
  %v1162 = vsel %vm1130, %v1112, %v1161
  %v1163 = vsel %vm1132, %v1113, %v1162
  %v1164 = vsel %vm1134, %v1114, %v1163
  %v1165 = vsel %vm1136, %v1115, %v1164
  %v1166 = vsel %vm1124, %v1117, %v1116
  %v1167 = vsel %vm1126, %v1118, %v1166
  %v1168 = vsel %vm1128, %v1119, %v1167
  %v1169 = vsel %vm1130, %v1120, %v1168
  %v1170 = vsel %vm1132, %v1121, %v1169
  %v1171 = vsel %vm1134, %v1122, %v1170
  %v1172 = vsel %vm1136, %v1123, %v1171
  %v1173 = vpack.c.b16 %v1137, %v1137
  %v1174 = vpack.c.b16 %v1144, %v1144
  %v1175 = vpack.c.b16 %v1151, %v1151
  %v1176 = vpack.c.b16 %v1158, %v1158
  %v1177 = vpack.c.b16 %v1165, %v1165
  %v1178 = vpack.c.b16 %v1172, %v1172
  %vm1185 = vcmask 519168
  %1186 = vst.msk [vmem:[%s3] sm:$0xf] %vm1185, %v1173
  %1187 = vst.msk [vmem:[%s3 + $0x4] sm:$0xf] %vm1185, %v1174
  %1188 = vst.msk [vmem:[%s3 + $0x8] sm:$0xf] %vm1185, %v1175
  %1189 = vst.msk [vmem:[%s3 + $0xc] sm:$0xf] %vm1185, %v1176
  %1190 = vst.msk [vmem:[%s3 + $0x10] sm:$0xf] %vm1185, %v1177
  %1191 = vst.msk [vmem:[%s3 + $0x14] sm:$0xf] %vm1185, %v1178
  // Predicated region
  $region14: #{forward.3} parent=0 // pred_check
    _
  $region15: #{forward.3} parent=0 // pred_check_branch
    %1193 = sbr.rel (0) target = $region17
  $region16: #{forward.3} parent=0 // pred_region
    _
  $region17: #{forward.3} parent=0 // pred_fallthru
    _
  // Predicated region
  $region18: #{forward.3} parent=0 // pred_check
    _
  $region19: #{forward.3} parent=0 // pred_check_branch
    %1195 = sbr.rel (0) target = $region21
  $region20: #{forward.3} parent=0 // pred_region
    _
  $region21: #{forward.3} parent=0 // pred_fallthru
    _

// kernel: forward.5
$region0: #{forward.5}
  #allocation0 [shape = 'u32[]', space=smem, size = 0x4, offset = 0x4, fixed_abs, tag = 'smem constant byte address 0x4 - core index']
  #allocation1 [shape = 'u32[144,128]{1,0:T(1,128)}', space=vmem, size = 0x12000, scoped, tag = 'internal scratch']
  %s0 = inlined_call_operand.vmem [shape: bf16[2,64,256], index: 0, kind: input, shape index: {}]
  %s1 = inlined_call_operand.vmem [shape: bf16[2,2,64,256], index: 1, kind: input, shape index: {}]
  %s2 = inlined_call_operand.vmem [shape: f32[2,2,1,1], index: 2, kind: input, shape index: {}]
  %s3 = inlined_call_operand.vmem [shape: bf16[256,256], index: 3, kind: input, shape index: {}]
  %s4 = inlined_call_operand.vmem [shape: f32[1,256], index: 4, kind: input, shape index: {}]
  %s5 = inlined_call_operand.vmem [shape: bf16[256,256], index: 5, kind: input, shape index: {}]
  %s6 = inlined_call_operand.vmem [shape: f32[1,256], index: 6, kind: input, shape index: {}]
  %s7 = inlined_call_operand.vmem [shape: bf16[256,256], index: 7, kind: input, shape index: {}]
  %s8 = inlined_call_operand.vmem [shape: f32[1,256], index: 8, kind: input, shape index: {}]
  %s9 = inlined_call_operand.vmem [shape: f32[256,8], index: 9, kind: input, shape index: {}]
  %s10 = inlined_call_operand.vmem [shape: f32[8,256], index: 10, kind: input, shape index: {}]
  %s11 = inlined_call_operand.vmem [shape: bf16[256,256], index: 11, kind: input, shape index: {}]
  %s12 = inlined_call_operand.vmem [shape: f32[1,256], index: 12, kind: input, shape index: {}]
  %s13 = inlined_call_operand.vmem [shape: bf16[256,128], index: 13, kind: input, shape index: {}]
  %s14 = inlined_call_operand.vmem [shape: f32[1,128], index: 14, kind: input, shape index: {}]
  %s15 = inlined_call_operand.vmem [shape: f32[2,64,128], index: 15, kind: output, shape index: {0}]
  %s16 = inlined_call_operand.vmem [shape: f32[2,2,64,8], index: 16, kind: output, shape index: {1}]
  %17 = xla_tuple %s15, %s16
  %s18 = sld [smem:[#allocation0]]
  $region101: #{forward.5} parent=0
    _
  %s20 = ssub.s32 1, %s18
  %s21 = scalar_select 0, %s20, %s18
  loop: start=0, step=1, limit=4
  $region2: #{forward.5} parent=0 // loop_pre_header
    _
  $region3: #{forward.5} parent=0 // loop_header
    %s23 = sphi 0, %s27
    %p24 = scmp.ge.s32.totalorder %s23, 4
    %s30 = sphi 0, %s42
    %s31 = sphi 0, %s38
    %s32 = sphi 0, %s30
    %s33 = sphi 0, %s31
    %s34 = sphi 0, %s32
    %s35 = sphi 0, %s33
    %s47 = sphi 0, %s49
    %s50 = sphi 0, %s47
    %s51 = sphi 0, %s50
    %s67 = sphi 0, %s51
    %s75 = sphi 0, %s77
    %s78 = sphi 0, %s75
    %s79 = sphi 0, %s78
    %s95 = sphi 0, %s79
    %s101 = sphi 0, %s103
    %s104 = sphi 0, %s101
    %s105 = sphi 0, %s104
    %s121 = sphi 0, %s105
    %s125 = sphi 0, %s125
    %s127 = sphi 0, %s125
    %s128 = sphi 0, %s127
    %s142 = sphi 0, %s128
    %s146 = sphi 0, %s146
    %s148 = sphi 0, %s146
    %s149 = sphi 0, %s148
    %s163 = sphi 0, %s149
    %s167 = sphi 0, %s167
    %s169 = sphi 0, %s167
    %s170 = sphi 0, %s169
    %s184 = sphi 0, %s170
    %s188 = sphi 0, %s188
    %s190 = sphi 0, %s188
    %s191 = sphi 0, %s190
    %s205 = sphi 0, %s191
    %s209 = sphi 0, %s209
    %s211 = sphi 0, %s209
    %s212 = sphi 0, %s211
    %s226 = sphi 0, %s212
    %s230 = sphi 0, %s230
    %s232 = sphi 0, %s230
    %s233 = sphi 0, %s232
    %s247 = sphi 0, %s233
    %s251 = sphi 0, %s251
    %s253 = sphi 0, %s251
    %s254 = sphi 0, %s253
    %s268 = sphi 0, %s254
    %s272 = sphi 0, %s272
    %s274 = sphi 0, %s272
    %s275 = sphi 0, %s274
    %s289 = sphi 0, %s275
    %s293 = sphi 0, %s293
    %s295 = sphi 0, %s293
    %s296 = sphi 0, %s295
    %s310 = sphi 0, %s296
    %s314 = sphi 0, %s314
    %s316 = sphi 0, %s314
    %s317 = sphi 0, %s316
    %s331 = sphi 0, %s317
    %s335 = sphi 0, %s335
    %s337 = sphi 0, %s335
    %s338 = sphi 0, %s337
    %s352 = sphi 0, %s338
    %s356 = sphi 0, %s356
    %s358 = sphi 0, %s356
    %s359 = sphi 0, %s358
    %s373 = sphi 0, %s359
    %s381 = sphi 0, %s383
    %s384 = sphi 0, %s381
    %s385 = sphi 0, %s384
    %s401 = sphi 0, %s385
    %s409 = sphi 0, %s411
    %s412 = sphi 0, %s409
    %s413 = sphi 0, %s412
    %s429 = sphi 0, %s413
  $region4: #{forward.5} parent=0 // loop_header_branch
    %26 = sbr.rel (%p24) target = $region8
  $region5: #{forward.5} parent=0 // loop_body
    %s28 = ssub.s32 %s23, 1
    %s29 = ssub.s32 %s23, 2
    %s36 = sadd.s32 1, %s31
    %p37 = scmp.ge.s32.totalorder %s36, 1
    %s38 = scalar_select %p37, 0, %s36
    %s39 = sadd.s32 1, %s30
    %s40 = scalar_select %p37, %s39, %s30
    %p41 = scmp.ge.s32.totalorder %s40, 2
    %s42 = scalar_select %p41, 0, %s40
    %s43 = ssub.s32 %s30, %s42
    %s44 = ssub.s32 %s31, %s38
    %s45 = sor.u32 %s43, %s44
    %p46 = scmp.eq.s32.totalorder %s45, 0
    %s48 = sadd.s32 %s47, 1
    %s49 = scalar_select %p46, %s47, %s48
    %p52 = pneg %p46
    %p53 = scmp.eq.s32.totalorder %s23, 1
    %p54 = por %p52, %p53
    %p55 = scmp.ne.s32.totalorder %s47, %s50
    %p56 = scmp.eq.s32.totalorder %s23, 0
    %p57 = por %p55, %p56
    %p58 = scmp.ne.s32.totalorder %s47, %s50
    %p59 = scmp.eq.s32.totalorder %s28, 1
    %p60 = por %p58, %p59
    %p61 = scmp.ne.s32.totalorder %s50, %s51
    %p62 = scmp.eq.s32.totalorder %s28, 0
    %p63 = por %p61, %p62
    %p64 = scmp.ne.s32.totalorder %s50, %s51
    %p65 = scmp.eq.s32.totalorder %s29, 1
    %p66 = por %p64, %p65
    %p68 = scmp.ne.s32.totalorder %s51, %s67
    %p69 = scmp.eq.s32.totalorder %s29, 0
    %p70 = por %p68, %p69
    %s71 = ssub.s32 %s30, %s42
    %s72 = ssub.s32 %s31, %s38
    %s73 = sor.u32 %s71, %s72
    %p74 = scmp.eq.s32.totalorder %s73, 0
    %s76 = sadd.s32 %s75, 1
    %s77 = scalar_select %p74, %s75, %s76
    %p80 = pneg %p74
    %p81 = scmp.eq.s32.totalorder %s23, 1
    %p82 = por %p80, %p81
    %p83 = scmp.ne.s32.totalorder %s75, %s78
    %p84 = scmp.eq.s32.totalorder %s23, 0
    %p85 = por %p83, %p84
    %p86 = scmp.ne.s32.totalorder %s75, %s78
    %p87 = scmp.eq.s32.totalorder %s28, 1
    %p88 = por %p86, %p87
    %p89 = scmp.ne.s32.totalorder %s78, %s79
    %p90 = scmp.eq.s32.totalorder %s28, 0
    %p91 = por %p89, %p90
    %p92 = scmp.ne.s32.totalorder %s78, %s79
    %p93 = scmp.eq.s32.totalorder %s29, 1
    %p94 = por %p92, %p93
    %p96 = scmp.ne.s32.totalorder %s79, %s95
    %p97 = scmp.eq.s32.totalorder %s29, 0
    %p98 = por %p96, %p97
    %s99 = ssub.s32 %s30, %s42
    %p100 = scmp.eq.s32.totalorder %s99, 0
    %s102 = sadd.s32 %s101, 1
    %s103 = scalar_select %p100, %s101, %s102
    %p106 = pneg %p100
    %p107 = scmp.eq.s32.totalorder %s23, 1
    %p108 = por %p106, %p107
    %p109 = scmp.ne.s32.totalorder %s101, %s104
    %p110 = scmp.eq.s32.totalorder %s23, 0
    %p111 = por %p109, %p110
    %p112 = scmp.ne.s32.totalorder %s101, %s104
    %p113 = scmp.eq.s32.totalorder %s28, 1
    %p114 = por %p112, %p113
    %p115 = scmp.ne.s32.totalorder %s104, %s105
    %p116 = scmp.eq.s32.totalorder %s28, 0
    %p117 = por %p115, %p116
    %p118 = scmp.ne.s32.totalorder %s104, %s105
    %p119 = scmp.eq.s32.totalorder %s29, 1
    %p120 = por %p118, %p119
    %p122 = scmp.ne.s32.totalorder %s105, %s121
    %p123 = scmp.eq.s32.totalorder %s29, 0
    %p124 = por %p122, %p123
    %s126 = sadd.s32 %s125, 1
    %p129 = scmp.eq.s32.totalorder %s23, 1
    %p130 = scmp.ne.s32.totalorder %s125, %s127
    %p131 = scmp.eq.s32.totalorder %s23, 0
    %p132 = por %p130, %p131
    %p133 = scmp.ne.s32.totalorder %s125, %s127
    %p134 = scmp.eq.s32.totalorder %s28, 1
    %p135 = por %p133, %p134
    %p136 = scmp.ne.s32.totalorder %s127, %s128
    %p137 = scmp.eq.s32.totalorder %s28, 0
    %p138 = por %p136, %p137
    %p139 = scmp.ne.s32.totalorder %s127, %s128
    %p140 = scmp.eq.s32.totalorder %s29, 1
    %p141 = por %p139, %p140
    %p143 = scmp.ne.s32.totalorder %s128, %s142
    %p144 = scmp.eq.s32.totalorder %s29, 0
    %p145 = por %p143, %p144
    %s147 = sadd.s32 %s146, 1
    %p150 = scmp.eq.s32.totalorder %s23, 1
    %p151 = scmp.ne.s32.totalorder %s146, %s148
    %p152 = scmp.eq.s32.totalorder %s23, 0
    %p153 = por %p151, %p152
    %p154 = scmp.ne.s32.totalorder %s146, %s148
    %p155 = scmp.eq.s32.totalorder %s28, 1
    %p156 = por %p154, %p155
    %p157 = scmp.ne.s32.totalorder %s148, %s149
    %p158 = scmp.eq.s32.totalorder %s28, 0
    %p159 = por %p157, %p158
    %p160 = scmp.ne.s32.totalorder %s148, %s149
    %p161 = scmp.eq.s32.totalorder %s29, 1
    %p162 = por %p160, %p161
    %p164 = scmp.ne.s32.totalorder %s149, %s163
    %p165 = scmp.eq.s32.totalorder %s29, 0
    %p166 = por %p164, %p165
    %s168 = sadd.s32 %s167, 1
    %p171 = scmp.eq.s32.totalorder %s23, 1
    %p172 = scmp.ne.s32.totalorder %s167, %s169
    %p173 = scmp.eq.s32.totalorder %s23, 0
    %p174 = por %p172, %p173
    %p175 = scmp.ne.s32.totalorder %s167, %s169
    %p176 = scmp.eq.s32.totalorder %s28, 1
    %p177 = por %p175, %p176
    %p178 = scmp.ne.s32.totalorder %s169, %s170
    %p179 = scmp.eq.s32.totalorder %s28, 0
    %p180 = por %p178, %p179
    %p181 = scmp.ne.s32.totalorder %s169, %s170
    %p182 = scmp.eq.s32.totalorder %s29, 1
    %p183 = por %p181, %p182
    %p185 = scmp.ne.s32.totalorder %s170, %s184
    %p186 = scmp.eq.s32.totalorder %s29, 0
    %p187 = por %p185, %p186
    %s189 = sadd.s32 %s188, 1
    %p192 = scmp.eq.s32.totalorder %s23, 1
    %p193 = scmp.ne.s32.totalorder %s188, %s190
    %p194 = scmp.eq.s32.totalorder %s23, 0
    %p195 = por %p193, %p194
    %p196 = scmp.ne.s32.totalorder %s188, %s190
    %p197 = scmp.eq.s32.totalorder %s28, 1
    %p198 = por %p196, %p197
    %p199 = scmp.ne.s32.totalorder %s190, %s191
    %p200 = scmp.eq.s32.totalorder %s28, 0
    %p201 = por %p199, %p200
    %p202 = scmp.ne.s32.totalorder %s190, %s191
    %p203 = scmp.eq.s32.totalorder %s29, 1
    %p204 = por %p202, %p203
    %p206 = scmp.ne.s32.totalorder %s191, %s205
    %p207 = scmp.eq.s32.totalorder %s29, 0
    %p208 = por %p206, %p207
    %s210 = sadd.s32 %s209, 1
    %p213 = scmp.eq.s32.totalorder %s23, 1
    %p214 = scmp.ne.s32.totalorder %s209, %s211
    %p215 = scmp.eq.s32.totalorder %s23, 0
    %p216 = por %p214, %p215
    %p217 = scmp.ne.s32.totalorder %s209, %s211
    %p218 = scmp.eq.s32.totalorder %s28, 1
    %p219 = por %p217, %p218
    %p220 = scmp.ne.s32.totalorder %s211, %s212
    %p221 = scmp.eq.s32.totalorder %s28, 0
    %p222 = por %p220, %p221
    %p223 = scmp.ne.s32.totalorder %s211, %s212
    %p224 = scmp.eq.s32.totalorder %s29, 1
    %p225 = por %p223, %p224
    %p227 = scmp.ne.s32.totalorder %s212, %s226
    %p228 = scmp.eq.s32.totalorder %s29, 0
    %p229 = por %p227, %p228
    %s231 = sadd.s32 %s230, 1
    %p234 = scmp.eq.s32.totalorder %s23, 1
    %p235 = scmp.ne.s32.totalorder %s230, %s232
    %p236 = scmp.eq.s32.totalorder %s23, 0
    %p237 = por %p235, %p236
    %p238 = scmp.ne.s32.totalorder %s230, %s232
    %p239 = scmp.eq.s32.totalorder %s28, 1
    %p240 = por %p238, %p239
    %p241 = scmp.ne.s32.totalorder %s232, %s233
    %p242 = scmp.eq.s32.totalorder %s28, 0
    %p243 = por %p241, %p242
    %p244 = scmp.ne.s32.totalorder %s232, %s233
    %p245 = scmp.eq.s32.totalorder %s29, 1
    %p246 = por %p244, %p245
    %p248 = scmp.ne.s32.totalorder %s233, %s247
    %p249 = scmp.eq.s32.totalorder %s29, 0
    %p250 = por %p248, %p249
    %s252 = sadd.s32 %s251, 1
    %p255 = scmp.eq.s32.totalorder %s23, 1
    %p256 = scmp.ne.s32.totalorder %s251, %s253
    %p257 = scmp.eq.s32.totalorder %s23, 0
    %p258 = por %p256, %p257
    %p259 = scmp.ne.s32.totalorder %s251, %s253
    %p260 = scmp.eq.s32.totalorder %s28, 1
    %p261 = por %p259, %p260
    %p262 = scmp.ne.s32.totalorder %s253, %s254
    %p263 = scmp.eq.s32.totalorder %s28, 0
    %p264 = por %p262, %p263
    %p265 = scmp.ne.s32.totalorder %s253, %s254
    %p266 = scmp.eq.s32.totalorder %s29, 1
    %p267 = por %p265, %p266
    %p269 = scmp.ne.s32.totalorder %s254, %s268
    %p270 = scmp.eq.s32.totalorder %s29, 0
    %p271 = por %p269, %p270
    %s273 = sadd.s32 %s272, 1
    %p276 = scmp.eq.s32.totalorder %s23, 1
    %p277 = scmp.ne.s32.totalorder %s272, %s274
    %p278 = scmp.eq.s32.totalorder %s23, 0
    %p279 = por %p277, %p278
    %p280 = scmp.ne.s32.totalorder %s272, %s274
    %p281 = scmp.eq.s32.totalorder %s28, 1
    %p282 = por %p280, %p281
    %p283 = scmp.ne.s32.totalorder %s274, %s275
    %p284 = scmp.eq.s32.totalorder %s28, 0
    %p285 = por %p283, %p284
    %p286 = scmp.ne.s32.totalorder %s274, %s275
    %p287 = scmp.eq.s32.totalorder %s29, 1
    %p288 = por %p286, %p287
    %p290 = scmp.ne.s32.totalorder %s275, %s289
    %p291 = scmp.eq.s32.totalorder %s29, 0
    %p292 = por %p290, %p291
    %s294 = sadd.s32 %s293, 1
    %p297 = scmp.eq.s32.totalorder %s23, 1
    %p298 = scmp.ne.s32.totalorder %s293, %s295
    %p299 = scmp.eq.s32.totalorder %s23, 0
    %p300 = por %p298, %p299
    %p301 = scmp.ne.s32.totalorder %s293, %s295
    %p302 = scmp.eq.s32.totalorder %s28, 1
    %p303 = por %p301, %p302
    %p304 = scmp.ne.s32.totalorder %s295, %s296
    %p305 = scmp.eq.s32.totalorder %s28, 0
    %p306 = por %p304, %p305
    %p307 = scmp.ne.s32.totalorder %s295, %s296
    %p308 = scmp.eq.s32.totalorder %s29, 1
    %p309 = por %p307, %p308
    %p311 = scmp.ne.s32.totalorder %s296, %s310
    %p312 = scmp.eq.s32.totalorder %s29, 0
    %p313 = por %p311, %p312
    %s315 = sadd.s32 %s314, 1
    %p318 = scmp.eq.s32.totalorder %s23, 1
    %p319 = scmp.ne.s32.totalorder %s314, %s316
    %p320 = scmp.eq.s32.totalorder %s23, 0
    %p321 = por %p319, %p320
    %p322 = scmp.ne.s32.totalorder %s314, %s316
    %p323 = scmp.eq.s32.totalorder %s28, 1
    %p324 = por %p322, %p323
    %p325 = scmp.ne.s32.totalorder %s316, %s317
    %p326 = scmp.eq.s32.totalorder %s28, 0
    %p327 = por %p325, %p326
    %p328 = scmp.ne.s32.totalorder %s316, %s317
    %p329 = scmp.eq.s32.totalorder %s29, 1
    %p330 = por %p328, %p329
    %p332 = scmp.ne.s32.totalorder %s317, %s331
    %p333 = scmp.eq.s32.totalorder %s29, 0
    %p334 = por %p332, %p333
    %s336 = sadd.s32 %s335, 1
    %p339 = scmp.eq.s32.totalorder %s23, 1
    %p340 = scmp.ne.s32.totalorder %s335, %s337
    %p341 = scmp.eq.s32.totalorder %s23, 0
    %p342 = por %p340, %p341
    %p343 = scmp.ne.s32.totalorder %s335, %s337
    %p344 = scmp.eq.s32.totalorder %s28, 1
    %p345 = por %p343, %p344
    %p346 = scmp.ne.s32.totalorder %s337, %s338
    %p347 = scmp.eq.s32.totalorder %s28, 0
    %p348 = por %p346, %p347
    %p349 = scmp.ne.s32.totalorder %s337, %s338
    %p350 = scmp.eq.s32.totalorder %s29, 1
    %p351 = por %p349, %p350
    %p353 = scmp.ne.s32.totalorder %s338, %s352
    %p354 = scmp.eq.s32.totalorder %s29, 0
    %p355 = por %p353, %p354
    %s357 = sadd.s32 %s356, 1
    %p360 = scmp.eq.s32.totalorder %s23, 1
    %p361 = scmp.ne.s32.totalorder %s356, %s358
    %p362 = scmp.eq.s32.totalorder %s23, 0
    %p363 = por %p361, %p362
    %p364 = scmp.ne.s32.totalorder %s356, %s358
    %p365 = scmp.eq.s32.totalorder %s28, 1
    %p366 = por %p364, %p365
    %p367 = scmp.ne.s32.totalorder %s358, %s359
    %p368 = scmp.eq.s32.totalorder %s28, 0
    %p369 = por %p367, %p368
    %p370 = scmp.ne.s32.totalorder %s358, %s359
    %p371 = scmp.eq.s32.totalorder %s29, 1
    %p372 = por %p370, %p371
    %p374 = scmp.ne.s32.totalorder %s359, %s373
    %p375 = scmp.eq.s32.totalorder %s29, 0
    %p376 = por %p374, %p375
    %s377 = ssub.s32 %s30, %s42
    %s378 = ssub.s32 %s31, %s38
    %s379 = sor.u32 %s377, %s378
    %p380 = scmp.eq.s32.totalorder %s379, 0
    %s382 = sadd.s32 %s381, 1
    %s383 = scalar_select %p380, %s381, %s382
    %p386 = pneg %p380
    %p387 = scmp.eq.s32.totalorder %s23, 1
    %p388 = por %p386, %p387
    %p389 = scmp.ne.s32.totalorder %s381, %s384
    %p390 = scmp.eq.s32.totalorder %s23, 0
    %p391 = por %p389, %p390
    %p392 = scmp.ne.s32.totalorder %s381, %s384
    %p393 = scmp.eq.s32.totalorder %s28, 1
    %p394 = por %p392, %p393
    %p395 = scmp.ne.s32.totalorder %s384, %s385
    %p396 = scmp.eq.s32.totalorder %s28, 0
    %p397 = por %p395, %p396
    %p398 = scmp.ne.s32.totalorder %s384, %s385
    %p399 = scmp.eq.s32.totalorder %s29, 1
    %p400 = por %p398, %p399
    %p402 = scmp.ne.s32.totalorder %s385, %s401
    %p403 = scmp.eq.s32.totalorder %s29, 0
    %p404 = por %p402, %p403
    %s405 = ssub.s32 %s30, %s42
    %s406 = ssub.s32 %s31, %s38
    %s407 = sor.u32 %s405, %s406
    %p408 = scmp.eq.s32.totalorder %s407, 0
    %s410 = sadd.s32 %s409, 1
    %s411 = scalar_select %p408, %s409, %s410
    %p414 = pneg %p408
    %p415 = scmp.eq.s32.totalorder %s23, 1
    %p416 = por %p414, %p415
    %p417 = scmp.ne.s32.totalorder %s409, %s412
    %p418 = scmp.eq.s32.totalorder %s23, 0
    %p419 = por %p417, %p418
    %p420 = scmp.ne.s32.totalorder %s409, %s412
    %p421 = scmp.eq.s32.totalorder %s28, 1
    %p422 = por %p420, %p421
    %p423 = scmp.ne.s32.totalorder %s412, %s413
    %p424 = scmp.eq.s32.totalorder %s28, 0
    %p425 = por %p423, %p424
    %p426 = scmp.ne.s32.totalorder %s412, %s413
    %p427 = scmp.eq.s32.totalorder %s29, 1
    %p428 = por %p426, %p427
    %p430 = scmp.ne.s32.totalorder %s413, %s429
    %p431 = scmp.eq.s32.totalorder %s29, 0
    %p432 = por %p430, %p431
    %p433 = scmp.le.s32.totalorder 1, %s23
    %p434 = scmp.lt.s32.totalorder %s23, 3
    %p435 = pnand %p433, %p434
    %p436 = pneg %p435
    // Predicated region
    $region9: #{forward.5} parent=5 // pred_check
      _
    $region10: #{forward.5} parent=5 // pred_check_branch
      %438 = sbr.rel (%p435) target = $region12
    $region11: #{forward.5} parent=5 // pred_region
      %s439 = ssub.s32 %s23, 1
      // Predicated region
      $region13: #{forward.5} parent=11 // pred_check
        %p440 = pneg %p138
      $region14: #{forward.5} parent=11 // pred_check_branch
        %442 = sbr.rel (%p440) target = $region16
      $region15: #{forward.5} parent=11 // pred_region
        _
      $region16: #{forward.5} parent=11 // pred_fallthru
        _
      // Predicated region
      $region17: #{forward.5} parent=11 // pred_check
        %p443 = pneg %p159
      $region18: #{forward.5} parent=11 // pred_check_branch
        %445 = sbr.rel (%p443) target = $region20
      $region19: #{forward.5} parent=11 // pred_region
        _
      $region20: #{forward.5} parent=11 // pred_fallthru
        _
      // Predicated region
      $region21: #{forward.5} parent=11 // pred_check
        %p446 = pneg %p180
      $region22: #{forward.5} parent=11 // pred_check_branch
        %448 = sbr.rel (%p446) target = $region24
      $region23: #{forward.5} parent=11 // pred_region
        _
      $region24: #{forward.5} parent=11 // pred_fallthru
        _
      // Predicated region
      $region25: #{forward.5} parent=11 // pred_check
        %p449 = pneg %p201
      $region26: #{forward.5} parent=11 // pred_check_branch
        %451 = sbr.rel (%p449) target = $region28
      $region27: #{forward.5} parent=11 // pred_region
        _
      $region28: #{forward.5} parent=11 // pred_fallthru
        _
      // Predicated region
      $region29: #{forward.5} parent=11 // pred_check
        %p452 = pneg %p222
      $region30: #{forward.5} parent=11 // pred_check_branch
        %454 = sbr.rel (%p452) target = $region32
      $region31: #{forward.5} parent=11 // pred_region
        _
      $region32: #{forward.5} parent=11 // pred_fallthru
        _
      // Predicated region
      $region33: #{forward.5} parent=11 // pred_check
        %p455 = pneg %p243
      $region34: #{forward.5} parent=11 // pred_check_branch
        %457 = sbr.rel (%p455) target = $region36
      $region35: #{forward.5} parent=11 // pred_region
        _
      $region36: #{forward.5} parent=11 // pred_fallthru
        _
      // Predicated region
      $region37: #{forward.5} parent=11 // pred_check
        %p458 = pneg %p264
      $region38: #{forward.5} parent=11 // pred_check_branch
        %460 = sbr.rel (%p458) target = $region40
      $region39: #{forward.5} parent=11 // pred_region
        _
      $region40: #{forward.5} parent=11 // pred_fallthru
        _
      // Predicated region
      $region41: #{forward.5} parent=11 // pred_check
        %p461 = pneg %p285
      $region42: #{forward.5} parent=11 // pred_check_branch
        %463 = sbr.rel (%p461) target = $region44
      $region43: #{forward.5} parent=11 // pred_region
        _
      $region44: #{forward.5} parent=11 // pred_fallthru
        _
      // Predicated region
      $region45: #{forward.5} parent=11 // pred_check
        %p464 = pneg %p306
      $region46: #{forward.5} parent=11 // pred_check_branch
        %466 = sbr.rel (%p464) target = $region48
      $region47: #{forward.5} parent=11 // pred_region
        _
      $region48: #{forward.5} parent=11 // pred_fallthru
        _
      // Predicated region
      $region49: #{forward.5} parent=11 // pred_check
        %p467 = pneg %p327
      $region50: #{forward.5} parent=11 // pred_check_branch
        %469 = sbr.rel (%p467) target = $region52
      $region51: #{forward.5} parent=11 // pred_region
        _
      $region52: #{forward.5} parent=11 // pred_fallthru
        _
      // Predicated region
      $region53: #{forward.5} parent=11 // pred_check
        %p470 = pneg %p348
      $region54: #{forward.5} parent=11 // pred_check_branch
        %472 = sbr.rel (%p470) target = $region56
      $region55: #{forward.5} parent=11 // pred_region
        _
      $region56: #{forward.5} parent=11 // pred_fallthru
        _
      // Predicated region
      $region57: #{forward.5} parent=11 // pred_check
        %p473 = pneg %p369
      $region58: #{forward.5} parent=11 // pred_check_branch
        %475 = sbr.rel (%p473) target = $region60
      $region59: #{forward.5} parent=11 // pred_region
        _
      $region60: #{forward.5} parent=11 // pred_fallthru
        _
    $region12: #{forward.5} parent=5 // pred_fallthru
      _
    %p476 = scmp.lt.s32.totalorder %s23, 2
    // Predicated region
    $region61: #{forward.5} parent=5 // pred_check
      %p477 = pneg %p476
    $region62: #{forward.5} parent=5 // pred_check_branch
      %479 = sbr.rel (%p477) target = $region64
    $region63: #{forward.5} parent=5 // pred_region
      // Predicated region
      $region65: #{forward.5} parent=63 // pred_check
        %p480 = pneg %p57
      $region66: #{forward.5} parent=63 // pred_check_branch
        %482 = sbr.rel (%p480) target = $region68
      $region67: #{forward.5} parent=63 // pred_region
        %s483 = smul.u32 8, %s31
        %p484 = scmp.lt.s32.totalorder %s30, 1
        %s485 = scalar_select %p484, %s30, 1
        %p486 = scmp.lt.s32.totalorder %s483, 7
        %s487 = scalar_select %p486, %s483, 7
        %s488 = smul.addr %s487, 2
        %s489 = smul.addr %s485, 16
        %s490 = sadd.s32 %s488, %s489
        %s491 = smul.addr %s490, 4
        %s492 = scalar_lea.vmem %s0, %s491
        %s493 = smul.u32 8, %s31
      $region68: #{forward.5} parent=63 // pred_fallthru
        _
      // Predicated region
      $region69: #{forward.5} parent=63 // pred_check
        %p494 = pneg %p85
      $region70: #{forward.5} parent=63 // pred_check_branch
        %496 = sbr.rel (%p494) target = $region72
      $region71: #{forward.5} parent=63 // pred_region
        %s497 = smul.u32 8, %s31
        %p498 = scmp.lt.s32.totalorder %s30, 1
        %s499 = scalar_select %p498, %s30, 1
        %p500 = scmp.lt.s32.totalorder %s497, 7
        %s501 = scalar_select %p500, %s497, 7
        %s502 = smul.addr %s501, 2
        %s503 = smul.addr %s499, 32
        %s504 = sadd.s32 %s502, %s503
        %s505 = smul.addr %s504, 4
        %s506 = scalar_lea.vmem %s1, %s505
        %s507 = smul.u32 8, %s31
      $region72: #{forward.5} parent=63 // pred_fallthru
        _
      // Predicated region
      $region73: #{forward.5} parent=63 // pred_check
        %p508 = pneg %p111
      $region74: #{forward.5} parent=63 // pred_check_branch
        %510 = sbr.rel (%p508) target = $region76
      $region75: #{forward.5} parent=63 // pred_region
        %p511 = scmp.lt.s32.totalorder %s30, 1
        %s512 = scalar_select %p511, %s30, 1
        %s513 = smul.addr %s512, 2
        %s514 = scalar_lea.vmem %s2, %s513
      $region76: #{forward.5} parent=63 // pred_fallthru
        _
    $region64: #{forward.5} parent=5 // pred_fallthru
      _
    %p515 = scmp.le.s32.totalorder 1, %s23
    %p516 = scmp.lt.s32.totalorder %s23, 3
    %p517 = pnand %p515, %p516
    %p518 = pneg %p517
    // Predicated region
    $region77: #{forward.5} parent=5 // pred_check
      _
    $region78: #{forward.5} parent=5 // pred_check_branch
      %520 = sbr.rel (%p517) target = $region80
    $region79: #{forward.5} parent=5 // pred_region
      %s521 = ssub.s32 %s23, 1
      %s522 = smul.u32 8, %s33
      %p523 = scmp.lt.s32.totalorder %s32, 1
      %s524 = scalar_select %p523, %s32, 1
      %p525 = scmp.lt.s32.totalorder %s522, 7
      %s526 = scalar_select %p525, %s522, 7
      %s527 = smul.addr %s526, 2
      %s528 = smul.addr %s524, 16
      %s529 = sadd.s32 %s527, %s528
      %s530 = smul.addr %s529, 4
      %s531 = scalar_lea.vmem %s0, %s530
      %p532 = pneg %p63
      %p533 = pneg %p60
      %s534 = smul.u32 8, %s33
      %p535 = scmp.lt.s32.totalorder %s32, 1
      %s536 = scalar_select %p535, %s32, 1
      %p537 = scmp.lt.s32.totalorder %s534, 7
      %s538 = scalar_select %p537, %s534, 7
      %s539 = smul.addr %s538, 2
      %s540 = smul.addr %s536, 32
      %s541 = sadd.s32 %s539, %s540
      %s542 = smul.addr %s541, 4
      %s543 = scalar_lea.vmem %s1, %s542
      %p544 = pneg %p91
      %p545 = pneg %p88
      %p546 = scmp.lt.s32.totalorder %s32, 1
      %s547 = scalar_select %p546, %s32, 1
      %s548 = smul.addr %s547, 2
      %s549 = scalar_lea.vmem %s2, %s548
      %p550 = pneg %p117
      %p551 = pneg %p114
      %p552 = pneg %p138
      %p553 = pneg %p135
      %p554 = pneg %p159
      %p555 = pneg %p156
      %p556 = pneg %p180
      %p557 = pneg %p177
      %p558 = pneg %p201
      %p559 = pneg %p198
      %p560 = pneg %p222
      %p561 = pneg %p219
      %p562 = pneg %p243
      %p563 = pneg %p240
      %p564 = pneg %p264
      %p565 = pneg %p261
      %p566 = pneg %p285
      %p567 = pneg %p282
      %p568 = pneg %p306
      %p569 = pneg %p303
      %p570 = pneg %p327
      %p571 = pneg %p324
      %p572 = pneg %p348
      %p573 = pneg %p345
      %p574 = pneg %p369
      %p575 = pneg %p366
      %p576 = pneg %p397
      %p577 = pneg %p394
      %s578 = smul.u32 8, %s33
      %p579 = scmp.lt.s32.totalorder %s32, 1
      %s580 = scalar_select %p579, %s32, 1
      %p581 = scmp.lt.s32.totalorder %s578, 7
      %s582 = scalar_select %p581, %s578, 7
      %s583 = smul.addr %s580, 8
      %s584 = sadd.s32 %s582, %s583
      %s585 = smul.addr %s584, 8
      %s586 = scalar_lea.vmem %s15, %s585
      %p587 = pneg %p425
      %p588 = pneg %p422
      %s589 = smul.u32 8, %s33
      %p590 = scmp.lt.s32.totalorder %s32, 1
      %s591 = scalar_select %p590, %s32, 1
      %p592 = scmp.lt.s32.totalorder %s589, 7
      %s593 = scalar_select %p592, %s589, 7
      %s594 = smul.addr %s591, 16
      %s595 = sadd.s32 %s593, %s594
      %s596 = smul.addr %s595, 8
      %s597 = scalar_lea.vmem %s16, %s596
      %s598 = smul.u32 8, %s33
      %p599 = scmp.lt.s32.totalorder %s32, 1
      %s600 = scalar_select %p599, %s32, 1
      %p601 = scmp.lt.s32.totalorder %s598, 7
      %s602 = scalar_select %p601, %s598, 7
      %s603 = smul.addr %s602, 2
      %s604 = smul.addr %s600, 16
      %s605 = sadd.s32 %s603, %s604
      %s606 = smul.addr %s605, 4
      %s607 = scalar_lea.vmem %s0, %s606
      %s608 = smul.u32 8, %s33
      %s609 = smul.u32 8, %s33
      %p610 = scmp.lt.s32.totalorder %s32, 1
      %s611 = scalar_select %p610, %s32, 1
      %p612 = scmp.lt.s32.totalorder %s609, 7
      %s613 = scalar_select %p612, %s609, 7
      %s614 = smul.addr %s613, 2
      %s615 = smul.addr %s611, 32
      %s616 = sadd.s32 %s614, %s615
      %s617 = smul.addr %s616, 4
      %s618 = scalar_lea.vmem %s1, %s617
      %s619 = smul.u32 8, %s33
      %p620 = scmp.lt.s32.totalorder %s32, 1
      %s621 = scalar_select %p620, %s32, 1
      %s622 = smul.addr %s621, 2
      %s623 = scalar_lea.vmem %s2, %s622
      %s624 = smul.u32 8, %s33
      %p625 = scmp.lt.s32.totalorder %s32, 1
      %s626 = scalar_select %p625, %s32, 1
      %p627 = scmp.lt.s32.totalorder %s624, 7
      %s628 = scalar_select %p627, %s624, 7
      %s629 = smul.addr %s626, 8
      %s630 = sadd.s32 %s628, %s629
      %s631 = smul.addr %s630, 8
      %s632 = scalar_lea.vmem %s15, %s631
      %s633 = smul.u32 8, %s33
      %s634 = smul.u32 8, %s33
      %p635 = scmp.lt.s32.totalorder %s32, 1
      %s636 = scalar_select %p635, %s32, 1
      %p637 = scmp.lt.s32.totalorder %s634, 7
      %s638 = scalar_select %p637, %s634, 7
      %s639 = smul.addr %s636, 16
      %s640 = sadd.s32 %s638, %s639
      %s641 = smul.addr %s640, 8
      %s642 = scalar_lea.vmem %s16, %s641
      %s643 = smul.u32 8, %s33
      %v645 = vld [vmem:[%s607] sm:$0xff]
      %v646 = vld [vmem:[%s607 + $0x8] sm:$0xff]
      %v647 = vld [vmem:[%s607 + $0x10] sm:$0xff]
      %v648 = vld [vmem:[%s607 + $0x18] sm:$0xff]
      %v649 = vld [vmem:[%s607 + $0x20] sm:$0xff]
      %v650 = vld [vmem:[%s607 + $0x28] sm:$0xff]
      %v651 = vld [vmem:[%s607 + $0x30] sm:$0xff]
      %v652 = vld [vmem:[%s607 + $0x38] sm:$0xff]
      %v653 = vld [vmem:[%s3] sm:$0xff]
      %v654 = vld [vmem:[%s3 + $0x8] sm:$0xff]
      %v655 = vld [vmem:[%s3 + $0x10] sm:$0xff]
      %v656 = vld [vmem:[%s3 + $0x18] sm:$0xff]
      %v657 = vld [vmem:[%s3 + $0x20] sm:$0xff]
      %v658 = vld [vmem:[%s3 + $0x28] sm:$0xff]
      %v659 = vld [vmem:[%s3 + $0x30] sm:$0xff]
      %v660 = vld [vmem:[%s3 + $0x38] sm:$0xff]
      %v661 = vld [vmem:[%s3 + $0x40] sm:$0xff]
      %v662 = vld [vmem:[%s3 + $0x48] sm:$0xff]
      %v663 = vld [vmem:[%s3 + $0x50] sm:$0xff]
      %v664 = vld [vmem:[%s3 + $0x58] sm:$0xff]
      %v665 = vld [vmem:[%s3 + $0x60] sm:$0xff]
      %v666 = vld [vmem:[%s3 + $0x68] sm:$0xff]
      %v667 = vld [vmem:[%s3 + $0x70] sm:$0xff]
      %v668 = vld [vmem:[%s3 + $0x78] sm:$0xff]
      %v669 = vld [vmem:[%s3 + $0x80] sm:$0xff]
      %v670 = vld [vmem:[%s3 + $0x88] sm:$0xff]
      %v671 = vld [vmem:[%s3 + $0x90] sm:$0xff]
      %v672 = vld [vmem:[%s3 + $0x98] sm:$0xff]
      %v673 = vld [vmem:[%s3 + $0xa0] sm:$0xff]
      %v674 = vld [vmem:[%s3 + $0xa8] sm:$0xff]
      %v675 = vld [vmem:[%s3 + $0xb0] sm:$0xff]
      %v676 = vld [vmem:[%s3 + $0xb8] sm:$0xff]
      %v677 = vld [vmem:[%s3 + $0xc0] sm:$0xff]
      %v678 = vld [vmem:[%s3 + $0xc8] sm:$0xff]
      %v679 = vld [vmem:[%s3 + $0xd0] sm:$0xff]
      %v680 = vld [vmem:[%s3 + $0xd8] sm:$0xff]
      %v681 = vld [vmem:[%s3 + $0xe0] sm:$0xff]
      %v682 = vld [vmem:[%s3 + $0xe8] sm:$0xff]
      %v683 = vld [vmem:[%s3 + $0xf0] sm:$0xff]
      %v684 = vld [vmem:[%s3 + $0xf8] sm:$0xff]
      %v685 = vld [vmem:[%s4] sm:$0x3]
      %v687 = vlaneseq
      %v688 = vshrl.u32 %v687, 7
      %v689 = vsub.s32 0, %v688
      %v690 = vrot.slane %v685, %v689
      %v691 = vlaneseq
      %v692 = vshrl.u32 %v691, 7
      %v693 = vsub.s32 1, %v692
      %v694 = vrot.slane %v685, %v693
      %v705 = vunpack.c.l.b16 %v645
      %v706 = vunpack.c.h.b16 %v645
      %v707 = vunpack.c.l.b16 %v646
      %v708 = vunpack.c.h.b16 %v646
      %v709 = vunpack.c.l.b16 %v647
      %v710 = vunpack.c.h.b16 %v647
      %v711 = vunpack.c.l.b16 %v648
      %v712 = vunpack.c.h.b16 %v648
      %v713 = vunpack.c.l.b16 %v649
      %v714 = vunpack.c.h.b16 %v649
      %v715 = vunpack.c.l.b16 %v650
      %v716 = vunpack.c.h.b16 %v650
      %v717 = vunpack.c.l.b16 %v651
      %v718 = vunpack.c.h.b16 %v651
      %v719 = vunpack.c.l.b16 %v652
      %v720 = vunpack.c.h.b16 %v652
      %v721 = vpack.c.b16 %v707, %v705
      %v722 = vpack.c.b16 %v708, %v706
      %v723 = vpack.c.b16 %v711, %v709
      %v724 = vpack.c.b16 %v712, %v710
      %v725 = vpack.c.b16 %v715, %v713
      %v726 = vpack.c.b16 %v716, %v714
      %v727 = vpack.c.b16 %v719, %v717
      %v728 = vpack.c.b16 %v720, %v718
      %v769 = vunpack.c.l.b16 %v653
      %v770 = vunpack.c.h.b16 %v653
      %v771 = vunpack.c.l.b16 %v654
      %v772 = vunpack.c.h.b16 %v654
      %v773 = vunpack.c.l.b16 %v655
      %v774 = vunpack.c.h.b16 %v655
      %v775 = vunpack.c.l.b16 %v656
      %v776 = vunpack.c.h.b16 %v656
      %v777 = vunpack.c.l.b16 %v657
      %v778 = vunpack.c.h.b16 %v657
      %v779 = vunpack.c.l.b16 %v658
      %v780 = vunpack.c.h.b16 %v658
      %v781 = vunpack.c.l.b16 %v659
      %v782 = vunpack.c.h.b16 %v659
      %v783 = vunpack.c.l.b16 %v660
      %v784 = vunpack.c.h.b16 %v660
      %v785 = vunpack.c.l.b16 %v661
      %v786 = vunpack.c.h.b16 %v661
      %v787 = vunpack.c.l.b16 %v662
      %v788 = vunpack.c.h.b16 %v662
      %v789 = vunpack.c.l.b16 %v663
      %v790 = vunpack.c.h.b16 %v663
      %v791 = vunpack.c.l.b16 %v664
      %v792 = vunpack.c.h.b16 %v664
      %v793 = vunpack.c.l.b16 %v665
      %v794 = vunpack.c.h.b16 %v665
      %v795 = vunpack.c.l.b16 %v666
      %v796 = vunpack.c.h.b16 %v666
      %v797 = vunpack.c.l.b16 %v667
      %v798 = vunpack.c.h.b16 %v667
      %v799 = vunpack.c.l.b16 %v668
      %v800 = vunpack.c.h.b16 %v668
      %v801 = vunpack.c.l.b16 %v669
      %v802 = vunpack.c.h.b16 %v669
      %v803 = vunpack.c.l.b16 %v670
      %v804 = vunpack.c.h.b16 %v670
      %v805 = vunpack.c.l.b16 %v671
      %v806 = vunpack.c.h.b16 %v671
      %v807 = vunpack.c.l.b16 %v672
      %v808 = vunpack.c.h.b16 %v672
      %v809 = vunpack.c.l.b16 %v673
      %v810 = vunpack.c.h.b16 %v673
      %v811 = vunpack.c.l.b16 %v674
      %v812 = vunpack.c.h.b16 %v674
      %v813 = vunpack.c.l.b16 %v675
      %v814 = vunpack.c.h.b16 %v675
      %v815 = vunpack.c.l.b16 %v676
      %v816 = vunpack.c.h.b16 %v676
      %v817 = vunpack.c.l.b16 %v677
      %v818 = vunpack.c.h.b16 %v677
      %v819 = vunpack.c.l.b16 %v678
      %v820 = vunpack.c.h.b16 %v678
      %v821 = vunpack.c.l.b16 %v679
      %v822 = vunpack.c.h.b16 %v679
      %v823 = vunpack.c.l.b16 %v680
      %v824 = vunpack.c.h.b16 %v680
      %v825 = vunpack.c.l.b16 %v681
      %v826 = vunpack.c.h.b16 %v681
      %v827 = vunpack.c.l.b16 %v682
      %v828 = vunpack.c.h.b16 %v682
      %v829 = vunpack.c.l.b16 %v683
      %v830 = vunpack.c.h.b16 %v683
      %v831 = vunpack.c.l.b16 %v684
      %v832 = vunpack.c.h.b16 %v684
      %v833 = vpack.c.b16 %v771, %v769
      %v834 = vpack.c.b16 %v772, %v770
      %v835 = vpack.c.b16 %v775, %v773
      %v836 = vpack.c.b16 %v776, %v774
      %v837 = vpack.c.b16 %v779, %v777
      %v838 = vpack.c.b16 %v780, %v778
      %v839 = vpack.c.b16 %v783, %v781
      %v840 = vpack.c.b16 %v784, %v782
      %v841 = vpack.c.b16 %v787, %v785
      %v842 = vpack.c.b16 %v788, %v786
      %v843 = vpack.c.b16 %v791, %v789
      %v844 = vpack.c.b16 %v792, %v790
      %v845 = vpack.c.b16 %v795, %v793
      %v846 = vpack.c.b16 %v796, %v794
      %v847 = vpack.c.b16 %v799, %v797
      %v848 = vpack.c.b16 %v800, %v798
      %v849 = vpack.c.b16 %v803, %v801
      %v850 = vpack.c.b16 %v804, %v802
      %v851 = vpack.c.b16 %v807, %v805
      %v852 = vpack.c.b16 %v808, %v806
      %v853 = vpack.c.b16 %v811, %v809
      %v854 = vpack.c.b16 %v812, %v810
      %v855 = vpack.c.b16 %v815, %v813
      %v856 = vpack.c.b16 %v816, %v814
      %v857 = vpack.c.b16 %v819, %v817
      %v858 = vpack.c.b16 %v820, %v818
      %v859 = vpack.c.b16 %v823, %v821
      %v860 = vpack.c.b16 %v824, %v822
      %v861 = vpack.c.b16 %v827, %v825
      %v862 = vpack.c.b16 %v828, %v826
      %v863 = vpack.c.b16 %v831, %v829
      %v864 = vpack.c.b16 %v832, %v830
      %897 = vmatprep.subr.bf16.mxu0 %v834
      %898 = vmatpush1.bf16.msra.mxu0 %v833
      %899 = vmatprep.subr.bf16.mxu0 %v836
      %900 = vmatpush1.bf16.msra.mxu0 %v835
      %901 = vmatprep.subr.bf16.mxu0 %v838
      %902 = vmatpush1.bf16.msra.mxu0 %v837
      %903 = vmatprep.subr.bf16.mxu0 %v840
      %904 = vmatpush1.bf16.msra.mxu0 %v839
      %905 = vmatprep.subr.bf16.mxu0 %v842
      %906 = vmatpush1.bf16.msra.mxu0 %v841
      %907 = vmatprep.subr.bf16.mxu0 %v844
      %908 = vmatpush1.bf16.msra.mxu0 %v843
      %909 = vmatprep.subr.bf16.mxu0 %v846
      %910 = vmatpush1.bf16.msra.mxu0 %v845
      %911 = vmatprep.subr.bf16.mxu0 %v848
      %912 = vmatpush1.bf16.msra.mxu0 %v847
      %913 = vmatprep.subr.bf16.mxu0 %v850
      %914 = vmatpush1.bf16.msra.mxu0 %v849
      %915 = vmatprep.subr.bf16.mxu0 %v852
      %916 = vmatpush1.bf16.msra.mxu0 %v851
      %917 = vmatprep.subr.bf16.mxu0 %v854
      %918 = vmatpush1.bf16.msra.mxu0 %v853
      %919 = vmatprep.subr.bf16.mxu0 %v856
      %920 = vmatpush1.bf16.msra.mxu0 %v855
      %921 = vmatprep.subr.bf16.mxu0 %v858
      %922 = vmatpush1.bf16.msra.mxu0 %v857
      %923 = vmatprep.subr.bf16.mxu0 %v860
      %924 = vmatpush1.bf16.msra.mxu0 %v859
      %925 = vmatprep.subr.bf16.mxu0 %v862
      %926 = vmatpush1.bf16.msra.mxu0 %v861
      %927 = vmatprep.subr.bf16.mxu0 %v864
      %928 = vmatpush1.bf16.msra.mxu0 %v863
      %929 = vmatprep.mubr.bf16.mxu0 %v722
      %930 = vmatmul.mubr.bf16.gmra.mrb[0].mxu0 %v721
      %v931 = vpop.f32.mrb[0].mxu0
      %v932 = vadd.f32 %v690, %v931
      %v933 = vpop.f32.mrb[0].mxu0
      %v934 = vadd.f32 %v694, %v933
      %v935 = vpop.f32.mrb[0].mxu0
      %v936 = vadd.f32 %v690, %v935
      %v937 = vpop.f32.mrb[0].mxu0
      %v938 = vadd.f32 %v694, %v937
      %939 = vmatprep.mubr.bf16.mxu0 %v724
      %940 = vmatmul.mubr.bf16.gmra.mrb[0].mxu0 %v723
      %v941 = vpop.f32.mrb[0].mxu0
      %v942 = vadd.f32 %v690, %v941
      %v943 = vpop.f32.mrb[0].mxu0
      %v944 = vadd.f32 %v694, %v943
      %v945 = vpop.f32.mrb[0].mxu0
      %v946 = vadd.f32 %v690, %v945
      %v947 = vpop.f32.mrb[0].mxu0
      %v948 = vadd.f32 %v694, %v947
      %949 = vmatprep.mubr.bf16.mxu0 %v726
      %950 = vmatmul.mubr.bf16.gmra.mrb[0].mxu0 %v725
      %v951 = vpop.f32.mrb[0].mxu0
      %v952 = vadd.f32 %v690, %v951
      %v953 = vpop.f32.mrb[0].mxu0
      %v954 = vadd.f32 %v694, %v953
      %v955 = vpop.f32.mrb[0].mxu0
      %v956 = vadd.f32 %v690, %v955
      %v957 = vpop.f32.mrb[0].mxu0
      %v958 = vadd.f32 %v694, %v957
      %959 = vmatprep.mubr.bf16.mxu0 %v728
      %960 = vmatmul.mubr.bf16.gmra.mrb[0].mxu0 %v727
      %v961 = vpop.f32.mrb[0].mxu0
      %v962 = vadd.f32 %v690, %v961
      %v963 = vpop.f32.mrb[0].mxu0
      %v964 = vadd.f32 %v694, %v963
      %v965 = vpop.f32.mrb[0].mxu0
      %v966 = vadd.f32 %v690, %v965
      %v967 = vpop.f32.mrb[0].mxu0
      %v968 = vadd.f32 %v694, %v967
      %969 = vdwg.mxu0
      %v970 = vld [vmem:[%s618] sm:$0xff]
      %v971 = vld [vmem:[%s618 + $0x8] sm:$0xff]
      %v972 = vld [vmem:[%s618 + $0x10] sm:$0xff]
      %v973 = vld [vmem:[%s618 + $0x18] sm:$0xff]
      %v974 = vld [vmem:[%s618 + $0x20] sm:$0xff]
      %v975 = vld [vmem:[%s618 + $0x28] sm:$0xff]
      %v976 = vld [vmem:[%s618 + $0x30] sm:$0xff]
      %v977 = vld [vmem:[%s618 + $0x38] sm:$0xff]
      %v978 = vld [vmem:[%s5] sm:$0xff]
      %v979 = vld [vmem:[%s5 + $0x8] sm:$0xff]
      %v980 = vld [vmem:[%s5 + $0x10] sm:$0xff]
      %v981 = vld [vmem:[%s5 + $0x18] sm:$0xff]
      %v982 = vld [vmem:[%s5 + $0x20] sm:$0xff]
      %v983 = vld [vmem:[%s5 + $0x28] sm:$0xff]
      %v984 = vld [vmem:[%s5 + $0x30] sm:$0xff]
      %v985 = vld [vmem:[%s5 + $0x38] sm:$0xff]
      %v986 = vld [vmem:[%s5 + $0x40] sm:$0xff]
      %v987 = vld [vmem:[%s5 + $0x48] sm:$0xff]
      %v988 = vld [vmem:[%s5 + $0x50] sm:$0xff]
      %v989 = vld [vmem:[%s5 + $0x58] sm:$0xff]
      %v990 = vld [vmem:[%s5 + $0x60] sm:$0xff]
      %v991 = vld [vmem:[%s5 + $0x68] sm:$0xff]
      %v992 = vld [vmem:[%s5 + $0x70] sm:$0xff]
      %v993 = vld [vmem:[%s5 + $0x78] sm:$0xff]
      %v994 = vld [vmem:[%s5 + $0x80] sm:$0xff]
      %v995 = vld [vmem:[%s5 + $0x88] sm:$0xff]
      %v996 = vld [vmem:[%s5 + $0x90] sm:$0xff]
      %v997 = vld [vmem:[%s5 + $0x98] sm:$0xff]
      %v998 = vld [vmem:[%s5 + $0xa0] sm:$0xff]
      %v999 = vld [vmem:[%s5 + $0xa8] sm:$0xff]
      %v1000 = vld [vmem:[%s5 + $0xb0] sm:$0xff]
      %v1001 = vld [vmem:[%s5 + $0xb8] sm:$0xff]
      %v1002 = vld [vmem:[%s5 + $0xc0] sm:$0xff]
      %v1003 = vld [vmem:[%s5 + $0xc8] sm:$0xff]
      %v1004 = vld [vmem:[%s5 + $0xd0] sm:$0xff]
      %v1005 = vld [vmem:[%s5 + $0xd8] sm:$0xff]
      %v1006 = vld [vmem:[%s5 + $0xe0] sm:$0xff]
      %v1007 = vld [vmem:[%s5 + $0xe8] sm:$0xff]
      %v1008 = vld [vmem:[%s5 + $0xf0] sm:$0xff]
      %v1009 = vld [vmem:[%s5 + $0xf8] sm:$0xff]
      %v1010 = vld [vmem:[%s6] sm:$0x3]
      %v1012 = vlaneseq
      %v1013 = vshrl.u32 %v1012, 7
      %v1014 = vsub.s32 0, %v1013
      %v1015 = vrot.slane %v1010, %v1014
      %v1016 = vlaneseq
      %v1017 = vshrl.u32 %v1016, 7
      %v1018 = vsub.s32 1, %v1017
      %v1019 = vrot.slane %v1010, %v1018
      %v1030 = vunpack.c.l.b16 %v970
      %v1031 = vunpack.c.h.b16 %v970
      %v1032 = vunpack.c.l.b16 %v971
      %v1033 = vunpack.c.h.b16 %v971
      %v1034 = vunpack.c.l.b16 %v972
      %v1035 = vunpack.c.h.b16 %v972
      %v1036 = vunpack.c.l.b16 %v973
      %v1037 = vunpack.c.h.b16 %v973
      %v1038 = vunpack.c.l.b16 %v974
      %v1039 = vunpack.c.h.b16 %v974
      %v1040 = vunpack.c.l.b16 %v975
      %v1041 = vunpack.c.h.b16 %v975
      %v1042 = vunpack.c.l.b16 %v976
      %v1043 = vunpack.c.h.b16 %v976
      %v1044 = vunpack.c.l.b16 %v977
      %v1045 = vunpack.c.h.b16 %v977
      %v1046 = vpack.c.b16 %v1032, %v1030
      %v1047 = vpack.c.b16 %v1033, %v1031
      %v1048 = vpack.c.b16 %v1036, %v1034
      %v1049 = vpack.c.b16 %v1037, %v1035
      %v1050 = vpack.c.b16 %v1040, %v1038
      %v1051 = vpack.c.b16 %v1041, %v1039
      %v1052 = vpack.c.b16 %v1044, %v1042
      %v1053 = vpack.c.b16 %v1045, %v1043
      %v1094 = vunpack.c.l.b16 %v978
      %v1095 = vunpack.c.h.b16 %v978
      %v1096 = vunpack.c.l.b16 %v979
      %v1097 = vunpack.c.h.b16 %v979
      %v1098 = vunpack.c.l.b16 %v980
      %v1099 = vunpack.c.h.b16 %v980
      %v1100 = vunpack.c.l.b16 %v981
      %v1101 = vunpack.c.h.b16 %v981
      %v1102 = vunpack.c.l.b16 %v982
      %v1103 = vunpack.c.h.b16 %v982
      %v1104 = vunpack.c.l.b16 %v983
      %v1105 = vunpack.c.h.b16 %v983
      %v1106 = vunpack.c.l.b16 %v984
      %v1107 = vunpack.c.h.b16 %v984
      %v1108 = vunpack.c.l.b16 %v985
      %v1109 = vunpack.c.h.b16 %v985
      %v1110 = vunpack.c.l.b16 %v986
      %v1111 = vunpack.c.h.b16 %v986
      %v1112 = vunpack.c.l.b16 %v987
      %v1113 = vunpack.c.h.b16 %v987
      %v1114 = vunpack.c.l.b16 %v988
      %v1115 = vunpack.c.h.b16 %v988
      %v1116 = vunpack.c.l.b16 %v989
      %v1117 = vunpack.c.h.b16 %v989
      %v1118 = vunpack.c.l.b16 %v990
      %v1119 = vunpack.c.h.b16 %v990
      %v1120 = vunpack.c.l.b16 %v991
      %v1121 = vunpack.c.h.b16 %v991
      %v1122 = vunpack.c.l.b16 %v992
      %v1123 = vunpack.c.h.b16 %v992
      %v1124 = vunpack.c.l.b16 %v993
      %v1125 = vunpack.c.h.b16 %v993
      %v1126 = vunpack.c.l.b16 %v994
      %v1127 = vunpack.c.h.b16 %v994
      %v1128 = vunpack.c.l.b16 %v995
      %v1129 = vunpack.c.h.b16 %v995
      %v1130 = vunpack.c.l.b16 %v996
      %v1131 = vunpack.c.h.b16 %v996
      %v1132 = vunpack.c.l.b16 %v997
      %v1133 = vunpack.c.h.b16 %v997
      %v1134 = vunpack.c.l.b16 %v998
      %v1135 = vunpack.c.h.b16 %v998
      %v1136 = vunpack.c.l.b16 %v999
      %v1137 = vunpack.c.h.b16 %v999
      %v1138 = vunpack.c.l.b16 %v1000
      %v1139 = vunpack.c.h.b16 %v1000
      %v1140 = vunpack.c.l.b16 %v1001
      %v1141 = vunpack.c.h.b16 %v1001
      %v1142 = vunpack.c.l.b16 %v1002
      %v1143 = vunpack.c.h.b16 %v1002
      %v1144 = vunpack.c.l.b16 %v1003
      %v1145 = vunpack.c.h.b16 %v1003
      %v1146 = vunpack.c.l.b16 %v1004
      %v1147 = vunpack.c.h.b16 %v1004
      %v1148 = vunpack.c.l.b16 %v1005
      %v1149 = vunpack.c.h.b16 %v1005
      %v1150 = vunpack.c.l.b16 %v1006
      %v1151 = vunpack.c.h.b16 %v1006
      %v1152 = vunpack.c.l.b16 %v1007
      %v1153 = vunpack.c.h.b16 %v1007
      %v1154 = vunpack.c.l.b16 %v1008
      %v1155 = vunpack.c.h.b16 %v1008
      %v1156 = vunpack.c.l.b16 %v1009
      %v1157 = vunpack.c.h.b16 %v1009
      %v1158 = vpack.c.b16 %v1096, %v1094
      %v1159 = vpack.c.b16 %v1097, %v1095
      %v1160 = vpack.c.b16 %v1100, %v1098
      %v1161 = vpack.c.b16 %v1101, %v1099
      %v1162 = vpack.c.b16 %v1104, %v1102
      %v1163 = vpack.c.b16 %v1105, %v1103
      %v1164 = vpack.c.b16 %v1108, %v1106
      %v1165 = vpack.c.b16 %v1109, %v1107
      %v1166 = vpack.c.b16 %v1112, %v1110
      %v1167 = vpack.c.b16 %v1113, %v1111
      %v1168 = vpack.c.b16 %v1116, %v1114
      %v1169 = vpack.c.b16 %v1117, %v1115
      %v1170 = vpack.c.b16 %v1120, %v1118
      %v1171 = vpack.c.b16 %v1121, %v1119
      %v1172 = vpack.c.b16 %v1124, %v1122
      %v1173 = vpack.c.b16 %v1125, %v1123
      %v1174 = vpack.c.b16 %v1128, %v1126
      %v1175 = vpack.c.b16 %v1129, %v1127
      %v1176 = vpack.c.b16 %v1132, %v1130
      %v1177 = vpack.c.b16 %v1133, %v1131
      %v1178 = vpack.c.b16 %v1136, %v1134
      %v1179 = vpack.c.b16 %v1137, %v1135
      %v1180 = vpack.c.b16 %v1140, %v1138
      %v1181 = vpack.c.b16 %v1141, %v1139
      %v1182 = vpack.c.b16 %v1144, %v1142
      %v1183 = vpack.c.b16 %v1145, %v1143
      %v1184 = vpack.c.b16 %v1148, %v1146
      %v1185 = vpack.c.b16 %v1149, %v1147
      %v1186 = vpack.c.b16 %v1152, %v1150
      %v1187 = vpack.c.b16 %v1153, %v1151
      %v1188 = vpack.c.b16 %v1156, %v1154
      %v1189 = vpack.c.b16 %v1157, %v1155
      %1222 = vmatprep.subr.bf16.mxu0 %v1159
      %1223 = vmatpush1.bf16.msra.mxu0 %v1158
      %1224 = vmatprep.subr.bf16.mxu0 %v1161
      %1225 = vmatpush1.bf16.msra.mxu0 %v1160
      %1226 = vmatprep.subr.bf16.mxu0 %v1163
      %1227 = vmatpush1.bf16.msra.mxu0 %v1162
      %1228 = vmatprep.subr.bf16.mxu0 %v1165
      %1229 = vmatpush1.bf16.msra.mxu0 %v1164
      %1230 = vmatprep.subr.bf16.mxu0 %v1167
      %1231 = vmatpush1.bf16.msra.mxu0 %v1166
      %1232 = vmatprep.subr.bf16.mxu0 %v1169
      %1233 = vmatpush1.bf16.msra.mxu0 %v1168
      %1234 = vmatprep.subr.bf16.mxu0 %v1171
      %1235 = vmatpush1.bf16.msra.mxu0 %v1170
      %1236 = vmatprep.subr.bf16.mxu0 %v1173
      %1237 = vmatpush1.bf16.msra.mxu0 %v1172
      %1238 = vmatprep.subr.bf16.mxu0 %v1175
      %1239 = vmatpush1.bf16.msra.mxu0 %v1174
      %1240 = vmatprep.subr.bf16.mxu0 %v1177
      %1241 = vmatpush1.bf16.msra.mxu0 %v1176
      %1242 = vmatprep.subr.bf16.mxu0 %v1179
      %1243 = vmatpush1.bf16.msra.mxu0 %v1178
      %1244 = vmatprep.subr.bf16.mxu0 %v1181
      %1245 = vmatpush1.bf16.msra.mxu0 %v1180
      %1246 = vmatprep.subr.bf16.mxu0 %v1183
      %1247 = vmatpush1.bf16.msra.mxu0 %v1182
      %1248 = vmatprep.subr.bf16.mxu0 %v1185
      %1249 = vmatpush1.bf16.msra.mxu0 %v1184
      %1250 = vmatprep.subr.bf16.mxu0 %v1187
      %1251 = vmatpush1.bf16.msra.mxu0 %v1186
      %1252 = vmatprep.subr.bf16.mxu0 %v1189
      %1253 = vmatpush1.bf16.msra.mxu0 %v1188
      %1254 = vmatprep.mubr.bf16.mxu0 %v1047
      %1255 = vmatmul.mubr.bf16.gmra.mrb[0].mxu0 %v1046
      %v1256 = vpop.f32.mrb[0].mxu0
      %v1257 = vadd.f32 %v1015, %v1256
      %v1258 = vpop.f32.mrb[0].mxu0
      %v1259 = vadd.f32 %v1019, %v1258
      %v1260 = vpop.f32.mrb[0].mxu0
      %v1261 = vadd.f32 %v1015, %v1260
      %v1262 = vpop.f32.mrb[0].mxu0
      %v1263 = vadd.f32 %v1019, %v1262
      %1264 = vmatprep.mubr.bf16.mxu0 %v1049
      %1265 = vmatmul.mubr.bf16.gmra.mrb[0].mxu0 %v1048
      %v1266 = vpop.f32.mrb[0].mxu0
      %v1267 = vadd.f32 %v1015, %v1266
      %v1268 = vpop.f32.mrb[0].mxu0
      %v1269 = vadd.f32 %v1019, %v1268
      %v1270 = vpop.f32.mrb[0].mxu0
      %v1271 = vadd.f32 %v1015, %v1270
      %v1272 = vpop.f32.mrb[0].mxu0
      %v1273 = vadd.f32 %v1019, %v1272
      %1274 = vmatprep.mubr.bf16.mxu0 %v1051
      %1275 = vmatmul.mubr.bf16.gmra.mrb[0].mxu0 %v1050
      %v1276 = vpop.f32.mrb[0].mxu0
      %v1277 = vadd.f32 %v1015, %v1276
      %v1278 = vpop.f32.mrb[0].mxu0
      %v1279 = vadd.f32 %v1019, %v1278
      %v1280 = vpop.f32.mrb[0].mxu0
      %v1281 = vadd.f32 %v1015, %v1280
      %v1282 = vpop.f32.mrb[0].mxu0
      %v1283 = vadd.f32 %v1019, %v1282
      %1284 = vmatprep.mubr.bf16.mxu0 %v1053
      %1285 = vmatmul.mubr.bf16.gmra.mrb[0].mxu0 %v1052
      %v1286 = vpop.f32.mrb[0].mxu0
      %v1287 = vadd.f32 %v1015, %v1286
      %v1288 = vpop.f32.mrb[0].mxu0
      %v1289 = vadd.f32 %v1019, %v1288
      %v1290 = vpop.f32.mrb[0].mxu0
      %v1291 = vadd.f32 %v1015, %v1290
      %v1292 = vpop.f32.mrb[0].mxu0
      %v1293 = vadd.f32 %v1019, %v1292
      %1294 = vdwg.mxu0
      %v1295 = vmul.f32 %v932, %v1257
      %v1296 = vmul.f32 %v934, %v1259
      %v1297 = vmul.f32 %v936, %v1261
      %v1298 = vmul.f32 %v938, %v1263
      %v1299 = vmul.f32 %v942, %v1267
      %v1300 = vmul.f32 %v944, %v1269
      %v1301 = vmul.f32 %v946, %v1271
      %v1302 = vmul.f32 %v948, %v1273
      %v1303 = vmul.f32 %v952, %v1277
      %v1304 = vmul.f32 %v954, %v1279
      %v1305 = vmul.f32 %v956, %v1281
      %v1306 = vmul.f32 %v958, %v1283
      %v1307 = vmul.f32 %v962, %v1287
      %v1308 = vmul.f32 %v964, %v1289
      %v1309 = vmul.f32 %v966, %v1291
      %v1310 = vmul.f32 %v968, %v1293
      %v1311 = vld [vmem:[%s9] sm:$0xff]
      %v1312 = vld [vmem:[%s9 + $0x8] sm:$0xff]
      %v1313 = vld [vmem:[%s9 + $0x10] sm:$0xff]
      %v1314 = vld [vmem:[%s9 + $0x18] sm:$0xff]
      %v1315 = vld [vmem:[%s9 + $0x20] sm:$0xff]
      %v1316 = vld [vmem:[%s9 + $0x28] sm:$0xff]
      %v1317 = vld [vmem:[%s9 + $0x30] sm:$0xff]
      %v1318 = vld [vmem:[%s9 + $0x38] sm:$0xff]
      %v1319 = vld [vmem:[%s9 + $0x40] sm:$0xff]
      %v1320 = vld [vmem:[%s9 + $0x48] sm:$0xff]
      %v1321 = vld [vmem:[%s9 + $0x50] sm:$0xff]
      %v1322 = vld [vmem:[%s9 + $0x58] sm:$0xff]
      %v1323 = vld [vmem:[%s9 + $0x60] sm:$0xff]
      %v1324 = vld [vmem:[%s9 + $0x68] sm:$0xff]
      %v1325 = vld [vmem:[%s9 + $0x70] sm:$0xff]
      %v1326 = vld [vmem:[%s9 + $0x78] sm:$0xff]
      %v1327 = vld [vmem:[%s9 + $0x80] sm:$0xff]
      %v1328 = vld [vmem:[%s9 + $0x88] sm:$0xff]
      %v1329 = vld [vmem:[%s9 + $0x90] sm:$0xff]
      %v1330 = vld [vmem:[%s9 + $0x98] sm:$0xff]
      %v1331 = vld [vmem:[%s9 + $0xa0] sm:$0xff]
      %v1332 = vld [vmem:[%s9 + $0xa8] sm:$0xff]
      %v1333 = vld [vmem:[%s9 + $0xb0] sm:$0xff]
      %v1334 = vld [vmem:[%s9 + $0xb8] sm:$0xff]
      %v1335 = vld [vmem:[%s9 + $0xc0] sm:$0xff]
      %v1336 = vld [vmem:[%s9 + $0xc8] sm:$0xff]
      %v1337 = vld [vmem:[%s9 + $0xd0] sm:$0xff]
      %v1338 = vld [vmem:[%s9 + $0xd8] sm:$0xff]
      %v1339 = vld [vmem:[%s9 + $0xe0] sm:$0xff]
      %v1340 = vld [vmem:[%s9 + $0xe8] sm:$0xff]
      %v1341 = vld [vmem:[%s9 + $0xf0] sm:$0xff]
      %v1342 = vld [vmem:[%s9 + $0xf8] sm:$0xff]
      %1343 = vmatprep.subr.mxu0 0.0
      %1344 = vmatpush1.msra.mxu0 %v1311
      %1345 = vmatprep.subr.mxu0 0.0
      %1346 = vmatpush1.msra.mxu0 %v1312
      %1347 = vmatprep.subr.mxu0 0.0
      %1348 = vmatpush1.msra.mxu0 %v1313
      %1349 = vmatprep.subr.mxu0 0.0
      %1350 = vmatpush1.msra.mxu0 %v1314
      %1351 = vmatprep.subr.mxu0 0.0
      %1352 = vmatpush1.msra.mxu0 %v1315
      %1353 = vmatprep.subr.mxu0 0.0
      %1354 = vmatpush1.msra.mxu0 %v1316
      %1355 = vmatprep.subr.mxu0 0.0
      %1356 = vmatpush1.msra.mxu0 %v1317
      %1357 = vmatprep.subr.mxu0 0.0
      %1358 = vmatpush1.msra.mxu0 %v1318
      %1359 = vmatprep.subr.mxu0 0.0
      %1360 = vmatpush1.msra.mxu0 %v1319
      %1361 = vmatprep.subr.mxu0 0.0
      %1362 = vmatpush1.msra.mxu0 %v1320
      %1363 = vmatprep.subr.mxu0 0.0
      %1364 = vmatpush1.msra.mxu0 %v1321
      %1365 = vmatprep.subr.mxu0 0.0
      %1366 = vmatpush1.msra.mxu0 %v1322
      %1367 = vmatprep.subr.mxu0 0.0
      %1368 = vmatpush1.msra.mxu0 %v1323
      %1369 = vmatprep.subr.mxu0 0.0
      %1370 = vmatpush1.msra.mxu0 %v1324
      %1371 = vmatprep.subr.mxu0 0.0
      %1372 = vmatpush1.msra.mxu0 %v1325
      %1373 = vmatprep.subr.mxu0 0.0
      %1374 = vmatpush1.msra.mxu0 %v1326
      %1375 = vmatprep.subr.mxu0 0.0
      %1376 = vmatpush1.msra.mxu0 %v1327
      %1377 = vmatprep.subr.mxu0 0.0
      %1378 = vmatpush1.msra.mxu0 %v1328
      %1379 = vmatprep.subr.mxu0 0.0
      %1380 = vmatpush1.msra.mxu0 %v1329
      %1381 = vmatprep.subr.mxu0 0.0
      %1382 = vmatpush1.msra.mxu0 %v1330
      %1383 = vmatprep.subr.mxu0 0.0
      %1384 = vmatpush1.msra.mxu0 %v1331
      %1385 = vmatprep.subr.mxu0 0.0
      %1386 = vmatpush1.msra.mxu0 %v1332
      %1387 = vmatprep.subr.mxu0 0.0
      %1388 = vmatpush1.msra.mxu0 %v1333
      %1389 = vmatprep.subr.mxu0 0.0
      %1390 = vmatpush1.msra.mxu0 %v1334
      %1391 = vmatprep.subr.mxu0 0.0
      %1392 = vmatpush1.msra.mxu0 %v1335
      %1393 = vmatprep.subr.mxu0 0.0
      %1394 = vmatpush1.msra.mxu0 %v1336
      %1395 = vmatprep.subr.mxu0 0.0
      %1396 = vmatpush1.msra.mxu0 %v1337
      %1397 = vmatprep.subr.mxu0 0.0
      %1398 = vmatpush1.msra.mxu0 %v1338
      %1399 = vmatprep.subr.mxu0 0.0
      %1400 = vmatpush1.msra.mxu0 %v1339
      %1401 = vmatprep.subr.mxu0 0.0
      %1402 = vmatpush1.msra.mxu0 %v1340
      %1403 = vmatprep.subr.mxu0 0.0
      %1404 = vmatpush1.msra.mxu0 %v1341
      %1405 = vmatprep.subr.mxu0 0.0
      %1406 = vmatpush1.msra.mxu0 %v1342
      %1407 = vmatprep.mubr.f32.mxu0 %v1296
      %1408 = vmatmul.mubr.f32.gmra.mrb[0].mxu0 %v1295
      %v1409 = vpop.f32.mrb[0].mxu0
      %v1410 = vadd.f32 0.0, %v1409
      %v1411 = vpop.f32.mrb[0].mxu0
      %1412 = vmatprep.mubr.f32.mxu0 %v1298
      %1413 = vmatmul.mubr.f32.gmra.mrb[0].mxu0 %v1297
      %v1414 = vpop.f32.mrb[0].mxu0
      %v1415 = vadd.f32 0.0, %v1414
      %v1416 = vpop.f32.mrb[0].mxu0
      %1417 = vmatprep.mubr.f32.mxu0 %v1300
      %1418 = vmatmul.mubr.f32.gmra.mrb[0].mxu0 %v1299
      %v1419 = vpop.f32.mrb[0].mxu0
      %v1420 = vadd.f32 0.0, %v1419
      %v1421 = vpop.f32.mrb[0].mxu0
      %1422 = vmatprep.mubr.f32.mxu0 %v1302
      %1423 = vmatmul.mubr.f32.gmra.mrb[0].mxu0 %v1301
      %v1424 = vpop.f32.mrb[0].mxu0
      %v1425 = vadd.f32 0.0, %v1424
      %v1426 = vpop.f32.mrb[0].mxu0
      %1427 = vmatprep.mubr.f32.mxu0 %v1304
      %1428 = vmatmul.mubr.f32.gmra.mrb[0].mxu0 %v1303
      %v1429 = vpop.f32.mrb[0].mxu0
      %v1430 = vadd.f32 0.0, %v1429
      %v1431 = vpop.f32.mrb[0].mxu0
      %1432 = vmatprep.mubr.f32.mxu0 %v1306
      %1433 = vmatmul.mubr.f32.gmra.mrb[0].mxu0 %v1305
      %v1434 = vpop.f32.mrb[0].mxu0
      %v1435 = vadd.f32 0.0, %v1434
      %v1436 = vpop.f32.mrb[0].mxu0
      %1437 = vmatprep.mubr.f32.mxu0 %v1308
      %1438 = vmatmul.mubr.f32.gmra.mrb[0].mxu0 %v1307
      %v1439 = vpop.f32.mrb[0].mxu0
      %v1440 = vadd.f32 0.0, %v1439
      %v1441 = vpop.f32.mrb[0].mxu0
      %1442 = vmatprep.mubr.f32.mxu0 %v1310
      %1443 = vmatmul.mubr.f32.gmra.mrb[0].mxu0 %v1309
      %v1444 = vpop.f32.mrb[0].mxu0
      %v1445 = vadd.f32 0.0, %v1444
      %v1446 = vpop.f32.mrb[0].mxu0
      %1447 = vdwg.mxu0
      %v1448 = vmul.f32 %v1410, 0.17677669
      %v1449 = vmul.f32 %v1415, 0.17677669
      %v1450 = vmul.f32 %v1420, 0.17677669
      %v1451 = vmul.f32 %v1425, 0.17677669
      %v1452 = vmul.f32 %v1430, 0.17677669
      %v1453 = vmul.f32 %v1435, 0.17677669
      %v1454 = vmul.f32 %v1440, 0.17677669
      %v1455 = vmul.f32 %v1445, 0.17677669
      %v1456 = vld [vmem:[%s623] sm:$0x1]
      %v1458 = vlaneseq
      %v1459 = vshrl.u32 %v1458, 7
      %v1460 = vsub.s32 0, %v1459
      %v1461 = vrot.slane %v1456, %v1460
      %1462 = vset.pattern.permute.xlu0 0
      %1463 = vperm.xlu0 %1462, %v1461
      %v1464 = vpop.permute.xlu0 %1463
      %v1466 = vadd.f32 %v1448, %v1464
      %v1467 = vadd.f32 %v1449, %v1464
      %v1468 = vadd.f32 %v1450, %v1464
      %v1469 = vadd.f32 %v1451, %v1464
      %v1470 = vadd.f32 %v1452, %v1464
      %v1471 = vadd.f32 %v1453, %v1464
      %v1472 = vadd.f32 %v1454, %v1464
      %v1473 = vadd.f32 %v1455, %v1464
      %s1474 = scalar_lea.vmem %s618, 64
      %v1475 = vld [vmem:[%s1474] sm:$0xff]
      %v1476 = vld [vmem:[%s1474 + $0x8] sm:$0xff]
      %v1477 = vld [vmem:[%s1474 + $0x10] sm:$0xff]
      %v1478 = vld [vmem:[%s1474 + $0x18] sm:$0xff]
      %v1479 = vld [vmem:[%s1474 + $0x20] sm:$0xff]
      %v1480 = vld [vmem:[%s1474 + $0x28] sm:$0xff]
      %v1481 = vld [vmem:[%s1474 + $0x30] sm:$0xff]
      %v1482 = vld [vmem:[%s1474 + $0x38] sm:$0xff]
      %v1491 = vunpack.c.l.b16 %v1475
      %v1492 = vunpack.c.h.b16 %v1475
      %v1493 = vunpack.c.l.b16 %v1476
      %v1494 = vunpack.c.h.b16 %v1476
      %v1495 = vunpack.c.l.b16 %v1477
      %v1496 = vunpack.c.h.b16 %v1477
      %v1497 = vunpack.c.l.b16 %v1478
      %v1498 = vunpack.c.h.b16 %v1478
      %v1499 = vunpack.c.l.b16 %v1479
      %v1500 = vunpack.c.h.b16 %v1479
      %v1501 = vunpack.c.l.b16 %v1480
      %v1502 = vunpack.c.h.b16 %v1480
      %v1503 = vunpack.c.l.b16 %v1481
      %v1504 = vunpack.c.h.b16 %v1481
      %v1505 = vunpack.c.l.b16 %v1482
      %v1506 = vunpack.c.h.b16 %v1482
      %v1507 = vpack.c.b16 %v1493, %v1491
      %v1508 = vpack.c.b16 %v1494, %v1492
      %v1509 = vpack.c.b16 %v1497, %v1495
      %v1510 = vpack.c.b16 %v1498, %v1496
      %v1511 = vpack.c.b16 %v1501, %v1499
      %v1512 = vpack.c.b16 %v1502, %v1500
      %v1513 = vpack.c.b16 %v1505, %v1503
      %v1514 = vpack.c.b16 %v1506, %v1504
      %1523 = vmatprep.subr.bf16.mxu0 %v1159
      %1524 = vmatpush1.bf16.msra.mxu0 %v1158
      %1525 = vmatprep.subr.bf16.mxu0 %v1161
      %1526 = vmatpush1.bf16.msra.mxu0 %v1160
      %1527 = vmatprep.subr.bf16.mxu0 %v1163
      %1528 = vmatpush1.bf16.msra.mxu0 %v1162
      %1529 = vmatprep.subr.bf16.mxu0 %v1165
      %1530 = vmatpush1.bf16.msra.mxu0 %v1164
      %1531 = vmatprep.subr.bf16.mxu0 %v1167
      %1532 = vmatpush1.bf16.msra.mxu0 %v1166
      %1533 = vmatprep.subr.bf16.mxu0 %v1169
      %1534 = vmatpush1.bf16.msra.mxu0 %v1168
      %1535 = vmatprep.subr.bf16.mxu0 %v1171
      %1536 = vmatpush1.bf16.msra.mxu0 %v1170
      %1537 = vmatprep.subr.bf16.mxu0 %v1173
      %1538 = vmatpush1.bf16.msra.mxu0 %v1172
      %1539 = vmatprep.subr.bf16.mxu0 %v1175
      %1540 = vmatpush1.bf16.msra.mxu0 %v1174
      %1541 = vmatprep.subr.bf16.mxu0 %v1177
      %1542 = vmatpush1.bf16.msra.mxu0 %v1176
      %1543 = vmatprep.subr.bf16.mxu0 %v1179
      %1544 = vmatpush1.bf16.msra.mxu0 %v1178
      %1545 = vmatprep.subr.bf16.mxu0 %v1181
      %1546 = vmatpush1.bf16.msra.mxu0 %v1180
      %1547 = vmatprep.subr.bf16.mxu0 %v1183
      %1548 = vmatpush1.bf16.msra.mxu0 %v1182
      %1549 = vmatprep.subr.bf16.mxu0 %v1185
      %1550 = vmatpush1.bf16.msra.mxu0 %v1184
      %1551 = vmatprep.subr.bf16.mxu0 %v1187
      %1552 = vmatpush1.bf16.msra.mxu0 %v1186
      %1553 = vmatprep.subr.bf16.mxu0 %v1189
      %1554 = vmatpush1.bf16.msra.mxu0 %v1188
      %1555 = vmatprep.mubr.bf16.mxu0 %v1508
      %1556 = vmatmul.mubr.bf16.gmra.mrb[0].mxu0 %v1507
      %v1557 = vpop.f32.mrb[0].mxu0
      %v1558 = vadd.f32 %v1015, %v1557
      %v1559 = vpop.f32.mrb[0].mxu0
      %v1560 = vadd.f32 %v1019, %v1559
      %v1561 = vpop.f32.mrb[0].mxu0
      %v1562 = vadd.f32 %v1015, %v1561
      %v1563 = vpop.f32.mrb[0].mxu0
      %v1564 = vadd.f32 %v1019, %v1563
      %1565 = vmatprep.mubr.bf16.mxu0 %v1510
      %1566 = vmatmul.mubr.bf16.gmra.mrb[0].mxu0 %v1509
      %v1567 = vpop.f32.mrb[0].mxu0
      %v1568 = vadd.f32 %v1015, %v1567
      %v1569 = vpop.f32.mrb[0].mxu0
      %v1570 = vadd.f32 %v1019, %v1569
      %v1571 = vpop.f32.mrb[0].mxu0
      %v1572 = vadd.f32 %v1015, %v1571
      %v1573 = vpop.f32.mrb[0].mxu0
      %v1574 = vadd.f32 %v1019, %v1573
      %1575 = vmatprep.mubr.bf16.mxu0 %v1512
      %1576 = vmatmul.mubr.bf16.gmra.mrb[0].mxu0 %v1511
      %v1577 = vpop.f32.mrb[0].mxu0
      %v1578 = vadd.f32 %v1015, %v1577
      %v1579 = vpop.f32.mrb[0].mxu0
      %v1580 = vadd.f32 %v1019, %v1579
      %v1581 = vpop.f32.mrb[0].mxu0
      %v1582 = vadd.f32 %v1015, %v1581
      %v1583 = vpop.f32.mrb[0].mxu0
      %v1584 = vadd.f32 %v1019, %v1583
      %1585 = vmatprep.mubr.bf16.mxu0 %v1514
      %1586 = vmatmul.mubr.bf16.gmra.mrb[0].mxu0 %v1513
      %v1587 = vpop.f32.mrb[0].mxu0
      %v1588 = vadd.f32 %v1015, %v1587
      %v1589 = vpop.f32.mrb[0].mxu0
      %v1590 = vadd.f32 %v1019, %v1589
      %v1591 = vpop.f32.mrb[0].mxu0
      %v1592 = vadd.f32 %v1015, %v1591
      %v1593 = vpop.f32.mrb[0].mxu0
      %v1594 = vadd.f32 %v1019, %v1593
      %1595 = vdwg.mxu0
      %v1596 = vmul.f32 %v932, %v1558
      %v1597 = vmul.f32 %v934, %v1560
      %v1598 = vmul.f32 %v936, %v1562
      %v1599 = vmul.f32 %v938, %v1564
      %v1600 = vmul.f32 %v942, %v1568
      %v1601 = vmul.f32 %v944, %v1570
      %v1602 = vmul.f32 %v946, %v1572
      %v1603 = vmul.f32 %v948, %v1574
      %v1604 = vmul.f32 %v952, %v1578
      %v1605 = vmul.f32 %v954, %v1580
      %v1606 = vmul.f32 %v956, %v1582
      %v1607 = vmul.f32 %v958, %v1584
      %v1608 = vmul.f32 %v962, %v1588
      %v1609 = vmul.f32 %v964, %v1590
      %v1610 = vmul.f32 %v966, %v1592
      %v1611 = vmul.f32 %v968, %v1594
      %1612 = vmatprep.subr.mxu0 0.0
      %1613 = vmatpush1.msra.mxu0 %v1311
      %1614 = vmatprep.subr.mxu0 0.0
      %1615 = vmatpush1.msra.mxu0 %v1312
      %1616 = vmatprep.subr.mxu0 0.0
      %1617 = vmatpush1.msra.mxu0 %v1313
      %1618 = vmatprep.subr.mxu0 0.0
      %1619 = vmatpush1.msra.mxu0 %v1314
      %1620 = vmatprep.subr.mxu0 0.0
      %1621 = vmatpush1.msra.mxu0 %v1315
      %1622 = vmatprep.subr.mxu0 0.0
      %1623 = vmatpush1.msra.mxu0 %v1316
      %1624 = vmatprep.subr.mxu0 0.0
      %1625 = vmatpush1.msra.mxu0 %v1317
      %1626 = vmatprep.subr.mxu0 0.0
      %1627 = vmatpush1.msra.mxu0 %v1318
      %1628 = vmatprep.subr.mxu0 0.0
      %1629 = vmatpush1.msra.mxu0 %v1319
      %1630 = vmatprep.subr.mxu0 0.0
      %1631 = vmatpush1.msra.mxu0 %v1320
      %1632 = vmatprep.subr.mxu0 0.0
      %1633 = vmatpush1.msra.mxu0 %v1321
      %1634 = vmatprep.subr.mxu0 0.0
      %1635 = vmatpush1.msra.mxu0 %v1322
      %1636 = vmatprep.subr.mxu0 0.0
      %1637 = vmatpush1.msra.mxu0 %v1323
      %1638 = vmatprep.subr.mxu0 0.0
      %1639 = vmatpush1.msra.mxu0 %v1324
      %1640 = vmatprep.subr.mxu0 0.0
      %1641 = vmatpush1.msra.mxu0 %v1325
      %1642 = vmatprep.subr.mxu0 0.0
      %1643 = vmatpush1.msra.mxu0 %v1326
      %1644 = vmatprep.subr.mxu0 0.0
      %1645 = vmatpush1.msra.mxu0 %v1327
      %1646 = vmatprep.subr.mxu0 0.0
      %1647 = vmatpush1.msra.mxu0 %v1328
      %1648 = vmatprep.subr.mxu0 0.0
      %1649 = vmatpush1.msra.mxu0 %v1329
      %1650 = vmatprep.subr.mxu0 0.0
      %1651 = vmatpush1.msra.mxu0 %v1330
      %1652 = vmatprep.subr.mxu0 0.0
      %1653 = vmatpush1.msra.mxu0 %v1331
      %1654 = vmatprep.subr.mxu0 0.0
      %1655 = vmatpush1.msra.mxu0 %v1332
      %1656 = vmatprep.subr.mxu0 0.0
      %1657 = vmatpush1.msra.mxu0 %v1333
      %1658 = vmatprep.subr.mxu0 0.0
      %1659 = vmatpush1.msra.mxu0 %v1334
      %1660 = vmatprep.subr.mxu0 0.0
      %1661 = vmatpush1.msra.mxu0 %v1335
      %1662 = vmatprep.subr.mxu0 0.0
      %1663 = vmatpush1.msra.mxu0 %v1336
      %1664 = vmatprep.subr.mxu0 0.0
      %1665 = vmatpush1.msra.mxu0 %v1337
      %1666 = vmatprep.subr.mxu0 0.0
      %1667 = vmatpush1.msra.mxu0 %v1338
      %1668 = vmatprep.subr.mxu0 0.0
      %1669 = vmatpush1.msra.mxu0 %v1339
      %1670 = vmatprep.subr.mxu0 0.0
      %1671 = vmatpush1.msra.mxu0 %v1340
      %1672 = vmatprep.subr.mxu0 0.0
      %1673 = vmatpush1.msra.mxu0 %v1341
      %1674 = vmatprep.subr.mxu0 0.0
      %1675 = vmatpush1.msra.mxu0 %v1342
      %1676 = vmatprep.mubr.f32.mxu0 %v1597
      %1677 = vmatmul.mubr.f32.gmra.mrb[0].mxu0 %v1596
      %v1678 = vpop.f32.mrb[0].mxu0
      %v1679 = vadd.f32 0.0, %v1678
      %v1680 = vpop.f32.mrb[0].mxu0
      %1681 = vmatprep.mubr.f32.mxu0 %v1599
      %1682 = vmatmul.mubr.f32.gmra.mrb[0].mxu0 %v1598
      %v1683 = vpop.f32.mrb[0].mxu0
      %v1684 = vadd.f32 0.0, %v1683
      %v1685 = vpop.f32.mrb[0].mxu0
      %1686 = vmatprep.mubr.f32.mxu0 %v1601
      %1687 = vmatmul.mubr.f32.gmra.mrb[0].mxu0 %v1600
      %v1688 = vpop.f32.mrb[0].mxu0
      %v1689 = vadd.f32 0.0, %v1688
      %v1690 = vpop.f32.mrb[0].mxu0
      %1691 = vmatprep.mubr.f32.mxu0 %v1603
      %1692 = vmatmul.mubr.f32.gmra.mrb[0].mxu0 %v1602
      %v1693 = vpop.f32.mrb[0].mxu0
      %v1694 = vadd.f32 0.0, %v1693
      %v1695 = vpop.f32.mrb[0].mxu0
      %1696 = vmatprep.mubr.f32.mxu0 %v1605
      %1697 = vmatmul.mubr.f32.gmra.mrb[0].mxu0 %v1604
      %v1698 = vpop.f32.mrb[0].mxu0
      %v1699 = vadd.f32 0.0, %v1698
      %v1700 = vpop.f32.mrb[0].mxu0
      %1701 = vmatprep.mubr.f32.mxu0 %v1607
      %1702 = vmatmul.mubr.f32.gmra.mrb[0].mxu0 %v1606
      %v1703 = vpop.f32.mrb[0].mxu0
      %v1704 = vadd.f32 0.0, %v1703
      %v1705 = vpop.f32.mrb[0].mxu0
      %1706 = vmatprep.mubr.f32.mxu0 %v1609
      %1707 = vmatmul.mubr.f32.gmra.mrb[0].mxu0 %v1608
      %v1708 = vpop.f32.mrb[0].mxu0
      %v1709 = vadd.f32 0.0, %v1708
      %v1710 = vpop.f32.mrb[0].mxu0
      %1711 = vmatprep.mubr.f32.mxu0 %v1611
      %1712 = vmatmul.mubr.f32.gmra.mrb[0].mxu0 %v1610
      %v1713 = vpop.f32.mrb[0].mxu0
      %v1714 = vadd.f32 0.0, %v1713
      %v1715 = vpop.f32.mrb[0].mxu0
      %1716 = vdwg.mxu0
      %v1717 = vmul.f32 %v1679, 0.17677669
      %v1718 = vmul.f32 %v1684, 0.17677669
      %v1719 = vmul.f32 %v1689, 0.17677669
      %v1720 = vmul.f32 %v1694, 0.17677669
      %v1721 = vmul.f32 %v1699, 0.17677669
      %v1722 = vmul.f32 %v1704, 0.17677669
      %v1723 = vmul.f32 %v1709, 0.17677669
      %v1724 = vmul.f32 %v1714, 0.17677669
      %s1725 = scalar_lea.vmem %s623, 1
      %v1726 = vld [vmem:[%s1725] sm:$0x1]
      %v1728 = vlaneseq
      %v1729 = vshrl.u32 %v1728, 7
      %v1730 = vsub.s32 0, %v1729
      %v1731 = vrot.slane %v1726, %v1730
      %1732 = vset.pattern.permute.xlu0 0
      %1733 = vperm.xlu0 %1732, %v1731
      %v1734 = vpop.permute.xlu0 %1733
      %v1736 = vadd.f32 %v1717, %v1734
      %v1737 = vadd.f32 %v1718, %v1734
      %v1738 = vadd.f32 %v1719, %v1734
      %v1739 = vadd.f32 %v1720, %v1734
      %v1740 = vadd.f32 %v1721, %v1734
      %v1741 = vadd.f32 %v1722, %v1734
      %v1742 = vadd.f32 %v1723, %v1734
      %v1743 = vadd.f32 %v1724, %v1734
      %vm1744 = vcmask 64512
      %v1745 = vsel %vm1744, %v1466, -inf
      %v1746 = vsel %vm1744, %v1736, -inf
      %v1747 = vmax.f32 %v1745, %v1746
      %v1748 = vsel %vm1744, %v1467, -inf
      %v1749 = vsel %vm1744, %v1737, -inf
      %v1750 = vmax.f32 %v1748, %v1749
      %v1751 = vsel %vm1744, %v1468, -inf
      %v1752 = vsel %vm1744, %v1738, -inf
      %v1753 = vmax.f32 %v1751, %v1752
      %v1754 = vsel %vm1744, %v1469, -inf
      %v1755 = vsel %vm1744, %v1739, -inf
      %v1756 = vmax.f32 %v1754, %v1755
      %v1757 = vsel %vm1744, %v1470, -inf
      %v1758 = vsel %vm1744, %v1740, -inf
      %v1759 = vmax.f32 %v1757, %v1758
      %v1760 = vsel %vm1744, %v1471, -inf
      %v1761 = vsel %vm1744, %v1741, -inf
      %v1762 = vmax.f32 %v1760, %v1761
      %v1763 = vsel %vm1744, %v1472, -inf
      %v1764 = vsel %vm1744, %v1742, -inf
      %v1765 = vmax.f32 %v1763, %v1764
      %v1766 = vsel %vm1744, %v1473, -inf
      %v1767 = vsel %vm1744, %v1743, -inf
      %v1768 = vmax.f32 %v1766, %v1767
      %v1769 = vsub.f32 %v1466, %v1747
      %v1770 = vsub.f32 %v1467, %v1750
      %v1771 = vsub.f32 %v1468, %v1753
      %v1772 = vsub.f32 %v1469, %v1756
      %v1773 = vsub.f32 %v1470, %v1759
      %v1774 = vsub.f32 %v1471, %v1762
      %v1775 = vsub.f32 %v1472, %v1765
      %v1776 = vsub.f32 %v1473, %v1768
      %v1777 = vsub.f32 %v1736, %v1747
      %v1778 = vsub.f32 %v1737, %v1750
      %v1779 = vsub.f32 %v1738, %v1753
      %v1780 = vsub.f32 %v1739, %v1756
      %v1781 = vsub.f32 %v1740, %v1759
      %v1782 = vsub.f32 %v1741, %v1762
      %v1783 = vsub.f32 %v1742, %v1765
      %v1784 = vsub.f32 %v1743, %v1768
      %v1785 = vmul.f32 %v1769, 1.442695
      %v1786 = vpow.pop %v1785
      %v1787 = vmul.f32 %v1770, 1.442695
      %v1788 = vpow.pop %v1787
      %v1789 = vmul.f32 %v1771, 1.442695
      %v1790 = vpow.pop %v1789
      %v1791 = vmul.f32 %v1772, 1.442695
      %v1792 = vpow.pop %v1791
      %v1793 = vmul.f32 %v1773, 1.442695
      %v1794 = vpow.pop %v1793
      %v1795 = vmul.f32 %v1774, 1.442695
      %v1796 = vpow.pop %v1795
      %v1797 = vmul.f32 %v1775, 1.442695
      %v1798 = vpow.pop %v1797
      %v1799 = vmul.f32 %v1776, 1.442695
      %v1800 = vpow.pop %v1799
      %v1801 = vmul.f32 %v1777, 1.442695
      %v1802 = vpow.pop %v1801
      %v1803 = vmul.f32 %v1778, 1.442695
      %v1804 = vpow.pop %v1803
      %v1805 = vmul.f32 %v1779, 1.442695
      %v1806 = vpow.pop %v1805
      %v1807 = vmul.f32 %v1780, 1.442695
      %v1808 = vpow.pop %v1807
      %v1809 = vmul.f32 %v1781, 1.442695
      %v1810 = vpow.pop %v1809
      %v1811 = vmul.f32 %v1782, 1.442695
      %v1812 = vpow.pop %v1811
      %v1813 = vmul.f32 %v1783, 1.442695
      %v1814 = vpow.pop %v1813
      %v1815 = vmul.f32 %v1784, 1.442695
      %v1816 = vpow.pop %v1815
      %v1817 = vsel %vm1744, %v1786, 0.0
      %v1818 = vsel %vm1744, %v1802, 0.0
      %v1819 = vadd.f32 %v1817, %v1818
      %v1820 = vsel %vm1744, %v1788, 0.0
      %v1821 = vsel %vm1744, %v1804, 0.0
      %v1822 = vadd.f32 %v1820, %v1821
      %v1823 = vsel %vm1744, %v1790, 0.0
      %v1824 = vsel %vm1744, %v1806, 0.0
      %v1825 = vadd.f32 %v1823, %v1824
      %v1826 = vsel %vm1744, %v1792, 0.0
      %v1827 = vsel %vm1744, %v1808, 0.0
      %v1828 = vadd.f32 %v1826, %v1827
      %v1829 = vsel %vm1744, %v1794, 0.0
      %v1830 = vsel %vm1744, %v1810, 0.0
      %v1831 = vadd.f32 %v1829, %v1830
      %v1832 = vsel %vm1744, %v1796, 0.0
      %v1833 = vsel %vm1744, %v1812, 0.0
      %v1834 = vadd.f32 %v1832, %v1833
      %v1835 = vsel %vm1744, %v1798, 0.0
      %v1836 = vsel %vm1744, %v1814, 0.0
      %v1837 = vadd.f32 %v1835, %v1836
      %v1838 = vsel %vm1744, %v1800, 0.0
      %v1839 = vsel %vm1744, %v1816, 0.0
      %v1840 = vadd.f32 %v1838, %v1839
      %v1841 = vrcp.pop %v1819
      %v1842 = vrcp.pop %v1822
      %v1843 = vrcp.pop %v1825
      %v1844 = vrcp.pop %v1828
      %v1845 = vrcp.pop %v1831
      %v1846 = vrcp.pop %v1834
      %v1847 = vrcp.pop %v1837
      %v1848 = vrcp.pop %v1840
      %v1849 = vmul.f32 %v1786, %v1841
      %v1850 = vmul.f32 %v1788, %v1842
      %v1851 = vmul.f32 %v1790, %v1843
      %v1852 = vmul.f32 %v1792, %v1844
      %v1853 = vmul.f32 %v1794, %v1845
      %v1854 = vmul.f32 %v1796, %v1846
      %v1855 = vmul.f32 %v1798, %v1847
      %v1856 = vmul.f32 %v1800, %v1848
      %v1857 = vmul.f32 %v1802, %v1841
      %v1858 = vmul.f32 %v1804, %v1842
      %v1859 = vmul.f32 %v1806, %v1843
      %v1860 = vmul.f32 %v1808, %v1844
      %v1861 = vmul.f32 %v1810, %v1845
      %v1862 = vmul.f32 %v1812, %v1846
      %v1863 = vmul.f32 %v1814, %v1847
      %v1864 = vmul.f32 %v1816, %v1848
      %1865 = vst.msk [vmem:[%s642] sm:$0xff] %vm1744, %v1849
      %1866 = vst.msk [vmem:[%s642 + $0x8] sm:$0xff] %vm1744, %v1850
      %1867 = vst.msk [vmem:[%s642 + $0x10] sm:$0xff] %vm1744, %v1851
      %1868 = vst.msk [vmem:[%s642 + $0x18] sm:$0xff] %vm1744, %v1852
      %1869 = vst.msk [vmem:[%s642 + $0x20] sm:$0xff] %vm1744, %v1853
      %1870 = vst.msk [vmem:[%s642 + $0x28] sm:$0xff] %vm1744, %v1854
      %1871 = vst.msk [vmem:[%s642 + $0x30] sm:$0xff] %vm1744, %v1855
      %1872 = vst.msk [vmem:[%s642 + $0x38] sm:$0xff] %vm1744, %v1856
      %1873 = vst.msk [vmem:[%s642 + $0x40] sm:$0xff] %vm1744, %v1857
      %1874 = vst.msk [vmem:[%s642 + $0x48] sm:$0xff] %vm1744, %v1858
      %1875 = vst.msk [vmem:[%s642 + $0x50] sm:$0xff] %vm1744, %v1859
      %1876 = vst.msk [vmem:[%s642 + $0x58] sm:$0xff] %vm1744, %v1860
      %1877 = vst.msk [vmem:[%s642 + $0x60] sm:$0xff] %vm1744, %v1861
      %1878 = vst.msk [vmem:[%s642 + $0x68] sm:$0xff] %vm1744, %v1862
      %1879 = vst.msk [vmem:[%s642 + $0x70] sm:$0xff] %vm1744, %v1863
      %1880 = vst.msk [vmem:[%s642 + $0x78] sm:$0xff] %vm1744, %v1864
      %v1881 = vld [vmem:[%s618] sm:$0xff]
      %v1882 = vld [vmem:[%s618 + $0x8] sm:$0xff]
      %v1883 = vld [vmem:[%s618 + $0x10] sm:$0xff]
      %v1884 = vld [vmem:[%s618 + $0x18] sm:$0xff]
      %v1885 = vld [vmem:[%s618 + $0x20] sm:$0xff]
      %v1886 = vld [vmem:[%s618 + $0x28] sm:$0xff]
      %v1887 = vld [vmem:[%s618 + $0x30] sm:$0xff]
      %v1888 = vld [vmem:[%s618 + $0x38] sm:$0xff]
      %v1889 = vld [vmem:[%s7] sm:$0xff]
      %v1890 = vld [vmem:[%s7 + $0x8] sm:$0xff]
      %v1891 = vld [vmem:[%s7 + $0x10] sm:$0xff]
      %v1892 = vld [vmem:[%s7 + $0x18] sm:$0xff]
      %v1893 = vld [vmem:[%s7 + $0x20] sm:$0xff]
      %v1894 = vld [vmem:[%s7 + $0x28] sm:$0xff]
      %v1895 = vld [vmem:[%s7 + $0x30] sm:$0xff]
      %v1896 = vld [vmem:[%s7 + $0x38] sm:$0xff]
      %v1897 = vld [vmem:[%s7 + $0x40] sm:$0xff]
      %v1898 = vld [vmem:[%s7 + $0x48] sm:$0xff]
      %v1899 = vld [vmem:[%s7 + $0x50] sm:$0xff]
      %v1900 = vld [vmem:[%s7 + $0x58] sm:$0xff]
      %v1901 = vld [vmem:[%s7 + $0x60] sm:$0xff]
      %v1902 = vld [vmem:[%s7 + $0x68] sm:$0xff]
      %v1903 = vld [vmem:[%s7 + $0x70] sm:$0xff]
      %v1904 = vld [vmem:[%s7 + $0x78] sm:$0xff]
      %v1905 = vld [vmem:[%s7 + $0x80] sm:$0xff]
      %v1906 = vld [vmem:[%s7 + $0x88] sm:$0xff]
      %v1907 = vld [vmem:[%s7 + $0x90] sm:$0xff]
      %v1908 = vld [vmem:[%s7 + $0x98] sm:$0xff]
      %v1909 = vld [vmem:[%s7 + $0xa0] sm:$0xff]
      %v1910 = vld [vmem:[%s7 + $0xa8] sm:$0xff]
      %v1911 = vld [vmem:[%s7 + $0xb0] sm:$0xff]
      %v1912 = vld [vmem:[%s7 + $0xb8] sm:$0xff]
      %v1913 = vld [vmem:[%s7 + $0xc0] sm:$0xff]
      %v1914 = vld [vmem:[%s7 + $0xc8] sm:$0xff]
      %v1915 = vld [vmem:[%s7 + $0xd0] sm:$0xff]
      %v1916 = vld [vmem:[%s7 + $0xd8] sm:$0xff]
      %v1917 = vld [vmem:[%s7 + $0xe0] sm:$0xff]
      %v1918 = vld [vmem:[%s7 + $0xe8] sm:$0xff]
      %v1919 = vld [vmem:[%s7 + $0xf0] sm:$0xff]
      %v1920 = vld [vmem:[%s7 + $0xf8] sm:$0xff]
      %v1921 = vld [vmem:[%s8] sm:$0x3]
      %v1923 = vlaneseq
      %v1924 = vshrl.u32 %v1923, 7
      %v1925 = vsub.s32 0, %v1924
      %v1926 = vrot.slane %v1921, %v1925
      %v1927 = vlaneseq
      %v1928 = vshrl.u32 %v1927, 7
      %v1929 = vsub.s32 1, %v1928
      %v1930 = vrot.slane %v1921, %v1929
      %v1941 = vunpack.c.l.b16 %v1881
      %v1942 = vunpack.c.h.b16 %v1881
      %v1943 = vunpack.c.l.b16 %v1882
      %v1944 = vunpack.c.h.b16 %v1882
      %v1945 = vunpack.c.l.b16 %v1883
      %v1946 = vunpack.c.h.b16 %v1883
      %v1947 = vunpack.c.l.b16 %v1884
      %v1948 = vunpack.c.h.b16 %v1884
      %v1949 = vunpack.c.l.b16 %v1885
      %v1950 = vunpack.c.h.b16 %v1885
      %v1951 = vunpack.c.l.b16 %v1886
      %v1952 = vunpack.c.h.b16 %v1886
      %v1953 = vunpack.c.l.b16 %v1887
      %v1954 = vunpack.c.h.b16 %v1887
      %v1955 = vunpack.c.l.b16 %v1888
      %v1956 = vunpack.c.h.b16 %v1888
      %v1957 = vpack.c.b16 %v1943, %v1941
      %v1958 = vpack.c.b16 %v1944, %v1942
      %v1959 = vpack.c.b16 %v1947, %v1945
      %v1960 = vpack.c.b16 %v1948, %v1946
      %v1961 = vpack.c.b16 %v1951, %v1949
      %v1962 = vpack.c.b16 %v1952, %v1950
      %v1963 = vpack.c.b16 %v1955, %v1953
      %v1964 = vpack.c.b16 %v1956, %v1954
      %v2005 = vunpack.c.l.b16 %v1889
      %v2006 = vunpack.c.h.b16 %v1889
      %v2007 = vunpack.c.l.b16 %v1890
      %v2008 = vunpack.c.h.b16 %v1890
      %v2009 = vunpack.c.l.b16 %v1891
      %v2010 = vunpack.c.h.b16 %v1891
      %v2011 = vunpack.c.l.b16 %v1892
      %v2012 = vunpack.c.h.b16 %v1892
      %v2013 = vunpack.c.l.b16 %v1893
      %v2014 = vunpack.c.h.b16 %v1893
      %v2015 = vunpack.c.l.b16 %v1894
      %v2016 = vunpack.c.h.b16 %v1894
      %v2017 = vunpack.c.l.b16 %v1895
      %v2018 = vunpack.c.h.b16 %v1895
      %v2019 = vunpack.c.l.b16 %v1896
      %v2020 = vunpack.c.h.b16 %v1896
      %v2021 = vunpack.c.l.b16 %v1897
      %v2022 = vunpack.c.h.b16 %v1897
      %v2023 = vunpack.c.l.b16 %v1898
      %v2024 = vunpack.c.h.b16 %v1898
      %v2025 = vunpack.c.l.b16 %v1899
      %v2026 = vunpack.c.h.b16 %v1899
      %v2027 = vunpack.c.l.b16 %v1900
      %v2028 = vunpack.c.h.b16 %v1900
      %v2029 = vunpack.c.l.b16 %v1901
      %v2030 = vunpack.c.h.b16 %v1901
      %v2031 = vunpack.c.l.b16 %v1902
      %v2032 = vunpack.c.h.b16 %v1902
      %v2033 = vunpack.c.l.b16 %v1903
      %v2034 = vunpack.c.h.b16 %v1903
      %v2035 = vunpack.c.l.b16 %v1904
      %v2036 = vunpack.c.h.b16 %v1904
      %v2037 = vunpack.c.l.b16 %v1905
      %v2038 = vunpack.c.h.b16 %v1905
      %v2039 = vunpack.c.l.b16 %v1906
      %v2040 = vunpack.c.h.b16 %v1906
      %v2041 = vunpack.c.l.b16 %v1907
      %v2042 = vunpack.c.h.b16 %v1907
      %v2043 = vunpack.c.l.b16 %v1908
      %v2044 = vunpack.c.h.b16 %v1908
      %v2045 = vunpack.c.l.b16 %v1909
      %v2046 = vunpack.c.h.b16 %v1909
      %v2047 = vunpack.c.l.b16 %v1910
      %v2048 = vunpack.c.h.b16 %v1910
      %v2049 = vunpack.c.l.b16 %v1911
      %v2050 = vunpack.c.h.b16 %v1911
      %v2051 = vunpack.c.l.b16 %v1912
      %v2052 = vunpack.c.h.b16 %v1912
      %v2053 = vunpack.c.l.b16 %v1913
      %v2054 = vunpack.c.h.b16 %v1913
      %v2055 = vunpack.c.l.b16 %v1914
      %v2056 = vunpack.c.h.b16 %v1914
      %v2057 = vunpack.c.l.b16 %v1915
      %v2058 = vunpack.c.h.b16 %v1915
      %v2059 = vunpack.c.l.b16 %v1916
      %v2060 = vunpack.c.h.b16 %v1916
      %v2061 = vunpack.c.l.b16 %v1917
      %v2062 = vunpack.c.h.b16 %v1917
      %v2063 = vunpack.c.l.b16 %v1918
      %v2064 = vunpack.c.h.b16 %v1918
      %v2065 = vunpack.c.l.b16 %v1919
      %v2066 = vunpack.c.h.b16 %v1919
      %v2067 = vunpack.c.l.b16 %v1920
      %v2068 = vunpack.c.h.b16 %v1920
      %v2069 = vpack.c.b16 %v2007, %v2005
      %v2070 = vpack.c.b16 %v2008, %v2006
      %v2071 = vpack.c.b16 %v2011, %v2009
      %v2072 = vpack.c.b16 %v2012, %v2010
      %v2073 = vpack.c.b16 %v2015, %v2013
      %v2074 = vpack.c.b16 %v2016, %v2014
      %v2075 = vpack.c.b16 %v2019, %v2017
      %v2076 = vpack.c.b16 %v2020, %v2018
      %v2077 = vpack.c.b16 %v2023, %v2021
      %v2078 = vpack.c.b16 %v2024, %v2022
      %v2079 = vpack.c.b16 %v2027, %v2025
      %v2080 = vpack.c.b16 %v2028, %v2026
      %v2081 = vpack.c.b16 %v2031, %v2029
      %v2082 = vpack.c.b16 %v2032, %v2030
      %v2083 = vpack.c.b16 %v2035, %v2033
      %v2084 = vpack.c.b16 %v2036, %v2034
      %v2085 = vpack.c.b16 %v2039, %v2037
      %v2086 = vpack.c.b16 %v2040, %v2038
      %v2087 = vpack.c.b16 %v2043, %v2041
      %v2088 = vpack.c.b16 %v2044, %v2042
      %v2089 = vpack.c.b16 %v2047, %v2045
      %v2090 = vpack.c.b16 %v2048, %v2046
      %v2091 = vpack.c.b16 %v2051, %v2049
      %v2092 = vpack.c.b16 %v2052, %v2050
      %v2093 = vpack.c.b16 %v2055, %v2053
      %v2094 = vpack.c.b16 %v2056, %v2054
      %v2095 = vpack.c.b16 %v2059, %v2057
      %v2096 = vpack.c.b16 %v2060, %v2058
      %v2097 = vpack.c.b16 %v2063, %v2061
      %v2098 = vpack.c.b16 %v2064, %v2062
      %v2099 = vpack.c.b16 %v2067, %v2065
      %v2100 = vpack.c.b16 %v2068, %v2066
      %2133 = vmatprep.subr.bf16.mxu0 %v2070
      %2134 = vmatpush1.bf16.msra.mxu0 %v2069
      %2135 = vmatprep.subr.bf16.mxu0 %v2072
      %2136 = vmatpush1.bf16.msra.mxu0 %v2071
      %2137 = vmatprep.subr.bf16.mxu0 %v2074
      %2138 = vmatpush1.bf16.msra.mxu0 %v2073
      %2139 = vmatprep.subr.bf16.mxu0 %v2076
      %2140 = vmatpush1.bf16.msra.mxu0 %v2075
      %2141 = vmatprep.subr.bf16.mxu0 %v2078
      %2142 = vmatpush1.bf16.msra.mxu0 %v2077
      %2143 = vmatprep.subr.bf16.mxu0 %v2080
      %2144 = vmatpush1.bf16.msra.mxu0 %v2079
      %2145 = vmatprep.subr.bf16.mxu0 %v2082
      %2146 = vmatpush1.bf16.msra.mxu0 %v2081
      %2147 = vmatprep.subr.bf16.mxu0 %v2084
      %2148 = vmatpush1.bf16.msra.mxu0 %v2083
      %2149 = vmatprep.subr.bf16.mxu0 %v2086
      %2150 = vmatpush1.bf16.msra.mxu0 %v2085
      %2151 = vmatprep.subr.bf16.mxu0 %v2088
      %2152 = vmatpush1.bf16.msra.mxu0 %v2087
      %2153 = vmatprep.subr.bf16.mxu0 %v2090
      %2154 = vmatpush1.bf16.msra.mxu0 %v2089
      %2155 = vmatprep.subr.bf16.mxu0 %v2092
      %2156 = vmatpush1.bf16.msra.mxu0 %v2091
      %2157 = vmatprep.subr.bf16.mxu0 %v2094
      %2158 = vmatpush1.bf16.msra.mxu0 %v2093
      %2159 = vmatprep.subr.bf16.mxu0 %v2096
      %2160 = vmatpush1.bf16.msra.mxu0 %v2095
      %2161 = vmatprep.subr.bf16.mxu0 %v2098
      %2162 = vmatpush1.bf16.msra.mxu0 %v2097
      %2163 = vmatprep.subr.bf16.mxu0 %v2100
      %2164 = vmatpush1.bf16.msra.mxu0 %v2099
      %2165 = vmatprep.mubr.bf16.mxu0 %v1958
      %2166 = vmatmul.mubr.bf16.gmra.mrb[0].mxu0 %v1957
      %v2167 = vpop.f32.mrb[0].mxu0
      %v2168 = vadd.f32 %v1926, %v2167
      %v2169 = vpop.f32.mrb[0].mxu0
      %v2170 = vadd.f32 %v1930, %v2169
      %v2171 = vpop.f32.mrb[0].mxu0
      %v2172 = vadd.f32 %v1926, %v2171
      %v2173 = vpop.f32.mrb[0].mxu0
      %v2174 = vadd.f32 %v1930, %v2173
      %2175 = vmatprep.mubr.bf16.mxu0 %v1960
      %2176 = vmatmul.mubr.bf16.gmra.mrb[0].mxu0 %v1959
      %v2177 = vpop.f32.mrb[0].mxu0
      %v2178 = vadd.f32 %v1926, %v2177
      %v2179 = vpop.f32.mrb[0].mxu0
      %v2180 = vadd.f32 %v1930, %v2179
      %v2181 = vpop.f32.mrb[0].mxu0
      %v2182 = vadd.f32 %v1926, %v2181
      %v2183 = vpop.f32.mrb[0].mxu0
      %v2184 = vadd.f32 %v1930, %v2183
      %2185 = vmatprep.mubr.bf16.mxu0 %v1962
      %2186 = vmatmul.mubr.bf16.gmra.mrb[0].mxu0 %v1961
      %v2187 = vpop.f32.mrb[0].mxu0
      %v2188 = vadd.f32 %v1926, %v2187
      %v2189 = vpop.f32.mrb[0].mxu0
      %v2190 = vadd.f32 %v1930, %v2189
      %v2191 = vpop.f32.mrb[0].mxu0
      %v2192 = vadd.f32 %v1926, %v2191
      %v2193 = vpop.f32.mrb[0].mxu0
      %v2194 = vadd.f32 %v1930, %v2193
      %2195 = vmatprep.mubr.bf16.mxu0 %v1964
      %2196 = vmatmul.mubr.bf16.gmra.mrb[0].mxu0 %v1963
      %v2197 = vpop.f32.mrb[0].mxu0
      %v2198 = vadd.f32 %v1926, %v2197
      %v2199 = vpop.f32.mrb[0].mxu0
      %v2200 = vadd.f32 %v1930, %v2199
      %v2201 = vpop.f32.mrb[0].mxu0
      %v2202 = vadd.f32 %v1926, %v2201
      %v2203 = vpop.f32.mrb[0].mxu0
      %v2204 = vadd.f32 %v1930, %v2203
      %2205 = vdwg.mxu0
      %v2206 = vld [vmem:[%s642] sm:$0xff]
      %v2207 = vld [vmem:[%s642 + $0x8] sm:$0xff]
      %v2208 = vld [vmem:[%s642 + $0x10] sm:$0xff]
      %v2209 = vld [vmem:[%s642 + $0x18] sm:$0xff]
      %v2210 = vld [vmem:[%s642 + $0x20] sm:$0xff]
      %v2211 = vld [vmem:[%s642 + $0x28] sm:$0xff]
      %v2212 = vld [vmem:[%s642 + $0x30] sm:$0xff]
      %v2213 = vld [vmem:[%s642 + $0x38] sm:$0xff]
      %v2214 = vld [vmem:[%s10] sm:$0xff]
      %v2215 = vld [vmem:[%s10 + $0x8] sm:$0xff]
      %v2217 = vsel %vm1744, %v2206, 0
      %v2220 = vsel %vm1744, %v2207, 0
      %v2223 = vsel %vm1744, %v2208, 0
      %v2226 = vsel %vm1744, %v2209, 0
      %v2229 = vsel %vm1744, %v2210, 0
      %v2232 = vsel %vm1744, %v2211, 0
      %v2235 = vsel %vm1744, %v2212, 0
      %v2238 = vsel %vm1744, %v2213, 0
      %2240 = vmatprep.subr.mxu0 %v2215
      %2241 = vmatpush1.msra.mxu0 %v2214
      %2242 = vmatprep.subr.mxu0 0.0
      %2243 = vmatpush1.msra.mxu0 0.0
      %2244 = vmatprep.subr.mxu0 0.0
      %2245 = vmatpush1.msra.mxu0 0.0
      %2246 = vmatprep.subr.mxu0 0.0
      %2247 = vmatpush1.msra.mxu0 0.0
      %2248 = vmatprep.subr.mxu0 0.0
      %2249 = vmatpush1.msra.mxu0 0.0
      %2250 = vmatprep.subr.mxu0 0.0
      %2251 = vmatpush1.msra.mxu0 0.0
      %2252 = vmatprep.subr.mxu0 0.0
      %2253 = vmatpush1.msra.mxu0 0.0
      %2254 = vmatprep.subr.mxu0 0.0
      %2255 = vmatpush1.msra.mxu0 0.0
      %2256 = vmatprep.subr.mxu0 0.0
      %2257 = vmatpush1.msra.mxu0 0.0
      %2258 = vmatprep.subr.mxu0 0.0
      %2259 = vmatpush1.msra.mxu0 0.0
      %2260 = vmatprep.subr.mxu0 0.0
      %2261 = vmatpush1.msra.mxu0 0.0
      %2262 = vmatprep.subr.mxu0 0.0
      %2263 = vmatpush1.msra.mxu0 0.0
      %2264 = vmatprep.subr.mxu0 0.0
      %2265 = vmatpush1.msra.mxu0 0.0
      %2266 = vmatprep.subr.mxu0 0.0
      %2267 = vmatpush1.msra.mxu0 0.0
      %2268 = vmatprep.subr.mxu0 0.0
      %2269 = vmatpush1.msra.mxu0 0.0
      %2270 = vmatprep.subr.mxu0 0.0
      %2271 = vmatpush1.msra.mxu0 0.0
      %2272 = vmatprep.subr.mxu0 0.0
      %2273 = vmatpush1.msra.mxu0 0.0
      %2274 = vmatprep.subr.mxu0 0.0
      %2275 = vmatpush1.msra.mxu0 0.0
      %2276 = vmatprep.subr.mxu0 0.0
      %2277 = vmatpush1.msra.mxu0 0.0
      %2278 = vmatprep.subr.mxu0 0.0
      %2279 = vmatpush1.msra.mxu0 0.0
      %2280 = vmatprep.subr.mxu0 0.0
      %2281 = vmatpush1.msra.mxu0 0.0
      %2282 = vmatprep.subr.mxu0 0.0
      %2283 = vmatpush1.msra.mxu0 0.0
      %2284 = vmatprep.subr.mxu0 0.0
      %2285 = vmatpush1.msra.mxu0 0.0
      %2286 = vmatprep.subr.mxu0 0.0
      %2287 = vmatpush1.msra.mxu0 0.0
      %2288 = vmatprep.subr.mxu0 0.0
      %2289 = vmatpush1.msra.mxu0 0.0
      %2290 = vmatprep.subr.mxu0 0.0
      %2291 = vmatpush1.msra.mxu0 0.0
      %2292 = vmatprep.subr.mxu0 0.0
      %2293 = vmatpush1.msra.mxu0 0.0
      %2294 = vmatprep.subr.mxu0 0.0
      %2295 = vmatpush1.msra.mxu0 0.0
      %2296 = vmatprep.subr.mxu0 0.0
      %2297 = vmatpush1.msra.mxu0 0.0
      %2298 = vmatprep.subr.mxu0 0.0
      %2299 = vmatpush1.msra.mxu0 0.0
      %2300 = vmatprep.subr.mxu0 0.0
      %2301 = vmatpush1.msra.mxu0 0.0
      %2302 = vmatprep.subr.mxu0 0.0
      %2303 = vmatpush1.msra.mxu0 0.0
      %2304 = vmatprep.mubr.f32.mxu0 0.0
      %2305 = vmatmul.mubr.f32.gmra.mrb[0].mxu0 %v2217
      %v2306 = vpop.f32.mrb[0].mxu0
      %v2307 = vadd.f32 0.0, %v2306
      %v2308 = vpop.f32.mrb[0].mxu0
      %v2309 = vadd.f32 0.0, %v2308
      %2310 = vmatprep.mubr.f32.mxu0 0.0
      %2311 = vmatmul.mubr.f32.gmra.mrb[0].mxu0 %v2220
      %v2312 = vpop.f32.mrb[0].mxu0
      %v2313 = vadd.f32 0.0, %v2312
      %v2314 = vpop.f32.mrb[0].mxu0
      %v2315 = vadd.f32 0.0, %v2314
      %2316 = vmatprep.mubr.f32.mxu0 0.0
      %2317 = vmatmul.mubr.f32.gmra.mrb[0].mxu0 %v2223
      %v2318 = vpop.f32.mrb[0].mxu0
      %v2319 = vadd.f32 0.0, %v2318
      %v2320 = vpop.f32.mrb[0].mxu0
      %v2321 = vadd.f32 0.0, %v2320
      %2322 = vmatprep.mubr.f32.mxu0 0.0
      %2323 = vmatmul.mubr.f32.gmra.mrb[0].mxu0 %v2226
      %v2324 = vpop.f32.mrb[0].mxu0
      %v2325 = vadd.f32 0.0, %v2324
      %v2326 = vpop.f32.mrb[0].mxu0
      %v2327 = vadd.f32 0.0, %v2326
      %2328 = vmatprep.mubr.f32.mxu0 0.0
      %2329 = vmatmul.mubr.f32.gmra.mrb[0].mxu0 %v2229
      %v2330 = vpop.f32.mrb[0].mxu0
      %v2331 = vadd.f32 0.0, %v2330
      %v2332 = vpop.f32.mrb[0].mxu0
      %v2333 = vadd.f32 0.0, %v2332
      %2334 = vmatprep.mubr.f32.mxu0 0.0
      %2335 = vmatmul.mubr.f32.gmra.mrb[0].mxu0 %v2232
      %v2336 = vpop.f32.mrb[0].mxu0
      %v2337 = vadd.f32 0.0, %v2336
      %v2338 = vpop.f32.mrb[0].mxu0
      %v2339 = vadd.f32 0.0, %v2338
      %2340 = vmatprep.mubr.f32.mxu0 0.0
      %2341 = vmatmul.mubr.f32.gmra.mrb[0].mxu0 %v2235
      %v2342 = vpop.f32.mrb[0].mxu0
      %v2343 = vadd.f32 0.0, %v2342
      %v2344 = vpop.f32.mrb[0].mxu0
      %v2345 = vadd.f32 0.0, %v2344
      %2346 = vmatprep.mubr.f32.mxu0 0.0
      %2347 = vmatmul.mubr.f32.gmra.mrb[0].mxu0 %v2238
      %v2348 = vpop.f32.mrb[0].mxu0
      %v2349 = vadd.f32 0.0, %v2348
      %v2350 = vpop.f32.mrb[0].mxu0
      %v2351 = vadd.f32 0.0, %v2350
      %2352 = vdwg.mxu0
      %v2353 = vmul.f32 %v2307, %v2168
      %v2354 = vmul.f32 %v2309, %v2170
      %v2355 = vmul.f32 %v2313, %v2172
      %v2356 = vmul.f32 %v2315, %v2174
      %v2357 = vmul.f32 %v2319, %v2178
      %v2358 = vmul.f32 %v2321, %v2180
      %v2359 = vmul.f32 %v2325, %v2182
      %v2360 = vmul.f32 %v2327, %v2184
      %v2361 = vmul.f32 %v2331, %v2188
      %v2362 = vmul.f32 %v2333, %v2190
      %v2363 = vmul.f32 %v2337, %v2192
      %v2364 = vmul.f32 %v2339, %v2194
      %v2365 = vmul.f32 %v2343, %v2198
      %v2366 = vmul.f32 %v2345, %v2200
      %v2367 = vmul.f32 %v2349, %v2202
      %v2368 = vmul.f32 %v2351, %v2204
      %v2369 = vadd.f32 %v2353, 0.0
      %v2370 = vadd.f32 %v2354, 0.0
      %v2371 = vadd.f32 %v2355, 0.0
      %v2372 = vadd.f32 %v2356, 0.0
      %v2373 = vadd.f32 %v2357, 0.0
      %v2374 = vadd.f32 %v2358, 0.0
      %v2375 = vadd.f32 %v2359, 0.0
      %v2376 = vadd.f32 %v2360, 0.0
      %v2377 = vadd.f32 %v2361, 0.0
      %v2378 = vadd.f32 %v2362, 0.0
      %v2379 = vadd.f32 %v2363, 0.0
      %v2380 = vadd.f32 %v2364, 0.0
      %v2381 = vadd.f32 %v2365, 0.0
      %v2382 = vadd.f32 %v2366, 0.0
      %v2383 = vadd.f32 %v2367, 0.0
      %v2384 = vadd.f32 %v2368, 0.0
      %v2385 = vld [vmem:[%s1474] sm:$0xff]
      %v2386 = vld [vmem:[%s1474 + $0x8] sm:$0xff]
      %v2387 = vld [vmem:[%s1474 + $0x10] sm:$0xff]
      %v2388 = vld [vmem:[%s1474 + $0x18] sm:$0xff]
      %v2389 = vld [vmem:[%s1474 + $0x20] sm:$0xff]
      %v2390 = vld [vmem:[%s1474 + $0x28] sm:$0xff]
      %v2391 = vld [vmem:[%s1474 + $0x30] sm:$0xff]
      %v2392 = vld [vmem:[%s1474 + $0x38] sm:$0xff]
      %v2401 = vunpack.c.l.b16 %v2385
      %v2402 = vunpack.c.h.b16 %v2385
      %v2403 = vunpack.c.l.b16 %v2386
      %v2404 = vunpack.c.h.b16 %v2386
      %v2405 = vunpack.c.l.b16 %v2387
      %v2406 = vunpack.c.h.b16 %v2387
      %v2407 = vunpack.c.l.b16 %v2388
      %v2408 = vunpack.c.h.b16 %v2388
      %v2409 = vunpack.c.l.b16 %v2389
      %v2410 = vunpack.c.h.b16 %v2389
      %v2411 = vunpack.c.l.b16 %v2390
      %v2412 = vunpack.c.h.b16 %v2390
      %v2413 = vunpack.c.l.b16 %v2391
      %v2414 = vunpack.c.h.b16 %v2391
      %v2415 = vunpack.c.l.b16 %v2392
      %v2416 = vunpack.c.h.b16 %v2392
      %v2417 = vpack.c.b16 %v2403, %v2401
      %v2418 = vpack.c.b16 %v2404, %v2402
      %v2419 = vpack.c.b16 %v2407, %v2405
      %v2420 = vpack.c.b16 %v2408, %v2406
      %v2421 = vpack.c.b16 %v2411, %v2409
      %v2422 = vpack.c.b16 %v2412, %v2410
      %v2423 = vpack.c.b16 %v2415, %v2413
      %v2424 = vpack.c.b16 %v2416, %v2414
      %2433 = vmatprep.subr.bf16.mxu0 %v2070
      %2434 = vmatpush1.bf16.msra.mxu0 %v2069
      %2435 = vmatprep.subr.bf16.mxu0 %v2072
      %2436 = vmatpush1.bf16.msra.mxu0 %v2071
      %2437 = vmatprep.subr.bf16.mxu0 %v2074
      %2438 = vmatpush1.bf16.msra.mxu0 %v2073
      %2439 = vmatprep.subr.bf16.mxu0 %v2076
      %2440 = vmatpush1.bf16.msra.mxu0 %v2075
      %2441 = vmatprep.subr.bf16.mxu0 %v2078
      %2442 = vmatpush1.bf16.msra.mxu0 %v2077
      %2443 = vmatprep.subr.bf16.mxu0 %v2080
      %2444 = vmatpush1.bf16.msra.mxu0 %v2079
      %2445 = vmatprep.subr.bf16.mxu0 %v2082
      %2446 = vmatpush1.bf16.msra.mxu0 %v2081
      %2447 = vmatprep.subr.bf16.mxu0 %v2084
      %2448 = vmatpush1.bf16.msra.mxu0 %v2083
      %2449 = vmatprep.subr.bf16.mxu0 %v2086
      %2450 = vmatpush1.bf16.msra.mxu0 %v2085
      %2451 = vmatprep.subr.bf16.mxu0 %v2088
      %2452 = vmatpush1.bf16.msra.mxu0 %v2087
      %2453 = vmatprep.subr.bf16.mxu0 %v2090
      %2454 = vmatpush1.bf16.msra.mxu0 %v2089
      %2455 = vmatprep.subr.bf16.mxu0 %v2092
      %2456 = vmatpush1.bf16.msra.mxu0 %v2091
      %2457 = vmatprep.subr.bf16.mxu0 %v2094
      %2458 = vmatpush1.bf16.msra.mxu0 %v2093
      %2459 = vmatprep.subr.bf16.mxu0 %v2096
      %2460 = vmatpush1.bf16.msra.mxu0 %v2095
      %2461 = vmatprep.subr.bf16.mxu0 %v2098
      %2462 = vmatpush1.bf16.msra.mxu0 %v2097
      %2463 = vmatprep.subr.bf16.mxu0 %v2100
      %2464 = vmatpush1.bf16.msra.mxu0 %v2099
      %2465 = vmatprep.mubr.bf16.mxu0 %v2418
      %2466 = vmatmul.mubr.bf16.gmra.mrb[0].mxu0 %v2417
      %v2467 = vpop.f32.mrb[0].mxu0
      %v2468 = vadd.f32 %v1926, %v2467
      %v2469 = vpop.f32.mrb[0].mxu0
      %v2470 = vadd.f32 %v1930, %v2469
      %v2471 = vpop.f32.mrb[0].mxu0
      %v2472 = vadd.f32 %v1926, %v2471
      %v2473 = vpop.f32.mrb[0].mxu0
      %v2474 = vadd.f32 %v1930, %v2473
      %2475 = vmatprep.mubr.bf16.mxu0 %v2420
      %2476 = vmatmul.mubr.bf16.gmra.mrb[0].mxu0 %v2419
      %v2477 = vpop.f32.mrb[0].mxu0
      %v2478 = vadd.f32 %v1926, %v2477
      %v2479 = vpop.f32.mrb[0].mxu0
      %v2480 = vadd.f32 %v1930, %v2479
      %v2481 = vpop.f32.mrb[0].mxu0
      %v2482 = vadd.f32 %v1926, %v2481
      %v2483 = vpop.f32.mrb[0].mxu0
      %v2484 = vadd.f32 %v1930, %v2483
      %2485 = vmatprep.mubr.bf16.mxu0 %v2422
      %2486 = vmatmul.mubr.bf16.gmra.mrb[0].mxu0 %v2421
      %v2487 = vpop.f32.mrb[0].mxu0
      %v2488 = vadd.f32 %v1926, %v2487
      %v2489 = vpop.f32.mrb[0].mxu0
      %v2490 = vadd.f32 %v1930, %v2489
      %v2491 = vpop.f32.mrb[0].mxu0
      %v2492 = vadd.f32 %v1926, %v2491
      %v2493 = vpop.f32.mrb[0].mxu0
      %v2494 = vadd.f32 %v1930, %v2493
      %2495 = vmatprep.mubr.bf16.mxu0 %v2424
      %2496 = vmatmul.mubr.bf16.gmra.mrb[0].mxu0 %v2423
      %v2497 = vpop.f32.mrb[0].mxu0
      %v2498 = vadd.f32 %v1926, %v2497
      %v2499 = vpop.f32.mrb[0].mxu0
      %v2500 = vadd.f32 %v1930, %v2499
      %v2501 = vpop.f32.mrb[0].mxu0
      %v2502 = vadd.f32 %v1926, %v2501
      %v2503 = vpop.f32.mrb[0].mxu0
      %v2504 = vadd.f32 %v1930, %v2503
      %2505 = vdwg.mxu0
      %s2506 = scalar_lea.vmem %s642, 64
      %v2507 = vld [vmem:[%s2506] sm:$0xff]
      %v2508 = vld [vmem:[%s2506 + $0x8] sm:$0xff]
      %v2509 = vld [vmem:[%s2506 + $0x10] sm:$0xff]
      %v2510 = vld [vmem:[%s2506 + $0x18] sm:$0xff]
      %v2511 = vld [vmem:[%s2506 + $0x20] sm:$0xff]
      %v2512 = vld [vmem:[%s2506 + $0x28] sm:$0xff]
      %v2513 = vld [vmem:[%s2506 + $0x30] sm:$0xff]
      %v2514 = vld [vmem:[%s2506 + $0x38] sm:$0xff]
      %v2516 = vsel %vm1744, %v2507, 0
      %v2519 = vsel %vm1744, %v2508, 0
      %v2522 = vsel %vm1744, %v2509, 0
      %v2525 = vsel %vm1744, %v2510, 0
      %v2528 = vsel %vm1744, %v2511, 0
      %v2531 = vsel %vm1744, %v2512, 0
      %v2534 = vsel %vm1744, %v2513, 0
      %v2537 = vsel %vm1744, %v2514, 0
      %2539 = vmatprep.subr.mxu0 %v2215
      %2540 = vmatpush1.msra.mxu0 %v2214
      %2541 = vmatprep.subr.mxu0 0.0
      %2542 = vmatpush1.msra.mxu0 0.0
      %2543 = vmatprep.subr.mxu0 0.0
      %2544 = vmatpush1.msra.mxu0 0.0
      %2545 = vmatprep.subr.mxu0 0.0
      %2546 = vmatpush1.msra.mxu0 0.0
      %2547 = vmatprep.subr.mxu0 0.0
      %2548 = vmatpush1.msra.mxu0 0.0
      %2549 = vmatprep.subr.mxu0 0.0
      %2550 = vmatpush1.msra.mxu0 0.0
      %2551 = vmatprep.subr.mxu0 0.0
      %2552 = vmatpush1.msra.mxu0 0.0
      %2553 = vmatprep.subr.mxu0 0.0
      %2554 = vmatpush1.msra.mxu0 0.0
      %2555 = vmatprep.subr.mxu0 0.0
      %2556 = vmatpush1.msra.mxu0 0.0
      %2557 = vmatprep.subr.mxu0 0.0
      %2558 = vmatpush1.msra.mxu0 0.0
      %2559 = vmatprep.subr.mxu0 0.0
      %2560 = vmatpush1.msra.mxu0 0.0
      %2561 = vmatprep.subr.mxu0 0.0
      %2562 = vmatpush1.msra.mxu0 0.0
      %2563 = vmatprep.subr.mxu0 0.0
      %2564 = vmatpush1.msra.mxu0 0.0
      %2565 = vmatprep.subr.mxu0 0.0
      %2566 = vmatpush1.msra.mxu0 0.0
      %2567 = vmatprep.subr.mxu0 0.0
      %2568 = vmatpush1.msra.mxu0 0.0
      %2569 = vmatprep.subr.mxu0 0.0
      %2570 = vmatpush1.msra.mxu0 0.0
      %2571 = vmatprep.subr.mxu0 0.0
      %2572 = vmatpush1.msra.mxu0 0.0
      %2573 = vmatprep.subr.mxu0 0.0
      %2574 = vmatpush1.msra.mxu0 0.0
      %2575 = vmatprep.subr.mxu0 0.0
      %2576 = vmatpush1.msra.mxu0 0.0
      %2577 = vmatprep.subr.mxu0 0.0
      %2578 = vmatpush1.msra.mxu0 0.0
      %2579 = vmatprep.subr.mxu0 0.0
      %2580 = vmatpush1.msra.mxu0 0.0
      %2581 = vmatprep.subr.mxu0 0.0
      %2582 = vmatpush1.msra.mxu0 0.0
      %2583 = vmatprep.subr.mxu0 0.0
      %2584 = vmatpush1.msra.mxu0 0.0
      %2585 = vmatprep.subr.mxu0 0.0
      %2586 = vmatpush1.msra.mxu0 0.0
      %2587 = vmatprep.subr.mxu0 0.0
      %2588 = vmatpush1.msra.mxu0 0.0
      %2589 = vmatprep.subr.mxu0 0.0
      %2590 = vmatpush1.msra.mxu0 0.0
      %2591 = vmatprep.subr.mxu0 0.0
      %2592 = vmatpush1.msra.mxu0 0.0
      %2593 = vmatprep.subr.mxu0 0.0
      %2594 = vmatpush1.msra.mxu0 0.0
      %2595 = vmatprep.subr.mxu0 0.0
      %2596 = vmatpush1.msra.mxu0 0.0
      %2597 = vmatprep.subr.mxu0 0.0
      %2598 = vmatpush1.msra.mxu0 0.0
      %2599 = vmatprep.subr.mxu0 0.0
      %2600 = vmatpush1.msra.mxu0 0.0
      %2601 = vmatprep.subr.mxu0 0.0
      %2602 = vmatpush1.msra.mxu0 0.0
      %2603 = vmatprep.mubr.f32.mxu0 0.0
      %2604 = vmatmul.mubr.f32.gmra.mrb[0].mxu0 %v2516
      %v2605 = vpop.f32.mrb[0].mxu0
      %v2606 = vadd.f32 0.0, %v2605
      %v2607 = vpop.f32.mrb[0].mxu0
      %v2608 = vadd.f32 0.0, %v2607
      %2609 = vmatprep.mubr.f32.mxu0 0.0
      %2610 = vmatmul.mubr.f32.gmra.mrb[0].mxu0 %v2519
      %v2611 = vpop.f32.mrb[0].mxu0
      %v2612 = vadd.f32 0.0, %v2611
      %v2613 = vpop.f32.mrb[0].mxu0
      %v2614 = vadd.f32 0.0, %v2613
      %2615 = vmatprep.mubr.f32.mxu0 0.0
      %2616 = vmatmul.mubr.f32.gmra.mrb[0].mxu0 %v2522
      %v2617 = vpop.f32.mrb[0].mxu0
      %v2618 = vadd.f32 0.0, %v2617
      %v2619 = vpop.f32.mrb[0].mxu0
      %v2620 = vadd.f32 0.0, %v2619
      %2621 = vmatprep.mubr.f32.mxu0 0.0
      %2622 = vmatmul.mubr.f32.gmra.mrb[0].mxu0 %v2525
      %v2623 = vpop.f32.mrb[0].mxu0
      %v2624 = vadd.f32 0.0, %v2623
      %v2625 = vpop.f32.mrb[0].mxu0
      %v2626 = vadd.f32 0.0, %v2625
      %2627 = vmatprep.mubr.f32.mxu0 0.0
      %2628 = vmatmul.mubr.f32.gmra.mrb[0].mxu0 %v2528
      %v2629 = vpop.f32.mrb[0].mxu0
      %v2630 = vadd.f32 0.0, %v2629
      %v2631 = vpop.f32.mrb[0].mxu0
      %v2632 = vadd.f32 0.0, %v2631
      %2633 = vmatprep.mubr.f32.mxu0 0.0
      %2634 = vmatmul.mubr.f32.gmra.mrb[0].mxu0 %v2531
      %v2635 = vpop.f32.mrb[0].mxu0
      %v2636 = vadd.f32 0.0, %v2635
      %v2637 = vpop.f32.mrb[0].mxu0
      %v2638 = vadd.f32 0.0, %v2637
      %2639 = vmatprep.mubr.f32.mxu0 0.0
      %2640 = vmatmul.mubr.f32.gmra.mrb[0].mxu0 %v2534
      %v2641 = vpop.f32.mrb[0].mxu0
      %v2642 = vadd.f32 0.0, %v2641
      %v2643 = vpop.f32.mrb[0].mxu0
      %v2644 = vadd.f32 0.0, %v2643
      %2645 = vmatprep.mubr.f32.mxu0 0.0
      %2646 = vmatmul.mubr.f32.gmra.mrb[0].mxu0 %v2537
      %v2647 = vpop.f32.mrb[0].mxu0
      %v2648 = vadd.f32 0.0, %v2647
      %v2649 = vpop.f32.mrb[0].mxu0
      %v2650 = vadd.f32 0.0, %v2649
      %2651 = vdwg.mxu0
      %v2652 = vmul.f32 %v2606, %v2468
      %v2653 = vmul.f32 %v2608, %v2470
      %v2654 = vmul.f32 %v2612, %v2472
      %v2655 = vmul.f32 %v2614, %v2474
      %v2656 = vmul.f32 %v2618, %v2478
      %v2657 = vmul.f32 %v2620, %v2480
      %v2658 = vmul.f32 %v2624, %v2482
      %v2659 = vmul.f32 %v2626, %v2484
      %v2660 = vmul.f32 %v2630, %v2488
      %v2661 = vmul.f32 %v2632, %v2490
      %v2662 = vmul.f32 %v2636, %v2492
      %v2663 = vmul.f32 %v2638, %v2494
      %v2664 = vmul.f32 %v2642, %v2498
      %v2665 = vmul.f32 %v2644, %v2500
      %v2666 = vmul.f32 %v2648, %v2502
      %v2667 = vmul.f32 %v2650, %v2504
      %v2668 = vadd.f32 %v2369, %v2652
      %v2669 = vadd.f32 %v2370, %v2653
      %v2670 = vadd.f32 %v2371, %v2654
      %v2671 = vadd.f32 %v2372, %v2655
      %v2672 = vadd.f32 %v2373, %v2656
      %v2673 = vadd.f32 %v2374, %v2657
      %v2674 = vadd.f32 %v2375, %v2658
      %v2675 = vadd.f32 %v2376, %v2659
      %v2676 = vadd.f32 %v2377, %v2660
      %v2677 = vadd.f32 %v2378, %v2661
      %v2678 = vadd.f32 %v2379, %v2662
      %v2679 = vadd.f32 %v2380, %v2663
      %v2680 = vadd.f32 %v2381, %v2664
      %v2681 = vadd.f32 %v2382, %v2665
      %v2682 = vadd.f32 %v2383, %v2666
      %v2683 = vadd.f32 %v2384, %v2667
      %v2684 = vpack.c.bf16 %v2670, %v2668
      %v2685 = vpack.c.bf16 %v2671, %v2669
      %v2686 = vpack.c.bf16 %v2674, %v2672
      %v2687 = vpack.c.bf16 %v2675, %v2673
      %v2688 = vpack.c.bf16 %v2678, %v2676
      %v2689 = vpack.c.bf16 %v2679, %v2677
      %v2690 = vpack.c.bf16 %v2682, %v2680
      %v2691 = vpack.c.bf16 %v2683, %v2681
      %v2692 = vld [vmem:[%s11] sm:$0xff]
      %v2693 = vld [vmem:[%s11 + $0x8] sm:$0xff]
      %v2694 = vld [vmem:[%s11 + $0x10] sm:$0xff]
      %v2695 = vld [vmem:[%s11 + $0x18] sm:$0xff]
      %v2696 = vld [vmem:[%s11 + $0x20] sm:$0xff]
      %v2697 = vld [vmem:[%s11 + $0x28] sm:$0xff]
      %v2698 = vld [vmem:[%s11 + $0x30] sm:$0xff]
      %v2699 = vld [vmem:[%s11 + $0x38] sm:$0xff]
      %v2700 = vld [vmem:[%s11 + $0x40] sm:$0xff]
      %v2701 = vld [vmem:[%s11 + $0x48] sm:$0xff]
      %v2702 = vld [vmem:[%s11 + $0x50] sm:$0xff]
      %v2703 = vld [vmem:[%s11 + $0x58] sm:$0xff]
      %v2704 = vld [vmem:[%s11 + $0x60] sm:$0xff]
      %v2705 = vld [vmem:[%s11 + $0x68] sm:$0xff]
      %v2706 = vld [vmem:[%s11 + $0x70] sm:$0xff]
      %v2707 = vld [vmem:[%s11 + $0x78] sm:$0xff]
      %v2708 = vld [vmem:[%s11 + $0x80] sm:$0xff]
      %v2709 = vld [vmem:[%s11 + $0x88] sm:$0xff]
      %v2710 = vld [vmem:[%s11 + $0x90] sm:$0xff]
      %v2711 = vld [vmem:[%s11 + $0x98] sm:$0xff]
      %v2712 = vld [vmem:[%s11 + $0xa0] sm:$0xff]
      %v2713 = vld [vmem:[%s11 + $0xa8] sm:$0xff]
      %v2714 = vld [vmem:[%s11 + $0xb0] sm:$0xff]
      %v2715 = vld [vmem:[%s11 + $0xb8] sm:$0xff]
      %v2716 = vld [vmem:[%s11 + $0xc0] sm:$0xff]
      %v2717 = vld [vmem:[%s11 + $0xc8] sm:$0xff]
      %v2718 = vld [vmem:[%s11 + $0xd0] sm:$0xff]
      %v2719 = vld [vmem:[%s11 + $0xd8] sm:$0xff]
      %v2720 = vld [vmem:[%s11 + $0xe0] sm:$0xff]
      %v2721 = vld [vmem:[%s11 + $0xe8] sm:$0xff]
      %v2722 = vld [vmem:[%s11 + $0xf0] sm:$0xff]
      %v2723 = vld [vmem:[%s11 + $0xf8] sm:$0xff]
      %v2724 = vld [vmem:[%s12] sm:$0x3]
      %v2726 = vlaneseq
      %v2727 = vshrl.u32 %v2726, 7
      %v2728 = vsub.s32 0, %v2727
      %v2729 = vrot.slane %v2724, %v2728
      %v2730 = vlaneseq
      %v2731 = vshrl.u32 %v2730, 7
      %v2732 = vsub.s32 1, %v2731
      %v2733 = vrot.slane %v2724, %v2732
      %v2768 = vunpack.c.l.b16 %v2692
      %v2769 = vunpack.c.h.b16 %v2692
      %v2770 = vunpack.c.l.b16 %v2693
      %v2771 = vunpack.c.h.b16 %v2693
      %v2772 = vunpack.c.l.b16 %v2694
      %v2773 = vunpack.c.h.b16 %v2694
      %v2774 = vunpack.c.l.b16 %v2695
      %v2775 = vunpack.c.h.b16 %v2695
      %v2776 = vunpack.c.l.b16 %v2696
      %v2777 = vunpack.c.h.b16 %v2696
      %v2778 = vunpack.c.l.b16 %v2697
      %v2779 = vunpack.c.h.b16 %v2697
      %v2780 = vunpack.c.l.b16 %v2698
      %v2781 = vunpack.c.h.b16 %v2698
      %v2782 = vunpack.c.l.b16 %v2699
      %v2783 = vunpack.c.h.b16 %v2699
      %v2784 = vunpack.c.l.b16 %v2700
      %v2785 = vunpack.c.h.b16 %v2700
      %v2786 = vunpack.c.l.b16 %v2701
      %v2787 = vunpack.c.h.b16 %v2701
      %v2788 = vunpack.c.l.b16 %v2702
      %v2789 = vunpack.c.h.b16 %v2702
      %v2790 = vunpack.c.l.b16 %v2703
      %v2791 = vunpack.c.h.b16 %v2703
      %v2792 = vunpack.c.l.b16 %v2704
      %v2793 = vunpack.c.h.b16 %v2704
      %v2794 = vunpack.c.l.b16 %v2705
      %v2795 = vunpack.c.h.b16 %v2705
      %v2796 = vunpack.c.l.b16 %v2706
      %v2797 = vunpack.c.h.b16 %v2706
      %v2798 = vunpack.c.l.b16 %v2707
      %v2799 = vunpack.c.h.b16 %v2707
      %v2800 = vunpack.c.l.b16 %v2708
      %v2801 = vunpack.c.h.b16 %v2708
      %v2802 = vunpack.c.l.b16 %v2709
      %v2803 = vunpack.c.h.b16 %v2709
      %v2804 = vunpack.c.l.b16 %v2710
      %v2805 = vunpack.c.h.b16 %v2710
      %v2806 = vunpack.c.l.b16 %v2711
      %v2807 = vunpack.c.h.b16 %v2711
      %v2808 = vunpack.c.l.b16 %v2712
      %v2809 = vunpack.c.h.b16 %v2712
      %v2810 = vunpack.c.l.b16 %v2713
      %v2811 = vunpack.c.h.b16 %v2713
      %v2812 = vunpack.c.l.b16 %v2714
      %v2813 = vunpack.c.h.b16 %v2714
      %v2814 = vunpack.c.l.b16 %v2715
      %v2815 = vunpack.c.h.b16 %v2715
      %v2816 = vunpack.c.l.b16 %v2716
      %v2817 = vunpack.c.h.b16 %v2716
      %v2818 = vunpack.c.l.b16 %v2717
      %v2819 = vunpack.c.h.b16 %v2717
      %v2820 = vunpack.c.l.b16 %v2718
      %v2821 = vunpack.c.h.b16 %v2718
      %v2822 = vunpack.c.l.b16 %v2719
      %v2823 = vunpack.c.h.b16 %v2719
      %v2824 = vunpack.c.l.b16 %v2720
      %v2825 = vunpack.c.h.b16 %v2720
      %v2826 = vunpack.c.l.b16 %v2721
      %v2827 = vunpack.c.h.b16 %v2721
      %v2828 = vunpack.c.l.b16 %v2722
      %v2829 = vunpack.c.h.b16 %v2722
      %v2830 = vunpack.c.l.b16 %v2723
      %v2831 = vunpack.c.h.b16 %v2723
      %v2832 = vpack.c.b16 %v2770, %v2768
      %v2833 = vpack.c.b16 %v2771, %v2769
      %v2834 = vpack.c.b16 %v2774, %v2772
      %v2835 = vpack.c.b16 %v2775, %v2773
      %v2836 = vpack.c.b16 %v2778, %v2776
      %v2837 = vpack.c.b16 %v2779, %v2777
      %v2838 = vpack.c.b16 %v2782, %v2780
      %v2839 = vpack.c.b16 %v2783, %v2781
      %v2840 = vpack.c.b16 %v2786, %v2784
      %v2841 = vpack.c.b16 %v2787, %v2785
      %v2842 = vpack.c.b16 %v2790, %v2788
      %v2843 = vpack.c.b16 %v2791, %v2789
      %v2844 = vpack.c.b16 %v2794, %v2792
      %v2845 = vpack.c.b16 %v2795, %v2793
      %v2846 = vpack.c.b16 %v2798, %v2796
      %v2847 = vpack.c.b16 %v2799, %v2797
      %v2848 = vpack.c.b16 %v2802, %v2800
      %v2849 = vpack.c.b16 %v2803, %v2801
      %v2850 = vpack.c.b16 %v2806, %v2804
      %v2851 = vpack.c.b16 %v2807, %v2805
      %v2852 = vpack.c.b16 %v2810, %v2808
      %v2853 = vpack.c.b16 %v2811, %v2809
      %v2854 = vpack.c.b16 %v2814, %v2812
      %v2855 = vpack.c.b16 %v2815, %v2813
      %v2856 = vpack.c.b16 %v2818, %v2816
      %v2857 = vpack.c.b16 %v2819, %v2817
      %v2858 = vpack.c.b16 %v2822, %v2820
      %v2859 = vpack.c.b16 %v2823, %v2821
      %v2860 = vpack.c.b16 %v2826, %v2824
      %v2861 = vpack.c.b16 %v2827, %v2825
      %v2862 = vpack.c.b16 %v2830, %v2828
      %v2863 = vpack.c.b16 %v2831, %v2829
      %2896 = vmatprep.subr.bf16.mxu0 %v2833
      %2897 = vmatpush1.bf16.msra.mxu0 %v2832
      %2898 = vmatprep.subr.bf16.mxu0 %v2835
      %2899 = vmatpush1.bf16.msra.mxu0 %v2834
      %2900 = vmatprep.subr.bf16.mxu0 %v2837
      %2901 = vmatpush1.bf16.msra.mxu0 %v2836
      %2902 = vmatprep.subr.bf16.mxu0 %v2839
      %2903 = vmatpush1.bf16.msra.mxu0 %v2838
      %2904 = vmatprep.subr.bf16.mxu0 %v2841
      %2905 = vmatpush1.bf16.msra.mxu0 %v2840
      %2906 = vmatprep.subr.bf16.mxu0 %v2843
      %2907 = vmatpush1.bf16.msra.mxu0 %v2842
      %2908 = vmatprep.subr.bf16.mxu0 %v2845
      %2909 = vmatpush1.bf16.msra.mxu0 %v2844
      %2910 = vmatprep.subr.bf16.mxu0 %v2847
      %2911 = vmatpush1.bf16.msra.mxu0 %v2846
      %2912 = vmatprep.subr.bf16.mxu0 %v2849
      %2913 = vmatpush1.bf16.msra.mxu0 %v2848
      %2914 = vmatprep.subr.bf16.mxu0 %v2851
      %2915 = vmatpush1.bf16.msra.mxu0 %v2850
      %2916 = vmatprep.subr.bf16.mxu0 %v2853
      %2917 = vmatpush1.bf16.msra.mxu0 %v2852
      %2918 = vmatprep.subr.bf16.mxu0 %v2855
      %2919 = vmatpush1.bf16.msra.mxu0 %v2854
      %2920 = vmatprep.subr.bf16.mxu0 %v2857
      %2921 = vmatpush1.bf16.msra.mxu0 %v2856
      %2922 = vmatprep.subr.bf16.mxu0 %v2859
      %2923 = vmatpush1.bf16.msra.mxu0 %v2858
      %2924 = vmatprep.subr.bf16.mxu0 %v2861
      %2925 = vmatpush1.bf16.msra.mxu0 %v2860
      %2926 = vmatprep.subr.bf16.mxu0 %v2863
      %2927 = vmatpush1.bf16.msra.mxu0 %v2862
      %2928 = vmatprep.mubr.bf16.mxu0 %v2685
      %2929 = vmatmul.mubr.bf16.gmra.mrb[0].mxu0 %v2684
      %v2930 = vpop.f32.mrb[0].mxu0
      %v2931 = vadd.f32 %v2729, %v2930
      %v2932 = vpop.f32.mrb[0].mxu0
      %v2933 = vadd.f32 %v2733, %v2932
      %v2934 = vpop.f32.mrb[0].mxu0
      %v2935 = vadd.f32 %v2729, %v2934
      %v2936 = vpop.f32.mrb[0].mxu0
      %v2937 = vadd.f32 %v2733, %v2936
      %2938 = vmatprep.mubr.bf16.mxu0 %v2687
      %2939 = vmatmul.mubr.bf16.gmra.mrb[0].mxu0 %v2686
      %v2940 = vpop.f32.mrb[0].mxu0
      %v2941 = vadd.f32 %v2729, %v2940
      %v2942 = vpop.f32.mrb[0].mxu0
      %v2943 = vadd.f32 %v2733, %v2942
      %v2944 = vpop.f32.mrb[0].mxu0
      %v2945 = vadd.f32 %v2729, %v2944
      %v2946 = vpop.f32.mrb[0].mxu0
      %v2947 = vadd.f32 %v2733, %v2946
      %2948 = vmatprep.mubr.bf16.mxu0 %v2689
      %2949 = vmatmul.mubr.bf16.gmra.mrb[0].mxu0 %v2688
      %v2950 = vpop.f32.mrb[0].mxu0
      %v2951 = vadd.f32 %v2729, %v2950
      %v2952 = vpop.f32.mrb[0].mxu0
      %v2953 = vadd.f32 %v2733, %v2952
      %v2954 = vpop.f32.mrb[0].mxu0
      %v2955 = vadd.f32 %v2729, %v2954
      %v2956 = vpop.f32.mrb[0].mxu0
      %v2957 = vadd.f32 %v2733, %v2956
      %2958 = vmatprep.mubr.bf16.mxu0 %v2691
      %2959 = vmatmul.mubr.bf16.gmra.mrb[0].mxu0 %v2690
      %v2960 = vpop.f32.mrb[0].mxu0
      %v2961 = vadd.f32 %v2729, %v2960
      %v2962 = vpop.f32.mrb[0].mxu0
      %v2963 = vadd.f32 %v2733, %v2962
      %v2964 = vpop.f32.mrb[0].mxu0
      %v2965 = vadd.f32 %v2729, %v2964
      %v2966 = vpop.f32.mrb[0].mxu0
      %v2967 = vadd.f32 %v2733, %v2966
      %2968 = vdwg.mxu0
      %v2969 = vpack.c.bf16 %v2935, %v2931
      %v2970 = vpack.c.bf16 %v2937, %v2933
      %v2971 = vpack.c.bf16 %v2945, %v2941
      %v2972 = vpack.c.bf16 %v2947, %v2943
      %v2973 = vpack.c.bf16 %v2955, %v2951
      %v2974 = vpack.c.bf16 %v2957, %v2953
      %v2975 = vpack.c.bf16 %v2965, %v2961
      %v2976 = vpack.c.bf16 %v2967, %v2963
      %v2977 = vld [vmem:[%s13] sm:$0xf]
      %v2978 = vld [vmem:[%s13 + $0x4] sm:$0xf]
      %v2979 = vld [vmem:[%s13 + $0x8] sm:$0xf]
      %v2980 = vld [vmem:[%s13 + $0xc] sm:$0xf]
      %v2981 = vld [vmem:[%s13 + $0x10] sm:$0xf]
      %v2982 = vld [vmem:[%s13 + $0x14] sm:$0xf]
      %v2983 = vld [vmem:[%s13 + $0x18] sm:$0xf]
      %v2984 = vld [vmem:[%s13 + $0x1c] sm:$0xf]
      %v2985 = vld [vmem:[%s13 + $0x20] sm:$0xf]
      %v2986 = vld [vmem:[%s13 + $0x24] sm:$0xf]
      %v2987 = vld [vmem:[%s13 + $0x28] sm:$0xf]
      %v2988 = vld [vmem:[%s13 + $0x2c] sm:$0xf]
      %v2989 = vld [vmem:[%s13 + $0x30] sm:$0xf]
      %v2990 = vld [vmem:[%s13 + $0x34] sm:$0xf]
      %v2991 = vld [vmem:[%s13 + $0x38] sm:$0xf]
      %v2992 = vld [vmem:[%s13 + $0x3c] sm:$0xf]
      %v2993 = vld [vmem:[%s13 + $0x40] sm:$0xf]
      %v2994 = vld [vmem:[%s13 + $0x44] sm:$0xf]
      %v2995 = vld [vmem:[%s13 + $0x48] sm:$0xf]
      %v2996 = vld [vmem:[%s13 + $0x4c] sm:$0xf]
      %v2997 = vld [vmem:[%s13 + $0x50] sm:$0xf]
      %v2998 = vld [vmem:[%s13 + $0x54] sm:$0xf]
      %v2999 = vld [vmem:[%s13 + $0x58] sm:$0xf]
      %v3000 = vld [vmem:[%s13 + $0x5c] sm:$0xf]
      %v3001 = vld [vmem:[%s13 + $0x60] sm:$0xf]
      %v3002 = vld [vmem:[%s13 + $0x64] sm:$0xf]
      %v3003 = vld [vmem:[%s13 + $0x68] sm:$0xf]
      %v3004 = vld [vmem:[%s13 + $0x6c] sm:$0xf]
      %v3005 = vld [vmem:[%s13 + $0x70] sm:$0xf]
      %v3006 = vld [vmem:[%s13 + $0x74] sm:$0xf]
      %v3007 = vld [vmem:[%s13 + $0x78] sm:$0xf]
      %v3008 = vld [vmem:[%s13 + $0x7c] sm:$0xf]
      %v3009 = vld [vmem:[%s14] sm:$0x1]
      %v3011 = vlaneseq
      %v3012 = vshrl.u32 %v3011, 7
      %v3013 = vsub.s32 0, %v3012
      %v3014 = vrot.slane %v3009, %v3013
      %v3048 = vunpack.c.l.b16 %v2977
      %v3049 = vunpack.c.l.b16 %v2978
      %v3050 = vunpack.c.l.b16 %v2979
      %v3051 = vunpack.c.l.b16 %v2980
      %v3052 = vunpack.c.l.b16 %v2981
      %v3053 = vunpack.c.l.b16 %v2982
      %v3054 = vunpack.c.l.b16 %v2983
      %v3055 = vunpack.c.l.b16 %v2984
      %v3056 = vunpack.c.l.b16 %v2985
      %v3057 = vunpack.c.l.b16 %v2986
      %v3058 = vunpack.c.l.b16 %v2987
      %v3059 = vunpack.c.l.b16 %v2988
      %v3060 = vunpack.c.l.b16 %v2989
      %v3061 = vunpack.c.l.b16 %v2990
      %v3062 = vunpack.c.l.b16 %v2991
      %v3063 = vunpack.c.l.b16 %v2992
      %v3064 = vunpack.c.l.b16 %v2993
      %v3065 = vunpack.c.l.b16 %v2994
      %v3066 = vunpack.c.l.b16 %v2995
      %v3067 = vunpack.c.l.b16 %v2996
      %v3068 = vunpack.c.l.b16 %v2997
      %v3069 = vunpack.c.l.b16 %v2998
      %v3070 = vunpack.c.l.b16 %v2999
      %v3071 = vunpack.c.l.b16 %v3000
      %v3072 = vunpack.c.l.b16 %v3001
      %v3073 = vunpack.c.l.b16 %v3002
      %v3074 = vunpack.c.l.b16 %v3003
      %v3075 = vunpack.c.l.b16 %v3004
      %v3076 = vunpack.c.l.b16 %v3005
      %v3077 = vunpack.c.l.b16 %v3006
      %v3078 = vunpack.c.l.b16 %v3007
      %v3079 = vunpack.c.l.b16 %v3008
      %v3080 = vpack.c.b16 %v3049, %v3048
      %v3081 = vpack.c.b16 %v3051, %v3050
      %v3082 = vpack.c.b16 %v3053, %v3052
      %v3083 = vpack.c.b16 %v3055, %v3054
      %v3084 = vpack.c.b16 %v3057, %v3056
      %v3085 = vpack.c.b16 %v3059, %v3058
      %v3086 = vpack.c.b16 %v3061, %v3060
      %v3087 = vpack.c.b16 %v3063, %v3062
      %v3088 = vpack.c.b16 %v3065, %v3064
      %v3089 = vpack.c.b16 %v3067, %v3066
      %v3090 = vpack.c.b16 %v3069, %v3068
      %v3091 = vpack.c.b16 %v3071, %v3070
      %v3092 = vpack.c.b16 %v3073, %v3072
      %v3093 = vpack.c.b16 %v3075, %v3074
      %v3094 = vpack.c.b16 %v3077, %v3076
      %v3095 = vpack.c.b16 %v3079, %v3078
      %3112 = vmatprep.subr.bf16.mxu0 0
      %3113 = vmatpush1.bf16.msra.mxu0 %v3080
      %3114 = vmatprep.subr.bf16.mxu0 0
      %3115 = vmatpush1.bf16.msra.mxu0 %v3081
      %3116 = vmatprep.subr.bf16.mxu0 0
      %3117 = vmatpush1.bf16.msra.mxu0 %v3082
      %3118 = vmatprep.subr.bf16.mxu0 0
      %3119 = vmatpush1.bf16.msra.mxu0 %v3083
      %3120 = vmatprep.subr.bf16.mxu0 0
      %3121 = vmatpush1.bf16.msra.mxu0 %v3084
      %3122 = vmatprep.subr.bf16.mxu0 0
      %3123 = vmatpush1.bf16.msra.mxu0 %v3085
      %3124 = vmatprep.subr.bf16.mxu0 0
      %3125 = vmatpush1.bf16.msra.mxu0 %v3086
      %3126 = vmatprep.subr.bf16.mxu0 0
      %3127 = vmatpush1.bf16.msra.mxu0 %v3087
      %3128 = vmatprep.subr.bf16.mxu0 0
      %3129 = vmatpush1.bf16.msra.mxu0 %v3088
      %3130 = vmatprep.subr.bf16.mxu0 0
      %3131 = vmatpush1.bf16.msra.mxu0 %v3089
      %3132 = vmatprep.subr.bf16.mxu0 0
      %3133 = vmatpush1.bf16.msra.mxu0 %v3090
      %3134 = vmatprep.subr.bf16.mxu0 0
      %3135 = vmatpush1.bf16.msra.mxu0 %v3091
      %3136 = vmatprep.subr.bf16.mxu0 0
      %3137 = vmatpush1.bf16.msra.mxu0 %v3092
      %3138 = vmatprep.subr.bf16.mxu0 0
      %3139 = vmatpush1.bf16.msra.mxu0 %v3093
      %3140 = vmatprep.subr.bf16.mxu0 0
      %3141 = vmatpush1.bf16.msra.mxu0 %v3094
      %3142 = vmatprep.subr.bf16.mxu0 0
      %3143 = vmatpush1.bf16.msra.mxu0 %v3095
      %3144 = vmatprep.mubr.bf16.mxu0 %v2970
      %3145 = vmatmul.mubr.bf16.gmra.mrb[0].mxu0 %v2969
      %v3146 = vpop.f32.mrb[0].mxu0
      %v3147 = vadd.f32 %v3014, %v3146
      %v3148 = vpop.f32.mrb[0].mxu0
      %v3149 = vpop.f32.mrb[0].mxu0
      %v3150 = vadd.f32 %v3014, %v3149
      %v3151 = vpop.f32.mrb[0].mxu0
      %3152 = vmatprep.mubr.bf16.mxu0 %v2972
      %3153 = vmatmul.mubr.bf16.gmra.mrb[0].mxu0 %v2971
      %v3154 = vpop.f32.mrb[0].mxu0
      %v3155 = vadd.f32 %v3014, %v3154
      %v3156 = vpop.f32.mrb[0].mxu0
      %v3157 = vpop.f32.mrb[0].mxu0
      %v3158 = vadd.f32 %v3014, %v3157
      %v3159 = vpop.f32.mrb[0].mxu0
      %3160 = vmatprep.mubr.bf16.mxu0 %v2974
      %3161 = vmatmul.mubr.bf16.gmra.mrb[0].mxu0 %v2973
      %v3162 = vpop.f32.mrb[0].mxu0
      %v3163 = vadd.f32 %v3014, %v3162
      %v3164 = vpop.f32.mrb[0].mxu0
      %v3165 = vpop.f32.mrb[0].mxu0
      %v3166 = vadd.f32 %v3014, %v3165
      %v3167 = vpop.f32.mrb[0].mxu0
      %3168 = vmatprep.mubr.bf16.mxu0 %v2976
      %3169 = vmatmul.mubr.bf16.gmra.mrb[0].mxu0 %v2975
      %v3170 = vpop.f32.mrb[0].mxu0
      %v3171 = vadd.f32 %v3014, %v3170
      %v3172 = vpop.f32.mrb[0].mxu0
      %v3173 = vpop.f32.mrb[0].mxu0
      %v3174 = vadd.f32 %v3014, %v3173
      %v3175 = vpop.f32.mrb[0].mxu0
      %3176 = vdwg.mxu0
      %3177 = vst [vmem:[%s632] sm:$0xff] %v3147
      %3178 = vst [vmem:[%s632 + $0x8] sm:$0xff] %v3150
      %3179 = vst [vmem:[%s632 + $0x10] sm:$0xff] %v3155
      %3180 = vst [vmem:[%s632 + $0x18] sm:$0xff] %v3158
      %3181 = vst [vmem:[%s632 + $0x20] sm:$0xff] %v3163
      %3182 = vst [vmem:[%s632 + $0x28] sm:$0xff] %v3166
      %3183 = vst [vmem:[%s632 + $0x30] sm:$0xff] %v3171
      %3184 = vst [vmem:[%s632 + $0x38] sm:$0xff] %v3174
      %s3185 = smul.u32 8, %s33
      %p3186 = scmp.lt.s32.totalorder %s32, 1
      %s3187 = scalar_select %p3186, %s32, 1
      %p3188 = scmp.lt.s32.totalorder %s3185, 7
      %s3189 = scalar_select %p3188, %s3185, 7
      %s3190 = smul.addr %s3187, 8
      %s3191 = sadd.s32 %s3189, %s3190
      %s3192 = smul.addr %s3191, 8
      %s3193 = scalar_lea.vmem %s15, %s3192
      %s3194 = smul.u32 8, %s33
      %p3195 = scmp.lt.s32.totalorder %s32, 1
      %s3196 = scalar_select %p3195, %s32, 1
      %p3197 = scmp.lt.s32.totalorder %s3194, 7
      %s3198 = scalar_select %p3197, %s3194, 7
      %s3199 = smul.addr %s3196, 16
      %s3200 = sadd.s32 %s3198, %s3199
      %s3201 = smul.addr %s3200, 8
      %s3202 = scalar_lea.vmem %s16, %s3201
      // Predicated region
      $region81: #{forward.5} parent=79 // pred_check
        %p3203 = pneg %p394
      $region82: #{forward.5} parent=79 // pred_check_branch
        %3205 = sbr.rel (%p3203) target = $region84
      $region83: #{forward.5} parent=79 // pred_region
        %s3206 = smul.u32 8, %s33
      $region84: #{forward.5} parent=79 // pred_fallthru
        _
      // Predicated region
      $region85: #{forward.5} parent=79 // pred_check
        %p3207 = pneg %p422
      $region86: #{forward.5} parent=79 // pred_check_branch
        %3209 = sbr.rel (%p3207) target = $region88
      $region87: #{forward.5} parent=79 // pred_region
        %s3210 = smul.u32 8, %s33
      $region88: #{forward.5} parent=79 // pred_fallthru
        _
    $region80: #{forward.5} parent=5 // pred_fallthru
      _
    %p3211 = scmp.le.s32.totalorder 2, %s23
    // Predicated region
    $region89: #{forward.5} parent=5 // pred_check
      %p3212 = pneg %p3211
    $region90: #{forward.5} parent=5 // pred_check_branch
      %3214 = sbr.rel (%p3212) target = $region92
    $region91: #{forward.5} parent=5 // pred_region
      %s3215 = ssub.s32 %s23, 2
      // Predicated region
      $region93: #{forward.5} parent=91 // pred_check
        %p3216 = pneg %p400
      $region94: #{forward.5} parent=91 // pred_check_branch
        %3218 = sbr.rel (%p3216) target = $region96
      $region95: #{forward.5} parent=91 // pred_region
        %s3219 = smul.u32 8, %s35
        %p3220 = scmp.lt.s32.totalorder %s34, 1
        %s3221 = scalar_select %p3220, %s34, 1
        %p3222 = scmp.lt.s32.totalorder %s3219, 7
        %s3223 = scalar_select %p3222, %s3219, 7
        %s3224 = smul.addr %s3221, 8
        %s3225 = sadd.s32 %s3223, %s3224
        %s3226 = smul.addr %s3225, 8
        %s3227 = scalar_lea.vmem %s15, %s3226
      $region96: #{forward.5} parent=91 // pred_fallthru
        _
      // Predicated region
      $region97: #{forward.5} parent=91 // pred_check
        %p3228 = pneg %p428
      $region98: #{forward.5} parent=91 // pred_check_branch
        %3230 = sbr.rel (%p3228) target = $region100
      $region99: #{forward.5} parent=91 // pred_region
        %s3231 = smul.u32 8, %s35
        %p3232 = scmp.lt.s32.totalorder %s34, 1
        %s3233 = scalar_select %p3232, %s34, 1
        %p3234 = scmp.lt.s32.totalorder %s3231, 7
        %s3235 = scalar_select %p3234, %s3231, 7
        %s3236 = smul.addr %s3233, 16
        %s3237 = sadd.s32 %s3235, %s3236
        %s3238 = smul.addr %s3237, 8
        %s3239 = scalar_lea.vmem %s16, %s3238
      $region100: #{forward.5} parent=91 // pred_fallthru
        _
    $region92: #{forward.5} parent=5 // pred_fallthru
      _
  $region6: #{forward.5} parent=0 // loop_footer
    %s27 = sadd.s32 1, %s23
  $region7: #{forward.5} parent=0 // loop_footer_branch
    %22 = sbr.rel target = $region3
  $region8: #{forward.5} parent=0 // loop_exit
    _

// kernel: forward.4
$region0: #{forward.4}
  #allocation0 [shape = 'u32[]', space=smem, size = 0x4, offset = 0x4, fixed_abs, tag = 'smem constant byte address 0x4 - core index']
  #allocation1 [shape = 'u32[144,128]{1,0:T(1,128)}', space=vmem, size = 0x12000, scoped, tag = 'internal scratch']
  #allocation2 [shape = 'bf16[10,10,64]{2,1,0:T(8,128)(2,1)}', space=vmem, size = 0xa000, scoped, tag = 'scratch operand']
  #allocation3 [shape = 'bf16[6,6,128]{2,1,0:T(8,128)(2,1)}', space=vmem, size = 0x3000, scoped, tag = 'scratch operand']
  %s0 = inlined_call_operand.vmem [shape: bf16[3,4,9,9,64], index: 0, kind: input, shape index: {}]
  %s1 = inlined_call_operand.vmem [shape: bf16[576,64], index: 1, kind: input, shape index: {}]
  %s2 = inlined_call_operand.vmem [shape: f32[1,64], index: 2, kind: input, shape index: {}]
  %s3 = inlined_call_operand.vmem [shape: bf16[576,64], index: 3, kind: input, shape index: {}]
  %s4 = inlined_call_operand.vmem [shape: f32[1,64], index: 4, kind: input, shape index: {}]
  %s5 = inlined_call_operand.vmem [shape: bf16[16,64], index: 5, kind: input, shape index: {}]
  %s6 = inlined_call_operand.vmem [shape: bf16[576,128], index: 6, kind: input, shape index: {}]
  %s7 = inlined_call_operand.vmem [shape: f32[1,128], index: 7, kind: input, shape index: {}]
  %s8 = inlined_call_operand.vmem [shape: bf16[1152,128], index: 8, kind: input, shape index: {}]
  %s9 = inlined_call_operand.vmem [shape: f32[1,128], index: 9, kind: input, shape index: {}]
  %s10 = inlined_call_operand.vmem [shape: bf16[64,128], index: 10, kind: input, shape index: {}]
  %s11 = inlined_call_operand.vmem [shape: f32[1,128], index: 11, kind: input, shape index: {}]
  %s12 = inlined_call_operand.vmem [shape: bf16[128,512], index: 12, kind: input, shape index: {}]
  %s13 = inlined_call_operand.vmem [shape: f32[1,128], index: 13, kind: input, shape index: {}]
  %s14 = inlined_call_operand.vmem [shape: f32[64,64], index: 14, kind: input, shape index: {}]
  %s15 = inlined_call_operand.vmem [shape: bf16[3,64,256], index: 15, kind: output, shape index: {}]
  %s16 = sld [smem:[#allocation0]]
  $region93: #{forward.4} parent=0
    _
  %s18 = ssub.s32 1, %s16
  %s19 = scalar_select 0, %s18, %s16
  loop: start=0, step=1, limit=5
  $region2: #{forward.4} parent=0 // loop_pre_header
    _
  $region3: #{forward.4} parent=0 // loop_header
    %s21 = sphi 0, %s25
    %p22 = scmp.ge.s32.totalorder %s21, 5
    %s31 = sphi 0, %s33
    %s34 = sphi 0, %s31
    %s35 = sphi 0, %s34
    %s51 = sphi 0, %s35
    %s55 = sphi 0, %s55
    %s57 = sphi 0, %s55
    %s58 = sphi 0, %s57
    %s72 = sphi 0, %s58
    %s76 = sphi 0, %s76
    %s78 = sphi 0, %s76
    %s79 = sphi 0, %s78
    %s93 = sphi 0, %s79
    %s97 = sphi 0, %s97
    %s99 = sphi 0, %s97
    %s100 = sphi 0, %s99
    %s114 = sphi 0, %s100
    %s118 = sphi 0, %s118
    %s120 = sphi 0, %s118
    %s121 = sphi 0, %s120
    %s135 = sphi 0, %s121
    %s139 = sphi 0, %s139
    %s141 = sphi 0, %s139
    %s142 = sphi 0, %s141
    %s156 = sphi 0, %s142
    %s160 = sphi 0, %s160
    %s162 = sphi 0, %s160
    %s163 = sphi 0, %s162
    %s177 = sphi 0, %s163
    %s181 = sphi 0, %s181
    %s183 = sphi 0, %s181
    %s184 = sphi 0, %s183
    %s198 = sphi 0, %s184
    %s202 = sphi 0, %s202
    %s204 = sphi 0, %s202
    %s205 = sphi 0, %s204
    %s219 = sphi 0, %s205
    %s223 = sphi 0, %s223
    %s225 = sphi 0, %s223
    %s226 = sphi 0, %s225
    %s240 = sphi 0, %s226
    %s244 = sphi 0, %s244
    %s246 = sphi 0, %s244
    %s247 = sphi 0, %s246
    %s261 = sphi 0, %s247
    %s265 = sphi 0, %s265
    %s267 = sphi 0, %s265
    %s268 = sphi 0, %s267
    %s282 = sphi 0, %s268
    %s286 = sphi 0, %s286
    %s288 = sphi 0, %s286
    %s289 = sphi 0, %s288
    %s303 = sphi 0, %s289
    %s307 = sphi 0, %s307
    %s309 = sphi 0, %s307
    %s310 = sphi 0, %s309
    %s324 = sphi 0, %s310
    %s328 = sphi 0, %s328
    %s330 = sphi 0, %s328
    %s331 = sphi 0, %s330
    %s345 = sphi 0, %s331
    %s351 = sphi 0, %s353
    %s354 = sphi 0, %s351
    %s355 = sphi 0, %s354
    %s371 = sphi 0, %s355
  $region4: #{forward.4} parent=0 // loop_header_branch
    %24 = sbr.rel (%p22) target = $region8
  $region5: #{forward.4} parent=0 // loop_body
    %s26 = ssub.s32 %s21, 1
    %s27 = ssub.s32 %s21, 2
    %s28 = sadd.s32 %s21, 1
    %s29 = ssub.s32 %s21, %s28
    %p30 = scmp.eq.s32.totalorder %s29, 0
    %s32 = sadd.s32 %s31, 1
    %s33 = scalar_select %p30, %s31, %s32
    %p36 = pneg %p30
    %p37 = scmp.eq.s32.totalorder %s21, 2
    %p38 = por %p36, %p37
    %p39 = scmp.ne.s32.totalorder %s31, %s34
    %p40 = scmp.eq.s32.totalorder %s21, 0
    %p41 = por %p39, %p40
    %p42 = scmp.ne.s32.totalorder %s31, %s34
    %p43 = scmp.eq.s32.totalorder %s26, 2
    %p44 = por %p42, %p43
    %p45 = scmp.ne.s32.totalorder %s34, %s35
    %p46 = scmp.eq.s32.totalorder %s26, 0
    %p47 = por %p45, %p46
    %p48 = scmp.ne.s32.totalorder %s34, %s35
    %p49 = scmp.eq.s32.totalorder %s27, 2
    %p50 = por %p48, %p49
    %p52 = scmp.ne.s32.totalorder %s35, %s51
    %p53 = scmp.eq.s32.totalorder %s27, 0
    %p54 = por %p52, %p53
    %s56 = sadd.s32 %s55, 1
    %p59 = scmp.eq.s32.totalorder %s21, 2
    %p60 = scmp.ne.s32.totalorder %s55, %s57
    %p61 = scmp.eq.s32.totalorder %s21, 0
    %p62 = por %p60, %p61
    %p63 = scmp.ne.s32.totalorder %s55, %s57
    %p64 = scmp.eq.s32.totalorder %s26, 2
    %p65 = por %p63, %p64
    %p66 = scmp.ne.s32.totalorder %s57, %s58
    %p67 = scmp.eq.s32.totalorder %s26, 0
    %p68 = por %p66, %p67
    %p69 = scmp.ne.s32.totalorder %s57, %s58
    %p70 = scmp.eq.s32.totalorder %s27, 2
    %p71 = por %p69, %p70
    %p73 = scmp.ne.s32.totalorder %s58, %s72
    %p74 = scmp.eq.s32.totalorder %s27, 0
    %p75 = por %p73, %p74
    %s77 = sadd.s32 %s76, 1
    %p80 = scmp.eq.s32.totalorder %s21, 2
    %p81 = scmp.ne.s32.totalorder %s76, %s78
    %p82 = scmp.eq.s32.totalorder %s21, 0
    %p83 = por %p81, %p82
    %p84 = scmp.ne.s32.totalorder %s76, %s78
    %p85 = scmp.eq.s32.totalorder %s26, 2
    %p86 = por %p84, %p85
    %p87 = scmp.ne.s32.totalorder %s78, %s79
    %p88 = scmp.eq.s32.totalorder %s26, 0
    %p89 = por %p87, %p88
    %p90 = scmp.ne.s32.totalorder %s78, %s79
    %p91 = scmp.eq.s32.totalorder %s27, 2
    %p92 = por %p90, %p91
    %p94 = scmp.ne.s32.totalorder %s79, %s93
    %p95 = scmp.eq.s32.totalorder %s27, 0
    %p96 = por %p94, %p95
    %s98 = sadd.s32 %s97, 1
    %p101 = scmp.eq.s32.totalorder %s21, 2
    %p102 = scmp.ne.s32.totalorder %s97, %s99
    %p103 = scmp.eq.s32.totalorder %s21, 0
    %p104 = por %p102, %p103
    %p105 = scmp.ne.s32.totalorder %s97, %s99
    %p106 = scmp.eq.s32.totalorder %s26, 2
    %p107 = por %p105, %p106
    %p108 = scmp.ne.s32.totalorder %s99, %s100
    %p109 = scmp.eq.s32.totalorder %s26, 0
    %p110 = por %p108, %p109
    %p111 = scmp.ne.s32.totalorder %s99, %s100
    %p112 = scmp.eq.s32.totalorder %s27, 2
    %p113 = por %p111, %p112
    %p115 = scmp.ne.s32.totalorder %s100, %s114
    %p116 = scmp.eq.s32.totalorder %s27, 0
    %p117 = por %p115, %p116
    %s119 = sadd.s32 %s118, 1
    %p122 = scmp.eq.s32.totalorder %s21, 2
    %p123 = scmp.ne.s32.totalorder %s118, %s120
    %p124 = scmp.eq.s32.totalorder %s21, 0
    %p125 = por %p123, %p124
    %p126 = scmp.ne.s32.totalorder %s118, %s120
    %p127 = scmp.eq.s32.totalorder %s26, 2
    %p128 = por %p126, %p127
    %p129 = scmp.ne.s32.totalorder %s120, %s121
    %p130 = scmp.eq.s32.totalorder %s26, 0
    %p131 = por %p129, %p130
    %p132 = scmp.ne.s32.totalorder %s120, %s121
    %p133 = scmp.eq.s32.totalorder %s27, 2
    %p134 = por %p132, %p133
    %p136 = scmp.ne.s32.totalorder %s121, %s135
    %p137 = scmp.eq.s32.totalorder %s27, 0
    %p138 = por %p136, %p137
    %s140 = sadd.s32 %s139, 1
    %p143 = scmp.eq.s32.totalorder %s21, 2
    %p144 = scmp.ne.s32.totalorder %s139, %s141
    %p145 = scmp.eq.s32.totalorder %s21, 0
    %p146 = por %p144, %p145
    %p147 = scmp.ne.s32.totalorder %s139, %s141
    %p148 = scmp.eq.s32.totalorder %s26, 2
    %p149 = por %p147, %p148
    %p150 = scmp.ne.s32.totalorder %s141, %s142
    %p151 = scmp.eq.s32.totalorder %s26, 0
    %p152 = por %p150, %p151
    %p153 = scmp.ne.s32.totalorder %s141, %s142
    %p154 = scmp.eq.s32.totalorder %s27, 2
    %p155 = por %p153, %p154
    %p157 = scmp.ne.s32.totalorder %s142, %s156
    %p158 = scmp.eq.s32.totalorder %s27, 0
    %p159 = por %p157, %p158
    %s161 = sadd.s32 %s160, 1
    %p164 = scmp.eq.s32.totalorder %s21, 2
    %p165 = scmp.ne.s32.totalorder %s160, %s162
    %p166 = scmp.eq.s32.totalorder %s21, 0
    %p167 = por %p165, %p166
    %p168 = scmp.ne.s32.totalorder %s160, %s162
    %p169 = scmp.eq.s32.totalorder %s26, 2
    %p170 = por %p168, %p169
    %p171 = scmp.ne.s32.totalorder %s162, %s163
    %p172 = scmp.eq.s32.totalorder %s26, 0
    %p173 = por %p171, %p172
    %p174 = scmp.ne.s32.totalorder %s162, %s163
    %p175 = scmp.eq.s32.totalorder %s27, 2
    %p176 = por %p174, %p175
    %p178 = scmp.ne.s32.totalorder %s163, %s177
    %p179 = scmp.eq.s32.totalorder %s27, 0
    %p180 = por %p178, %p179
    %s182 = sadd.s32 %s181, 1
    %p185 = scmp.eq.s32.totalorder %s21, 2
    %p186 = scmp.ne.s32.totalorder %s181, %s183
    %p187 = scmp.eq.s32.totalorder %s21, 0
    %p188 = por %p186, %p187
    %p189 = scmp.ne.s32.totalorder %s181, %s183
    %p190 = scmp.eq.s32.totalorder %s26, 2
    %p191 = por %p189, %p190
    %p192 = scmp.ne.s32.totalorder %s183, %s184
    %p193 = scmp.eq.s32.totalorder %s26, 0
    %p194 = por %p192, %p193
    %p195 = scmp.ne.s32.totalorder %s183, %s184
    %p196 = scmp.eq.s32.totalorder %s27, 2
    %p197 = por %p195, %p196
    %p199 = scmp.ne.s32.totalorder %s184, %s198
    %p200 = scmp.eq.s32.totalorder %s27, 0
    %p201 = por %p199, %p200
    %s203 = sadd.s32 %s202, 1
    %p206 = scmp.eq.s32.totalorder %s21, 2
    %p207 = scmp.ne.s32.totalorder %s202, %s204
    %p208 = scmp.eq.s32.totalorder %s21, 0
    %p209 = por %p207, %p208
    %p210 = scmp.ne.s32.totalorder %s202, %s204
    %p211 = scmp.eq.s32.totalorder %s26, 2
    %p212 = por %p210, %p211
    %p213 = scmp.ne.s32.totalorder %s204, %s205
    %p214 = scmp.eq.s32.totalorder %s26, 0
    %p215 = por %p213, %p214
    %p216 = scmp.ne.s32.totalorder %s204, %s205
    %p217 = scmp.eq.s32.totalorder %s27, 2
    %p218 = por %p216, %p217
    %p220 = scmp.ne.s32.totalorder %s205, %s219
    %p221 = scmp.eq.s32.totalorder %s27, 0
    %p222 = por %p220, %p221
    %s224 = sadd.s32 %s223, 1
    %p227 = scmp.eq.s32.totalorder %s21, 2
    %p228 = scmp.ne.s32.totalorder %s223, %s225
    %p229 = scmp.eq.s32.totalorder %s21, 0
    %p230 = por %p228, %p229
    %p231 = scmp.ne.s32.totalorder %s223, %s225
    %p232 = scmp.eq.s32.totalorder %s26, 2
    %p233 = por %p231, %p232
    %p234 = scmp.ne.s32.totalorder %s225, %s226
    %p235 = scmp.eq.s32.totalorder %s26, 0
    %p236 = por %p234, %p235
    %p237 = scmp.ne.s32.totalorder %s225, %s226
    %p238 = scmp.eq.s32.totalorder %s27, 2
    %p239 = por %p237, %p238
    %p241 = scmp.ne.s32.totalorder %s226, %s240
    %p242 = scmp.eq.s32.totalorder %s27, 0
    %p243 = por %p241, %p242
    %s245 = sadd.s32 %s244, 1
    %p248 = scmp.eq.s32.totalorder %s21, 2
    %p249 = scmp.ne.s32.totalorder %s244, %s246
    %p250 = scmp.eq.s32.totalorder %s21, 0
    %p251 = por %p249, %p250
    %p252 = scmp.ne.s32.totalorder %s244, %s246
    %p253 = scmp.eq.s32.totalorder %s26, 2
    %p254 = por %p252, %p253
    %p255 = scmp.ne.s32.totalorder %s246, %s247
    %p256 = scmp.eq.s32.totalorder %s26, 0
    %p257 = por %p255, %p256
    %p258 = scmp.ne.s32.totalorder %s246, %s247
    %p259 = scmp.eq.s32.totalorder %s27, 2
    %p260 = por %p258, %p259
    %p262 = scmp.ne.s32.totalorder %s247, %s261
    %p263 = scmp.eq.s32.totalorder %s27, 0
    %p264 = por %p262, %p263
    %s266 = sadd.s32 %s265, 1
    %p269 = scmp.eq.s32.totalorder %s21, 2
    %p270 = scmp.ne.s32.totalorder %s265, %s267
    %p271 = scmp.eq.s32.totalorder %s21, 0
    %p272 = por %p270, %p271
    %p273 = scmp.ne.s32.totalorder %s265, %s267
    %p274 = scmp.eq.s32.totalorder %s26, 2
    %p275 = por %p273, %p274
    %p276 = scmp.ne.s32.totalorder %s267, %s268
    %p277 = scmp.eq.s32.totalorder %s26, 0
    %p278 = por %p276, %p277
    %p279 = scmp.ne.s32.totalorder %s267, %s268
    %p280 = scmp.eq.s32.totalorder %s27, 2
    %p281 = por %p279, %p280
    %p283 = scmp.ne.s32.totalorder %s268, %s282
    %p284 = scmp.eq.s32.totalorder %s27, 0
    %p285 = por %p283, %p284
    %s287 = sadd.s32 %s286, 1
    %p290 = scmp.eq.s32.totalorder %s21, 2
    %p291 = scmp.ne.s32.totalorder %s286, %s288
    %p292 = scmp.eq.s32.totalorder %s21, 0
    %p293 = por %p291, %p292
    %p294 = scmp.ne.s32.totalorder %s286, %s288
    %p295 = scmp.eq.s32.totalorder %s26, 2
    %p296 = por %p294, %p295
    %p297 = scmp.ne.s32.totalorder %s288, %s289
    %p298 = scmp.eq.s32.totalorder %s26, 0
    %p299 = por %p297, %p298
    %p300 = scmp.ne.s32.totalorder %s288, %s289
    %p301 = scmp.eq.s32.totalorder %s27, 2
    %p302 = por %p300, %p301
    %p304 = scmp.ne.s32.totalorder %s289, %s303
    %p305 = scmp.eq.s32.totalorder %s27, 0
    %p306 = por %p304, %p305
    %s308 = sadd.s32 %s307, 1
    %p311 = scmp.eq.s32.totalorder %s21, 2
    %p312 = scmp.ne.s32.totalorder %s307, %s309
    %p313 = scmp.eq.s32.totalorder %s21, 0
    %p314 = por %p312, %p313
    %p315 = scmp.ne.s32.totalorder %s307, %s309
    %p316 = scmp.eq.s32.totalorder %s26, 2
    %p317 = por %p315, %p316
    %p318 = scmp.ne.s32.totalorder %s309, %s310
    %p319 = scmp.eq.s32.totalorder %s26, 0
    %p320 = por %p318, %p319
    %p321 = scmp.ne.s32.totalorder %s309, %s310
    %p322 = scmp.eq.s32.totalorder %s27, 2
    %p323 = por %p321, %p322
    %p325 = scmp.ne.s32.totalorder %s310, %s324
    %p326 = scmp.eq.s32.totalorder %s27, 0
    %p327 = por %p325, %p326
    %s329 = sadd.s32 %s328, 1
    %p332 = scmp.eq.s32.totalorder %s21, 2
    %p333 = scmp.ne.s32.totalorder %s328, %s330
    %p334 = scmp.eq.s32.totalorder %s21, 0
    %p335 = por %p333, %p334
    %p336 = scmp.ne.s32.totalorder %s328, %s330
    %p337 = scmp.eq.s32.totalorder %s26, 2
    %p338 = por %p336, %p337
    %p339 = scmp.ne.s32.totalorder %s330, %s331
    %p340 = scmp.eq.s32.totalorder %s26, 0
    %p341 = por %p339, %p340
    %p342 = scmp.ne.s32.totalorder %s330, %s331
    %p343 = scmp.eq.s32.totalorder %s27, 2
    %p344 = por %p342, %p343
    %p346 = scmp.ne.s32.totalorder %s331, %s345
    %p347 = scmp.eq.s32.totalorder %s27, 0
    %p348 = por %p346, %p347
    %s349 = ssub.s32 %s21, %s28
    %p350 = scmp.eq.s32.totalorder %s349, 0
    %s352 = sadd.s32 %s351, 1
    %s353 = scalar_select %p350, %s351, %s352
    %p356 = pneg %p350
    %p357 = scmp.eq.s32.totalorder %s21, 2
    %p358 = por %p356, %p357
    %p359 = scmp.ne.s32.totalorder %s351, %s354
    %p360 = scmp.eq.s32.totalorder %s21, 0
    %p361 = por %p359, %p360
    %p362 = scmp.ne.s32.totalorder %s351, %s354
    %p363 = scmp.eq.s32.totalorder %s26, 2
    %p364 = por %p362, %p363
    %p365 = scmp.ne.s32.totalorder %s354, %s355
    %p366 = scmp.eq.s32.totalorder %s26, 0
    %p367 = por %p365, %p366
    %p368 = scmp.ne.s32.totalorder %s354, %s355
    %p369 = scmp.eq.s32.totalorder %s27, 2
    %p370 = por %p368, %p369
    %p372 = scmp.ne.s32.totalorder %s355, %s371
    %p373 = scmp.eq.s32.totalorder %s27, 0
    %p374 = por %p372, %p373
    %p375 = scmp.le.s32.totalorder 1, %s21
    %p376 = scmp.lt.s32.totalorder %s21, 4
    %p377 = pnand %p375, %p376
    %p378 = pneg %p377
    // Predicated region
    $region9: #{forward.4} parent=5 // pred_check
      _
    $region10: #{forward.4} parent=5 // pred_check_branch
      %380 = sbr.rel (%p377) target = $region12
    $region11: #{forward.4} parent=5 // pred_region
      %s381 = ssub.s32 %s21, 1
      // Predicated region
      $region13: #{forward.4} parent=11 // pred_check
        %p382 = pneg %p68
      $region14: #{forward.4} parent=11 // pred_check_branch
        %384 = sbr.rel (%p382) target = $region16
      $region15: #{forward.4} parent=11 // pred_region
        _
      $region16: #{forward.4} parent=11 // pred_fallthru
        _
      // Predicated region
      $region17: #{forward.4} parent=11 // pred_check
        %p385 = pneg %p89
      $region18: #{forward.4} parent=11 // pred_check_branch
        %387 = sbr.rel (%p385) target = $region20
      $region19: #{forward.4} parent=11 // pred_region
        _
      $region20: #{forward.4} parent=11 // pred_fallthru
        _
      // Predicated region
      $region21: #{forward.4} parent=11 // pred_check
        %p388 = pneg %p110
      $region22: #{forward.4} parent=11 // pred_check_branch
        %390 = sbr.rel (%p388) target = $region24
      $region23: #{forward.4} parent=11 // pred_region
        _
      $region24: #{forward.4} parent=11 // pred_fallthru
        _
      // Predicated region
      $region25: #{forward.4} parent=11 // pred_check
        %p391 = pneg %p131
      $region26: #{forward.4} parent=11 // pred_check_branch
        %393 = sbr.rel (%p391) target = $region28
      $region27: #{forward.4} parent=11 // pred_region
        _
      $region28: #{forward.4} parent=11 // pred_fallthru
        _
      // Predicated region
      $region29: #{forward.4} parent=11 // pred_check
        %p394 = pneg %p152
      $region30: #{forward.4} parent=11 // pred_check_branch
        %396 = sbr.rel (%p394) target = $region32
      $region31: #{forward.4} parent=11 // pred_region
        _
      $region32: #{forward.4} parent=11 // pred_fallthru
        _
      // Predicated region
      $region33: #{forward.4} parent=11 // pred_check
        %p397 = pneg %p173
      $region34: #{forward.4} parent=11 // pred_check_branch
        %399 = sbr.rel (%p397) target = $region36
      $region35: #{forward.4} parent=11 // pred_region
        _
      $region36: #{forward.4} parent=11 // pred_fallthru
        _
      // Predicated region
      $region37: #{forward.4} parent=11 // pred_check
        %p400 = pneg %p194
      $region38: #{forward.4} parent=11 // pred_check_branch
        %402 = sbr.rel (%p400) target = $region40
      $region39: #{forward.4} parent=11 // pred_region
        _
      $region40: #{forward.4} parent=11 // pred_fallthru
        _
      // Predicated region
      $region41: #{forward.4} parent=11 // pred_check
        %p403 = pneg %p215
      $region42: #{forward.4} parent=11 // pred_check_branch
        %405 = sbr.rel (%p403) target = $region44
      $region43: #{forward.4} parent=11 // pred_region
        _
      $region44: #{forward.4} parent=11 // pred_fallthru
        _
      // Predicated region
      $region45: #{forward.4} parent=11 // pred_check
        %p406 = pneg %p236
      $region46: #{forward.4} parent=11 // pred_check_branch
        %408 = sbr.rel (%p406) target = $region48
      $region47: #{forward.4} parent=11 // pred_region
        _
      $region48: #{forward.4} parent=11 // pred_fallthru
        _
      // Predicated region
      $region49: #{forward.4} parent=11 // pred_check
        %p409 = pneg %p257
      $region50: #{forward.4} parent=11 // pred_check_branch
        %411 = sbr.rel (%p409) target = $region52
      $region51: #{forward.4} parent=11 // pred_region
        _
      $region52: #{forward.4} parent=11 // pred_fallthru
        _
      // Predicated region
      $region53: #{forward.4} parent=11 // pred_check
        %p412 = pneg %p278
      $region54: #{forward.4} parent=11 // pred_check_branch
        %414 = sbr.rel (%p412) target = $region56
      $region55: #{forward.4} parent=11 // pred_region
        _
      $region56: #{forward.4} parent=11 // pred_fallthru
        _
      // Predicated region
      $region57: #{forward.4} parent=11 // pred_check
        %p415 = pneg %p299
      $region58: #{forward.4} parent=11 // pred_check_branch
        %417 = sbr.rel (%p415) target = $region60
      $region59: #{forward.4} parent=11 // pred_region
        _
      $region60: #{forward.4} parent=11 // pred_fallthru
        _
      // Predicated region
      $region61: #{forward.4} parent=11 // pred_check
        %p418 = pneg %p320
      $region62: #{forward.4} parent=11 // pred_check_branch
        %420 = sbr.rel (%p418) target = $region64
      $region63: #{forward.4} parent=11 // pred_region
        _
      $region64: #{forward.4} parent=11 // pred_fallthru
        _
      // Predicated region
      $region65: #{forward.4} parent=11 // pred_check
        %p421 = pneg %p341
      $region66: #{forward.4} parent=11 // pred_check_branch
        %423 = sbr.rel (%p421) target = $region68
      $region67: #{forward.4} parent=11 // pred_region
        _
      $region68: #{forward.4} parent=11 // pred_fallthru
        _
    $region12: #{forward.4} parent=5 // pred_fallthru
      _
    %p424 = scmp.lt.s32.totalorder %s21, 3
    // Predicated region
    $region69: #{forward.4} parent=5 // pred_check
      %p425 = pneg %p424
    $region70: #{forward.4} parent=5 // pred_check_branch
      %427 = sbr.rel (%p425) target = $region72
    $region71: #{forward.4} parent=5 // pred_region
      // Predicated region
      $region73: #{forward.4} parent=71 // pred_check
        %p428 = pneg %p41
      $region74: #{forward.4} parent=71 // pred_check_branch
        %430 = sbr.rel (%p428) target = $region76
      $region75: #{forward.4} parent=71 // pred_region
        %p431 = scmp.lt.s32.totalorder %s21, 2
        %s432 = scalar_select %p431, %s21, 2
        %s433 = smul.addr %s432, 72
        %s434 = smul.addr %s433, 4
        %s435 = scalar_lea.vmem %s0, %s434
      $region76: #{forward.4} parent=71 // pred_fallthru
        _
    $region72: #{forward.4} parent=5 // pred_fallthru
      _
    %p436 = scmp.le.s32.totalorder 1, %s21
    %p437 = scmp.lt.s32.totalorder %s21, 4
    %p438 = pnand %p436, %p437
    %p439 = pneg %p438
    // Predicated region
    $region77: #{forward.4} parent=5 // pred_check
      _
    $region78: #{forward.4} parent=5 // pred_check_branch
      %441 = sbr.rel (%p438) target = $region80
    $region79: #{forward.4} parent=5 // pred_region
      %s442 = ssub.s32 %s21, 1
      %p443 = scmp.lt.s32.totalorder %s26, 2
      %s444 = scalar_select %p443, %s26, 2
      %s445 = smul.addr %s444, 72
      %s446 = smul.addr %s445, 4
      %s447 = scalar_lea.vmem %s0, %s446
      %p448 = pneg %p47
      %p449 = pneg %p44
      %p450 = pneg %p68
      %p451 = pneg %p65
      %p452 = pneg %p89
      %p453 = pneg %p86
      %p454 = pneg %p110
      %p455 = pneg %p107
      %p456 = pneg %p131
      %p457 = pneg %p128
      %p458 = pneg %p152
      %p459 = pneg %p149
      %p460 = pneg %p173
      %p461 = pneg %p170
      %p462 = pneg %p194
      %p463 = pneg %p191
      %p464 = pneg %p215
      %p465 = pneg %p212
      %p466 = pneg %p236
      %p467 = pneg %p233
      %p468 = pneg %p257
      %p469 = pneg %p254
      %p470 = pneg %p278
      %p471 = pneg %p275
      %p472 = pneg %p299
      %p473 = pneg %p296
      %p474 = pneg %p320
      %p475 = pneg %p317
      %p476 = pneg %p341
      %p477 = pneg %p338
      %p478 = pneg %p367
      %p479 = pneg %p364
      %p480 = scmp.lt.s32.totalorder %s26, 2
      %s481 = scalar_select %p480, %s26, 2
      %s482 = smul.addr %s481, 16
      %s483 = smul.addr %s482, 4
      %s484 = scalar_lea.vmem %s15, %s483
      %p485 = scmp.lt.s32.totalorder %s26, 2
      %s486 = scalar_select %p485, %s26, 2
      %s487 = smul.addr %s486, 72
      %s488 = smul.addr %s487, 4
      %s489 = scalar_lea.vmem %s0, %s488
      %p490 = scmp.lt.s32.totalorder %s26, 2
      %s491 = scalar_select %p490, %s26, 2
      %s492 = smul.addr %s491, 16
      %s493 = smul.addr %s492, 4
      %s494 = scalar_lea.vmem %s15, %s493
      %v496 = vld [vmem:[%s489] sm:$0xf]
      %v497 = vld [vmem:[%s489 + $0x8] sm:$0xf]
      %v498 = vld [vmem:[%s489 + $0x10] sm:$0xf]
      %v499 = vld [vmem:[%s489 + $0x18] sm:$0xf]
      %v500 = vld [vmem:[%s489 + $0x20] sm:$0xf]
      %v501 = vld [vmem:[%s489 + $0x28] sm:$0xf]
      %v502 = vld [vmem:[%s489 + $0x30] sm:$0xf]
      %v503 = vld [vmem:[%s489 + $0x38] sm:$0xf]
      %s504 = scalar_lea.vmem %s489, 72
      %v505 = vld [vmem:[%s504] sm:$0xf]
      %v506 = vld [vmem:[%s504 + $0x8] sm:$0xf]
      %v507 = vld [vmem:[%s504 + $0x10] sm:$0xf]
      %v508 = vld [vmem:[%s504 + $0x18] sm:$0xf]
      %v509 = vld [vmem:[%s504 + $0x20] sm:$0xf]
      %v510 = vld [vmem:[%s504 + $0x28] sm:$0xf]
      %v511 = vld [vmem:[%s504 + $0x30] sm:$0xf]
      %v512 = vld [vmem:[%s504 + $0x38] sm:$0xf]
      %v513 = vld [vmem:[%s489 + $0x4] sm:$0x1]
      %v514 = vld [vmem:[%s489 + $0xc] sm:$0x1]
      %v515 = vld [vmem:[%s489 + $0x14] sm:$0x1]
      %v516 = vld [vmem:[%s489 + $0x1c] sm:$0x1]
      %v517 = vld [vmem:[%s489 + $0x24] sm:$0x1]
      %v518 = vld [vmem:[%s489 + $0x2c] sm:$0x1]
      %v519 = vld [vmem:[%s489 + $0x34] sm:$0x1]
      %v520 = vld [vmem:[%s489 + $0x3c] sm:$0x1]
      %vm521 = vsmask.f32 3328
      %vm522 = vsmask.f32 7440
      %vm523 = vmor %vm521, %vm522
      %v525 = vshrl.u32 %v496, 16
      %v527 = vrot.slane %v525, 4
      %v528 = vshll.u32 %v496, 16
      %v530 = vrot.slane %v528, 5
      %v531 = vor.u32 %v527, %v530
      %v532 = vrot.slane %v531, 4
      %v534 = vshll.u32 %v513, 16
      %v536 = vrot.slane %v534, 5
      %v537 = vsel %vm523, %v532, %v536
      %v539 = vshrl.u32 %v497, 16
      %v541 = vrot.slane %v539, 4
      %v542 = vshll.u32 %v497, 16
      %v544 = vrot.slane %v542, 5
      %v545 = vor.u32 %v541, %v544
      %v546 = vrot.slane %v545, 4
      %v548 = vshll.u32 %v514, 16
      %v550 = vrot.slane %v548, 5
      %v551 = vsel %vm523, %v546, %v550
      %v553 = vshrl.u32 %v498, 16
      %v555 = vrot.slane %v553, 4
      %v556 = vshll.u32 %v498, 16
      %v558 = vrot.slane %v556, 5
      %v559 = vor.u32 %v555, %v558
      %v560 = vrot.slane %v559, 4
      %v562 = vshll.u32 %v515, 16
      %v564 = vrot.slane %v562, 5
      %v565 = vsel %vm523, %v560, %v564
      %v567 = vshrl.u32 %v499, 16
      %v569 = vrot.slane %v567, 4
      %v570 = vshll.u32 %v499, 16
      %v572 = vrot.slane %v570, 5
      %v573 = vor.u32 %v569, %v572
      %v574 = vrot.slane %v573, 4
      %v576 = vshll.u32 %v516, 16
      %v578 = vrot.slane %v576, 5
      %v579 = vsel %vm523, %v574, %v578
      %v581 = vshrl.u32 %v500, 16
      %v583 = vrot.slane %v581, 4
      %v584 = vshll.u32 %v500, 16
      %v586 = vrot.slane %v584, 5
      %v587 = vor.u32 %v583, %v586
      %v588 = vrot.slane %v587, 4
      %v590 = vshll.u32 %v517, 16
      %v592 = vrot.slane %v590, 5
      %v593 = vsel %vm523, %v588, %v592
      %v595 = vshrl.u32 %v501, 16
      %v597 = vrot.slane %v595, 4
      %v598 = vshll.u32 %v501, 16
      %v600 = vrot.slane %v598, 5
      %v601 = vor.u32 %v597, %v600
      %v602 = vrot.slane %v601, 4
      %v604 = vshll.u32 %v518, 16
      %v606 = vrot.slane %v604, 5
      %v607 = vsel %vm523, %v602, %v606
      %v609 = vshrl.u32 %v502, 16
      %v611 = vrot.slane %v609, 4
      %v612 = vshll.u32 %v502, 16
      %v614 = vrot.slane %v612, 5
      %v615 = vor.u32 %v611, %v614
      %v616 = vrot.slane %v615, 4
      %v618 = vshll.u32 %v519, 16
      %v620 = vrot.slane %v618, 5
      %v621 = vsel %vm523, %v616, %v620
      %v623 = vshrl.u32 %v503, 16
      %v625 = vrot.slane %v623, 4
      %v626 = vshll.u32 %v503, 16
      %v628 = vrot.slane %v626, 5
      %v629 = vor.u32 %v625, %v628
      %v630 = vrot.slane %v629, 4
      %v632 = vshll.u32 %v520, 16
      %v634 = vrot.slane %v632, 5
      %v635 = vsel %vm523, %v630, %v634
      %s636 = scalar_lea.vmem %s489, 144
      %v637 = vld [vmem:[%s636] sm:$0xf]
      %v638 = vld [vmem:[%s636 + $0x8] sm:$0xf]
      %v639 = vld [vmem:[%s636 + $0x10] sm:$0xf]
      %v640 = vld [vmem:[%s636 + $0x18] sm:$0xf]
      %v641 = vld [vmem:[%s636 + $0x20] sm:$0xf]
      %v642 = vld [vmem:[%s636 + $0x28] sm:$0xf]
      %v643 = vld [vmem:[%s636 + $0x30] sm:$0xf]
      %v644 = vld [vmem:[%s636 + $0x38] sm:$0xf]
      %s645 = scalar_lea.vmem %s489, 216
      %v646 = vld [vmem:[%s645] sm:$0xf]
      %v647 = vld [vmem:[%s645 + $0x8] sm:$0xf]
      %v648 = vld [vmem:[%s645 + $0x10] sm:$0xf]
      %v649 = vld [vmem:[%s645 + $0x18] sm:$0xf]
      %v650 = vld [vmem:[%s645 + $0x20] sm:$0xf]
      %v651 = vld [vmem:[%s645 + $0x28] sm:$0xf]
      %v652 = vld [vmem:[%s645 + $0x30] sm:$0xf]
      %v653 = vld [vmem:[%s645 + $0x38] sm:$0xf]
      %v654 = vld [vmem:[%s636 + $0x4] sm:$0x1]
      %v655 = vld [vmem:[%s636 + $0xc] sm:$0x1]
      %v656 = vld [vmem:[%s636 + $0x14] sm:$0x1]
      %v657 = vld [vmem:[%s636 + $0x1c] sm:$0x1]
      %v658 = vld [vmem:[%s636 + $0x24] sm:$0x1]
      %v659 = vld [vmem:[%s636 + $0x2c] sm:$0x1]
      %v660 = vld [vmem:[%s636 + $0x34] sm:$0x1]
      %v661 = vld [vmem:[%s636 + $0x3c] sm:$0x1]
      %v663 = vshrl.u32 %v637, 16
      %v665 = vrot.slane %v663, 4
      %v666 = vshll.u32 %v637, 16
      %v668 = vrot.slane %v666, 5
      %v669 = vor.u32 %v665, %v668
      %v670 = vrot.slane %v669, 4
      %v672 = vshll.u32 %v654, 16
      %v674 = vrot.slane %v672, 5
      %v675 = vsel %vm523, %v670, %v674
      %v677 = vshrl.u32 %v638, 16
      %v679 = vrot.slane %v677, 4
      %v680 = vshll.u32 %v638, 16
      %v682 = vrot.slane %v680, 5
      %v683 = vor.u32 %v679, %v682
      %v684 = vrot.slane %v683, 4
      %v686 = vshll.u32 %v655, 16
      %v688 = vrot.slane %v686, 5
      %v689 = vsel %vm523, %v684, %v688
      %v691 = vshrl.u32 %v639, 16
      %v693 = vrot.slane %v691, 4
      %v694 = vshll.u32 %v639, 16
      %v696 = vrot.slane %v694, 5
      %v697 = vor.u32 %v693, %v696
      %v698 = vrot.slane %v697, 4
      %v700 = vshll.u32 %v656, 16
      %v702 = vrot.slane %v700, 5
      %v703 = vsel %vm523, %v698, %v702
      %v705 = vshrl.u32 %v640, 16
      %v707 = vrot.slane %v705, 4
      %v708 = vshll.u32 %v640, 16
      %v710 = vrot.slane %v708, 5
      %v711 = vor.u32 %v707, %v710
      %v712 = vrot.slane %v711, 4
      %v714 = vshll.u32 %v657, 16
      %v716 = vrot.slane %v714, 5
      %v717 = vsel %vm523, %v712, %v716
      %v719 = vshrl.u32 %v641, 16
      %v721 = vrot.slane %v719, 4
      %v722 = vshll.u32 %v641, 16
      %v724 = vrot.slane %v722, 5
      %v725 = vor.u32 %v721, %v724
      %v726 = vrot.slane %v725, 4
      %v728 = vshll.u32 %v658, 16
      %v730 = vrot.slane %v728, 5
      %v731 = vsel %vm523, %v726, %v730
      %v733 = vshrl.u32 %v642, 16
      %v735 = vrot.slane %v733, 4
      %v736 = vshll.u32 %v642, 16
      %v738 = vrot.slane %v736, 5
      %v739 = vor.u32 %v735, %v738
      %v740 = vrot.slane %v739, 4
      %v742 = vshll.u32 %v659, 16
      %v744 = vrot.slane %v742, 5
      %v745 = vsel %vm523, %v740, %v744
      %v747 = vshrl.u32 %v643, 16
      %v749 = vrot.slane %v747, 4
      %v750 = vshll.u32 %v643, 16
      %v752 = vrot.slane %v750, 5
      %v753 = vor.u32 %v749, %v752
      %v754 = vrot.slane %v753, 4
      %v756 = vshll.u32 %v660, 16
      %v758 = vrot.slane %v756, 5
      %v759 = vsel %vm523, %v754, %v758
      %v761 = vshrl.u32 %v644, 16
      %v763 = vrot.slane %v761, 4
      %v764 = vshll.u32 %v644, 16
      %v766 = vrot.slane %v764, 5
      %v767 = vor.u32 %v763, %v766
      %v768 = vrot.slane %v767, 4
      %v770 = vshll.u32 %v661, 16
      %v772 = vrot.slane %v770, 5
      %v773 = vsel %vm523, %v768, %v772
      %s774 = scalar_lea.vmem %s489, 8
      %v775 = vld [vmem:[%s774] sm:$0xf]
      %v776 = vld [vmem:[%s774 + $0x8] sm:$0xf]
      %v777 = vld [vmem:[%s774 + $0x10] sm:$0xf]
      %v778 = vld [vmem:[%s774 + $0x18] sm:$0xf]
      %v779 = vld [vmem:[%s774 + $0x20] sm:$0xf]
      %v780 = vld [vmem:[%s774 + $0x28] sm:$0xf]
      %v781 = vld [vmem:[%s774 + $0x30] sm:$0xf]
      %v782 = vld [vmem:[%s774 + $0x38] sm:$0xf]
      %s783 = scalar_lea.vmem %s489, 80
      %v784 = vld [vmem:[%s783] sm:$0xf]
      %v785 = vld [vmem:[%s783 + $0x8] sm:$0xf]
      %v786 = vld [vmem:[%s783 + $0x10] sm:$0xf]
      %v787 = vld [vmem:[%s783 + $0x18] sm:$0xf]
      %v788 = vld [vmem:[%s783 + $0x20] sm:$0xf]
      %v789 = vld [vmem:[%s783 + $0x28] sm:$0xf]
      %v790 = vld [vmem:[%s783 + $0x30] sm:$0xf]
      %v791 = vld [vmem:[%s783 + $0x38] sm:$0xf]
      %v792 = vld [vmem:[%s774 + $0x4] sm:$0x1]
      %v793 = vld [vmem:[%s774 + $0xc] sm:$0x1]
      %v794 = vld [vmem:[%s774 + $0x14] sm:$0x1]
      %v795 = vld [vmem:[%s774 + $0x1c] sm:$0x1]
      %v796 = vld [vmem:[%s774 + $0x24] sm:$0x1]
      %v797 = vld [vmem:[%s774 + $0x2c] sm:$0x1]
      %v798 = vld [vmem:[%s774 + $0x34] sm:$0x1]
      %v799 = vld [vmem:[%s774 + $0x3c] sm:$0x1]
      %v801 = vshrl.u32 %v775, 16
      %v803 = vrot.slane %v801, 4
      %v804 = vshll.u32 %v775, 16
      %v806 = vrot.slane %v804, 5
      %v807 = vor.u32 %v803, %v806
      %v808 = vrot.slane %v807, 4
      %v810 = vshll.u32 %v792, 16
      %v812 = vrot.slane %v810, 5
      %v813 = vsel %vm523, %v808, %v812
      %v815 = vshrl.u32 %v776, 16
      %v817 = vrot.slane %v815, 4
      %v818 = vshll.u32 %v776, 16
      %v820 = vrot.slane %v818, 5
      %v821 = vor.u32 %v817, %v820
      %v822 = vrot.slane %v821, 4
      %v824 = vshll.u32 %v793, 16
      %v826 = vrot.slane %v824, 5
      %v827 = vsel %vm523, %v822, %v826
      %v829 = vshrl.u32 %v777, 16
      %v831 = vrot.slane %v829, 4
      %v832 = vshll.u32 %v777, 16
      %v834 = vrot.slane %v832, 5
      %v835 = vor.u32 %v831, %v834
      %v836 = vrot.slane %v835, 4
      %v838 = vshll.u32 %v794, 16
      %v840 = vrot.slane %v838, 5
      %v841 = vsel %vm523, %v836, %v840
      %v843 = vshrl.u32 %v778, 16
      %v845 = vrot.slane %v843, 4
      %v846 = vshll.u32 %v778, 16
      %v848 = vrot.slane %v846, 5
      %v849 = vor.u32 %v845, %v848
      %v850 = vrot.slane %v849, 4
      %v852 = vshll.u32 %v795, 16
      %v854 = vrot.slane %v852, 5
      %v855 = vsel %vm523, %v850, %v854
      %v857 = vshrl.u32 %v779, 16
      %v859 = vrot.slane %v857, 4
      %v860 = vshll.u32 %v779, 16
      %v862 = vrot.slane %v860, 5
      %v863 = vor.u32 %v859, %v862
      %v864 = vrot.slane %v863, 4
      %v866 = vshll.u32 %v796, 16
      %v868 = vrot.slane %v866, 5
      %v869 = vsel %vm523, %v864, %v868
      %v871 = vshrl.u32 %v780, 16
      %v873 = vrot.slane %v871, 4
      %v874 = vshll.u32 %v780, 16
      %v876 = vrot.slane %v874, 5
      %v877 = vor.u32 %v873, %v876
      %v878 = vrot.slane %v877, 4
      %v880 = vshll.u32 %v797, 16
      %v882 = vrot.slane %v880, 5
      %v883 = vsel %vm523, %v878, %v882
      %v885 = vshrl.u32 %v781, 16
      %v887 = vrot.slane %v885, 4
      %v888 = vshll.u32 %v781, 16
      %v890 = vrot.slane %v888, 5
      %v891 = vor.u32 %v887, %v890
      %v892 = vrot.slane %v891, 4
      %v894 = vshll.u32 %v798, 16
      %v896 = vrot.slane %v894, 5
      %v897 = vsel %vm523, %v892, %v896
      %v899 = vshrl.u32 %v782, 16
      %v901 = vrot.slane %v899, 4
      %v902 = vshll.u32 %v782, 16
      %v904 = vrot.slane %v902, 5
      %v905 = vor.u32 %v901, %v904
      %v906 = vrot.slane %v905, 4
      %v908 = vshll.u32 %v799, 16
      %v910 = vrot.slane %v908, 5
      %v911 = vsel %vm523, %v906, %v910
      %v920 = vunpack.c.l.b16 %v496
      %v921 = vunpack.c.l.b16 %v497
      %v922 = vunpack.c.l.b16 %v498
      %v923 = vunpack.c.l.b16 %v499
      %v924 = vunpack.c.l.b16 %v500
      %v925 = vunpack.c.l.b16 %v501
      %v926 = vunpack.c.l.b16 %v502
      %v927 = vunpack.c.l.b16 %v503
      %v928 = vpack.c.b16 %v921, %v920
      %v929 = vpack.c.b16 %v923, %v922
      %v930 = vpack.c.b16 %v925, %v924
      %v931 = vpack.c.b16 %v927, %v926
      %v940 = vunpack.c.l.b16 %v505
      %v941 = vunpack.c.l.b16 %v506
      %v942 = vunpack.c.l.b16 %v507
      %v943 = vunpack.c.l.b16 %v508
      %v944 = vunpack.c.l.b16 %v509
      %v945 = vunpack.c.l.b16 %v510
      %v946 = vunpack.c.l.b16 %v511
      %v947 = vunpack.c.l.b16 %v512
      %v948 = vpack.c.b16 %v941, %v940
      %v949 = vpack.c.b16 %v943, %v942
      %v950 = vpack.c.b16 %v945, %v944
      %v951 = vpack.c.b16 %v947, %v946
      %952 = vrot.lane.b32.xlu0 %v948, 64
      %v953 = vpop.permute.xlu0 %952
      %954 = vrot.lane.b32.xlu0 %v949, 64
      %v955 = vpop.permute.xlu0 %954
      %956 = vrot.lane.b32.xlu0 %v950, 64
      %v957 = vpop.permute.xlu0 %956
      %958 = vrot.lane.b32.xlu0 %v951, 64
      %v959 = vpop.permute.xlu0 %958
      %v960 = vunpack.c.l.b16 %v537
      %v961 = vunpack.c.l.b16 %v551
      %v962 = vunpack.c.l.b16 %v565
      %v963 = vunpack.c.l.b16 %v579
      %v964 = vunpack.c.l.b16 %v593
      %v965 = vunpack.c.l.b16 %v607
      %v966 = vunpack.c.l.b16 %v621
      %v967 = vunpack.c.l.b16 %v635
      %v968 = vpack.c.b16 %v961, %v960
      %v969 = vpack.c.b16 %v963, %v962
      %v970 = vpack.c.b16 %v965, %v964
      %v971 = vpack.c.b16 %v967, %v966
      %v980 = vunpack.c.l.b16 %v637
      %v981 = vunpack.c.l.b16 %v638
      %v982 = vunpack.c.l.b16 %v639
      %v983 = vunpack.c.l.b16 %v640
      %v984 = vunpack.c.l.b16 %v641
      %v985 = vunpack.c.l.b16 %v642
      %v986 = vunpack.c.l.b16 %v643
      %v987 = vunpack.c.l.b16 %v644
      %v988 = vpack.c.b16 %v981, %v980
      %v989 = vpack.c.b16 %v983, %v982
      %v990 = vpack.c.b16 %v985, %v984
      %v991 = vpack.c.b16 %v987, %v986
      %992 = vrot.lane.b32.xlu0 %v988, 64
      %v993 = vpop.permute.xlu0 %992
      %994 = vrot.lane.b32.xlu0 %v989, 64
      %v995 = vpop.permute.xlu0 %994
      %996 = vrot.lane.b32.xlu0 %v990, 64
      %v997 = vpop.permute.xlu0 %996
      %998 = vrot.lane.b32.xlu0 %v991, 64
      %v999 = vpop.permute.xlu0 %998
      %v1008 = vunpack.c.l.b16 %v646
      %v1009 = vunpack.c.l.b16 %v647
      %v1010 = vunpack.c.l.b16 %v648
      %v1011 = vunpack.c.l.b16 %v649
      %v1012 = vunpack.c.l.b16 %v650
      %v1013 = vunpack.c.l.b16 %v651
      %v1014 = vunpack.c.l.b16 %v652
      %v1015 = vunpack.c.l.b16 %v653
      %v1016 = vpack.c.b16 %v1009, %v1008
      %v1017 = vpack.c.b16 %v1011, %v1010
      %v1018 = vpack.c.b16 %v1013, %v1012
      %v1019 = vpack.c.b16 %v1015, %v1014
      %v1020 = vunpack.c.l.b16 %v675
      %v1021 = vunpack.c.l.b16 %v689
      %v1022 = vunpack.c.l.b16 %v703
      %v1023 = vunpack.c.l.b16 %v717
      %v1024 = vunpack.c.l.b16 %v731
      %v1025 = vunpack.c.l.b16 %v745
      %v1026 = vunpack.c.l.b16 %v759
      %v1027 = vunpack.c.l.b16 %v773
      %v1028 = vpack.c.b16 %v1021, %v1020
      %v1029 = vpack.c.b16 %v1023, %v1022
      %v1030 = vpack.c.b16 %v1025, %v1024
      %v1031 = vpack.c.b16 %v1027, %v1026
      %1032 = vrot.lane.b32.xlu0 %v1028, 64
      %v1033 = vpop.permute.xlu0 %1032
      %1034 = vrot.lane.b32.xlu0 %v1029, 64
      %v1035 = vpop.permute.xlu0 %1034
      %1036 = vrot.lane.b32.xlu0 %v1030, 64
      %v1037 = vpop.permute.xlu0 %1036
      %1038 = vrot.lane.b32.xlu0 %v1031, 64
      %v1039 = vpop.permute.xlu0 %1038
      %v1048 = vunpack.c.l.b16 %v775
      %v1049 = vunpack.c.l.b16 %v776
      %v1050 = vunpack.c.l.b16 %v777
      %v1051 = vunpack.c.l.b16 %v778
      %v1052 = vunpack.c.l.b16 %v779
      %v1053 = vunpack.c.l.b16 %v780
      %v1054 = vunpack.c.l.b16 %v781
      %v1055 = vunpack.c.l.b16 %v782
      %v1056 = vpack.c.b16 %v1049, %v1048
      %v1057 = vpack.c.b16 %v1051, %v1050
      %v1058 = vpack.c.b16 %v1053, %v1052
      %v1059 = vpack.c.b16 %v1055, %v1054
      %v1068 = vunpack.c.l.b16 %v784
      %v1069 = vunpack.c.l.b16 %v785
      %v1070 = vunpack.c.l.b16 %v786
      %v1071 = vunpack.c.l.b16 %v787
      %v1072 = vunpack.c.l.b16 %v788
      %v1073 = vunpack.c.l.b16 %v789
      %v1074 = vunpack.c.l.b16 %v790
      %v1075 = vunpack.c.l.b16 %v791
      %v1076 = vpack.c.b16 %v1069, %v1068
      %v1077 = vpack.c.b16 %v1071, %v1070
      %v1078 = vpack.c.b16 %v1073, %v1072
      %v1079 = vpack.c.b16 %v1075, %v1074
      %1080 = vrot.lane.b32.xlu0 %v1076, 64
      %v1081 = vpop.permute.xlu0 %1080
      %1082 = vrot.lane.b32.xlu0 %v1077, 64
      %v1083 = vpop.permute.xlu0 %1082
      %1084 = vrot.lane.b32.xlu0 %v1078, 64
      %v1085 = vpop.permute.xlu0 %1084
      %1086 = vrot.lane.b32.xlu0 %v1079, 64
      %v1087 = vpop.permute.xlu0 %1086
      %v1088 = vunpack.c.l.b16 %v813
      %v1089 = vunpack.c.l.b16 %v827
      %v1090 = vunpack.c.l.b16 %v841
      %v1091 = vunpack.c.l.b16 %v855
      %v1092 = vunpack.c.l.b16 %v869
      %v1093 = vunpack.c.l.b16 %v883
      %v1094 = vunpack.c.l.b16 %v897
      %v1095 = vunpack.c.l.b16 %v911
      %v1096 = vpack.c.b16 %v1089, %v1088
      %v1097 = vpack.c.b16 %v1091, %v1090
      %v1098 = vpack.c.b16 %v1093, %v1092
      %v1099 = vpack.c.b16 %v1095, %v1094
      %vm1100 = vcmask 523264
      %v1103 = vsel %vm1100, %v928, %v953
      %v1107 = vsel %vm1100, %v929, %v955
      %v1111 = vsel %vm1100, %v930, %v957
      %v1115 = vsel %vm1100, %v931, %v959
      %v1119 = vsel %vm1100, %v968, %v993
      %v1123 = vsel %vm1100, %v969, %v995
      %v1127 = vsel %vm1100, %v970, %v997
      %v1131 = vsel %vm1100, %v971, %v999
      %v1135 = vsel %vm1100, %v1016, %v1033
      %v1139 = vsel %vm1100, %v1017, %v1035
      %v1143 = vsel %vm1100, %v1018, %v1037
      %v1147 = vsel %vm1100, %v1019, %v1039
      %v1151 = vsel %vm1100, %v1056, %v1081
      %v1155 = vsel %vm1100, %v1057, %v1083
      %v1159 = vsel %vm1100, %v1058, %v1085
      %v1163 = vsel %vm1100, %v1059, %v1087
      %v1165 = vld [vmem:[%s1] sm:$0xf]
      %v1166 = vld [vmem:[%s1 + $0x4] sm:$0xf]
      %v1167 = vld [vmem:[%s1 + $0x8] sm:$0xf]
      %v1168 = vld [vmem:[%s1 + $0xc] sm:$0xf]
      %v1169 = vld [vmem:[%s1 + $0x10] sm:$0xf]
      %v1170 = vld [vmem:[%s1 + $0x14] sm:$0xf]
      %v1171 = vld [vmem:[%s1 + $0x18] sm:$0xf]
      %v1172 = vld [vmem:[%s1 + $0x1c] sm:$0xf]
      %v1173 = vld [vmem:[%s1 + $0x20] sm:$0xf]
      %v1174 = vld [vmem:[%s1 + $0x24] sm:$0xf]
      %v1175 = vld [vmem:[%s1 + $0x28] sm:$0xf]
      %v1176 = vld [vmem:[%s1 + $0x2c] sm:$0xf]
      %v1177 = vld [vmem:[%s1 + $0x30] sm:$0xf]
      %v1178 = vld [vmem:[%s1 + $0x34] sm:$0xf]
      %v1179 = vld [vmem:[%s1 + $0x38] sm:$0xf]
      %v1180 = vld [vmem:[%s1 + $0x3c] sm:$0xf]
      %v1181 = vld [vmem:[%s1 + $0x40] sm:$0xf]
      %v1182 = vld [vmem:[%s1 + $0x44] sm:$0xf]
      %v1183 = vld [vmem:[%s1 + $0x48] sm:$0xf]
      %v1184 = vld [vmem:[%s1 + $0x4c] sm:$0xf]
      %v1185 = vld [vmem:[%s1 + $0x50] sm:$0xf]
      %v1186 = vld [vmem:[%s1 + $0x54] sm:$0xf]
      %v1187 = vld [vmem:[%s1 + $0x58] sm:$0xf]
      %v1188 = vld [vmem:[%s1 + $0x5c] sm:$0xf]
      %v1189 = vld [vmem:[%s1 + $0x60] sm:$0xf]
      %v1190 = vld [vmem:[%s1 + $0x64] sm:$0xf]
      %v1191 = vld [vmem:[%s1 + $0x68] sm:$0xf]
      %v1192 = vld [vmem:[%s1 + $0x6c] sm:$0xf]
      %v1193 = vld [vmem:[%s1 + $0x70] sm:$0xf]
      %v1194 = vld [vmem:[%s1 + $0x74] sm:$0xf]
      %v1195 = vld [vmem:[%s1 + $0x78] sm:$0xf]
      %v1196 = vld [vmem:[%s1 + $0x7c] sm:$0xf]
      %v1197 = vld [vmem:[%s1 + $0x80] sm:$0xf]
      %v1198 = vld [vmem:[%s1 + $0x84] sm:$0xf]
      %v1199 = vld [vmem:[%s1 + $0x88] sm:$0xf]
      %v1200 = vld [vmem:[%s1 + $0x8c] sm:$0xf]
      %v1201 = vld [vmem:[%s1 + $0x90] sm:$0xf]
      %v1202 = vld [vmem:[%s1 + $0x94] sm:$0xf]
      %v1203 = vld [vmem:[%s1 + $0x98] sm:$0xf]
      %v1204 = vld [vmem:[%s1 + $0x9c] sm:$0xf]
      %v1205 = vld [vmem:[%s1 + $0xa0] sm:$0xf]
      %v1206 = vld [vmem:[%s1 + $0xa4] sm:$0xf]
      %v1207 = vld [vmem:[%s1 + $0xa8] sm:$0xf]
      %v1208 = vld [vmem:[%s1 + $0xac] sm:$0xf]
      %v1209 = vld [vmem:[%s1 + $0xb0] sm:$0xf]
      %v1210 = vld [vmem:[%s1 + $0xb4] sm:$0xf]
      %v1211 = vld [vmem:[%s1 + $0xb8] sm:$0xf]
      %v1212 = vld [vmem:[%s1 + $0xbc] sm:$0xf]
      %v1213 = vld [vmem:[%s1 + $0xc0] sm:$0xf]
      %v1214 = vld [vmem:[%s1 + $0xc4] sm:$0xf]
      %v1215 = vld [vmem:[%s1 + $0xc8] sm:$0xf]
      %v1216 = vld [vmem:[%s1 + $0xcc] sm:$0xf]
      %v1217 = vld [vmem:[%s1 + $0xd0] sm:$0xf]
      %v1218 = vld [vmem:[%s1 + $0xd4] sm:$0xf]
      %v1219 = vld [vmem:[%s1 + $0xd8] sm:$0xf]
      %v1220 = vld [vmem:[%s1 + $0xdc] sm:$0xf]
      %v1221 = vld [vmem:[%s1 + $0xe0] sm:$0xf]
      %v1222 = vld [vmem:[%s1 + $0xe4] sm:$0xf]
      %v1223 = vld [vmem:[%s1 + $0xe8] sm:$0xf]
      %v1224 = vld [vmem:[%s1 + $0xec] sm:$0xf]
      %v1225 = vld [vmem:[%s1 + $0xf0] sm:$0xf]
      %v1226 = vld [vmem:[%s1 + $0xf4] sm:$0xf]
      %v1227 = vld [vmem:[%s1 + $0xf8] sm:$0xf]
      %v1228 = vld [vmem:[%s1 + $0xfc] sm:$0xf]
      %v1229 = vld [vmem:[%s1 + $0x100] sm:$0xf]
      %v1230 = vld [vmem:[%s1 + $0x104] sm:$0xf]
      %v1231 = vld [vmem:[%s1 + $0x108] sm:$0xf]
      %v1232 = vld [vmem:[%s1 + $0x10c] sm:$0xf]
      %v1233 = vld [vmem:[%s1 + $0x110] sm:$0xf]
      %v1234 = vld [vmem:[%s1 + $0x114] sm:$0xf]
      %v1235 = vld [vmem:[%s1 + $0x118] sm:$0xf]
      %v1236 = vld [vmem:[%s1 + $0x11c] sm:$0xf]
      %v1237 = vld [vmem:[%s2] sm:$0x1]
      %v1239 = vlaneseq
      %v1240 = vshrl.u32 %v1239, 7
      %v1241 = vsub.s32 0, %v1240
      %v1242 = vrot.slane %v1237, %v1241
      %v1316 = vunpack.c.l.b16 %v1165
      %v1317 = vunpack.c.l.b16 %v1166
      %v1318 = vunpack.c.l.b16 %v1167
      %v1319 = vunpack.c.l.b16 %v1168
      %v1320 = vunpack.c.l.b16 %v1169
      %v1321 = vunpack.c.l.b16 %v1170
      %v1322 = vunpack.c.l.b16 %v1171
      %v1323 = vunpack.c.l.b16 %v1172
      %v1324 = vunpack.c.l.b16 %v1173
      %v1325 = vunpack.c.l.b16 %v1174
      %v1326 = vunpack.c.l.b16 %v1175
      %v1327 = vunpack.c.l.b16 %v1176
      %v1328 = vunpack.c.l.b16 %v1177
      %v1329 = vunpack.c.l.b16 %v1178
      %v1330 = vunpack.c.l.b16 %v1179
      %v1331 = vunpack.c.l.b16 %v1180
      %v1332 = vunpack.c.l.b16 %v1181
      %v1333 = vunpack.c.l.b16 %v1182
      %v1334 = vunpack.c.l.b16 %v1183
      %v1335 = vunpack.c.l.b16 %v1184
      %v1336 = vunpack.c.l.b16 %v1185
      %v1337 = vunpack.c.l.b16 %v1186
      %v1338 = vunpack.c.l.b16 %v1187
      %v1339 = vunpack.c.l.b16 %v1188
      %v1340 = vunpack.c.l.b16 %v1189
      %v1341 = vunpack.c.l.b16 %v1190
      %v1342 = vunpack.c.l.b16 %v1191
      %v1343 = vunpack.c.l.b16 %v1192
      %v1344 = vunpack.c.l.b16 %v1193
      %v1345 = vunpack.c.l.b16 %v1194
      %v1346 = vunpack.c.l.b16 %v1195
      %v1347 = vunpack.c.l.b16 %v1196
      %v1348 = vunpack.c.l.b16 %v1197
      %v1349 = vunpack.c.l.b16 %v1198
      %v1350 = vunpack.c.l.b16 %v1199
      %v1351 = vunpack.c.l.b16 %v1200
      %v1352 = vunpack.c.l.b16 %v1201
      %v1353 = vunpack.c.l.b16 %v1202
      %v1354 = vunpack.c.l.b16 %v1203
      %v1355 = vunpack.c.l.b16 %v1204
      %v1356 = vunpack.c.l.b16 %v1205
      %v1357 = vunpack.c.l.b16 %v1206
      %v1358 = vunpack.c.l.b16 %v1207
      %v1359 = vunpack.c.l.b16 %v1208
      %v1360 = vunpack.c.l.b16 %v1209
      %v1361 = vunpack.c.l.b16 %v1210
      %v1362 = vunpack.c.l.b16 %v1211
      %v1363 = vunpack.c.l.b16 %v1212
      %v1364 = vunpack.c.l.b16 %v1213
      %v1365 = vunpack.c.l.b16 %v1214
      %v1366 = vunpack.c.l.b16 %v1215
      %v1367 = vunpack.c.l.b16 %v1216
      %v1368 = vunpack.c.l.b16 %v1217
      %v1369 = vunpack.c.l.b16 %v1218
      %v1370 = vunpack.c.l.b16 %v1219
      %v1371 = vunpack.c.l.b16 %v1220
      %v1372 = vunpack.c.l.b16 %v1221
      %v1373 = vunpack.c.l.b16 %v1222
      %v1374 = vunpack.c.l.b16 %v1223
      %v1375 = vunpack.c.l.b16 %v1224
      %v1376 = vunpack.c.l.b16 %v1225
      %v1377 = vunpack.c.l.b16 %v1226
      %v1378 = vunpack.c.l.b16 %v1227
      %v1379 = vunpack.c.l.b16 %v1228
      %v1380 = vunpack.c.l.b16 %v1229
      %v1381 = vunpack.c.l.b16 %v1230
      %v1382 = vunpack.c.l.b16 %v1231
      %v1383 = vunpack.c.l.b16 %v1232
      %v1384 = vunpack.c.l.b16 %v1233
      %v1385 = vunpack.c.l.b16 %v1234
      %v1386 = vunpack.c.l.b16 %v1235
      %v1387 = vunpack.c.l.b16 %v1236
      %v1388 = vpack.c.b16 %v1317, %v1316
      %v1389 = vpack.c.b16 %v1319, %v1318
      %v1390 = vpack.c.b16 %v1321, %v1320
      %v1391 = vpack.c.b16 %v1323, %v1322
      %v1392 = vpack.c.b16 %v1325, %v1324
      %v1393 = vpack.c.b16 %v1327, %v1326
      %v1394 = vpack.c.b16 %v1329, %v1328
      %v1395 = vpack.c.b16 %v1331, %v1330
      %v1396 = vpack.c.b16 %v1333, %v1332
      %v1397 = vpack.c.b16 %v1335, %v1334
      %v1398 = vpack.c.b16 %v1337, %v1336
      %v1399 = vpack.c.b16 %v1339, %v1338
      %v1400 = vpack.c.b16 %v1341, %v1340
      %v1401 = vpack.c.b16 %v1343, %v1342
      %v1402 = vpack.c.b16 %v1345, %v1344
      %v1403 = vpack.c.b16 %v1347, %v1346
      %v1404 = vpack.c.b16 %v1349, %v1348
      %v1405 = vpack.c.b16 %v1351, %v1350
      %v1406 = vpack.c.b16 %v1353, %v1352
      %v1407 = vpack.c.b16 %v1355, %v1354
      %v1408 = vpack.c.b16 %v1357, %v1356
      %v1409 = vpack.c.b16 %v1359, %v1358
      %v1410 = vpack.c.b16 %v1361, %v1360
      %v1411 = vpack.c.b16 %v1363, %v1362
      %v1412 = vpack.c.b16 %v1365, %v1364
      %v1413 = vpack.c.b16 %v1367, %v1366
      %v1414 = vpack.c.b16 %v1369, %v1368
      %v1415 = vpack.c.b16 %v1371, %v1370
      %v1416 = vpack.c.b16 %v1373, %v1372
      %v1417 = vpack.c.b16 %v1375, %v1374
      %v1418 = vpack.c.b16 %v1377, %v1376
      %v1419 = vpack.c.b16 %v1379, %v1378
      %v1420 = vpack.c.b16 %v1381, %v1380
      %v1421 = vpack.c.b16 %v1383, %v1382
      %v1422 = vpack.c.b16 %v1385, %v1384
      %v1423 = vpack.c.b16 %v1387, %v1386
      %v1461 = vsel %vm1100, %v1096, 0
      %v1464 = vsel %vm1100, %v1097, 0
      %v1467 = vsel %vm1100, %v1098, 0
      %v1470 = vsel %vm1100, %v1099, 0
      %1472 = vmatprep.subr.bf16.mxu0 0
      %1473 = vmatpush1.bf16.msra.mxu0 %v1388
      %1474 = vmatprep.subr.bf16.mxu0 0
      %1475 = vmatpush1.bf16.msra.mxu0 %v1389
      %1476 = vmatprep.subr.bf16.mxu0 0
      %1477 = vmatpush1.bf16.msra.mxu0 %v1390
      %1478 = vmatprep.subr.bf16.mxu0 0
      %1479 = vmatpush1.bf16.msra.mxu0 %v1391
      %1480 = vmatprep.subr.bf16.mxu0 0
      %1481 = vmatpush1.bf16.msra.mxu0 %v1392
      %1482 = vmatprep.subr.bf16.mxu0 0
      %1483 = vmatpush1.bf16.msra.mxu0 %v1393
      %1484 = vmatprep.subr.bf16.mxu0 0
      %1485 = vmatpush1.bf16.msra.mxu0 %v1394
      %1486 = vmatprep.subr.bf16.mxu0 0
      %1487 = vmatpush1.bf16.msra.mxu0 %v1395
      %1488 = vmatprep.subr.bf16.mxu0 0
      %1489 = vmatpush1.bf16.msra.mxu0 %v1396
      %1490 = vmatprep.subr.bf16.mxu0 0
      %1491 = vmatpush1.bf16.msra.mxu0 %v1397
      %1492 = vmatprep.subr.bf16.mxu0 0
      %1493 = vmatpush1.bf16.msra.mxu0 %v1398
      %1494 = vmatprep.subr.bf16.mxu0 0
      %1495 = vmatpush1.bf16.msra.mxu0 %v1399
      %1496 = vmatprep.subr.bf16.mxu0 0
      %1497 = vmatpush1.bf16.msra.mxu0 %v1400
      %1498 = vmatprep.subr.bf16.mxu0 0
      %1499 = vmatpush1.bf16.msra.mxu0 %v1401
      %1500 = vmatprep.subr.bf16.mxu0 0
      %1501 = vmatpush1.bf16.msra.mxu0 %v1402
      %1502 = vmatprep.subr.bf16.mxu0 0
      %1503 = vmatpush1.bf16.msra.mxu0 %v1403
      %1504 = vmatprep.mubr.bf16.mxu0 %v1119
      %1505 = vmatmul.mubr.bf16.gmra.mrb[0].mxu0 %v1103
      %v1506 = vpop.f32.mrb[0].mxu0
      %v1507 = vadd.f32 %v1242, %v1506
      %v1508 = vpop.f32.mrb[0].mxu0
      %v1509 = vpop.f32.mrb[0].mxu0
      %v1510 = vadd.f32 %v1242, %v1509
      %v1511 = vpop.f32.mrb[0].mxu0
      %1512 = vmatprep.mubr.bf16.mxu0 %v1123
      %1513 = vmatmul.mubr.bf16.gmra.mrb[0].mxu0 %v1107
      %v1514 = vpop.f32.mrb[0].mxu0
      %v1515 = vadd.f32 %v1242, %v1514
      %v1516 = vpop.f32.mrb[0].mxu0
      %v1517 = vpop.f32.mrb[0].mxu0
      %v1518 = vadd.f32 %v1242, %v1517
      %v1519 = vpop.f32.mrb[0].mxu0
      %1520 = vmatprep.mubr.bf16.mxu0 %v1127
      %1521 = vmatmul.mubr.bf16.gmra.mrb[0].mxu0 %v1111
      %v1522 = vpop.f32.mrb[0].mxu0
      %v1523 = vadd.f32 %v1242, %v1522
      %v1524 = vpop.f32.mrb[0].mxu0
      %v1525 = vpop.f32.mrb[0].mxu0
      %v1526 = vadd.f32 %v1242, %v1525
      %v1527 = vpop.f32.mrb[0].mxu0
      %1528 = vmatprep.mubr.bf16.mxu0 %v1131
      %1529 = vmatmul.mubr.bf16.gmra.mrb[0].mxu0 %v1115
      %v1530 = vpop.f32.mrb[0].mxu0
      %v1531 = vadd.f32 %v1242, %v1530
      %v1532 = vpop.f32.mrb[0].mxu0
      %v1533 = vpop.f32.mrb[0].mxu0
      %v1534 = vadd.f32 %v1242, %v1533
      %v1535 = vpop.f32.mrb[0].mxu0
      %1536 = vdwg.mxu0
      %1537 = vmatprep.subr.bf16.mxu0 0
      %1538 = vmatpush1.bf16.msra.mxu0 %v1404
      %1539 = vmatprep.subr.bf16.mxu0 0
      %1540 = vmatpush1.bf16.msra.mxu0 %v1405
      %1541 = vmatprep.subr.bf16.mxu0 0
      %1542 = vmatpush1.bf16.msra.mxu0 %v1406
      %1543 = vmatprep.subr.bf16.mxu0 0
      %1544 = vmatpush1.bf16.msra.mxu0 %v1407
      %1545 = vmatprep.subr.bf16.mxu0 0
      %1546 = vmatpush1.bf16.msra.mxu0 %v1408
      %1547 = vmatprep.subr.bf16.mxu0 0
      %1548 = vmatpush1.bf16.msra.mxu0 %v1409
      %1549 = vmatprep.subr.bf16.mxu0 0
      %1550 = vmatpush1.bf16.msra.mxu0 %v1410
      %1551 = vmatprep.subr.bf16.mxu0 0
      %1552 = vmatpush1.bf16.msra.mxu0 %v1411
      %1553 = vmatprep.subr.bf16.mxu0 0
      %1554 = vmatpush1.bf16.msra.mxu0 %v1412
      %1555 = vmatprep.subr.bf16.mxu0 0
      %1556 = vmatpush1.bf16.msra.mxu0 %v1413
      %1557 = vmatprep.subr.bf16.mxu0 0
      %1558 = vmatpush1.bf16.msra.mxu0 %v1414
      %1559 = vmatprep.subr.bf16.mxu0 0
      %1560 = vmatpush1.bf16.msra.mxu0 %v1415
      %1561 = vmatprep.subr.bf16.mxu0 0
      %1562 = vmatpush1.bf16.msra.mxu0 %v1416
      %1563 = vmatprep.subr.bf16.mxu0 0
      %1564 = vmatpush1.bf16.msra.mxu0 %v1417
      %1565 = vmatprep.subr.bf16.mxu0 0
      %1566 = vmatpush1.bf16.msra.mxu0 %v1418
      %1567 = vmatprep.subr.bf16.mxu0 0
      %1568 = vmatpush1.bf16.msra.mxu0 %v1419
      %1569 = vmatprep.mubr.bf16.mxu0 %v1151
      %1570 = vmatmul.mubr.bf16.gmra.mrb[0].mxu0 %v1135
      %v1571 = vpop.f32.mrb[0].mxu0
      %v1572 = vadd.f32 %v1507, %v1571
      %v1573 = vpop.f32.mrb[0].mxu0
      %v1574 = vpop.f32.mrb[0].mxu0
      %v1575 = vadd.f32 %v1510, %v1574
      %v1576 = vpop.f32.mrb[0].mxu0
      %1577 = vmatprep.mubr.bf16.mxu0 %v1155
      %1578 = vmatmul.mubr.bf16.gmra.mrb[0].mxu0 %v1139
      %v1579 = vpop.f32.mrb[0].mxu0
      %v1580 = vadd.f32 %v1515, %v1579
      %v1581 = vpop.f32.mrb[0].mxu0
      %v1582 = vpop.f32.mrb[0].mxu0
      %v1583 = vadd.f32 %v1518, %v1582
      %v1584 = vpop.f32.mrb[0].mxu0
      %1585 = vmatprep.mubr.bf16.mxu0 %v1159
      %1586 = vmatmul.mubr.bf16.gmra.mrb[0].mxu0 %v1143
      %v1587 = vpop.f32.mrb[0].mxu0
      %v1588 = vadd.f32 %v1523, %v1587
      %v1589 = vpop.f32.mrb[0].mxu0
      %v1590 = vpop.f32.mrb[0].mxu0
      %v1591 = vadd.f32 %v1526, %v1590
      %v1592 = vpop.f32.mrb[0].mxu0
      %1593 = vmatprep.mubr.bf16.mxu0 %v1163
      %1594 = vmatmul.mubr.bf16.gmra.mrb[0].mxu0 %v1147
      %v1595 = vpop.f32.mrb[0].mxu0
      %v1596 = vadd.f32 %v1531, %v1595
      %v1597 = vpop.f32.mrb[0].mxu0
      %v1598 = vpop.f32.mrb[0].mxu0
      %v1599 = vadd.f32 %v1534, %v1598
      %v1600 = vpop.f32.mrb[0].mxu0
      %1601 = vdwg.mxu0
      %1602 = vmatprep.subr.bf16.mxu0 0
      %1603 = vmatpush1.bf16.msra.mxu0 %v1420
      %1604 = vmatprep.subr.bf16.mxu0 0
      %1605 = vmatpush1.bf16.msra.mxu0 %v1421
      %1606 = vmatprep.subr.bf16.mxu0 0
      %1607 = vmatpush1.bf16.msra.mxu0 %v1422
      %1608 = vmatprep.subr.bf16.mxu0 0
      %1609 = vmatpush1.bf16.msra.mxu0 %v1423
      %1610 = vmatprep.subr.bf16.mxu0 0
      %1611 = vmatpush1.bf16.msra.mxu0 0
      %1612 = vmatprep.subr.bf16.mxu0 0
      %1613 = vmatpush1.bf16.msra.mxu0 0
      %1614 = vmatprep.subr.bf16.mxu0 0
      %1615 = vmatpush1.bf16.msra.mxu0 0
      %1616 = vmatprep.subr.bf16.mxu0 0
      %1617 = vmatpush1.bf16.msra.mxu0 0
      %1618 = vmatprep.subr.bf16.mxu0 0
      %1619 = vmatpush1.bf16.msra.mxu0 0
      %1620 = vmatprep.subr.bf16.mxu0 0
      %1621 = vmatpush1.bf16.msra.mxu0 0
      %1622 = vmatprep.subr.bf16.mxu0 0
      %1623 = vmatpush1.bf16.msra.mxu0 0
      %1624 = vmatprep.subr.bf16.mxu0 0
      %1625 = vmatpush1.bf16.msra.mxu0 0
      %1626 = vmatprep.subr.bf16.mxu0 0
      %1627 = vmatpush1.bf16.msra.mxu0 0
      %1628 = vmatprep.subr.bf16.mxu0 0
      %1629 = vmatpush1.bf16.msra.mxu0 0
      %1630 = vmatprep.subr.bf16.mxu0 0
      %1631 = vmatpush1.bf16.msra.mxu0 0
      %1632 = vmatprep.subr.bf16.mxu0 0
      %1633 = vmatpush1.bf16.msra.mxu0 0
      %1634 = vmatprep.mubr.bf16.mxu0 0
      %1635 = vmatmul.mubr.bf16.gmra.mrb[0].mxu0 %v1461
      %v1636 = vpop.f32.mrb[0].mxu0
      %v1637 = vadd.f32 %v1572, %v1636
      %v1638 = vpop.f32.mrb[0].mxu0
      %v1639 = vpop.f32.mrb[0].mxu0
      %v1640 = vadd.f32 %v1575, %v1639
      %v1641 = vpop.f32.mrb[0].mxu0
      %1642 = vmatprep.mubr.bf16.mxu0 0
      %1643 = vmatmul.mubr.bf16.gmra.mrb[0].mxu0 %v1464
      %v1644 = vpop.f32.mrb[0].mxu0
      %v1645 = vadd.f32 %v1580, %v1644
      %v1646 = vpop.f32.mrb[0].mxu0
      %v1647 = vpop.f32.mrb[0].mxu0
      %v1648 = vadd.f32 %v1583, %v1647
      %v1649 = vpop.f32.mrb[0].mxu0
      %1650 = vmatprep.mubr.bf16.mxu0 0
      %1651 = vmatmul.mubr.bf16.gmra.mrb[0].mxu0 %v1467
      %v1652 = vpop.f32.mrb[0].mxu0
      %v1653 = vadd.f32 %v1588, %v1652
      %v1654 = vpop.f32.mrb[0].mxu0
      %v1655 = vpop.f32.mrb[0].mxu0
      %v1656 = vadd.f32 %v1591, %v1655
      %v1657 = vpop.f32.mrb[0].mxu0
      %1658 = vmatprep.mubr.bf16.mxu0 0
      %1659 = vmatmul.mubr.bf16.gmra.mrb[0].mxu0 %v1470
      %v1660 = vpop.f32.mrb[0].mxu0
      %v1661 = vadd.f32 %v1596, %v1660
      %v1662 = vpop.f32.mrb[0].mxu0
      %v1663 = vpop.f32.mrb[0].mxu0
      %v1664 = vadd.f32 %v1599, %v1663
      %v1665 = vpop.f32.mrb[0].mxu0
      %1666 = vdwg.mxu0
      %v1667 = vmax.f32 %v1637, 0.0
      %v1668 = vmax.f32 %v1640, 0.0
      %v1669 = vmax.f32 %v1645, 0.0
      %v1670 = vmax.f32 %v1648, 0.0
      %v1671 = vmax.f32 %v1653, 0.0
      %v1672 = vmax.f32 %v1656, 0.0
      %v1673 = vmax.f32 %v1661, 0.0
      %v1674 = vmax.f32 %v1664, 0.0
      %vm1675 = vcmask 519168
      %1676 = vst.msk [vmem:[#allocation2] sm:$0xf] %vm1675, 0
      %vm1677 = vcmask 516096
      %1678 = vst.msk [vmem:[#allocation2 + $0x4] sm:$0x1] %vm1677, 0
      %1679 = vst.msk [vmem:[#allocation2 + $0x8] sm:$0xf] %vm1675, 0
      %1680 = vst.msk [vmem:[#allocation2 + $0xc] sm:$0x1] %vm1677, 0
      %1681 = vst.msk [vmem:[#allocation2 + $0x10] sm:$0xf] %vm1675, 0
      %1682 = vst.msk [vmem:[#allocation2 + $0x14] sm:$0x1] %vm1677, 0
      %1683 = vst.msk [vmem:[#allocation2 + $0x18] sm:$0xf] %vm1675, 0
      %1684 = vst.msk [vmem:[#allocation2 + $0x1c] sm:$0x1] %vm1677, 0
      %1685 = vst.msk [vmem:[#allocation2 + $0x20] sm:$0xf] %vm1675, 0
      %1686 = vst.msk [vmem:[#allocation2 + $0x24] sm:$0x1] %vm1677, 0
      %1687 = vst.msk [vmem:[#allocation2 + $0x28] sm:$0xf] %vm1675, 0
      %1688 = vst.msk [vmem:[#allocation2 + $0x2c] sm:$0x1] %vm1677, 0
      %1689 = vst.msk [vmem:[#allocation2 + $0x30] sm:$0xf] %vm1675, 0
      %1690 = vst.msk [vmem:[#allocation2 + $0x34] sm:$0x1] %vm1677, 0
      %1691 = vst.msk [vmem:[#allocation2 + $0x38] sm:$0xf] %vm1675, 0
      %1692 = vst.msk [vmem:[#allocation2 + $0x3c] sm:$0x1] %vm1677, 0
      %1693 = vst.msk [vmem:[#allocation2 + $0x40] sm:$0xf] %vm1675, 0
      %1694 = vst.msk [vmem:[#allocation2 + $0x44] sm:$0x1] %vm1677, 0
      %1695 = vst.msk [vmem:[#allocation2 + $0x48] sm:$0xf] %vm1675, 0
      %1696 = vst.msk [vmem:[#allocation2 + $0x4c] sm:$0x1] %vm1677, 0
      %v1697 = vpack.c.bf16 %v1667, %v1667
      %v1698 = vpack.c.bf16 %v1668, %v1668
      %v1699 = vpack.c.bf16 %v1669, %v1669
      %v1700 = vpack.c.bf16 %v1670, %v1670
      %v1701 = vpack.c.bf16 %v1671, %v1671
      %v1702 = vpack.c.bf16 %v1672, %v1672
      %v1703 = vpack.c.bf16 %v1673, %v1673
      %v1704 = vpack.c.bf16 %v1674, %v1674
      %v1713 = vunpack.c.l.b16 %v1697
      %v1714 = vunpack.c.l.b16 %v1698
      %v1715 = vunpack.c.l.b16 %v1699
      %v1716 = vunpack.c.l.b16 %v1700
      %v1717 = vunpack.c.l.b16 %v1701
      %v1718 = vunpack.c.l.b16 %v1702
      %v1719 = vunpack.c.l.b16 %v1703
      %v1720 = vunpack.c.l.b16 %v1704
      %v1721 = vpack.c.b16 %v1713, %v1713
      %v1722 = vpack.c.b16 %v1714, %v1714
      %v1723 = vpack.c.b16 %v1715, %v1715
      %v1724 = vpack.c.b16 %v1716, %v1716
      %v1725 = vpack.c.b16 %v1717, %v1717
      %v1726 = vpack.c.b16 %v1718, %v1718
      %v1727 = vpack.c.b16 %v1719, %v1719
      %v1728 = vpack.c.b16 %v1720, %v1720
      %v1730 = vshrl.u32 %v1721, 16
      %v1732 = vrot.slane %v1730, 7
      %v1733 = vshll.u32 %v1721, 16
      %v1735 = vor.u32 %v1732, %v1733
      %v1736 = vrot.slane %v1732, 4
      %v1738 = vshrl.u32 %v1722, 16
      %v1740 = vrot.slane %v1738, 7
      %v1741 = vshll.u32 %v1722, 16
      %v1743 = vor.u32 %v1740, %v1741
      %v1744 = vrot.slane %v1740, 4
      %v1746 = vshrl.u32 %v1723, 16
      %v1748 = vrot.slane %v1746, 7
      %v1749 = vshll.u32 %v1723, 16
      %v1751 = vor.u32 %v1748, %v1749
      %v1752 = vrot.slane %v1748, 4
      %v1754 = vshrl.u32 %v1724, 16
      %v1756 = vrot.slane %v1754, 7
      %v1757 = vshll.u32 %v1724, 16
      %v1759 = vor.u32 %v1756, %v1757
      %v1760 = vrot.slane %v1756, 4
      %v1762 = vshrl.u32 %v1725, 16
      %v1764 = vrot.slane %v1762, 7
      %v1765 = vshll.u32 %v1725, 16
      %v1767 = vor.u32 %v1764, %v1765
      %v1768 = vrot.slane %v1764, 4
      %v1770 = vshrl.u32 %v1726, 16
      %v1772 = vrot.slane %v1770, 7
      %v1773 = vshll.u32 %v1726, 16
      %v1775 = vor.u32 %v1772, %v1773
      %v1776 = vrot.slane %v1772, 4
      %v1778 = vshrl.u32 %v1727, 16
      %v1780 = vrot.slane %v1778, 7
      %v1781 = vshll.u32 %v1727, 16
      %v1783 = vor.u32 %v1780, %v1781
      %v1784 = vrot.slane %v1780, 4
      %v1786 = vshrl.u32 %v1728, 16
      %v1788 = vrot.slane %v1786, 7
      %v1789 = vshll.u32 %v1728, 16
      %v1791 = vor.u32 %v1788, %v1789
      %v1792 = vrot.slane %v1788, 4
      %s1809 = scalar_lea.vmem [#allocation2], 8
      %vm1810 = vcmask 519168
      %vm1811 = vsmask.f32 7938
      %vm1812 = vmand %vm1810, %vm1811
      %v1813 = vld [vmem:[%s1809] sm:$0xf]
      %v1814 = vsel %vm1812, %v1735, %v1813
      %1815 = vst [vmem:[%s1809] sm:$0xf] %v1814
      %vm1816 = vcmask 516096
      %vm1817 = vsmask.f32 256
      %vm1818 = vmand %vm1816, %vm1817
      %v1819 = vld [vmem:[%s1809 + $0x4] sm:$0x1]
      %v1820 = vsel %vm1818, %v1736, %v1819
      %1821 = vst [vmem:[%s1809 + $0x4] sm:$0x1] %v1820
      %v1822 = vld [vmem:[%s1809 + $0x8] sm:$0xf]
      %v1823 = vsel %vm1812, %v1743, %v1822
      %1824 = vst [vmem:[%s1809 + $0x8] sm:$0xf] %v1823
      %v1825 = vld [vmem:[%s1809 + $0xc] sm:$0x1]
      %v1826 = vsel %vm1818, %v1744, %v1825
      %1827 = vst [vmem:[%s1809 + $0xc] sm:$0x1] %v1826
      %v1828 = vld [vmem:[%s1809 + $0x10] sm:$0xf]
      %v1829 = vsel %vm1812, %v1751, %v1828
      %1830 = vst [vmem:[%s1809 + $0x10] sm:$0xf] %v1829
      %v1831 = vld [vmem:[%s1809 + $0x14] sm:$0x1]
      %v1832 = vsel %vm1818, %v1752, %v1831
      %1833 = vst [vmem:[%s1809 + $0x14] sm:$0x1] %v1832
      %v1834 = vld [vmem:[%s1809 + $0x18] sm:$0xf]
      %v1835 = vsel %vm1812, %v1759, %v1834
      %1836 = vst [vmem:[%s1809 + $0x18] sm:$0xf] %v1835
      %v1837 = vld [vmem:[%s1809 + $0x1c] sm:$0x1]
      %v1838 = vsel %vm1818, %v1760, %v1837
      %1839 = vst [vmem:[%s1809 + $0x1c] sm:$0x1] %v1838
      %v1840 = vld [vmem:[%s1809 + $0x20] sm:$0xf]
      %v1841 = vsel %vm1812, %v1767, %v1840
      %1842 = vst [vmem:[%s1809 + $0x20] sm:$0xf] %v1841
      %v1843 = vld [vmem:[%s1809 + $0x24] sm:$0x1]
      %v1844 = vsel %vm1818, %v1768, %v1843
      %1845 = vst [vmem:[%s1809 + $0x24] sm:$0x1] %v1844
      %v1846 = vld [vmem:[%s1809 + $0x28] sm:$0xf]
      %v1847 = vsel %vm1812, %v1775, %v1846
      %1848 = vst [vmem:[%s1809 + $0x28] sm:$0xf] %v1847
      %v1849 = vld [vmem:[%s1809 + $0x2c] sm:$0x1]
      %v1850 = vsel %vm1818, %v1776, %v1849
      %1851 = vst [vmem:[%s1809 + $0x2c] sm:$0x1] %v1850
      %v1852 = vld [vmem:[%s1809 + $0x30] sm:$0xf]
      %v1853 = vsel %vm1812, %v1783, %v1852
      %1854 = vst [vmem:[%s1809 + $0x30] sm:$0xf] %v1853
      %v1855 = vld [vmem:[%s1809 + $0x34] sm:$0x1]
      %v1856 = vsel %vm1818, %v1784, %v1855
      %1857 = vst [vmem:[%s1809 + $0x34] sm:$0x1] %v1856
      %v1858 = vld [vmem:[%s1809 + $0x38] sm:$0xf]
      %v1859 = vsel %vm1812, %v1791, %v1858
      %1860 = vst [vmem:[%s1809 + $0x38] sm:$0xf] %v1859
      %v1861 = vld [vmem:[%s1809 + $0x3c] sm:$0x1]
      %v1862 = vsel %vm1818, %v1792, %v1861
      %1863 = vst [vmem:[%s1809 + $0x3c] sm:$0x1] %v1862
      %v1864 = vld [vmem:[#allocation2] sm:$0xf]
      %v1865 = vld [vmem:[#allocation2 + $0x8] sm:$0xf]
      %v1866 = vld [vmem:[#allocation2 + $0x10] sm:$0xf]
      %v1867 = vld [vmem:[#allocation2 + $0x18] sm:$0xf]
      %v1868 = vld [vmem:[#allocation2 + $0x20] sm:$0xf]
      %v1869 = vld [vmem:[#allocation2 + $0x28] sm:$0xf]
      %v1870 = vld [vmem:[#allocation2 + $0x30] sm:$0xf]
      %v1871 = vld [vmem:[#allocation2 + $0x38] sm:$0xf]
      %v1872 = vld [vmem:[#allocation2 + $0x4] sm:$0x1]
      %v1873 = vld [vmem:[#allocation2 + $0xc] sm:$0x1]
      %v1874 = vld [vmem:[#allocation2 + $0x14] sm:$0x1]
      %v1875 = vld [vmem:[#allocation2 + $0x1c] sm:$0x1]
      %v1876 = vld [vmem:[#allocation2 + $0x24] sm:$0x1]
      %v1877 = vld [vmem:[#allocation2 + $0x2c] sm:$0x1]
      %v1878 = vld [vmem:[#allocation2 + $0x34] sm:$0x1]
      %v1879 = vld [vmem:[#allocation2 + $0x3c] sm:$0x1]
      %v1881 = vshrl.u32 %v1864, 16
      %v1883 = vrot.slane %v1881, 4
      %v1884 = vshll.u32 %v1864, 16
      %v1886 = vrot.slane %v1884, 5
      %v1887 = vor.u32 %v1883, %v1886
      %v1888 = vrot.slane %v1887, 4
      %v1890 = vshll.u32 %v1872, 16
      %v1892 = vrot.slane %v1890, 5
      %v1893 = vsel %vm523, %v1888, %v1892
      %v1895 = vshrl.u32 %v1865, 16
      %v1897 = vrot.slane %v1895, 4
      %v1898 = vshll.u32 %v1865, 16
      %v1900 = vrot.slane %v1898, 5
      %v1901 = vor.u32 %v1897, %v1900
      %v1902 = vrot.slane %v1901, 4
      %v1904 = vshll.u32 %v1873, 16
      %v1906 = vrot.slane %v1904, 5
      %v1907 = vsel %vm523, %v1902, %v1906
      %v1909 = vshrl.u32 %v1866, 16
      %v1911 = vrot.slane %v1909, 4
      %v1912 = vshll.u32 %v1866, 16
      %v1914 = vrot.slane %v1912, 5
      %v1915 = vor.u32 %v1911, %v1914
      %v1916 = vrot.slane %v1915, 4
      %v1918 = vshll.u32 %v1874, 16
      %v1920 = vrot.slane %v1918, 5
      %v1921 = vsel %vm523, %v1916, %v1920
      %v1923 = vshrl.u32 %v1867, 16
      %v1925 = vrot.slane %v1923, 4
      %v1926 = vshll.u32 %v1867, 16
      %v1928 = vrot.slane %v1926, 5
      %v1929 = vor.u32 %v1925, %v1928
      %v1930 = vrot.slane %v1929, 4
      %v1932 = vshll.u32 %v1875, 16
      %v1934 = vrot.slane %v1932, 5
      %v1935 = vsel %vm523, %v1930, %v1934
      %v1937 = vshrl.u32 %v1868, 16
      %v1939 = vrot.slane %v1937, 4
      %v1940 = vshll.u32 %v1868, 16
      %v1942 = vrot.slane %v1940, 5
      %v1943 = vor.u32 %v1939, %v1942
      %v1944 = vrot.slane %v1943, 4
      %v1946 = vshll.u32 %v1876, 16
      %v1948 = vrot.slane %v1946, 5
      %v1949 = vsel %vm523, %v1944, %v1948
      %v1951 = vshrl.u32 %v1869, 16
      %v1953 = vrot.slane %v1951, 4
      %v1954 = vshll.u32 %v1869, 16
      %v1956 = vrot.slane %v1954, 5
      %v1957 = vor.u32 %v1953, %v1956
      %v1958 = vrot.slane %v1957, 4
      %v1960 = vshll.u32 %v1877, 16
      %v1962 = vrot.slane %v1960, 5
      %v1963 = vsel %vm523, %v1958, %v1962
      %v1965 = vshrl.u32 %v1870, 16
      %v1967 = vrot.slane %v1965, 4
      %v1968 = vshll.u32 %v1870, 16
      %v1970 = vrot.slane %v1968, 5
      %v1971 = vor.u32 %v1967, %v1970
      %v1972 = vrot.slane %v1971, 4
      %v1974 = vshll.u32 %v1878, 16
      %v1976 = vrot.slane %v1974, 5
      %v1977 = vsel %vm523, %v1972, %v1976
      %v1979 = vshrl.u32 %v1871, 16
      %v1981 = vrot.slane %v1979, 4
      %v1982 = vshll.u32 %v1871, 16
      %v1984 = vrot.slane %v1982, 5
      %v1985 = vor.u32 %v1981, %v1984
      %v1986 = vrot.slane %v1985, 4
      %v1988 = vshll.u32 %v1879, 16
      %v1990 = vrot.slane %v1988, 5
      %v1991 = vsel %vm523, %v1986, %v1990
      %v1992 = vld [vmem:[#allocation2] sm:$0xe]
      %v1993 = vld [vmem:[#allocation2 + $0x8] sm:$0xe]
      %v1994 = vld [vmem:[#allocation2 + $0x10] sm:$0xe]
      %v1995 = vld [vmem:[#allocation2 + $0x18] sm:$0xe]
      %v1996 = vld [vmem:[#allocation2 + $0x20] sm:$0xe]
      %v1997 = vld [vmem:[#allocation2 + $0x28] sm:$0xe]
      %v1998 = vld [vmem:[#allocation2 + $0x30] sm:$0xe]
      %v1999 = vld [vmem:[#allocation2 + $0x38] sm:$0xe]
      %vm2016 = vcmask 1042432
      %vm2017 = vcmask 1046532
      %vm2018 = vmor %vm2016, %vm2017
      %v2019 = vrot.slane %v1992, 5
      %v2020 = vrot.slane %v2019, 4
      %v2021 = vrot.slane %v1872, 5
      %v2022 = vsel %vm2018, %v2020, %v2021
      %v2023 = vrot.slane %v1993, 5
      %v2024 = vrot.slane %v2023, 4
      %v2025 = vrot.slane %v1873, 5
      %v2026 = vsel %vm2018, %v2024, %v2025
      %v2027 = vrot.slane %v1994, 5
      %v2028 = vrot.slane %v2027, 4
      %v2029 = vrot.slane %v1874, 5
      %v2030 = vsel %vm2018, %v2028, %v2029
      %v2031 = vrot.slane %v1995, 5
      %v2032 = vrot.slane %v2031, 4
      %v2033 = vrot.slane %v1875, 5
      %v2034 = vsel %vm2018, %v2032, %v2033
      %v2035 = vrot.slane %v1996, 5
      %v2036 = vrot.slane %v2035, 4
      %v2037 = vrot.slane %v1876, 5
      %v2038 = vsel %vm2018, %v2036, %v2037
      %v2039 = vrot.slane %v1997, 5
      %v2040 = vrot.slane %v2039, 4
      %v2041 = vrot.slane %v1877, 5
      %v2042 = vsel %vm2018, %v2040, %v2041
      %v2043 = vrot.slane %v1998, 5
      %v2044 = vrot.slane %v2043, 4
      %v2045 = vrot.slane %v1878, 5
      %v2046 = vsel %vm2018, %v2044, %v2045
      %v2047 = vrot.slane %v1999, 5
      %v2048 = vrot.slane %v2047, 4
      %v2049 = vrot.slane %v1879, 5
      %v2050 = vsel %vm2018, %v2048, %v2049
      %v2051 = vld [vmem:[%s1809] sm:$0xf]
      %v2052 = vld [vmem:[%s1809 + $0x8] sm:$0xf]
      %v2053 = vld [vmem:[%s1809 + $0x10] sm:$0xf]
      %v2054 = vld [vmem:[%s1809 + $0x18] sm:$0xf]
      %v2055 = vld [vmem:[%s1809 + $0x20] sm:$0xf]
      %v2056 = vld [vmem:[%s1809 + $0x28] sm:$0xf]
      %v2057 = vld [vmem:[%s1809 + $0x30] sm:$0xf]
      %v2058 = vld [vmem:[%s1809 + $0x38] sm:$0xf]
      %v2059 = vld [vmem:[%s1809 + $0x4] sm:$0x1]
      %v2060 = vld [vmem:[%s1809 + $0xc] sm:$0x1]
      %v2061 = vld [vmem:[%s1809 + $0x14] sm:$0x1]
      %v2062 = vld [vmem:[%s1809 + $0x1c] sm:$0x1]
      %v2063 = vld [vmem:[%s1809 + $0x24] sm:$0x1]
      %v2064 = vld [vmem:[%s1809 + $0x2c] sm:$0x1]
      %v2065 = vld [vmem:[%s1809 + $0x34] sm:$0x1]
      %v2066 = vld [vmem:[%s1809 + $0x3c] sm:$0x1]
      %v2068 = vshrl.u32 %v2051, 16
      %v2070 = vrot.slane %v2068, 4
      %v2071 = vshll.u32 %v2051, 16
      %v2073 = vrot.slane %v2071, 5
      %v2074 = vor.u32 %v2070, %v2073
      %v2075 = vrot.slane %v2074, 4
      %v2077 = vshll.u32 %v2059, 16
      %v2079 = vrot.slane %v2077, 5
      %v2080 = vsel %vm523, %v2075, %v2079
      %v2082 = vshrl.u32 %v2052, 16
      %v2084 = vrot.slane %v2082, 4
      %v2085 = vshll.u32 %v2052, 16
      %v2087 = vrot.slane %v2085, 5
      %v2088 = vor.u32 %v2084, %v2087
      %v2089 = vrot.slane %v2088, 4
      %v2091 = vshll.u32 %v2060, 16
      %v2093 = vrot.slane %v2091, 5
      %v2094 = vsel %vm523, %v2089, %v2093
      %v2096 = vshrl.u32 %v2053, 16
      %v2098 = vrot.slane %v2096, 4
      %v2099 = vshll.u32 %v2053, 16
      %v2101 = vrot.slane %v2099, 5
      %v2102 = vor.u32 %v2098, %v2101
      %v2103 = vrot.slane %v2102, 4
      %v2105 = vshll.u32 %v2061, 16
      %v2107 = vrot.slane %v2105, 5
      %v2108 = vsel %vm523, %v2103, %v2107
      %v2110 = vshrl.u32 %v2054, 16
      %v2112 = vrot.slane %v2110, 4
      %v2113 = vshll.u32 %v2054, 16
      %v2115 = vrot.slane %v2113, 5
      %v2116 = vor.u32 %v2112, %v2115
      %v2117 = vrot.slane %v2116, 4
      %v2119 = vshll.u32 %v2062, 16
      %v2121 = vrot.slane %v2119, 5
      %v2122 = vsel %vm523, %v2117, %v2121
      %v2124 = vshrl.u32 %v2055, 16
      %v2126 = vrot.slane %v2124, 4
      %v2127 = vshll.u32 %v2055, 16
      %v2129 = vrot.slane %v2127, 5
      %v2130 = vor.u32 %v2126, %v2129
      %v2131 = vrot.slane %v2130, 4
      %v2133 = vshll.u32 %v2063, 16
      %v2135 = vrot.slane %v2133, 5
      %v2136 = vsel %vm523, %v2131, %v2135
      %v2138 = vshrl.u32 %v2056, 16
      %v2140 = vrot.slane %v2138, 4
      %v2141 = vshll.u32 %v2056, 16
      %v2143 = vrot.slane %v2141, 5
      %v2144 = vor.u32 %v2140, %v2143
      %v2145 = vrot.slane %v2144, 4
      %v2147 = vshll.u32 %v2064, 16
      %v2149 = vrot.slane %v2147, 5
      %v2150 = vsel %vm523, %v2145, %v2149
      %v2152 = vshrl.u32 %v2057, 16
      %v2154 = vrot.slane %v2152, 4
      %v2155 = vshll.u32 %v2057, 16
      %v2157 = vrot.slane %v2155, 5
      %v2158 = vor.u32 %v2154, %v2157
      %v2159 = vrot.slane %v2158, 4
      %v2161 = vshll.u32 %v2065, 16
      %v2163 = vrot.slane %v2161, 5
      %v2164 = vsel %vm523, %v2159, %v2163
      %v2166 = vshrl.u32 %v2058, 16
      %v2168 = vrot.slane %v2166, 4
      %v2169 = vshll.u32 %v2058, 16
      %v2171 = vrot.slane %v2169, 5
      %v2172 = vor.u32 %v2168, %v2171
      %v2173 = vrot.slane %v2172, 4
      %v2175 = vshll.u32 %v2066, 16
      %v2177 = vrot.slane %v2175, 5
      %v2178 = vsel %vm523, %v2173, %v2177
      %v2179 = vld [vmem:[%s1809] sm:$0xe]
      %v2180 = vld [vmem:[%s1809 + $0x8] sm:$0xe]
      %v2181 = vld [vmem:[%s1809 + $0x10] sm:$0xe]
      %v2182 = vld [vmem:[%s1809 + $0x18] sm:$0xe]
      %v2183 = vld [vmem:[%s1809 + $0x20] sm:$0xe]
      %v2184 = vld [vmem:[%s1809 + $0x28] sm:$0xe]
      %v2185 = vld [vmem:[%s1809 + $0x30] sm:$0xe]
      %v2186 = vld [vmem:[%s1809 + $0x38] sm:$0xe]
      %v2203 = vrot.slane %v2179, 5
      %v2204 = vrot.slane %v2203, 4
      %v2205 = vrot.slane %v2059, 5
      %v2206 = vsel %vm2018, %v2204, %v2205
      %v2207 = vrot.slane %v2180, 5
      %v2208 = vrot.slane %v2207, 4
      %v2209 = vrot.slane %v2060, 5
      %v2210 = vsel %vm2018, %v2208, %v2209
      %v2211 = vrot.slane %v2181, 5
      %v2212 = vrot.slane %v2211, 4
      %v2213 = vrot.slane %v2061, 5
      %v2214 = vsel %vm2018, %v2212, %v2213
      %v2215 = vrot.slane %v2182, 5
      %v2216 = vrot.slane %v2215, 4
      %v2217 = vrot.slane %v2062, 5
      %v2218 = vsel %vm2018, %v2216, %v2217
      %v2219 = vrot.slane %v2183, 5
      %v2220 = vrot.slane %v2219, 4
      %v2221 = vrot.slane %v2063, 5
      %v2222 = vsel %vm2018, %v2220, %v2221
      %v2223 = vrot.slane %v2184, 5
      %v2224 = vrot.slane %v2223, 4
      %v2225 = vrot.slane %v2064, 5
      %v2226 = vsel %vm2018, %v2224, %v2225
      %v2227 = vrot.slane %v2185, 5
      %v2228 = vrot.slane %v2227, 4
      %v2229 = vrot.slane %v2065, 5
      %v2230 = vsel %vm2018, %v2228, %v2229
      %v2231 = vrot.slane %v2186, 5
      %v2232 = vrot.slane %v2231, 4
      %v2233 = vrot.slane %v2066, 5
      %v2234 = vsel %vm2018, %v2232, %v2233
      %s2235 = scalar_lea.vmem [#allocation2], 16
      %v2236 = vld [vmem:[%s2235] sm:$0xf]
      %v2237 = vld [vmem:[%s2235 + $0x8] sm:$0xf]
      %v2238 = vld [vmem:[%s2235 + $0x10] sm:$0xf]
      %v2239 = vld [vmem:[%s2235 + $0x18] sm:$0xf]
      %v2240 = vld [vmem:[%s2235 + $0x20] sm:$0xf]
      %v2241 = vld [vmem:[%s2235 + $0x28] sm:$0xf]
      %v2242 = vld [vmem:[%s2235 + $0x30] sm:$0xf]
      %v2243 = vld [vmem:[%s2235 + $0x38] sm:$0xf]
      %v2244 = vld [vmem:[%s2235 + $0x4] sm:$0x1]
      %v2245 = vld [vmem:[%s2235 + $0xc] sm:$0x1]
      %v2246 = vld [vmem:[%s2235 + $0x14] sm:$0x1]
      %v2247 = vld [vmem:[%s2235 + $0x1c] sm:$0x1]
      %v2248 = vld [vmem:[%s2235 + $0x24] sm:$0x1]
      %v2249 = vld [vmem:[%s2235 + $0x2c] sm:$0x1]
      %v2250 = vld [vmem:[%s2235 + $0x34] sm:$0x1]
      %v2251 = vld [vmem:[%s2235 + $0x3c] sm:$0x1]
      %v2253 = vshrl.u32 %v2236, 16
      %v2255 = vrot.slane %v2253, 4
      %v2256 = vshll.u32 %v2236, 16
      %v2258 = vrot.slane %v2256, 5
      %v2259 = vor.u32 %v2255, %v2258
      %v2260 = vrot.slane %v2259, 4
      %v2262 = vshll.u32 %v2244, 16
      %v2264 = vrot.slane %v2262, 5
      %v2265 = vsel %vm523, %v2260, %v2264
      %v2267 = vshrl.u32 %v2237, 16
      %v2269 = vrot.slane %v2267, 4
      %v2270 = vshll.u32 %v2237, 16
      %v2272 = vrot.slane %v2270, 5
      %v2273 = vor.u32 %v2269, %v2272
      %v2274 = vrot.slane %v2273, 4
      %v2276 = vshll.u32 %v2245, 16
      %v2278 = vrot.slane %v2276, 5
      %v2279 = vsel %vm523, %v2274, %v2278
      %v2281 = vshrl.u32 %v2238, 16
      %v2283 = vrot.slane %v2281, 4
      %v2284 = vshll.u32 %v2238, 16
      %v2286 = vrot.slane %v2284, 5
      %v2287 = vor.u32 %v2283, %v2286
      %v2288 = vrot.slane %v2287, 4
      %v2290 = vshll.u32 %v2246, 16
      %v2292 = vrot.slane %v2290, 5
      %v2293 = vsel %vm523, %v2288, %v2292
      %v2295 = vshrl.u32 %v2239, 16
      %v2297 = vrot.slane %v2295, 4
      %v2298 = vshll.u32 %v2239, 16
      %v2300 = vrot.slane %v2298, 5
      %v2301 = vor.u32 %v2297, %v2300
      %v2302 = vrot.slane %v2301, 4
      %v2304 = vshll.u32 %v2247, 16
      %v2306 = vrot.slane %v2304, 5
      %v2307 = vsel %vm523, %v2302, %v2306
      %v2309 = vshrl.u32 %v2240, 16
      %v2311 = vrot.slane %v2309, 4
      %v2312 = vshll.u32 %v2240, 16
      %v2314 = vrot.slane %v2312, 5
      %v2315 = vor.u32 %v2311, %v2314
      %v2316 = vrot.slane %v2315, 4
      %v2318 = vshll.u32 %v2248, 16
      %v2320 = vrot.slane %v2318, 5
      %v2321 = vsel %vm523, %v2316, %v2320
      %v2323 = vshrl.u32 %v2241, 16
      %v2325 = vrot.slane %v2323, 4
      %v2326 = vshll.u32 %v2241, 16
      %v2328 = vrot.slane %v2326, 5
      %v2329 = vor.u32 %v2325, %v2328
      %v2330 = vrot.slane %v2329, 4
      %v2332 = vshll.u32 %v2249, 16
      %v2334 = vrot.slane %v2332, 5
      %v2335 = vsel %vm523, %v2330, %v2334
      %v2337 = vshrl.u32 %v2242, 16
      %v2339 = vrot.slane %v2337, 4
      %v2340 = vshll.u32 %v2242, 16
      %v2342 = vrot.slane %v2340, 5
      %v2343 = vor.u32 %v2339, %v2342
      %v2344 = vrot.slane %v2343, 4
      %v2346 = vshll.u32 %v2250, 16
      %v2348 = vrot.slane %v2346, 5
      %v2349 = vsel %vm523, %v2344, %v2348
      %v2351 = vshrl.u32 %v2243, 16
      %v2353 = vrot.slane %v2351, 4
      %v2354 = vshll.u32 %v2243, 16
      %v2356 = vrot.slane %v2354, 5
      %v2357 = vor.u32 %v2353, %v2356
      %v2358 = vrot.slane %v2357, 4
      %v2360 = vshll.u32 %v2251, 16
      %v2362 = vrot.slane %v2360, 5
      %v2363 = vsel %vm523, %v2358, %v2362
      %v2364 = vld [vmem:[%s2235] sm:$0xe]
      %v2365 = vld [vmem:[%s2235 + $0x8] sm:$0xe]
      %v2366 = vld [vmem:[%s2235 + $0x10] sm:$0xe]
      %v2367 = vld [vmem:[%s2235 + $0x18] sm:$0xe]
      %v2368 = vld [vmem:[%s2235 + $0x20] sm:$0xe]
      %v2369 = vld [vmem:[%s2235 + $0x28] sm:$0xe]
      %v2370 = vld [vmem:[%s2235 + $0x30] sm:$0xe]
      %v2371 = vld [vmem:[%s2235 + $0x38] sm:$0xe]
      %v2388 = vrot.slane %v2364, 5
      %v2389 = vrot.slane %v2388, 4
      %v2390 = vrot.slane %v2244, 5
      %v2391 = vsel %vm2018, %v2389, %v2390
      %v2392 = vrot.slane %v2365, 5
      %v2393 = vrot.slane %v2392, 4
      %v2394 = vrot.slane %v2245, 5
      %v2395 = vsel %vm2018, %v2393, %v2394
      %v2396 = vrot.slane %v2366, 5
      %v2397 = vrot.slane %v2396, 4
      %v2398 = vrot.slane %v2246, 5
      %v2399 = vsel %vm2018, %v2397, %v2398
      %v2400 = vrot.slane %v2367, 5
      %v2401 = vrot.slane %v2400, 4
      %v2402 = vrot.slane %v2247, 5
      %v2403 = vsel %vm2018, %v2401, %v2402
      %v2404 = vrot.slane %v2368, 5
      %v2405 = vrot.slane %v2404, 4
      %v2406 = vrot.slane %v2248, 5
      %v2407 = vsel %vm2018, %v2405, %v2406
      %v2408 = vrot.slane %v2369, 5
      %v2409 = vrot.slane %v2408, 4
      %v2410 = vrot.slane %v2249, 5
      %v2411 = vsel %vm2018, %v2409, %v2410
      %v2412 = vrot.slane %v2370, 5
      %v2413 = vrot.slane %v2412, 4
      %v2414 = vrot.slane %v2250, 5
      %v2415 = vsel %vm2018, %v2413, %v2414
      %v2416 = vrot.slane %v2371, 5
      %v2417 = vrot.slane %v2416, 4
      %v2418 = vrot.slane %v2251, 5
      %v2419 = vsel %vm2018, %v2417, %v2418
      %v2428 = vunpack.c.l.b16 %v1864
      %v2429 = vunpack.c.l.b16 %v1865
      %v2430 = vunpack.c.l.b16 %v1866
      %v2431 = vunpack.c.l.b16 %v1867
      %v2432 = vunpack.c.l.b16 %v1868
      %v2433 = vunpack.c.l.b16 %v1869
      %v2434 = vunpack.c.l.b16 %v1870
      %v2435 = vunpack.c.l.b16 %v1871
      %v2436 = vpack.c.b16 %v2429, %v2428
      %v2437 = vpack.c.b16 %v2431, %v2430
      %v2438 = vpack.c.b16 %v2433, %v2432
      %v2439 = vpack.c.b16 %v2435, %v2434
      %v2440 = vunpack.c.l.b16 %v1893
      %v2441 = vunpack.c.l.b16 %v1907
      %v2442 = vunpack.c.l.b16 %v1921
      %v2443 = vunpack.c.l.b16 %v1935
      %v2444 = vunpack.c.l.b16 %v1949
      %v2445 = vunpack.c.l.b16 %v1963
      %v2446 = vunpack.c.l.b16 %v1977
      %v2447 = vunpack.c.l.b16 %v1991
      %v2448 = vpack.c.b16 %v2441, %v2440
      %v2449 = vpack.c.b16 %v2443, %v2442
      %v2450 = vpack.c.b16 %v2445, %v2444
      %v2451 = vpack.c.b16 %v2447, %v2446
      %2452 = vrot.lane.b32.xlu0 %v2448, 64
      %v2453 = vpop.permute.xlu0 %2452
      %2454 = vrot.lane.b32.xlu0 %v2449, 64
      %v2455 = vpop.permute.xlu0 %2454
      %2456 = vrot.lane.b32.xlu0 %v2450, 64
      %v2457 = vpop.permute.xlu0 %2456
      %2458 = vrot.lane.b32.xlu0 %v2451, 64
      %v2459 = vpop.permute.xlu0 %2458
      %v2460 = vunpack.c.l.b16 %v2022
      %v2461 = vunpack.c.l.b16 %v2026
      %v2462 = vunpack.c.l.b16 %v2030
      %v2463 = vunpack.c.l.b16 %v2034
      %v2464 = vunpack.c.l.b16 %v2038
      %v2465 = vunpack.c.l.b16 %v2042
      %v2466 = vunpack.c.l.b16 %v2046
      %v2467 = vunpack.c.l.b16 %v2050
      %v2468 = vpack.c.b16 %v2461, %v2460
      %v2469 = vpack.c.b16 %v2463, %v2462
      %v2470 = vpack.c.b16 %v2465, %v2464
      %v2471 = vpack.c.b16 %v2467, %v2466
      %v2480 = vunpack.c.l.b16 %v2051
      %v2481 = vunpack.c.l.b16 %v2052
      %v2482 = vunpack.c.l.b16 %v2053
      %v2483 = vunpack.c.l.b16 %v2054
      %v2484 = vunpack.c.l.b16 %v2055
      %v2485 = vunpack.c.l.b16 %v2056
      %v2486 = vunpack.c.l.b16 %v2057
      %v2487 = vunpack.c.l.b16 %v2058
      %v2488 = vpack.c.b16 %v2481, %v2480
      %v2489 = vpack.c.b16 %v2483, %v2482
      %v2490 = vpack.c.b16 %v2485, %v2484
      %v2491 = vpack.c.b16 %v2487, %v2486
      %2492 = vrot.lane.b32.xlu0 %v2488, 64
      %v2493 = vpop.permute.xlu0 %2492
      %2494 = vrot.lane.b32.xlu0 %v2489, 64
      %v2495 = vpop.permute.xlu0 %2494
      %2496 = vrot.lane.b32.xlu0 %v2490, 64
      %v2497 = vpop.permute.xlu0 %2496
      %2498 = vrot.lane.b32.xlu0 %v2491, 64
      %v2499 = vpop.permute.xlu0 %2498
      %v2500 = vunpack.c.l.b16 %v2080
      %v2501 = vunpack.c.l.b16 %v2094
      %v2502 = vunpack.c.l.b16 %v2108
      %v2503 = vunpack.c.l.b16 %v2122
      %v2504 = vunpack.c.l.b16 %v2136
      %v2505 = vunpack.c.l.b16 %v2150
      %v2506 = vunpack.c.l.b16 %v2164
      %v2507 = vunpack.c.l.b16 %v2178
      %v2508 = vpack.c.b16 %v2501, %v2500
      %v2509 = vpack.c.b16 %v2503, %v2502
      %v2510 = vpack.c.b16 %v2505, %v2504
      %v2511 = vpack.c.b16 %v2507, %v2506
      %v2512 = vunpack.c.l.b16 %v2206
      %v2513 = vunpack.c.l.b16 %v2210
      %v2514 = vunpack.c.l.b16 %v2214
      %v2515 = vunpack.c.l.b16 %v2218
      %v2516 = vunpack.c.l.b16 %v2222
      %v2517 = vunpack.c.l.b16 %v2226
      %v2518 = vunpack.c.l.b16 %v2230
      %v2519 = vunpack.c.l.b16 %v2234
      %v2520 = vpack.c.b16 %v2513, %v2512
      %v2521 = vpack.c.b16 %v2515, %v2514
      %v2522 = vpack.c.b16 %v2517, %v2516
      %v2523 = vpack.c.b16 %v2519, %v2518
      %2524 = vrot.lane.b32.xlu0 %v2520, 64
      %v2525 = vpop.permute.xlu0 %2524
      %2526 = vrot.lane.b32.xlu0 %v2521, 64
      %v2527 = vpop.permute.xlu0 %2526
      %2528 = vrot.lane.b32.xlu0 %v2522, 64
      %v2529 = vpop.permute.xlu0 %2528
      %2530 = vrot.lane.b32.xlu0 %v2523, 64
      %v2531 = vpop.permute.xlu0 %2530
      %v2540 = vunpack.c.l.b16 %v2236
      %v2541 = vunpack.c.l.b16 %v2237
      %v2542 = vunpack.c.l.b16 %v2238
      %v2543 = vunpack.c.l.b16 %v2239
      %v2544 = vunpack.c.l.b16 %v2240
      %v2545 = vunpack.c.l.b16 %v2241
      %v2546 = vunpack.c.l.b16 %v2242
      %v2547 = vunpack.c.l.b16 %v2243
      %v2548 = vpack.c.b16 %v2541, %v2540
      %v2549 = vpack.c.b16 %v2543, %v2542
      %v2550 = vpack.c.b16 %v2545, %v2544
      %v2551 = vpack.c.b16 %v2547, %v2546
      %v2552 = vunpack.c.l.b16 %v2265
      %v2553 = vunpack.c.l.b16 %v2279
      %v2554 = vunpack.c.l.b16 %v2293
      %v2555 = vunpack.c.l.b16 %v2307
      %v2556 = vunpack.c.l.b16 %v2321
      %v2557 = vunpack.c.l.b16 %v2335
      %v2558 = vunpack.c.l.b16 %v2349
      %v2559 = vunpack.c.l.b16 %v2363
      %v2560 = vpack.c.b16 %v2553, %v2552
      %v2561 = vpack.c.b16 %v2555, %v2554
      %v2562 = vpack.c.b16 %v2557, %v2556
      %v2563 = vpack.c.b16 %v2559, %v2558
      %2564 = vrot.lane.b32.xlu0 %v2560, 64
      %v2565 = vpop.permute.xlu0 %2564
      %2566 = vrot.lane.b32.xlu0 %v2561, 64
      %v2567 = vpop.permute.xlu0 %2566
      %2568 = vrot.lane.b32.xlu0 %v2562, 64
      %v2569 = vpop.permute.xlu0 %2568
      %2570 = vrot.lane.b32.xlu0 %v2563, 64
      %v2571 = vpop.permute.xlu0 %2570
      %v2572 = vunpack.c.l.b16 %v2391
      %v2573 = vunpack.c.l.b16 %v2395
      %v2574 = vunpack.c.l.b16 %v2399
      %v2575 = vunpack.c.l.b16 %v2403
      %v2576 = vunpack.c.l.b16 %v2407
      %v2577 = vunpack.c.l.b16 %v2411
      %v2578 = vunpack.c.l.b16 %v2415
      %v2579 = vunpack.c.l.b16 %v2419
      %v2580 = vpack.c.b16 %v2573, %v2572
      %v2581 = vpack.c.b16 %v2575, %v2574
      %v2582 = vpack.c.b16 %v2577, %v2576
      %v2583 = vpack.c.b16 %v2579, %v2578
      %v2586 = vsel %vm1100, %v2436, %v2453
      %v2590 = vsel %vm1100, %v2437, %v2455
      %v2594 = vsel %vm1100, %v2438, %v2457
      %v2598 = vsel %vm1100, %v2439, %v2459
      %v2602 = vsel %vm1100, %v2468, %v2493
      %v2606 = vsel %vm1100, %v2469, %v2495
      %v2610 = vsel %vm1100, %v2470, %v2497
      %v2614 = vsel %vm1100, %v2471, %v2499
      %v2618 = vsel %vm1100, %v2508, %v2525
      %v2622 = vsel %vm1100, %v2509, %v2527
      %v2626 = vsel %vm1100, %v2510, %v2529
      %v2630 = vsel %vm1100, %v2511, %v2531
      %v2634 = vsel %vm1100, %v2548, %v2565
      %v2638 = vsel %vm1100, %v2549, %v2567
      %v2642 = vsel %vm1100, %v2550, %v2569
      %v2646 = vsel %vm1100, %v2551, %v2571
      %v2648 = vld [vmem:[%s3] sm:$0xf]
      %v2649 = vld [vmem:[%s3 + $0x4] sm:$0xf]
      %v2650 = vld [vmem:[%s3 + $0x8] sm:$0xf]
      %v2651 = vld [vmem:[%s3 + $0xc] sm:$0xf]
      %v2652 = vld [vmem:[%s3 + $0x10] sm:$0xf]
      %v2653 = vld [vmem:[%s3 + $0x14] sm:$0xf]
      %v2654 = vld [vmem:[%s3 + $0x18] sm:$0xf]
      %v2655 = vld [vmem:[%s3 + $0x1c] sm:$0xf]
      %v2656 = vld [vmem:[%s3 + $0x20] sm:$0xf]
      %v2657 = vld [vmem:[%s3 + $0x24] sm:$0xf]
      %v2658 = vld [vmem:[%s3 + $0x28] sm:$0xf]
      %v2659 = vld [vmem:[%s3 + $0x2c] sm:$0xf]
      %v2660 = vld [vmem:[%s3 + $0x30] sm:$0xf]
      %v2661 = vld [vmem:[%s3 + $0x34] sm:$0xf]
      %v2662 = vld [vmem:[%s3 + $0x38] sm:$0xf]
      %v2663 = vld [vmem:[%s3 + $0x3c] sm:$0xf]
      %v2664 = vld [vmem:[%s3 + $0x40] sm:$0xf]
      %v2665 = vld [vmem:[%s3 + $0x44] sm:$0xf]
      %v2666 = vld [vmem:[%s3 + $0x48] sm:$0xf]
      %v2667 = vld [vmem:[%s3 + $0x4c] sm:$0xf]
      %v2668 = vld [vmem:[%s3 + $0x50] sm:$0xf]
      %v2669 = vld [vmem:[%s3 + $0x54] sm:$0xf]
      %v2670 = vld [vmem:[%s3 + $0x58] sm:$0xf]
      %v2671 = vld [vmem:[%s3 + $0x5c] sm:$0xf]
      %v2672 = vld [vmem:[%s3 + $0x60] sm:$0xf]
      %v2673 = vld [vmem:[%s3 + $0x64] sm:$0xf]
      %v2674 = vld [vmem:[%s3 + $0x68] sm:$0xf]
      %v2675 = vld [vmem:[%s3 + $0x6c] sm:$0xf]
      %v2676 = vld [vmem:[%s3 + $0x70] sm:$0xf]
      %v2677 = vld [vmem:[%s3 + $0x74] sm:$0xf]
      %v2678 = vld [vmem:[%s3 + $0x78] sm:$0xf]
      %v2679 = vld [vmem:[%s3 + $0x7c] sm:$0xf]
      %v2680 = vld [vmem:[%s3 + $0x80] sm:$0xf]
      %v2681 = vld [vmem:[%s3 + $0x84] sm:$0xf]
      %v2682 = vld [vmem:[%s3 + $0x88] sm:$0xf]
      %v2683 = vld [vmem:[%s3 + $0x8c] sm:$0xf]
      %v2684 = vld [vmem:[%s3 + $0x90] sm:$0xf]
      %v2685 = vld [vmem:[%s3 + $0x94] sm:$0xf]
      %v2686 = vld [vmem:[%s3 + $0x98] sm:$0xf]
      %v2687 = vld [vmem:[%s3 + $0x9c] sm:$0xf]
      %v2688 = vld [vmem:[%s3 + $0xa0] sm:$0xf]
      %v2689 = vld [vmem:[%s3 + $0xa4] sm:$0xf]
      %v2690 = vld [vmem:[%s3 + $0xa8] sm:$0xf]
      %v2691 = vld [vmem:[%s3 + $0xac] sm:$0xf]
      %v2692 = vld [vmem:[%s3 + $0xb0] sm:$0xf]
      %v2693 = vld [vmem:[%s3 + $0xb4] sm:$0xf]
      %v2694 = vld [vmem:[%s3 + $0xb8] sm:$0xf]
      %v2695 = vld [vmem:[%s3 + $0xbc] sm:$0xf]
      %v2696 = vld [vmem:[%s3 + $0xc0] sm:$0xf]
      %v2697 = vld [vmem:[%s3 + $0xc4] sm:$0xf]
      %v2698 = vld [vmem:[%s3 + $0xc8] sm:$0xf]
      %v2699 = vld [vmem:[%s3 + $0xcc] sm:$0xf]
      %v2700 = vld [vmem:[%s3 + $0xd0] sm:$0xf]
      %v2701 = vld [vmem:[%s3 + $0xd4] sm:$0xf]
      %v2702 = vld [vmem:[%s3 + $0xd8] sm:$0xf]
      %v2703 = vld [vmem:[%s3 + $0xdc] sm:$0xf]
      %v2704 = vld [vmem:[%s3 + $0xe0] sm:$0xf]
      %v2705 = vld [vmem:[%s3 + $0xe4] sm:$0xf]
      %v2706 = vld [vmem:[%s3 + $0xe8] sm:$0xf]
      %v2707 = vld [vmem:[%s3 + $0xec] sm:$0xf]
      %v2708 = vld [vmem:[%s3 + $0xf0] sm:$0xf]
      %v2709 = vld [vmem:[%s3 + $0xf4] sm:$0xf]
      %v2710 = vld [vmem:[%s3 + $0xf8] sm:$0xf]
      %v2711 = vld [vmem:[%s3 + $0xfc] sm:$0xf]
      %v2712 = vld [vmem:[%s3 + $0x100] sm:$0xf]
      %v2713 = vld [vmem:[%s3 + $0x104] sm:$0xf]
      %v2714 = vld [vmem:[%s3 + $0x108] sm:$0xf]
      %v2715 = vld [vmem:[%s3 + $0x10c] sm:$0xf]
      %v2716 = vld [vmem:[%s3 + $0x110] sm:$0xf]
      %v2717 = vld [vmem:[%s3 + $0x114] sm:$0xf]
      %v2718 = vld [vmem:[%s3 + $0x118] sm:$0xf]
      %v2719 = vld [vmem:[%s3 + $0x11c] sm:$0xf]
      %v2720 = vld [vmem:[%s4] sm:$0x1]
      %v2722 = vlaneseq
      %v2723 = vshrl.u32 %v2722, 7
      %v2724 = vsub.s32 0, %v2723
      %v2725 = vrot.slane %v2720, %v2724
      %v2799 = vunpack.c.l.b16 %v2648
      %v2800 = vunpack.c.l.b16 %v2649
      %v2801 = vunpack.c.l.b16 %v2650
      %v2802 = vunpack.c.l.b16 %v2651
      %v2803 = vunpack.c.l.b16 %v2652
      %v2804 = vunpack.c.l.b16 %v2653
      %v2805 = vunpack.c.l.b16 %v2654
      %v2806 = vunpack.c.l.b16 %v2655
      %v2807 = vunpack.c.l.b16 %v2656
      %v2808 = vunpack.c.l.b16 %v2657
      %v2809 = vunpack.c.l.b16 %v2658
      %v2810 = vunpack.c.l.b16 %v2659
      %v2811 = vunpack.c.l.b16 %v2660
      %v2812 = vunpack.c.l.b16 %v2661
      %v2813 = vunpack.c.l.b16 %v2662
      %v2814 = vunpack.c.l.b16 %v2663
      %v2815 = vunpack.c.l.b16 %v2664
      %v2816 = vunpack.c.l.b16 %v2665
      %v2817 = vunpack.c.l.b16 %v2666
      %v2818 = vunpack.c.l.b16 %v2667
      %v2819 = vunpack.c.l.b16 %v2668
      %v2820 = vunpack.c.l.b16 %v2669
      %v2821 = vunpack.c.l.b16 %v2670
      %v2822 = vunpack.c.l.b16 %v2671
      %v2823 = vunpack.c.l.b16 %v2672
      %v2824 = vunpack.c.l.b16 %v2673
      %v2825 = vunpack.c.l.b16 %v2674
      %v2826 = vunpack.c.l.b16 %v2675
      %v2827 = vunpack.c.l.b16 %v2676
      %v2828 = vunpack.c.l.b16 %v2677
      %v2829 = vunpack.c.l.b16 %v2678
      %v2830 = vunpack.c.l.b16 %v2679
      %v2831 = vunpack.c.l.b16 %v2680
      %v2832 = vunpack.c.l.b16 %v2681
      %v2833 = vunpack.c.l.b16 %v2682
      %v2834 = vunpack.c.l.b16 %v2683
      %v2835 = vunpack.c.l.b16 %v2684
      %v2836 = vunpack.c.l.b16 %v2685
      %v2837 = vunpack.c.l.b16 %v2686
      %v2838 = vunpack.c.l.b16 %v2687
      %v2839 = vunpack.c.l.b16 %v2688
      %v2840 = vunpack.c.l.b16 %v2689
      %v2841 = vunpack.c.l.b16 %v2690
      %v2842 = vunpack.c.l.b16 %v2691
      %v2843 = vunpack.c.l.b16 %v2692
      %v2844 = vunpack.c.l.b16 %v2693
      %v2845 = vunpack.c.l.b16 %v2694
      %v2846 = vunpack.c.l.b16 %v2695
      %v2847 = vunpack.c.l.b16 %v2696
      %v2848 = vunpack.c.l.b16 %v2697
      %v2849 = vunpack.c.l.b16 %v2698
      %v2850 = vunpack.c.l.b16 %v2699
      %v2851 = vunpack.c.l.b16 %v2700
      %v2852 = vunpack.c.l.b16 %v2701
      %v2853 = vunpack.c.l.b16 %v2702
      %v2854 = vunpack.c.l.b16 %v2703
      %v2855 = vunpack.c.l.b16 %v2704
      %v2856 = vunpack.c.l.b16 %v2705
      %v2857 = vunpack.c.l.b16 %v2706
      %v2858 = vunpack.c.l.b16 %v2707
      %v2859 = vunpack.c.l.b16 %v2708
      %v2860 = vunpack.c.l.b16 %v2709
      %v2861 = vunpack.c.l.b16 %v2710
      %v2862 = vunpack.c.l.b16 %v2711
      %v2863 = vunpack.c.l.b16 %v2712
      %v2864 = vunpack.c.l.b16 %v2713
      %v2865 = vunpack.c.l.b16 %v2714
      %v2866 = vunpack.c.l.b16 %v2715
      %v2867 = vunpack.c.l.b16 %v2716
      %v2868 = vunpack.c.l.b16 %v2717
      %v2869 = vunpack.c.l.b16 %v2718
      %v2870 = vunpack.c.l.b16 %v2719
      %v2871 = vpack.c.b16 %v2800, %v2799
      %v2872 = vpack.c.b16 %v2802, %v2801
      %v2873 = vpack.c.b16 %v2804, %v2803
      %v2874 = vpack.c.b16 %v2806, %v2805
      %v2875 = vpack.c.b16 %v2808, %v2807
      %v2876 = vpack.c.b16 %v2810, %v2809
      %v2877 = vpack.c.b16 %v2812, %v2811
      %v2878 = vpack.c.b16 %v2814, %v2813
      %v2879 = vpack.c.b16 %v2816, %v2815
      %v2880 = vpack.c.b16 %v2818, %v2817
      %v2881 = vpack.c.b16 %v2820, %v2819
      %v2882 = vpack.c.b16 %v2822, %v2821
      %v2883 = vpack.c.b16 %v2824, %v2823
      %v2884 = vpack.c.b16 %v2826, %v2825
      %v2885 = vpack.c.b16 %v2828, %v2827
      %v2886 = vpack.c.b16 %v2830, %v2829
      %v2887 = vpack.c.b16 %v2832, %v2831
      %v2888 = vpack.c.b16 %v2834, %v2833
      %v2889 = vpack.c.b16 %v2836, %v2835
      %v2890 = vpack.c.b16 %v2838, %v2837
      %v2891 = vpack.c.b16 %v2840, %v2839
      %v2892 = vpack.c.b16 %v2842, %v2841
      %v2893 = vpack.c.b16 %v2844, %v2843
      %v2894 = vpack.c.b16 %v2846, %v2845
      %v2895 = vpack.c.b16 %v2848, %v2847
      %v2896 = vpack.c.b16 %v2850, %v2849
      %v2897 = vpack.c.b16 %v2852, %v2851
      %v2898 = vpack.c.b16 %v2854, %v2853
      %v2899 = vpack.c.b16 %v2856, %v2855
      %v2900 = vpack.c.b16 %v2858, %v2857
      %v2901 = vpack.c.b16 %v2860, %v2859
      %v2902 = vpack.c.b16 %v2862, %v2861
      %v2903 = vpack.c.b16 %v2864, %v2863
      %v2904 = vpack.c.b16 %v2866, %v2865
      %v2905 = vpack.c.b16 %v2868, %v2867
      %v2906 = vpack.c.b16 %v2870, %v2869
      %v2944 = vsel %vm1100, %v2580, 0
      %v2947 = vsel %vm1100, %v2581, 0
      %v2950 = vsel %vm1100, %v2582, 0
      %v2953 = vsel %vm1100, %v2583, 0
      %2955 = vmatprep.subr.bf16.mxu0 0
      %2956 = vmatpush1.bf16.msra.mxu0 %v2871
      %2957 = vmatprep.subr.bf16.mxu0 0
      %2958 = vmatpush1.bf16.msra.mxu0 %v2872
      %2959 = vmatprep.subr.bf16.mxu0 0
      %2960 = vmatpush1.bf16.msra.mxu0 %v2873
      %2961 = vmatprep.subr.bf16.mxu0 0
      %2962 = vmatpush1.bf16.msra.mxu0 %v2874
      %2963 = vmatprep.subr.bf16.mxu0 0
      %2964 = vmatpush1.bf16.msra.mxu0 %v2875
      %2965 = vmatprep.subr.bf16.mxu0 0
      %2966 = vmatpush1.bf16.msra.mxu0 %v2876
      %2967 = vmatprep.subr.bf16.mxu0 0
      %2968 = vmatpush1.bf16.msra.mxu0 %v2877
      %2969 = vmatprep.subr.bf16.mxu0 0
      %2970 = vmatpush1.bf16.msra.mxu0 %v2878
      %2971 = vmatprep.subr.bf16.mxu0 0
      %2972 = vmatpush1.bf16.msra.mxu0 %v2879
      %2973 = vmatprep.subr.bf16.mxu0 0
      %2974 = vmatpush1.bf16.msra.mxu0 %v2880
      %2975 = vmatprep.subr.bf16.mxu0 0
      %2976 = vmatpush1.bf16.msra.mxu0 %v2881
      %2977 = vmatprep.subr.bf16.mxu0 0
      %2978 = vmatpush1.bf16.msra.mxu0 %v2882
      %2979 = vmatprep.subr.bf16.mxu0 0
      %2980 = vmatpush1.bf16.msra.mxu0 %v2883
      %2981 = vmatprep.subr.bf16.mxu0 0
      %2982 = vmatpush1.bf16.msra.mxu0 %v2884
      %2983 = vmatprep.subr.bf16.mxu0 0
      %2984 = vmatpush1.bf16.msra.mxu0 %v2885
      %2985 = vmatprep.subr.bf16.mxu0 0
      %2986 = vmatpush1.bf16.msra.mxu0 %v2886
      %2987 = vmatprep.mubr.bf16.mxu0 %v2602
      %2988 = vmatmul.mubr.bf16.gmra.mrb[0].mxu0 %v2586
      %v2989 = vpop.f32.mrb[0].mxu0
      %v2990 = vadd.f32 %v2725, %v2989
      %v2991 = vpop.f32.mrb[0].mxu0
      %v2992 = vpop.f32.mrb[0].mxu0
      %v2993 = vadd.f32 %v2725, %v2992
      %v2994 = vpop.f32.mrb[0].mxu0
      %2995 = vmatprep.mubr.bf16.mxu0 %v2606
      %2996 = vmatmul.mubr.bf16.gmra.mrb[0].mxu0 %v2590
      %v2997 = vpop.f32.mrb[0].mxu0
      %v2998 = vadd.f32 %v2725, %v2997
      %v2999 = vpop.f32.mrb[0].mxu0
      %v3000 = vpop.f32.mrb[0].mxu0
      %v3001 = vadd.f32 %v2725, %v3000
      %v3002 = vpop.f32.mrb[0].mxu0
      %3003 = vmatprep.mubr.bf16.mxu0 %v2610
      %3004 = vmatmul.mubr.bf16.gmra.mrb[0].mxu0 %v2594
      %v3005 = vpop.f32.mrb[0].mxu0
      %v3006 = vadd.f32 %v2725, %v3005
      %v3007 = vpop.f32.mrb[0].mxu0
      %v3008 = vpop.f32.mrb[0].mxu0
      %v3009 = vadd.f32 %v2725, %v3008
      %v3010 = vpop.f32.mrb[0].mxu0
      %3011 = vmatprep.mubr.bf16.mxu0 %v2614
      %3012 = vmatmul.mubr.bf16.gmra.mrb[0].mxu0 %v2598
      %v3013 = vpop.f32.mrb[0].mxu0
      %v3014 = vadd.f32 %v2725, %v3013
      %v3015 = vpop.f32.mrb[0].mxu0
      %v3016 = vpop.f32.mrb[0].mxu0
      %v3017 = vadd.f32 %v2725, %v3016
      %v3018 = vpop.f32.mrb[0].mxu0
      %3019 = vdwg.mxu0
      %3020 = vmatprep.subr.bf16.mxu0 0
      %3021 = vmatpush1.bf16.msra.mxu0 %v2887
      %3022 = vmatprep.subr.bf16.mxu0 0
      %3023 = vmatpush1.bf16.msra.mxu0 %v2888
      %3024 = vmatprep.subr.bf16.mxu0 0
      %3025 = vmatpush1.bf16.msra.mxu0 %v2889
      %3026 = vmatprep.subr.bf16.mxu0 0
      %3027 = vmatpush1.bf16.msra.mxu0 %v2890
      %3028 = vmatprep.subr.bf16.mxu0 0
      %3029 = vmatpush1.bf16.msra.mxu0 %v2891
      %3030 = vmatprep.subr.bf16.mxu0 0
      %3031 = vmatpush1.bf16.msra.mxu0 %v2892
      %3032 = vmatprep.subr.bf16.mxu0 0
      %3033 = vmatpush1.bf16.msra.mxu0 %v2893
      %3034 = vmatprep.subr.bf16.mxu0 0
      %3035 = vmatpush1.bf16.msra.mxu0 %v2894
      %3036 = vmatprep.subr.bf16.mxu0 0
      %3037 = vmatpush1.bf16.msra.mxu0 %v2895
      %3038 = vmatprep.subr.bf16.mxu0 0
      %3039 = vmatpush1.bf16.msra.mxu0 %v2896
      %3040 = vmatprep.subr.bf16.mxu0 0
      %3041 = vmatpush1.bf16.msra.mxu0 %v2897
      %3042 = vmatprep.subr.bf16.mxu0 0
      %3043 = vmatpush1.bf16.msra.mxu0 %v2898
      %3044 = vmatprep.subr.bf16.mxu0 0
      %3045 = vmatpush1.bf16.msra.mxu0 %v2899
      %3046 = vmatprep.subr.bf16.mxu0 0
      %3047 = vmatpush1.bf16.msra.mxu0 %v2900
      %3048 = vmatprep.subr.bf16.mxu0 0
      %3049 = vmatpush1.bf16.msra.mxu0 %v2901
      %3050 = vmatprep.subr.bf16.mxu0 0
      %3051 = vmatpush1.bf16.msra.mxu0 %v2902
      %3052 = vmatprep.mubr.bf16.mxu0 %v2634
      %3053 = vmatmul.mubr.bf16.gmra.mrb[0].mxu0 %v2618
      %v3054 = vpop.f32.mrb[0].mxu0
      %v3055 = vadd.f32 %v2990, %v3054
      %v3056 = vpop.f32.mrb[0].mxu0
      %v3057 = vpop.f32.mrb[0].mxu0
      %v3058 = vadd.f32 %v2993, %v3057
      %v3059 = vpop.f32.mrb[0].mxu0
      %3060 = vmatprep.mubr.bf16.mxu0 %v2638
      %3061 = vmatmul.mubr.bf16.gmra.mrb[0].mxu0 %v2622
      %v3062 = vpop.f32.mrb[0].mxu0
      %v3063 = vadd.f32 %v2998, %v3062
      %v3064 = vpop.f32.mrb[0].mxu0
      %v3065 = vpop.f32.mrb[0].mxu0
      %v3066 = vadd.f32 %v3001, %v3065
      %v3067 = vpop.f32.mrb[0].mxu0
      %3068 = vmatprep.mubr.bf16.mxu0 %v2642
      %3069 = vmatmul.mubr.bf16.gmra.mrb[0].mxu0 %v2626
      %v3070 = vpop.f32.mrb[0].mxu0
      %v3071 = vadd.f32 %v3006, %v3070
      %v3072 = vpop.f32.mrb[0].mxu0
      %v3073 = vpop.f32.mrb[0].mxu0
      %v3074 = vadd.f32 %v3009, %v3073
      %v3075 = vpop.f32.mrb[0].mxu0
      %3076 = vmatprep.mubr.bf16.mxu0 %v2646
      %3077 = vmatmul.mubr.bf16.gmra.mrb[0].mxu0 %v2630
      %v3078 = vpop.f32.mrb[0].mxu0
      %v3079 = vadd.f32 %v3014, %v3078
      %v3080 = vpop.f32.mrb[0].mxu0
      %v3081 = vpop.f32.mrb[0].mxu0
      %v3082 = vadd.f32 %v3017, %v3081
      %v3083 = vpop.f32.mrb[0].mxu0
      %3084 = vdwg.mxu0
      %3085 = vmatprep.subr.bf16.mxu0 0
      %3086 = vmatpush1.bf16.msra.mxu0 %v2903
      %3087 = vmatprep.subr.bf16.mxu0 0
      %3088 = vmatpush1.bf16.msra.mxu0 %v2904
      %3089 = vmatprep.subr.bf16.mxu0 0
      %3090 = vmatpush1.bf16.msra.mxu0 %v2905
      %3091 = vmatprep.subr.bf16.mxu0 0
      %3092 = vmatpush1.bf16.msra.mxu0 %v2906
      %3093 = vmatprep.subr.bf16.mxu0 0
      %3094 = vmatpush1.bf16.msra.mxu0 0
      %3095 = vmatprep.subr.bf16.mxu0 0
      %3096 = vmatpush1.bf16.msra.mxu0 0
      %3097 = vmatprep.subr.bf16.mxu0 0
      %3098 = vmatpush1.bf16.msra.mxu0 0
      %3099 = vmatprep.subr.bf16.mxu0 0
      %3100 = vmatpush1.bf16.msra.mxu0 0
      %3101 = vmatprep.subr.bf16.mxu0 0
      %3102 = vmatpush1.bf16.msra.mxu0 0
      %3103 = vmatprep.subr.bf16.mxu0 0
      %3104 = vmatpush1.bf16.msra.mxu0 0
      %3105 = vmatprep.subr.bf16.mxu0 0
      %3106 = vmatpush1.bf16.msra.mxu0 0
      %3107 = vmatprep.subr.bf16.mxu0 0
      %3108 = vmatpush1.bf16.msra.mxu0 0
      %3109 = vmatprep.subr.bf16.mxu0 0
      %3110 = vmatpush1.bf16.msra.mxu0 0
      %3111 = vmatprep.subr.bf16.mxu0 0
      %3112 = vmatpush1.bf16.msra.mxu0 0
      %3113 = vmatprep.subr.bf16.mxu0 0
      %3114 = vmatpush1.bf16.msra.mxu0 0
      %3115 = vmatprep.subr.bf16.mxu0 0
      %3116 = vmatpush1.bf16.msra.mxu0 0
      %3117 = vmatprep.mubr.bf16.mxu0 0
      %3118 = vmatmul.mubr.bf16.gmra.mrb[0].mxu0 %v2944
      %v3119 = vpop.f32.mrb[0].mxu0
      %v3120 = vadd.f32 %v3055, %v3119
      %v3121 = vpop.f32.mrb[0].mxu0
      %v3122 = vpop.f32.mrb[0].mxu0
      %v3123 = vadd.f32 %v3058, %v3122
      %v3124 = vpop.f32.mrb[0].mxu0
      %3125 = vmatprep.mubr.bf16.mxu0 0
      %3126 = vmatmul.mubr.bf16.gmra.mrb[0].mxu0 %v2947
      %v3127 = vpop.f32.mrb[0].mxu0
      %v3128 = vadd.f32 %v3063, %v3127
      %v3129 = vpop.f32.mrb[0].mxu0
      %v3130 = vpop.f32.mrb[0].mxu0
      %v3131 = vadd.f32 %v3066, %v3130
      %v3132 = vpop.f32.mrb[0].mxu0
      %3133 = vmatprep.mubr.bf16.mxu0 0
      %3134 = vmatmul.mubr.bf16.gmra.mrb[0].mxu0 %v2950
      %v3135 = vpop.f32.mrb[0].mxu0
      %v3136 = vadd.f32 %v3071, %v3135
      %v3137 = vpop.f32.mrb[0].mxu0
      %v3138 = vpop.f32.mrb[0].mxu0
      %v3139 = vadd.f32 %v3074, %v3138
      %v3140 = vpop.f32.mrb[0].mxu0
      %3141 = vmatprep.mubr.bf16.mxu0 0
      %3142 = vmatmul.mubr.bf16.gmra.mrb[0].mxu0 %v2953
      %v3143 = vpop.f32.mrb[0].mxu0
      %v3144 = vadd.f32 %v3079, %v3143
      %v3145 = vpop.f32.mrb[0].mxu0
      %v3146 = vpop.f32.mrb[0].mxu0
      %v3147 = vadd.f32 %v3082, %v3146
      %v3148 = vpop.f32.mrb[0].mxu0
      %3149 = vdwg.mxu0
      %v3150 = vmax.f32 %v3120, 0.0
      %v3151 = vmax.f32 %v3123, 0.0
      %v3152 = vmax.f32 %v3128, 0.0
      %v3153 = vmax.f32 %v3131, 0.0
      %v3154 = vmax.f32 %v3136, 0.0
      %v3155 = vmax.f32 %v3139, 0.0
      %v3156 = vmax.f32 %v3144, 0.0
      %v3157 = vmax.f32 %v3147, 0.0
      %v3158 = vpack.c.bf16 %v3150, %v3150
      %v3159 = vpack.c.bf16 %v3151, %v3151
      %v3160 = vpack.c.bf16 %v3152, %v3152
      %v3161 = vpack.c.bf16 %v3153, %v3153
      %v3162 = vpack.c.bf16 %v3154, %v3154
      %v3163 = vpack.c.bf16 %v3155, %v3155
      %v3164 = vpack.c.bf16 %v3156, %v3156
      %v3165 = vpack.c.bf16 %v3157, %v3157
      %v3174 = vunpack.c.l.b16 %v3158
      %v3175 = vunpack.c.l.b16 %v3159
      %v3176 = vunpack.c.l.b16 %v3160
      %v3177 = vunpack.c.l.b16 %v3161
      %v3178 = vunpack.c.l.b16 %v3162
      %v3179 = vunpack.c.l.b16 %v3163
      %v3180 = vunpack.c.l.b16 %v3164
      %v3181 = vunpack.c.l.b16 %v3165
      %v3182 = vpack.c.b16 %v3174, %v3174
      %v3183 = vpack.c.b16 %v3175, %v3175
      %v3184 = vpack.c.b16 %v3176, %v3176
      %v3185 = vpack.c.b16 %v3177, %v3177
      %v3186 = vpack.c.b16 %v3178, %v3178
      %v3187 = vpack.c.b16 %v3179, %v3179
      %v3188 = vpack.c.b16 %v3180, %v3180
      %v3189 = vpack.c.b16 %v3181, %v3181
      %v3191 = vshrl.u32 %v3182, 16
      %v3193 = vrot.slane %v3191, 7
      %v3194 = vshll.u32 %v3182, 16
      %v3196 = vor.u32 %v3193, %v3194
      %v3197 = vrot.slane %v3193, 4
      %v3199 = vshrl.u32 %v3183, 16
      %v3201 = vrot.slane %v3199, 7
      %v3202 = vshll.u32 %v3183, 16
      %v3204 = vor.u32 %v3201, %v3202
      %v3205 = vrot.slane %v3201, 4
      %v3207 = vshrl.u32 %v3184, 16
      %v3209 = vrot.slane %v3207, 7
      %v3210 = vshll.u32 %v3184, 16
      %v3212 = vor.u32 %v3209, %v3210
      %v3213 = vrot.slane %v3209, 4
      %v3215 = vshrl.u32 %v3185, 16
      %v3217 = vrot.slane %v3215, 7
      %v3218 = vshll.u32 %v3185, 16
      %v3220 = vor.u32 %v3217, %v3218
      %v3221 = vrot.slane %v3217, 4
      %v3223 = vshrl.u32 %v3186, 16
      %v3225 = vrot.slane %v3223, 7
      %v3226 = vshll.u32 %v3186, 16
      %v3228 = vor.u32 %v3225, %v3226
      %v3229 = vrot.slane %v3225, 4
      %v3231 = vshrl.u32 %v3187, 16
      %v3233 = vrot.slane %v3231, 7
      %v3234 = vshll.u32 %v3187, 16
      %v3236 = vor.u32 %v3233, %v3234
      %v3237 = vrot.slane %v3233, 4
      %v3239 = vshrl.u32 %v3188, 16
      %v3241 = vrot.slane %v3239, 7
      %v3242 = vshll.u32 %v3188, 16
      %v3244 = vor.u32 %v3241, %v3242
      %v3245 = vrot.slane %v3241, 4
      %v3247 = vshrl.u32 %v3189, 16
      %v3249 = vrot.slane %v3247, 7
      %v3250 = vshll.u32 %v3189, 16
      %v3252 = vor.u32 %v3249, %v3250
      %v3253 = vrot.slane %v3249, 4
      %v3270 = vsel %vm1812, %v3196, %v2051
      %3271 = vst [vmem:[%s1809] sm:$0xf] %v3270
      %v3272 = vld [vmem:[%s1809 + $0x4] sm:$0x1]
      %v3273 = vsel %vm1818, %v3197, %v3272
      %3274 = vst [vmem:[%s1809 + $0x4] sm:$0x1] %v3273
      %v3275 = vld [vmem:[%s1809 + $0x8] sm:$0xf]
      %v3276 = vsel %vm1812, %v3204, %v3275
      %3277 = vst [vmem:[%s1809 + $0x8] sm:$0xf] %v3276
      %v3278 = vld [vmem:[%s1809 + $0xc] sm:$0x1]
      %v3279 = vsel %vm1818, %v3205, %v3278
      %3280 = vst [vmem:[%s1809 + $0xc] sm:$0x1] %v3279
      %v3281 = vld [vmem:[%s1809 + $0x10] sm:$0xf]
      %v3282 = vsel %vm1812, %v3212, %v3281
      %3283 = vst [vmem:[%s1809 + $0x10] sm:$0xf] %v3282
      %v3284 = vld [vmem:[%s1809 + $0x14] sm:$0x1]
      %v3285 = vsel %vm1818, %v3213, %v3284
      %3286 = vst [vmem:[%s1809 + $0x14] sm:$0x1] %v3285
      %v3287 = vld [vmem:[%s1809 + $0x18] sm:$0xf]
      %v3288 = vsel %vm1812, %v3220, %v3287
      %3289 = vst [vmem:[%s1809 + $0x18] sm:$0xf] %v3288
      %v3290 = vld [vmem:[%s1809 + $0x1c] sm:$0x1]
      %v3291 = vsel %vm1818, %v3221, %v3290
      %3292 = vst [vmem:[%s1809 + $0x1c] sm:$0x1] %v3291
      %v3293 = vld [vmem:[%s1809 + $0x20] sm:$0xf]
      %v3294 = vsel %vm1812, %v3228, %v3293
      %3295 = vst [vmem:[%s1809 + $0x20] sm:$0xf] %v3294
      %v3296 = vld [vmem:[%s1809 + $0x24] sm:$0x1]
      %v3297 = vsel %vm1818, %v3229, %v3296
      %3298 = vst [vmem:[%s1809 + $0x24] sm:$0x1] %v3297
      %v3299 = vld [vmem:[%s1809 + $0x28] sm:$0xf]
      %v3300 = vsel %vm1812, %v3236, %v3299
      %3301 = vst [vmem:[%s1809 + $0x28] sm:$0xf] %v3300
      %v3302 = vld [vmem:[%s1809 + $0x2c] sm:$0x1]
      %v3303 = vsel %vm1818, %v3237, %v3302
      %3304 = vst [vmem:[%s1809 + $0x2c] sm:$0x1] %v3303
      %v3305 = vld [vmem:[%s1809 + $0x30] sm:$0xf]
      %v3306 = vsel %vm1812, %v3244, %v3305
      %3307 = vst [vmem:[%s1809 + $0x30] sm:$0xf] %v3306
      %v3308 = vld [vmem:[%s1809 + $0x34] sm:$0x1]
      %v3309 = vsel %vm1818, %v3245, %v3308
      %3310 = vst [vmem:[%s1809 + $0x34] sm:$0x1] %v3309
      %v3311 = vld [vmem:[%s1809 + $0x38] sm:$0xf]
      %v3312 = vsel %vm1812, %v3252, %v3311
      %3313 = vst [vmem:[%s1809 + $0x38] sm:$0xf] %v3312
      %v3314 = vld [vmem:[%s1809 + $0x3c] sm:$0x1]
      %v3315 = vsel %vm1818, %v3253, %v3314
      %3316 = vst [vmem:[%s1809 + $0x3c] sm:$0x1] %v3315
      %v3317 = vld [vmem:[#allocation2] sm:$0xf]
      %v3318 = vld [vmem:[#allocation2 + $0x8] sm:$0xf]
      %v3319 = vld [vmem:[#allocation2 + $0x10] sm:$0xf]
      %v3320 = vld [vmem:[#allocation2 + $0x18] sm:$0xf]
      %v3321 = vld [vmem:[#allocation2 + $0x20] sm:$0xf]
      %v3322 = vld [vmem:[#allocation2 + $0x28] sm:$0xf]
      %v3323 = vld [vmem:[#allocation2 + $0x30] sm:$0xf]
      %v3324 = vld [vmem:[#allocation2 + $0x38] sm:$0xf]
      %v3325 = vld [vmem:[#allocation2 + $0x4] sm:$0x1]
      %v3326 = vld [vmem:[#allocation2 + $0xc] sm:$0x1]
      %v3327 = vld [vmem:[#allocation2 + $0x14] sm:$0x1]
      %v3328 = vld [vmem:[#allocation2 + $0x1c] sm:$0x1]
      %v3329 = vld [vmem:[#allocation2 + $0x24] sm:$0x1]
      %v3330 = vld [vmem:[#allocation2 + $0x2c] sm:$0x1]
      %v3331 = vld [vmem:[#allocation2 + $0x34] sm:$0x1]
      %v3332 = vld [vmem:[#allocation2 + $0x3c] sm:$0x1]
      %v3334 = vshrl.u32 %v3317, 16
      %v3336 = vrot.slane %v3334, 4
      %v3337 = vshll.u32 %v3317, 16
      %v3339 = vrot.slane %v3337, 5
      %v3340 = vor.u32 %v3336, %v3339
      %v3341 = vrot.slane %v3340, 4
      %v3343 = vshll.u32 %v3325, 16
      %v3345 = vrot.slane %v3343, 5
      %v3346 = vsel %vm523, %v3341, %v3345
      %v3348 = vshrl.u32 %v3318, 16
      %v3350 = vrot.slane %v3348, 4
      %v3351 = vshll.u32 %v3318, 16
      %v3353 = vrot.slane %v3351, 5
      %v3354 = vor.u32 %v3350, %v3353
      %v3355 = vrot.slane %v3354, 4
      %v3357 = vshll.u32 %v3326, 16
      %v3359 = vrot.slane %v3357, 5
      %v3360 = vsel %vm523, %v3355, %v3359
      %v3362 = vshrl.u32 %v3319, 16
      %v3364 = vrot.slane %v3362, 4
      %v3365 = vshll.u32 %v3319, 16
      %v3367 = vrot.slane %v3365, 5
      %v3368 = vor.u32 %v3364, %v3367
      %v3369 = vrot.slane %v3368, 4
      %v3371 = vshll.u32 %v3327, 16
      %v3373 = vrot.slane %v3371, 5
      %v3374 = vsel %vm523, %v3369, %v3373
      %v3376 = vshrl.u32 %v3320, 16
      %v3378 = vrot.slane %v3376, 4
      %v3379 = vshll.u32 %v3320, 16
      %v3381 = vrot.slane %v3379, 5
      %v3382 = vor.u32 %v3378, %v3381
      %v3383 = vrot.slane %v3382, 4
      %v3385 = vshll.u32 %v3328, 16
      %v3387 = vrot.slane %v3385, 5
      %v3388 = vsel %vm523, %v3383, %v3387
      %v3390 = vshrl.u32 %v3321, 16
      %v3392 = vrot.slane %v3390, 4
      %v3393 = vshll.u32 %v3321, 16
      %v3395 = vrot.slane %v3393, 5
      %v3396 = vor.u32 %v3392, %v3395
      %v3397 = vrot.slane %v3396, 4
      %v3399 = vshll.u32 %v3329, 16
      %v3401 = vrot.slane %v3399, 5
      %v3402 = vsel %vm523, %v3397, %v3401
      %v3404 = vshrl.u32 %v3322, 16
      %v3406 = vrot.slane %v3404, 4
      %v3407 = vshll.u32 %v3322, 16
      %v3409 = vrot.slane %v3407, 5
      %v3410 = vor.u32 %v3406, %v3409
      %v3411 = vrot.slane %v3410, 4
      %v3413 = vshll.u32 %v3330, 16
      %v3415 = vrot.slane %v3413, 5
      %v3416 = vsel %vm523, %v3411, %v3415
      %v3418 = vshrl.u32 %v3323, 16
      %v3420 = vrot.slane %v3418, 4
      %v3421 = vshll.u32 %v3323, 16
      %v3423 = vrot.slane %v3421, 5
      %v3424 = vor.u32 %v3420, %v3423
      %v3425 = vrot.slane %v3424, 4
      %v3427 = vshll.u32 %v3331, 16
      %v3429 = vrot.slane %v3427, 5
      %v3430 = vsel %vm523, %v3425, %v3429
      %v3432 = vshrl.u32 %v3324, 16
      %v3434 = vrot.slane %v3432, 4
      %v3435 = vshll.u32 %v3324, 16
      %v3437 = vrot.slane %v3435, 5
      %v3438 = vor.u32 %v3434, %v3437
      %v3439 = vrot.slane %v3438, 4
      %v3441 = vshll.u32 %v3332, 16
      %v3443 = vrot.slane %v3441, 5
      %v3444 = vsel %vm523, %v3439, %v3443
      %v3445 = vld [vmem:[#allocation2] sm:$0xe]
      %v3446 = vld [vmem:[#allocation2 + $0x8] sm:$0xe]
      %v3447 = vld [vmem:[#allocation2 + $0x10] sm:$0xe]
      %v3448 = vld [vmem:[#allocation2 + $0x18] sm:$0xe]
      %v3449 = vld [vmem:[#allocation2 + $0x20] sm:$0xe]
      %v3450 = vld [vmem:[#allocation2 + $0x28] sm:$0xe]
      %v3451 = vld [vmem:[#allocation2 + $0x30] sm:$0xe]
      %v3452 = vld [vmem:[#allocation2 + $0x38] sm:$0xe]
      %v3469 = vrot.slane %v3445, 5
      %v3470 = vrot.slane %v3469, 4
      %v3471 = vrot.slane %v3325, 5
      %v3472 = vsel %vm2018, %v3470, %v3471
      %v3473 = vrot.slane %v3446, 5
      %v3474 = vrot.slane %v3473, 4
      %v3475 = vrot.slane %v3326, 5
      %v3476 = vsel %vm2018, %v3474, %v3475
      %v3477 = vrot.slane %v3447, 5
      %v3478 = vrot.slane %v3477, 4
      %v3479 = vrot.slane %v3327, 5
      %v3480 = vsel %vm2018, %v3478, %v3479
      %v3481 = vrot.slane %v3448, 5
      %v3482 = vrot.slane %v3481, 4
      %v3483 = vrot.slane %v3328, 5
      %v3484 = vsel %vm2018, %v3482, %v3483
      %v3485 = vrot.slane %v3449, 5
      %v3486 = vrot.slane %v3485, 4
      %v3487 = vrot.slane %v3329, 5
      %v3488 = vsel %vm2018, %v3486, %v3487
      %v3489 = vrot.slane %v3450, 5
      %v3490 = vrot.slane %v3489, 4
      %v3491 = vrot.slane %v3330, 5
      %v3492 = vsel %vm2018, %v3490, %v3491
      %v3493 = vrot.slane %v3451, 5
      %v3494 = vrot.slane %v3493, 4
      %v3495 = vrot.slane %v3331, 5
      %v3496 = vsel %vm2018, %v3494, %v3495
      %v3497 = vrot.slane %v3452, 5
      %v3498 = vrot.slane %v3497, 4
      %v3499 = vrot.slane %v3332, 5
      %v3500 = vsel %vm2018, %v3498, %v3499
      %v3501 = vld [vmem:[%s1809] sm:$0xf]
      %v3502 = vld [vmem:[%s1809 + $0x8] sm:$0xf]
      %v3503 = vld [vmem:[%s1809 + $0x10] sm:$0xf]
      %v3504 = vld [vmem:[%s1809 + $0x18] sm:$0xf]
      %v3505 = vld [vmem:[%s1809 + $0x20] sm:$0xf]
      %v3506 = vld [vmem:[%s1809 + $0x28] sm:$0xf]
      %v3507 = vld [vmem:[%s1809 + $0x30] sm:$0xf]
      %v3508 = vld [vmem:[%s1809 + $0x38] sm:$0xf]
      %v3509 = vld [vmem:[%s1809 + $0x4] sm:$0x1]
      %v3510 = vld [vmem:[%s1809 + $0xc] sm:$0x1]
      %v3511 = vld [vmem:[%s1809 + $0x14] sm:$0x1]
      %v3512 = vld [vmem:[%s1809 + $0x1c] sm:$0x1]
      %v3513 = vld [vmem:[%s1809 + $0x24] sm:$0x1]
      %v3514 = vld [vmem:[%s1809 + $0x2c] sm:$0x1]
      %v3515 = vld [vmem:[%s1809 + $0x34] sm:$0x1]
      %v3516 = vld [vmem:[%s1809 + $0x3c] sm:$0x1]
      %v3518 = vshrl.u32 %v3501, 16
      %v3520 = vrot.slane %v3518, 4
      %v3521 = vshll.u32 %v3501, 16
      %v3523 = vrot.slane %v3521, 5
      %v3524 = vor.u32 %v3520, %v3523
      %v3525 = vrot.slane %v3524, 4
      %v3527 = vshll.u32 %v3509, 16
      %v3529 = vrot.slane %v3527, 5
      %v3530 = vsel %vm523, %v3525, %v3529
      %v3532 = vshrl.u32 %v3502, 16
      %v3534 = vrot.slane %v3532, 4
      %v3535 = vshll.u32 %v3502, 16
      %v3537 = vrot.slane %v3535, 5
      %v3538 = vor.u32 %v3534, %v3537
      %v3539 = vrot.slane %v3538, 4
      %v3541 = vshll.u32 %v3510, 16
      %v3543 = vrot.slane %v3541, 5
      %v3544 = vsel %vm523, %v3539, %v3543
      %v3546 = vshrl.u32 %v3503, 16
      %v3548 = vrot.slane %v3546, 4
      %v3549 = vshll.u32 %v3503, 16
      %v3551 = vrot.slane %v3549, 5
      %v3552 = vor.u32 %v3548, %v3551
      %v3553 = vrot.slane %v3552, 4
      %v3555 = vshll.u32 %v3511, 16
      %v3557 = vrot.slane %v3555, 5
      %v3558 = vsel %vm523, %v3553, %v3557
      %v3560 = vshrl.u32 %v3504, 16
      %v3562 = vrot.slane %v3560, 4
      %v3563 = vshll.u32 %v3504, 16
      %v3565 = vrot.slane %v3563, 5
      %v3566 = vor.u32 %v3562, %v3565
      %v3567 = vrot.slane %v3566, 4
      %v3569 = vshll.u32 %v3512, 16
      %v3571 = vrot.slane %v3569, 5
      %v3572 = vsel %vm523, %v3567, %v3571
      %v3574 = vshrl.u32 %v3505, 16
      %v3576 = vrot.slane %v3574, 4
      %v3577 = vshll.u32 %v3505, 16
      %v3579 = vrot.slane %v3577, 5
      %v3580 = vor.u32 %v3576, %v3579
      %v3581 = vrot.slane %v3580, 4
      %v3583 = vshll.u32 %v3513, 16
      %v3585 = vrot.slane %v3583, 5
      %v3586 = vsel %vm523, %v3581, %v3585
      %v3588 = vshrl.u32 %v3506, 16
      %v3590 = vrot.slane %v3588, 4
      %v3591 = vshll.u32 %v3506, 16
      %v3593 = vrot.slane %v3591, 5
      %v3594 = vor.u32 %v3590, %v3593
      %v3595 = vrot.slane %v3594, 4
      %v3597 = vshll.u32 %v3514, 16
      %v3599 = vrot.slane %v3597, 5
      %v3600 = vsel %vm523, %v3595, %v3599
      %v3602 = vshrl.u32 %v3507, 16
      %v3604 = vrot.slane %v3602, 4
      %v3605 = vshll.u32 %v3507, 16
      %v3607 = vrot.slane %v3605, 5
      %v3608 = vor.u32 %v3604, %v3607
      %v3609 = vrot.slane %v3608, 4
      %v3611 = vshll.u32 %v3515, 16
      %v3613 = vrot.slane %v3611, 5
      %v3614 = vsel %vm523, %v3609, %v3613
      %v3616 = vshrl.u32 %v3508, 16
      %v3618 = vrot.slane %v3616, 4
      %v3619 = vshll.u32 %v3508, 16
      %v3621 = vrot.slane %v3619, 5
      %v3622 = vor.u32 %v3618, %v3621
      %v3623 = vrot.slane %v3622, 4
      %v3625 = vshll.u32 %v3516, 16
      %v3627 = vrot.slane %v3625, 5
      %v3628 = vsel %vm523, %v3623, %v3627
      %v3629 = vld [vmem:[%s1809] sm:$0xe]
      %v3630 = vld [vmem:[%s1809 + $0x8] sm:$0xe]
      %v3631 = vld [vmem:[%s1809 + $0x10] sm:$0xe]
      %v3632 = vld [vmem:[%s1809 + $0x18] sm:$0xe]
      %v3633 = vld [vmem:[%s1809 + $0x20] sm:$0xe]
      %v3634 = vld [vmem:[%s1809 + $0x28] sm:$0xe]
      %v3635 = vld [vmem:[%s1809 + $0x30] sm:$0xe]
      %v3636 = vld [vmem:[%s1809 + $0x38] sm:$0xe]
      %v3653 = vrot.slane %v3629, 5
      %v3654 = vrot.slane %v3653, 4
      %v3655 = vrot.slane %v3509, 5
      %v3656 = vsel %vm2018, %v3654, %v3655
      %v3657 = vrot.slane %v3630, 5
      %v3658 = vrot.slane %v3657, 4
      %v3659 = vrot.slane %v3510, 5
      %v3660 = vsel %vm2018, %v3658, %v3659
      %v3661 = vrot.slane %v3631, 5
      %v3662 = vrot.slane %v3661, 4
      %v3663 = vrot.slane %v3511, 5
      %v3664 = vsel %vm2018, %v3662, %v3663
      %v3665 = vrot.slane %v3632, 5
      %v3666 = vrot.slane %v3665, 4
      %v3667 = vrot.slane %v3512, 5
      %v3668 = vsel %vm2018, %v3666, %v3667
      %v3669 = vrot.slane %v3633, 5
      %v3670 = vrot.slane %v3669, 4
      %v3671 = vrot.slane %v3513, 5
      %v3672 = vsel %vm2018, %v3670, %v3671
      %v3673 = vrot.slane %v3634, 5
      %v3674 = vrot.slane %v3673, 4
      %v3675 = vrot.slane %v3514, 5
      %v3676 = vsel %vm2018, %v3674, %v3675
      %v3677 = vrot.slane %v3635, 5
      %v3678 = vrot.slane %v3677, 4
      %v3679 = vrot.slane %v3515, 5
      %v3680 = vsel %vm2018, %v3678, %v3679
      %v3681 = vrot.slane %v3636, 5
      %v3682 = vrot.slane %v3681, 4
      %v3683 = vrot.slane %v3516, 5
      %v3684 = vsel %vm2018, %v3682, %v3683
      %v3685 = vld [vmem:[%s2235] sm:$0xf]
      %v3686 = vld [vmem:[%s2235 + $0x8] sm:$0xf]
      %v3687 = vld [vmem:[%s2235 + $0x10] sm:$0xf]
      %v3688 = vld [vmem:[%s2235 + $0x18] sm:$0xf]
      %v3689 = vld [vmem:[%s2235 + $0x20] sm:$0xf]
      %v3690 = vld [vmem:[%s2235 + $0x28] sm:$0xf]
      %v3691 = vld [vmem:[%s2235 + $0x30] sm:$0xf]
      %v3692 = vld [vmem:[%s2235 + $0x38] sm:$0xf]
      %v3693 = vld [vmem:[%s2235 + $0x4] sm:$0x1]
      %v3694 = vld [vmem:[%s2235 + $0xc] sm:$0x1]
      %v3695 = vld [vmem:[%s2235 + $0x14] sm:$0x1]
      %v3696 = vld [vmem:[%s2235 + $0x1c] sm:$0x1]
      %v3697 = vld [vmem:[%s2235 + $0x24] sm:$0x1]
      %v3698 = vld [vmem:[%s2235 + $0x2c] sm:$0x1]
      %v3699 = vld [vmem:[%s2235 + $0x34] sm:$0x1]
      %v3700 = vld [vmem:[%s2235 + $0x3c] sm:$0x1]
      %v3702 = vshrl.u32 %v3685, 16
      %v3704 = vrot.slane %v3702, 4
      %v3705 = vshll.u32 %v3685, 16
      %v3707 = vrot.slane %v3705, 5
      %v3708 = vor.u32 %v3704, %v3707
      %v3709 = vrot.slane %v3708, 4
      %v3711 = vshll.u32 %v3693, 16
      %v3713 = vrot.slane %v3711, 5
      %v3714 = vsel %vm523, %v3709, %v3713
      %v3716 = vshrl.u32 %v3686, 16
      %v3718 = vrot.slane %v3716, 4
      %v3719 = vshll.u32 %v3686, 16
      %v3721 = vrot.slane %v3719, 5
      %v3722 = vor.u32 %v3718, %v3721
      %v3723 = vrot.slane %v3722, 4
      %v3725 = vshll.u32 %v3694, 16
      %v3727 = vrot.slane %v3725, 5
      %v3728 = vsel %vm523, %v3723, %v3727
      %v3730 = vshrl.u32 %v3687, 16
      %v3732 = vrot.slane %v3730, 4
      %v3733 = vshll.u32 %v3687, 16
      %v3735 = vrot.slane %v3733, 5
      %v3736 = vor.u32 %v3732, %v3735
      %v3737 = vrot.slane %v3736, 4
      %v3739 = vshll.u32 %v3695, 16
      %v3741 = vrot.slane %v3739, 5
      %v3742 = vsel %vm523, %v3737, %v3741
      %v3744 = vshrl.u32 %v3688, 16
      %v3746 = vrot.slane %v3744, 4
      %v3747 = vshll.u32 %v3688, 16
      %v3749 = vrot.slane %v3747, 5
      %v3750 = vor.u32 %v3746, %v3749
      %v3751 = vrot.slane %v3750, 4
      %v3753 = vshll.u32 %v3696, 16
      %v3755 = vrot.slane %v3753, 5
      %v3756 = vsel %vm523, %v3751, %v3755
      %v3758 = vshrl.u32 %v3689, 16
      %v3760 = vrot.slane %v3758, 4
      %v3761 = vshll.u32 %v3689, 16
      %v3763 = vrot.slane %v3761, 5
      %v3764 = vor.u32 %v3760, %v3763
      %v3765 = vrot.slane %v3764, 4
      %v3767 = vshll.u32 %v3697, 16
      %v3769 = vrot.slane %v3767, 5
      %v3770 = vsel %vm523, %v3765, %v3769
      %v3772 = vshrl.u32 %v3690, 16
      %v3774 = vrot.slane %v3772, 4
      %v3775 = vshll.u32 %v3690, 16
      %v3777 = vrot.slane %v3775, 5
      %v3778 = vor.u32 %v3774, %v3777
      %v3779 = vrot.slane %v3778, 4
      %v3781 = vshll.u32 %v3698, 16
      %v3783 = vrot.slane %v3781, 5
      %v3784 = vsel %vm523, %v3779, %v3783
      %v3786 = vshrl.u32 %v3691, 16
      %v3788 = vrot.slane %v3786, 4
      %v3789 = vshll.u32 %v3691, 16
      %v3791 = vrot.slane %v3789, 5
      %v3792 = vor.u32 %v3788, %v3791
      %v3793 = vrot.slane %v3792, 4
      %v3795 = vshll.u32 %v3699, 16
      %v3797 = vrot.slane %v3795, 5
      %v3798 = vsel %vm523, %v3793, %v3797
      %v3800 = vshrl.u32 %v3692, 16
      %v3802 = vrot.slane %v3800, 4
      %v3803 = vshll.u32 %v3692, 16
      %v3805 = vrot.slane %v3803, 5
      %v3806 = vor.u32 %v3802, %v3805
      %v3807 = vrot.slane %v3806, 4
      %v3809 = vshll.u32 %v3700, 16
      %v3811 = vrot.slane %v3809, 5
      %v3812 = vsel %vm523, %v3807, %v3811
      %v3813 = vld [vmem:[%s2235] sm:$0xe]
      %v3814 = vld [vmem:[%s2235 + $0x8] sm:$0xe]
      %v3815 = vld [vmem:[%s2235 + $0x10] sm:$0xe]
      %v3816 = vld [vmem:[%s2235 + $0x18] sm:$0xe]
      %v3817 = vld [vmem:[%s2235 + $0x20] sm:$0xe]
      %v3818 = vld [vmem:[%s2235 + $0x28] sm:$0xe]
      %v3819 = vld [vmem:[%s2235 + $0x30] sm:$0xe]
      %v3820 = vld [vmem:[%s2235 + $0x38] sm:$0xe]
      %v3837 = vrot.slane %v3813, 5
      %v3838 = vrot.slane %v3837, 4
      %v3839 = vrot.slane %v3693, 5
      %v3840 = vsel %vm2018, %v3838, %v3839
      %v3841 = vrot.slane %v3814, 5
      %v3842 = vrot.slane %v3841, 4
      %v3843 = vrot.slane %v3694, 5
      %v3844 = vsel %vm2018, %v3842, %v3843
      %v3845 = vrot.slane %v3815, 5
      %v3846 = vrot.slane %v3845, 4
      %v3847 = vrot.slane %v3695, 5
      %v3848 = vsel %vm2018, %v3846, %v3847
      %v3849 = vrot.slane %v3816, 5
      %v3850 = vrot.slane %v3849, 4
      %v3851 = vrot.slane %v3696, 5
      %v3852 = vsel %vm2018, %v3850, %v3851
      %v3853 = vrot.slane %v3817, 5
      %v3854 = vrot.slane %v3853, 4
      %v3855 = vrot.slane %v3697, 5
      %v3856 = vsel %vm2018, %v3854, %v3855
      %v3857 = vrot.slane %v3818, 5
      %v3858 = vrot.slane %v3857, 4
      %v3859 = vrot.slane %v3698, 5
      %v3860 = vsel %vm2018, %v3858, %v3859
      %v3861 = vrot.slane %v3819, 5
      %v3862 = vrot.slane %v3861, 4
      %v3863 = vrot.slane %v3699, 5
      %v3864 = vsel %vm2018, %v3862, %v3863
      %v3865 = vrot.slane %v3820, 5
      %v3866 = vrot.slane %v3865, 4
      %v3867 = vrot.slane %v3700, 5
      %v3868 = vsel %vm2018, %v3866, %v3867
      %v3877 = vunpack.c.l.b16 %v3317
      %v3878 = vunpack.c.l.b16 %v3318
      %v3879 = vunpack.c.l.b16 %v3319
      %v3880 = vunpack.c.l.b16 %v3320
      %v3881 = vunpack.c.l.b16 %v3321
      %v3882 = vunpack.c.l.b16 %v3322
      %v3883 = vunpack.c.l.b16 %v3323
      %v3884 = vunpack.c.l.b16 %v3324
      %v3885 = vpack.c.b16 %v3878, %v3877
      %v3886 = vpack.c.b16 %v3880, %v3879
      %v3887 = vpack.c.b16 %v3882, %v3881
      %v3888 = vpack.c.b16 %v3884, %v3883
      %v3889 = vunpack.c.l.b16 %v3346
      %v3890 = vunpack.c.l.b16 %v3360
      %v3891 = vunpack.c.l.b16 %v3374
      %v3892 = vunpack.c.l.b16 %v3388
      %v3893 = vunpack.c.l.b16 %v3402
      %v3894 = vunpack.c.l.b16 %v3416
      %v3895 = vunpack.c.l.b16 %v3430
      %v3896 = vunpack.c.l.b16 %v3444
      %v3897 = vpack.c.b16 %v3890, %v3889
      %v3898 = vpack.c.b16 %v3892, %v3891
      %v3899 = vpack.c.b16 %v3894, %v3893
      %v3900 = vpack.c.b16 %v3896, %v3895
      %3901 = vrot.lane.b32.xlu0 %v3897, 64
      %v3902 = vpop.permute.xlu0 %3901
      %3903 = vrot.lane.b32.xlu0 %v3898, 64
      %v3904 = vpop.permute.xlu0 %3903
      %3905 = vrot.lane.b32.xlu0 %v3899, 64
      %v3906 = vpop.permute.xlu0 %3905
      %3907 = vrot.lane.b32.xlu0 %v3900, 64
      %v3908 = vpop.permute.xlu0 %3907
      %v3909 = vunpack.c.l.b16 %v3472
      %v3910 = vunpack.c.l.b16 %v3476
      %v3911 = vunpack.c.l.b16 %v3480
      %v3912 = vunpack.c.l.b16 %v3484
      %v3913 = vunpack.c.l.b16 %v3488
      %v3914 = vunpack.c.l.b16 %v3492
      %v3915 = vunpack.c.l.b16 %v3496
      %v3916 = vunpack.c.l.b16 %v3500
      %v3917 = vpack.c.b16 %v3910, %v3909
      %v3918 = vpack.c.b16 %v3912, %v3911
      %v3919 = vpack.c.b16 %v3914, %v3913
      %v3920 = vpack.c.b16 %v3916, %v3915
      %v3929 = vunpack.c.l.b16 %v3501
      %v3930 = vunpack.c.l.b16 %v3502
      %v3931 = vunpack.c.l.b16 %v3503
      %v3932 = vunpack.c.l.b16 %v3504
      %v3933 = vunpack.c.l.b16 %v3505
      %v3934 = vunpack.c.l.b16 %v3506
      %v3935 = vunpack.c.l.b16 %v3507
      %v3936 = vunpack.c.l.b16 %v3508
      %v3937 = vpack.c.b16 %v3930, %v3929
      %v3938 = vpack.c.b16 %v3932, %v3931
      %v3939 = vpack.c.b16 %v3934, %v3933
      %v3940 = vpack.c.b16 %v3936, %v3935
      %3941 = vrot.lane.b32.xlu0 %v3937, 64
      %v3942 = vpop.permute.xlu0 %3941
      %3943 = vrot.lane.b32.xlu0 %v3938, 64
      %v3944 = vpop.permute.xlu0 %3943
      %3945 = vrot.lane.b32.xlu0 %v3939, 64
      %v3946 = vpop.permute.xlu0 %3945
      %3947 = vrot.lane.b32.xlu0 %v3940, 64
      %v3948 = vpop.permute.xlu0 %3947
      %v3949 = vunpack.c.l.b16 %v3530
      %v3950 = vunpack.c.l.b16 %v3544
      %v3951 = vunpack.c.l.b16 %v3558
      %v3952 = vunpack.c.l.b16 %v3572
      %v3953 = vunpack.c.l.b16 %v3586
      %v3954 = vunpack.c.l.b16 %v3600
      %v3955 = vunpack.c.l.b16 %v3614
      %v3956 = vunpack.c.l.b16 %v3628
      %v3957 = vpack.c.b16 %v3950, %v3949
      %v3958 = vpack.c.b16 %v3952, %v3951
      %v3959 = vpack.c.b16 %v3954, %v3953
      %v3960 = vpack.c.b16 %v3956, %v3955
      %v3961 = vunpack.c.l.b16 %v3656
      %v3962 = vunpack.c.l.b16 %v3660
      %v3963 = vunpack.c.l.b16 %v3664
      %v3964 = vunpack.c.l.b16 %v3668
      %v3965 = vunpack.c.l.b16 %v3672
      %v3966 = vunpack.c.l.b16 %v3676
      %v3967 = vunpack.c.l.b16 %v3680
      %v3968 = vunpack.c.l.b16 %v3684
      %v3969 = vpack.c.b16 %v3962, %v3961
      %v3970 = vpack.c.b16 %v3964, %v3963
      %v3971 = vpack.c.b16 %v3966, %v3965
      %v3972 = vpack.c.b16 %v3968, %v3967
      %3973 = vrot.lane.b32.xlu0 %v3969, 64
      %v3974 = vpop.permute.xlu0 %3973
      %3975 = vrot.lane.b32.xlu0 %v3970, 64
      %v3976 = vpop.permute.xlu0 %3975
      %3977 = vrot.lane.b32.xlu0 %v3971, 64
      %v3978 = vpop.permute.xlu0 %3977
      %3979 = vrot.lane.b32.xlu0 %v3972, 64
      %v3980 = vpop.permute.xlu0 %3979
      %v3989 = vunpack.c.l.b16 %v3685
      %v3990 = vunpack.c.l.b16 %v3686
      %v3991 = vunpack.c.l.b16 %v3687
      %v3992 = vunpack.c.l.b16 %v3688
      %v3993 = vunpack.c.l.b16 %v3689
      %v3994 = vunpack.c.l.b16 %v3690
      %v3995 = vunpack.c.l.b16 %v3691
      %v3996 = vunpack.c.l.b16 %v3692
      %v3997 = vpack.c.b16 %v3990, %v3989
      %v3998 = vpack.c.b16 %v3992, %v3991
      %v3999 = vpack.c.b16 %v3994, %v3993
      %v4000 = vpack.c.b16 %v3996, %v3995
      %v4001 = vunpack.c.l.b16 %v3714
      %v4002 = vunpack.c.l.b16 %v3728
      %v4003 = vunpack.c.l.b16 %v3742
      %v4004 = vunpack.c.l.b16 %v3756
      %v4005 = vunpack.c.l.b16 %v3770
      %v4006 = vunpack.c.l.b16 %v3784
      %v4007 = vunpack.c.l.b16 %v3798
      %v4008 = vunpack.c.l.b16 %v3812
      %v4009 = vpack.c.b16 %v4002, %v4001
      %v4010 = vpack.c.b16 %v4004, %v4003
      %v4011 = vpack.c.b16 %v4006, %v4005
      %v4012 = vpack.c.b16 %v4008, %v4007
      %4013 = vrot.lane.b32.xlu0 %v4009, 64
      %v4014 = vpop.permute.xlu0 %4013
      %4015 = vrot.lane.b32.xlu0 %v4010, 64
      %v4016 = vpop.permute.xlu0 %4015
      %4017 = vrot.lane.b32.xlu0 %v4011, 64
      %v4018 = vpop.permute.xlu0 %4017
      %4019 = vrot.lane.b32.xlu0 %v4012, 64
      %v4020 = vpop.permute.xlu0 %4019
      %v4021 = vunpack.c.l.b16 %v3840
      %v4022 = vunpack.c.l.b16 %v3844
      %v4023 = vunpack.c.l.b16 %v3848
      %v4024 = vunpack.c.l.b16 %v3852
      %v4025 = vunpack.c.l.b16 %v3856
      %v4026 = vunpack.c.l.b16 %v3860
      %v4027 = vunpack.c.l.b16 %v3864
      %v4028 = vunpack.c.l.b16 %v3868
      %v4029 = vpack.c.b16 %v4022, %v4021
      %v4030 = vpack.c.b16 %v4024, %v4023
      %v4031 = vpack.c.b16 %v4026, %v4025
      %v4032 = vpack.c.b16 %v4028, %v4027
      %v4039 = vsel %vm1100, %v3885, %v3902
      %v4043 = vsel %vm1100, %v3886, %v3904
      %v4047 = vsel %vm1100, %v3887, %v3906
      %v4051 = vsel %vm1100, %v3888, %v3908
      %v4055 = vsel %vm1100, %v3917, %v3942
      %v4059 = vsel %vm1100, %v3918, %v3944
      %v4063 = vsel %vm1100, %v3919, %v3946
      %v4067 = vsel %vm1100, %v3920, %v3948
      %v4071 = vsel %vm1100, %v3957, %v3974
      %v4075 = vsel %vm1100, %v3958, %v3976
      %v4079 = vsel %vm1100, %v3959, %v3978
      %v4083 = vsel %vm1100, %v3960, %v3980
      %v4087 = vsel %vm1100, %v3997, %v4014
      %v4091 = vsel %vm1100, %v3998, %v4016
      %v4095 = vsel %vm1100, %v3999, %v4018
      %v4099 = vsel %vm1100, %v4000, %v4020
      %v4101 = vld [vmem:[%s5] sm:$0xf]
      %v4102 = vld [vmem:[%s5 + $0x4] sm:$0xf]
      %v4105 = vunpack.c.l.b16 %v4101
      %v4106 = vunpack.c.l.b16 %v4102
      %v4107 = vpack.c.b16 %v4106, %v4105
      %v4109 = vsel %vm1100, %v4107, 0
      %4111 = vmatprep.subr.bf16.mxu0 %v4055
      %4112 = vmatpush1.bf16.msra.mxu0 %v4039
      %4113 = vmatprep.subr.bf16.mxu0 %v4059
      %4114 = vmatpush1.bf16.msra.mxu0 %v4043
      %4115 = vmatprep.subr.bf16.mxu0 %v4063
      %4116 = vmatpush1.bf16.msra.mxu0 %v4047
      %4117 = vmatprep.subr.bf16.mxu0 %v4067
      %4118 = vmatpush1.bf16.msra.mxu0 %v4051
      %4119 = vmatprep.subr.bf16.mxu0 0
      %4120 = vmatpush1.bf16.msra.mxu0 0
      %4121 = vmatprep.subr.bf16.mxu0 0
      %4122 = vmatpush1.bf16.msra.mxu0 0
      %4123 = vmatprep.subr.bf16.mxu0 0
      %4124 = vmatpush1.bf16.msra.mxu0 0
      %4125 = vmatprep.subr.bf16.mxu0 0
      %4126 = vmatpush1.bf16.msra.mxu0 0
      %4127 = vmatprep.subr.bf16.mxu0 0
      %4128 = vmatpush1.bf16.msra.mxu0 0
      %4129 = vmatprep.subr.bf16.mxu0 0
      %4130 = vmatpush1.bf16.msra.mxu0 0
      %4131 = vmatprep.subr.bf16.mxu0 0
      %4132 = vmatpush1.bf16.msra.mxu0 0
      %4133 = vmatprep.subr.bf16.mxu0 0
      %4134 = vmatpush1.bf16.msra.mxu0 0
      %4135 = vmatprep.subr.bf16.mxu0 0
      %4136 = vmatpush1.bf16.msra.mxu0 0
      %4137 = vmatprep.subr.bf16.mxu0 0
      %4138 = vmatpush1.bf16.msra.mxu0 0
      %4139 = vmatprep.subr.bf16.mxu0 0
      %4140 = vmatpush1.bf16.msra.mxu0 0
      %4141 = vmatprep.subr.bf16.mxu0 0
      %4142 = vmatpush1.bf16.msra.mxu0 0
      %4143 = vmatprep.mubr.bf16.mxu0 0
      %4144 = vmatmul.mubr.bf16.gmra.mrb[0].mxu0 %v4109
      %v4145 = vpop.f32.mrb[0].mxu0
      %v4146 = vadd.f32 0.0, %v4145
      %v4147 = vpop.f32.mrb[0].mxu0
      %v4148 = vadd.f32 0.0, %v4147
      %v4149 = vpop.f32.mrb[0].mxu0
      %v4150 = vadd.f32 0.0, %v4149
      %v4151 = vpop.f32.mrb[0].mxu0
      %v4152 = vadd.f32 0.0, %v4151
      %4153 = vdwg.mxu0
      %4154 = vmatprep.subr.bf16.mxu0 %v4087
      %4155 = vmatpush1.bf16.msra.mxu0 %v4071
      %4156 = vmatprep.subr.bf16.mxu0 %v4091
      %4157 = vmatpush1.bf16.msra.mxu0 %v4075
      %4158 = vmatprep.subr.bf16.mxu0 %v4095
      %4159 = vmatpush1.bf16.msra.mxu0 %v4079
      %4160 = vmatprep.subr.bf16.mxu0 %v4099
      %4161 = vmatpush1.bf16.msra.mxu0 %v4083
      %4162 = vmatprep.subr.bf16.mxu0 0
      %4163 = vmatpush1.bf16.msra.mxu0 0
      %4164 = vmatprep.subr.bf16.mxu0 0
      %4165 = vmatpush1.bf16.msra.mxu0 0
      %4166 = vmatprep.subr.bf16.mxu0 0
      %4167 = vmatpush1.bf16.msra.mxu0 0
      %4168 = vmatprep.subr.bf16.mxu0 0
      %4169 = vmatpush1.bf16.msra.mxu0 0
      %4170 = vmatprep.subr.bf16.mxu0 0
      %4171 = vmatpush1.bf16.msra.mxu0 0
      %4172 = vmatprep.subr.bf16.mxu0 0
      %4173 = vmatpush1.bf16.msra.mxu0 0
      %4174 = vmatprep.subr.bf16.mxu0 0
      %4175 = vmatpush1.bf16.msra.mxu0 0
      %4176 = vmatprep.subr.bf16.mxu0 0
      %4177 = vmatpush1.bf16.msra.mxu0 0
      %4178 = vmatprep.subr.bf16.mxu0 0
      %4179 = vmatpush1.bf16.msra.mxu0 0
      %4180 = vmatprep.subr.bf16.mxu0 0
      %4181 = vmatpush1.bf16.msra.mxu0 0
      %4182 = vmatprep.subr.bf16.mxu0 0
      %4183 = vmatpush1.bf16.msra.mxu0 0
      %4184 = vmatprep.subr.bf16.mxu0 0
      %4185 = vmatpush1.bf16.msra.mxu0 0
      %4186 = vmatprep.mubr.bf16.mxu0 0
      %4187 = vmatmul.mubr.bf16.gmra.mrb[0].mxu0 %v4109
      %v4188 = vpop.f32.mrb[0].mxu0
      %v4189 = vadd.f32 0.0, %v4188
      %v4190 = vpop.f32.mrb[0].mxu0
      %v4191 = vadd.f32 0.0, %v4190
      %v4192 = vpop.f32.mrb[0].mxu0
      %v4193 = vadd.f32 0.0, %v4192
      %v4194 = vpop.f32.mrb[0].mxu0
      %v4195 = vadd.f32 0.0, %v4194
      %4196 = vdwg.mxu0
      %4197 = vmatprep.subr.bf16.mxu0 0
      %4198 = vmatpush1.bf16.msra.mxu0 %v4029
      %4199 = vmatprep.subr.bf16.mxu0 0
      %4200 = vmatpush1.bf16.msra.mxu0 %v4030
      %4201 = vmatprep.subr.bf16.mxu0 0
      %4202 = vmatpush1.bf16.msra.mxu0 %v4031
      %4203 = vmatprep.subr.bf16.mxu0 0
      %4204 = vmatpush1.bf16.msra.mxu0 %v4032
      %4205 = vmatprep.subr.bf16.mxu0 0
      %4206 = vmatpush1.bf16.msra.mxu0 0
      %4207 = vmatprep.subr.bf16.mxu0 0
      %4208 = vmatpush1.bf16.msra.mxu0 0
      %4209 = vmatprep.subr.bf16.mxu0 0
      %4210 = vmatpush1.bf16.msra.mxu0 0
      %4211 = vmatprep.subr.bf16.mxu0 0
      %4212 = vmatpush1.bf16.msra.mxu0 0
      %4213 = vmatprep.subr.bf16.mxu0 0
      %4214 = vmatpush1.bf16.msra.mxu0 0
      %4215 = vmatprep.subr.bf16.mxu0 0
      %4216 = vmatpush1.bf16.msra.mxu0 0
      %4217 = vmatprep.subr.bf16.mxu0 0
      %4218 = vmatpush1.bf16.msra.mxu0 0
      %4219 = vmatprep.subr.bf16.mxu0 0
      %4220 = vmatpush1.bf16.msra.mxu0 0
      %4221 = vmatprep.subr.bf16.mxu0 0
      %4222 = vmatpush1.bf16.msra.mxu0 0
      %4223 = vmatprep.subr.bf16.mxu0 0
      %4224 = vmatpush1.bf16.msra.mxu0 0
      %4225 = vmatprep.subr.bf16.mxu0 0
      %4226 = vmatpush1.bf16.msra.mxu0 0
      %4227 = vmatprep.subr.bf16.mxu0 0
      %4228 = vmatpush1.bf16.msra.mxu0 0
      %4229 = vmatprep.mubr.bf16.mxu0 0
      %4230 = vmatmul.mubr.bf16.gmra.mrb[0].mxu0 %v4109
      %v4231 = vpop.f32.mrb[0].mxu0
      %v4232 = vadd.f32 0.0, %v4231
      %v4233 = vpop.f32.mrb[0].mxu0
      %v4234 = vpop.f32.mrb[0].mxu0
      %v4235 = vadd.f32 0.0, %v4234
      %v4236 = vpop.f32.mrb[0].mxu0
      %4237 = vdwg.mxu0
      %v4238 = vpack.c.bf16 %v4150, %v4146
      %v4239 = vpack.c.bf16 %v4152, %v4148
      %v4240 = vpack.c.bf16 %v4193, %v4189
      %v4241 = vpack.c.bf16 %v4195, %v4191
      %v4242 = vpack.c.bf16 %v4235, %v4232
      %v4243 = vld [vmem:[%s6] sm:$0xf]
      %v4244 = vld [vmem:[%s6 + $0x4] sm:$0xf]
      %v4245 = vld [vmem:[%s6 + $0x8] sm:$0xf]
      %v4246 = vld [vmem:[%s6 + $0xc] sm:$0xf]
      %v4247 = vld [vmem:[%s6 + $0x10] sm:$0xf]
      %v4248 = vld [vmem:[%s6 + $0x14] sm:$0xf]
      %v4249 = vld [vmem:[%s6 + $0x18] sm:$0xf]
      %v4250 = vld [vmem:[%s6 + $0x1c] sm:$0xf]
      %v4251 = vld [vmem:[%s6 + $0x20] sm:$0xf]
      %v4252 = vld [vmem:[%s6 + $0x24] sm:$0xf]
      %v4253 = vld [vmem:[%s6 + $0x28] sm:$0xf]
      %v4254 = vld [vmem:[%s6 + $0x2c] sm:$0xf]
      %v4255 = vld [vmem:[%s6 + $0x30] sm:$0xf]
      %v4256 = vld [vmem:[%s6 + $0x34] sm:$0xf]
      %v4257 = vld [vmem:[%s6 + $0x38] sm:$0xf]
      %v4258 = vld [vmem:[%s6 + $0x3c] sm:$0xf]
      %v4259 = vld [vmem:[%s6 + $0x40] sm:$0xf]
      %v4260 = vld [vmem:[%s6 + $0x44] sm:$0xf]
      %v4261 = vld [vmem:[%s6 + $0x48] sm:$0xf]
      %v4262 = vld [vmem:[%s6 + $0x4c] sm:$0xf]
      %v4263 = vld [vmem:[%s6 + $0x50] sm:$0xf]
      %v4264 = vld [vmem:[%s6 + $0x54] sm:$0xf]
      %v4265 = vld [vmem:[%s6 + $0x58] sm:$0xf]
      %v4266 = vld [vmem:[%s6 + $0x5c] sm:$0xf]
      %v4267 = vld [vmem:[%s6 + $0x60] sm:$0xf]
      %v4268 = vld [vmem:[%s6 + $0x64] sm:$0xf]
      %v4269 = vld [vmem:[%s6 + $0x68] sm:$0xf]
      %v4270 = vld [vmem:[%s6 + $0x6c] sm:$0xf]
      %v4271 = vld [vmem:[%s6 + $0x70] sm:$0xf]
      %v4272 = vld [vmem:[%s6 + $0x74] sm:$0xf]
      %v4273 = vld [vmem:[%s6 + $0x78] sm:$0xf]
      %v4274 = vld [vmem:[%s6 + $0x7c] sm:$0xf]
      %v4275 = vld [vmem:[%s6 + $0x80] sm:$0xf]
      %v4276 = vld [vmem:[%s6 + $0x84] sm:$0xf]
      %v4277 = vld [vmem:[%s6 + $0x88] sm:$0xf]
      %v4278 = vld [vmem:[%s6 + $0x8c] sm:$0xf]
      %v4279 = vld [vmem:[%s6 + $0x90] sm:$0xf]
      %v4280 = vld [vmem:[%s6 + $0x94] sm:$0xf]
      %v4281 = vld [vmem:[%s6 + $0x98] sm:$0xf]
      %v4282 = vld [vmem:[%s6 + $0x9c] sm:$0xf]
      %v4283 = vld [vmem:[%s6 + $0xa0] sm:$0xf]
      %v4284 = vld [vmem:[%s6 + $0xa4] sm:$0xf]
      %v4285 = vld [vmem:[%s6 + $0xa8] sm:$0xf]
      %v4286 = vld [vmem:[%s6 + $0xac] sm:$0xf]
      %v4287 = vld [vmem:[%s6 + $0xb0] sm:$0xf]
      %v4288 = vld [vmem:[%s6 + $0xb4] sm:$0xf]
      %v4289 = vld [vmem:[%s6 + $0xb8] sm:$0xf]
      %v4290 = vld [vmem:[%s6 + $0xbc] sm:$0xf]
      %v4291 = vld [vmem:[%s6 + $0xc0] sm:$0xf]
      %v4292 = vld [vmem:[%s6 + $0xc4] sm:$0xf]
      %v4293 = vld [vmem:[%s6 + $0xc8] sm:$0xf]
      %v4294 = vld [vmem:[%s6 + $0xcc] sm:$0xf]
      %v4295 = vld [vmem:[%s6 + $0xd0] sm:$0xf]
      %v4296 = vld [vmem:[%s6 + $0xd4] sm:$0xf]
      %v4297 = vld [vmem:[%s6 + $0xd8] sm:$0xf]
      %v4298 = vld [vmem:[%s6 + $0xdc] sm:$0xf]
      %v4299 = vld [vmem:[%s6 + $0xe0] sm:$0xf]
      %v4300 = vld [vmem:[%s6 + $0xe4] sm:$0xf]
      %v4301 = vld [vmem:[%s6 + $0xe8] sm:$0xf]
      %v4302 = vld [vmem:[%s6 + $0xec] sm:$0xf]
      %v4303 = vld [vmem:[%s6 + $0xf0] sm:$0xf]
      %v4304 = vld [vmem:[%s6 + $0xf4] sm:$0xf]
      %v4305 = vld [vmem:[%s6 + $0xf8] sm:$0xf]
      %v4306 = vld [vmem:[%s6 + $0xfc] sm:$0xf]
      %v4307 = vld [vmem:[%s6 + $0x100] sm:$0xf]
      %v4308 = vld [vmem:[%s6 + $0x104] sm:$0xf]
      %v4309 = vld [vmem:[%s6 + $0x108] sm:$0xf]
      %v4310 = vld [vmem:[%s6 + $0x10c] sm:$0xf]
      %v4311 = vld [vmem:[%s6 + $0x110] sm:$0xf]
      %v4312 = vld [vmem:[%s6 + $0x114] sm:$0xf]
      %v4313 = vld [vmem:[%s6 + $0x118] sm:$0xf]
      %v4314 = vld [vmem:[%s6 + $0x11c] sm:$0xf]
      %v4315 = vld [vmem:[%s7] sm:$0x1]
      %v4317 = vlaneseq
      %v4318 = vshrl.u32 %v4317, 7
      %v4319 = vsub.s32 0, %v4318
      %v4320 = vrot.slane %v4315, %v4319
      %v4394 = vunpack.c.l.b16 %v4243
      %v4395 = vunpack.c.l.b16 %v4244
      %v4396 = vunpack.c.l.b16 %v4245
      %v4397 = vunpack.c.l.b16 %v4246
      %v4398 = vunpack.c.l.b16 %v4247
      %v4399 = vunpack.c.l.b16 %v4248
      %v4400 = vunpack.c.l.b16 %v4249
      %v4401 = vunpack.c.l.b16 %v4250
      %v4402 = vunpack.c.l.b16 %v4251
      %v4403 = vunpack.c.l.b16 %v4252
      %v4404 = vunpack.c.l.b16 %v4253
      %v4405 = vunpack.c.l.b16 %v4254
      %v4406 = vunpack.c.l.b16 %v4255
      %v4407 = vunpack.c.l.b16 %v4256
      %v4408 = vunpack.c.l.b16 %v4257
      %v4409 = vunpack.c.l.b16 %v4258
      %v4410 = vunpack.c.l.b16 %v4259
      %v4411 = vunpack.c.l.b16 %v4260
      %v4412 = vunpack.c.l.b16 %v4261
      %v4413 = vunpack.c.l.b16 %v4262
      %v4414 = vunpack.c.l.b16 %v4263
      %v4415 = vunpack.c.l.b16 %v4264
      %v4416 = vunpack.c.l.b16 %v4265
      %v4417 = vunpack.c.l.b16 %v4266
      %v4418 = vunpack.c.l.b16 %v4267
      %v4419 = vunpack.c.l.b16 %v4268
      %v4420 = vunpack.c.l.b16 %v4269
      %v4421 = vunpack.c.l.b16 %v4270
      %v4422 = vunpack.c.l.b16 %v4271
      %v4423 = vunpack.c.l.b16 %v4272
      %v4424 = vunpack.c.l.b16 %v4273
      %v4425 = vunpack.c.l.b16 %v4274
      %v4426 = vunpack.c.l.b16 %v4275
      %v4427 = vunpack.c.l.b16 %v4276
      %v4428 = vunpack.c.l.b16 %v4277
      %v4429 = vunpack.c.l.b16 %v4278
      %v4430 = vunpack.c.l.b16 %v4279
      %v4431 = vunpack.c.l.b16 %v4280
      %v4432 = vunpack.c.l.b16 %v4281
      %v4433 = vunpack.c.l.b16 %v4282
      %v4434 = vunpack.c.l.b16 %v4283
      %v4435 = vunpack.c.l.b16 %v4284
      %v4436 = vunpack.c.l.b16 %v4285
      %v4437 = vunpack.c.l.b16 %v4286
      %v4438 = vunpack.c.l.b16 %v4287
      %v4439 = vunpack.c.l.b16 %v4288
      %v4440 = vunpack.c.l.b16 %v4289
      %v4441 = vunpack.c.l.b16 %v4290
      %v4442 = vunpack.c.l.b16 %v4291
      %v4443 = vunpack.c.l.b16 %v4292
      %v4444 = vunpack.c.l.b16 %v4293
      %v4445 = vunpack.c.l.b16 %v4294
      %v4446 = vunpack.c.l.b16 %v4295
      %v4447 = vunpack.c.l.b16 %v4296
      %v4448 = vunpack.c.l.b16 %v4297
      %v4449 = vunpack.c.l.b16 %v4298
      %v4450 = vunpack.c.l.b16 %v4299
      %v4451 = vunpack.c.l.b16 %v4300
      %v4452 = vunpack.c.l.b16 %v4301
      %v4453 = vunpack.c.l.b16 %v4302
      %v4454 = vunpack.c.l.b16 %v4303
      %v4455 = vunpack.c.l.b16 %v4304
      %v4456 = vunpack.c.l.b16 %v4305
      %v4457 = vunpack.c.l.b16 %v4306
      %v4458 = vunpack.c.l.b16 %v4307
      %v4459 = vunpack.c.l.b16 %v4308
      %v4460 = vunpack.c.l.b16 %v4309
      %v4461 = vunpack.c.l.b16 %v4310
      %v4462 = vunpack.c.l.b16 %v4311
      %v4463 = vunpack.c.l.b16 %v4312
      %v4464 = vunpack.c.l.b16 %v4313
      %v4465 = vunpack.c.l.b16 %v4314
      %v4466 = vpack.c.b16 %v4395, %v4394
      %v4467 = vpack.c.b16 %v4397, %v4396
      %v4468 = vpack.c.b16 %v4399, %v4398
      %v4469 = vpack.c.b16 %v4401, %v4400
      %v4470 = vpack.c.b16 %v4403, %v4402
      %v4471 = vpack.c.b16 %v4405, %v4404
      %v4472 = vpack.c.b16 %v4407, %v4406
      %v4473 = vpack.c.b16 %v4409, %v4408
      %v4474 = vpack.c.b16 %v4411, %v4410
      %v4475 = vpack.c.b16 %v4413, %v4412
      %v4476 = vpack.c.b16 %v4415, %v4414
      %v4477 = vpack.c.b16 %v4417, %v4416
      %v4478 = vpack.c.b16 %v4419, %v4418
      %v4479 = vpack.c.b16 %v4421, %v4420
      %v4480 = vpack.c.b16 %v4423, %v4422
      %v4481 = vpack.c.b16 %v4425, %v4424
      %v4482 = vpack.c.b16 %v4427, %v4426
      %v4483 = vpack.c.b16 %v4429, %v4428
      %v4484 = vpack.c.b16 %v4431, %v4430
      %v4485 = vpack.c.b16 %v4433, %v4432
      %v4486 = vpack.c.b16 %v4435, %v4434
      %v4487 = vpack.c.b16 %v4437, %v4436
      %v4488 = vpack.c.b16 %v4439, %v4438
      %v4489 = vpack.c.b16 %v4441, %v4440
      %v4490 = vpack.c.b16 %v4443, %v4442
      %v4491 = vpack.c.b16 %v4445, %v4444
      %v4492 = vpack.c.b16 %v4447, %v4446
      %v4493 = vpack.c.b16 %v4449, %v4448
      %v4494 = vpack.c.b16 %v4451, %v4450
      %v4495 = vpack.c.b16 %v4453, %v4452
      %v4496 = vpack.c.b16 %v4455, %v4454
      %v4497 = vpack.c.b16 %v4457, %v4456
      %v4498 = vpack.c.b16 %v4459, %v4458
      %v4499 = vpack.c.b16 %v4461, %v4460
      %v4500 = vpack.c.b16 %v4463, %v4462
      %v4501 = vpack.c.b16 %v4465, %v4464
      %v4539 = vsel %vm1100, %v4242, 0
      %4541 = vmatprep.subr.bf16.mxu0 0
      %4542 = vmatpush1.bf16.msra.mxu0 %v4466
      %4543 = vmatprep.subr.bf16.mxu0 0
      %4544 = vmatpush1.bf16.msra.mxu0 %v4467
      %4545 = vmatprep.subr.bf16.mxu0 0
      %4546 = vmatpush1.bf16.msra.mxu0 %v4468
      %4547 = vmatprep.subr.bf16.mxu0 0
      %4548 = vmatpush1.bf16.msra.mxu0 %v4469
      %4549 = vmatprep.subr.bf16.mxu0 0
      %4550 = vmatpush1.bf16.msra.mxu0 %v4470
      %4551 = vmatprep.subr.bf16.mxu0 0
      %4552 = vmatpush1.bf16.msra.mxu0 %v4471
      %4553 = vmatprep.subr.bf16.mxu0 0
      %4554 = vmatpush1.bf16.msra.mxu0 %v4472
      %4555 = vmatprep.subr.bf16.mxu0 0
      %4556 = vmatpush1.bf16.msra.mxu0 %v4473
      %4557 = vmatprep.subr.bf16.mxu0 0
      %4558 = vmatpush1.bf16.msra.mxu0 %v4474
      %4559 = vmatprep.subr.bf16.mxu0 0
      %4560 = vmatpush1.bf16.msra.mxu0 %v4475
      %4561 = vmatprep.subr.bf16.mxu0 0
      %4562 = vmatpush1.bf16.msra.mxu0 %v4476
      %4563 = vmatprep.subr.bf16.mxu0 0
      %4564 = vmatpush1.bf16.msra.mxu0 %v4477
      %4565 = vmatprep.subr.bf16.mxu0 0
      %4566 = vmatpush1.bf16.msra.mxu0 %v4478
      %4567 = vmatprep.subr.bf16.mxu0 0
      %4568 = vmatpush1.bf16.msra.mxu0 %v4479
      %4569 = vmatprep.subr.bf16.mxu0 0
      %4570 = vmatpush1.bf16.msra.mxu0 %v4480
      %4571 = vmatprep.subr.bf16.mxu0 0
      %4572 = vmatpush1.bf16.msra.mxu0 %v4481
      %4573 = vmatprep.mubr.bf16.mxu0 %v4239
      %4574 = vmatmul.mubr.bf16.gmra.mrb[0].mxu0 %v4238
      %v4575 = vpop.f32.mrb[0].mxu0
      %v4576 = vadd.f32 %v4320, %v4575
      %v4577 = vpop.f32.mrb[0].mxu0
      %v4578 = vpop.f32.mrb[0].mxu0
      %v4579 = vadd.f32 %v4320, %v4578
      %v4580 = vpop.f32.mrb[0].mxu0
      %4581 = vdwg.mxu0
      %4582 = vmatprep.subr.bf16.mxu0 0
      %4583 = vmatpush1.bf16.msra.mxu0 %v4482
      %4584 = vmatprep.subr.bf16.mxu0 0
      %4585 = vmatpush1.bf16.msra.mxu0 %v4483
      %4586 = vmatprep.subr.bf16.mxu0 0
      %4587 = vmatpush1.bf16.msra.mxu0 %v4484
      %4588 = vmatprep.subr.bf16.mxu0 0
      %4589 = vmatpush1.bf16.msra.mxu0 %v4485
      %4590 = vmatprep.subr.bf16.mxu0 0
      %4591 = vmatpush1.bf16.msra.mxu0 %v4486
      %4592 = vmatprep.subr.bf16.mxu0 0
      %4593 = vmatpush1.bf16.msra.mxu0 %v4487
      %4594 = vmatprep.subr.bf16.mxu0 0
      %4595 = vmatpush1.bf16.msra.mxu0 %v4488
      %4596 = vmatprep.subr.bf16.mxu0 0
      %4597 = vmatpush1.bf16.msra.mxu0 %v4489
      %4598 = vmatprep.subr.bf16.mxu0 0
      %4599 = vmatpush1.bf16.msra.mxu0 %v4490
      %4600 = vmatprep.subr.bf16.mxu0 0
      %4601 = vmatpush1.bf16.msra.mxu0 %v4491
      %4602 = vmatprep.subr.bf16.mxu0 0
      %4603 = vmatpush1.bf16.msra.mxu0 %v4492
      %4604 = vmatprep.subr.bf16.mxu0 0
      %4605 = vmatpush1.bf16.msra.mxu0 %v4493
      %4606 = vmatprep.subr.bf16.mxu0 0
      %4607 = vmatpush1.bf16.msra.mxu0 %v4494
      %4608 = vmatprep.subr.bf16.mxu0 0
      %4609 = vmatpush1.bf16.msra.mxu0 %v4495
      %4610 = vmatprep.subr.bf16.mxu0 0
      %4611 = vmatpush1.bf16.msra.mxu0 %v4496
      %4612 = vmatprep.subr.bf16.mxu0 0
      %4613 = vmatpush1.bf16.msra.mxu0 %v4497
      %4614 = vmatprep.mubr.bf16.mxu0 %v4241
      %4615 = vmatmul.mubr.bf16.gmra.mrb[0].mxu0 %v4240
      %v4616 = vpop.f32.mrb[0].mxu0
      %v4617 = vadd.f32 %v4576, %v4616
      %v4618 = vpop.f32.mrb[0].mxu0
      %v4619 = vpop.f32.mrb[0].mxu0
      %v4620 = vadd.f32 %v4579, %v4619
      %v4621 = vpop.f32.mrb[0].mxu0
      %4622 = vdwg.mxu0
      %4623 = vmatprep.subr.bf16.mxu0 0
      %4624 = vmatpush1.bf16.msra.mxu0 %v4498
      %4625 = vmatprep.subr.bf16.mxu0 0
      %4626 = vmatpush1.bf16.msra.mxu0 %v4499
      %4627 = vmatprep.subr.bf16.mxu0 0
      %4628 = vmatpush1.bf16.msra.mxu0 %v4500
      %4629 = vmatprep.subr.bf16.mxu0 0
      %4630 = vmatpush1.bf16.msra.mxu0 %v4501
      %4631 = vmatprep.subr.bf16.mxu0 0
      %4632 = vmatpush1.bf16.msra.mxu0 0
      %4633 = vmatprep.subr.bf16.mxu0 0
      %4634 = vmatpush1.bf16.msra.mxu0 0
      %4635 = vmatprep.subr.bf16.mxu0 0
      %4636 = vmatpush1.bf16.msra.mxu0 0
      %4637 = vmatprep.subr.bf16.mxu0 0
      %4638 = vmatpush1.bf16.msra.mxu0 0
      %4639 = vmatprep.subr.bf16.mxu0 0
      %4640 = vmatpush1.bf16.msra.mxu0 0
      %4641 = vmatprep.subr.bf16.mxu0 0
      %4642 = vmatpush1.bf16.msra.mxu0 0
      %4643 = vmatprep.subr.bf16.mxu0 0
      %4644 = vmatpush1.bf16.msra.mxu0 0
      %4645 = vmatprep.subr.bf16.mxu0 0
      %4646 = vmatpush1.bf16.msra.mxu0 0
      %4647 = vmatprep.subr.bf16.mxu0 0
      %4648 = vmatpush1.bf16.msra.mxu0 0
      %4649 = vmatprep.subr.bf16.mxu0 0
      %4650 = vmatpush1.bf16.msra.mxu0 0
      %4651 = vmatprep.subr.bf16.mxu0 0
      %4652 = vmatpush1.bf16.msra.mxu0 0
      %4653 = vmatprep.subr.bf16.mxu0 0
      %4654 = vmatpush1.bf16.msra.mxu0 0
      %4655 = vmatprep.mubr.bf16.mxu0 0
      %4656 = vmatmul.mubr.bf16.gmra.mrb[0].mxu0 %v4539
      %v4657 = vpop.f32.mrb[0].mxu0
      %v4658 = vadd.f32 %v4617, %v4657
      %v4659 = vpop.f32.mrb[0].mxu0
      %v4660 = vpop.f32.mrb[0].mxu0
      %v4661 = vadd.f32 %v4620, %v4660
      %v4662 = vpop.f32.mrb[0].mxu0
      %4663 = vdwg.mxu0
      %v4664 = vmax.f32 %v4658, 0.0
      %v4665 = vmax.f32 %v4661, 0.0
      %4666 = vst [vmem:[#allocation3] sm:$0x7] 0
      %4667 = vst [vmem:[#allocation3 + $0x4] sm:$0x7] 0
      %4668 = vst [vmem:[#allocation3 + $0x8] sm:$0x7] 0
      %4669 = vst [vmem:[#allocation3 + $0xc] sm:$0x7] 0
      %4670 = vst [vmem:[#allocation3 + $0x10] sm:$0x7] 0
      %4671 = vst [vmem:[#allocation3 + $0x14] sm:$0x7] 0
      %v4674 = vcombine.high %v4664, %v4664
      %v4675 = vcombine.high %v4665, %v4665
      %v4678 = vpack.c.bf16 %v4664, %v4664
      %v4679 = vpack.c.bf16 %v4674, %v4674
      %v4680 = vpack.c.bf16 %v4665, %v4665
      %v4681 = vpack.c.bf16 %v4675, %v4675
      %v4686 = vunpack.c.l.b16 %v4678
      %v4687 = vunpack.c.l.b16 %v4679
      %v4688 = vunpack.c.l.b16 %v4680
      %v4689 = vunpack.c.l.b16 %v4681
      %v4690 = vpack.c.b16 %v4686, %v4686
      %v4691 = vpack.c.b16 %v4687, %v4687
      %v4692 = vpack.c.b16 %v4688, %v4688
      %v4693 = vpack.c.b16 %v4689, %v4689
      %v4695 = vshrl.u32 %v4690, 16
      %v4697 = vrot.slane %v4695, 7
      %v4698 = vshll.u32 %v4690, 16
      %v4700 = vor.u32 %v4697, %v4698
      %v4702 = vshrl.u32 %v4691, 16
      %v4704 = vrot.slane %v4702, 7
      %v4705 = vshll.u32 %v4691, 16
      %v4707 = vor.u32 %v4704, %v4705
      %v4709 = vshrl.u32 %v4692, 16
      %v4711 = vrot.slane %v4709, 7
      %v4712 = vshll.u32 %v4692, 16
      %v4714 = vor.u32 %v4711, %v4712
      %v4716 = vshrl.u32 %v4693, 16
      %v4718 = vrot.slane %v4716, 7
      %v4719 = vshll.u32 %v4693, 16
      %v4721 = vor.u32 %v4718, %v4719
      %s4726 = scalar_lea.vmem [#allocation3], 4
      %vm4727 = vsmask.f32 2306
      %vm4728 = vmand %vm2016, %vm4727
      %v4729 = vld [vmem:[%s4726] sm:$0x7]
      %v4730 = vsel %vm4728, %v4700, %v4729
      %4731 = vst [vmem:[%s4726] sm:$0x7] %v4730
      %v4732 = vld [vmem:[%s4726 + $0x4] sm:$0x7]
      %v4733 = vsel %vm4728, %v4707, %v4732
      %4734 = vst [vmem:[%s4726 + $0x4] sm:$0x7] %v4733
      %v4735 = vld [vmem:[%s4726 + $0x8] sm:$0x7]
      %v4736 = vsel %vm4728, %v4714, %v4735
      %4737 = vst [vmem:[%s4726 + $0x8] sm:$0x7] %v4736
      %v4738 = vld [vmem:[%s4726 + $0xc] sm:$0x7]
      %v4739 = vsel %vm4728, %v4721, %v4738
      %4740 = vst [vmem:[%s4726 + $0xc] sm:$0x7] %v4739
      %v4741 = vld [vmem:[#allocation3] sm:$0x3]
      %v4742 = vld [vmem:[#allocation3 + $0x4] sm:$0x3]
      %v4743 = vld [vmem:[#allocation3 + $0x8] sm:$0x3]
      %v4744 = vld [vmem:[#allocation3 + $0xc] sm:$0x3]
      %v4745 = vld [vmem:[#allocation3] sm:$0x7]
      %v4746 = vld [vmem:[#allocation3 + $0x4] sm:$0x7]
      %v4747 = vld [vmem:[#allocation3 + $0x8] sm:$0x7]
      %v4748 = vld [vmem:[#allocation3 + $0xc] sm:$0x7]
      %v4754 = vunpack.c.l.s4 1983009808
      %v4755 = vunpack.c.0.s8 %v4754
      %v4756 = vlaneseq
      %v4757 = vshrl.u32 %v4756, 7
      %v4758 = vsub.s32 %v4755, %v4757
      %v4759 = vrot.slane %v4745, %v4758
      %v4760 = vcombine.high %v4759, %v4759
      %v4762 = vunpack.c.l.s4 1983009808
      %v4763 = vunpack.c.0.s8 %v4762
      %v4764 = vlaneseq
      %v4765 = vshrl.u32 %v4764, 7
      %v4766 = vsub.s32 %v4763, %v4765
      %v4767 = vrot.slane %v4746, %v4766
      %v4768 = vcombine.high %v4767, %v4767
      %v4770 = vunpack.c.l.s4 1983009808
      %v4771 = vunpack.c.0.s8 %v4770
      %v4772 = vlaneseq
      %v4773 = vshrl.u32 %v4772, 7
      %v4774 = vsub.s32 %v4771, %v4773
      %v4775 = vrot.slane %v4747, %v4774
      %v4776 = vcombine.high %v4775, %v4775
      %v4778 = vunpack.c.l.s4 1983009808
      %v4779 = vunpack.c.0.s8 %v4778
      %v4780 = vlaneseq
      %v4781 = vshrl.u32 %v4780, 7
      %v4782 = vsub.s32 %v4779, %v4781
      %v4783 = vrot.slane %v4748, %v4782
      %v4784 = vcombine.high %v4783, %v4783
      %vm4785 = vsmask.f32 1280
      %vm4786 = vsmask.f32 3336
      %vm4787 = vmor %vm4785, %vm4786
      %vm4788 = vsmask.f32 5392
      %vm4789 = vmor %vm4787, %vm4788
      %vm4790 = vsmask.f32 7448
      %vm4791 = vmor %vm4789, %vm4790
      %v4793 = vshrl.u32 %v4759, 16
      %v4795 = vrot.slane %v4793, 6
      %v4796 = vshll.u32 %v4759, 16
      %v4798 = vrot.slane %v4796, 7
      %v4799 = vor.u32 %v4795, %v4798
      %v4800 = vrot.slane %v4799, 2
      %v4802 = vshll.u32 %v4760, 16
      %v4804 = vrot.slane %v4802, 7
      %v4805 = vsel %vm4791, %v4800, %v4804
      %v4807 = vshrl.u32 %v4767, 16
      %v4809 = vrot.slane %v4807, 6
      %v4810 = vshll.u32 %v4767, 16
      %v4812 = vrot.slane %v4810, 7
      %v4813 = vor.u32 %v4809, %v4812
      %v4814 = vrot.slane %v4813, 2
      %v4816 = vshll.u32 %v4768, 16
      %v4818 = vrot.slane %v4816, 7
      %v4819 = vsel %vm4791, %v4814, %v4818
      %v4821 = vshrl.u32 %v4775, 16
      %v4823 = vrot.slane %v4821, 6
      %v4824 = vshll.u32 %v4775, 16
      %v4826 = vrot.slane %v4824, 7
      %v4827 = vor.u32 %v4823, %v4826
      %v4828 = vrot.slane %v4827, 2
      %v4830 = vshll.u32 %v4776, 16
      %v4832 = vrot.slane %v4830, 7
      %v4833 = vsel %vm4791, %v4828, %v4832
      %v4835 = vshrl.u32 %v4783, 16
      %v4837 = vrot.slane %v4835, 6
      %v4838 = vshll.u32 %v4783, 16
      %v4840 = vrot.slane %v4838, 7
      %v4841 = vor.u32 %v4837, %v4840
      %v4842 = vrot.slane %v4841, 2
      %v4844 = vshll.u32 %v4784, 16
      %v4846 = vrot.slane %v4844, 7
      %v4847 = vsel %vm4791, %v4842, %v4846
      %v4848 = vld [vmem:[#allocation3] sm:$0x6]
      %v4849 = vld [vmem:[#allocation3 + $0x4] sm:$0x6]
      %v4850 = vld [vmem:[#allocation3 + $0x8] sm:$0x6]
      %v4851 = vld [vmem:[#allocation3 + $0xc] sm:$0x6]
      %v4857 = vunpack.c.l.s4 1983009808
      %v4858 = vunpack.c.0.s8 %v4857
      %v4859 = vlaneseq
      %v4860 = vshrl.u32 %v4859, 7
      %v4861 = vsub.s32 %v4858, %v4860
      %v4862 = vrot.slane %v4848, %v4861
      %v4863 = vcombine.high %v4862, %v4862
      %v4865 = vunpack.c.l.s4 1983009808
      %v4866 = vunpack.c.0.s8 %v4865
      %v4867 = vlaneseq
      %v4868 = vshrl.u32 %v4867, 7
      %v4869 = vsub.s32 %v4866, %v4868
      %v4870 = vrot.slane %v4849, %v4869
      %v4871 = vcombine.high %v4870, %v4870
      %v4873 = vunpack.c.l.s4 1983009808
      %v4874 = vunpack.c.0.s8 %v4873
      %v4875 = vlaneseq
      %v4876 = vshrl.u32 %v4875, 7
      %v4877 = vsub.s32 %v4874, %v4876
      %v4878 = vrot.slane %v4850, %v4877
      %v4879 = vcombine.high %v4878, %v4878
      %v4881 = vunpack.c.l.s4 1983009808
      %v4882 = vunpack.c.0.s8 %v4881
      %v4883 = vlaneseq
      %v4884 = vshrl.u32 %v4883, 7
      %v4885 = vsub.s32 %v4882, %v4884
      %v4886 = vrot.slane %v4851, %v4885
      %v4887 = vcombine.high %v4886, %v4886
      %vm4888 = vcmask 1040384
      %vm4889 = vcmask 1042434
      %vm4890 = vmor %vm4888, %vm4889
      %vm4891 = vcmask 1044484
      %vm4892 = vmor %vm4890, %vm4891
      %vm4893 = vcmask 1046534
      %vm4894 = vmor %vm4892, %vm4893
      %v4895 = vrot.slane %v4862, 7
      %v4896 = vrot.slane %v4895, 2
      %v4897 = vrot.slane %v4863, 7
      %v4898 = vsel %vm4894, %v4896, %v4897
      %v4899 = vrot.slane %v4870, 7
      %v4900 = vrot.slane %v4899, 2
      %v4901 = vrot.slane %v4871, 7
      %v4902 = vsel %vm4894, %v4900, %v4901
      %v4903 = vrot.slane %v4878, 7
      %v4904 = vrot.slane %v4903, 2
      %v4905 = vrot.slane %v4879, 7
      %v4906 = vsel %vm4894, %v4904, %v4905
      %v4907 = vrot.slane %v4886, 7
      %v4908 = vrot.slane %v4907, 2
      %v4909 = vrot.slane %v4887, 7
      %v4910 = vsel %vm4894, %v4908, %v4909
      %v4911 = vld [vmem:[%s4726] sm:$0x3]
      %v4912 = vld [vmem:[%s4726 + $0x4] sm:$0x3]
      %v4913 = vld [vmem:[%s4726 + $0x8] sm:$0x3]
      %v4914 = vld [vmem:[%s4726 + $0xc] sm:$0x3]
      %v4915 = vld [vmem:[%s4726] sm:$0x7]
      %v4916 = vld [vmem:[%s4726 + $0x4] sm:$0x7]
      %v4917 = vld [vmem:[%s4726 + $0x8] sm:$0x7]
      %v4918 = vld [vmem:[%s4726 + $0xc] sm:$0x7]
      %v4924 = vunpack.c.l.s4 1983009808
      %v4925 = vunpack.c.0.s8 %v4924
      %v4926 = vlaneseq
      %v4927 = vshrl.u32 %v4926, 7
      %v4928 = vsub.s32 %v4925, %v4927
      %v4929 = vrot.slane %v4915, %v4928
      %v4930 = vcombine.high %v4929, %v4929
      %v4932 = vunpack.c.l.s4 1983009808
      %v4933 = vunpack.c.0.s8 %v4932
      %v4934 = vlaneseq
      %v4935 = vshrl.u32 %v4934, 7
      %v4936 = vsub.s32 %v4933, %v4935
      %v4937 = vrot.slane %v4916, %v4936
      %v4938 = vcombine.high %v4937, %v4937
      %v4940 = vunpack.c.l.s4 1983009808
      %v4941 = vunpack.c.0.s8 %v4940
      %v4942 = vlaneseq
      %v4943 = vshrl.u32 %v4942, 7
      %v4944 = vsub.s32 %v4941, %v4943
      %v4945 = vrot.slane %v4917, %v4944
      %v4946 = vcombine.high %v4945, %v4945
      %v4948 = vunpack.c.l.s4 1983009808
      %v4949 = vunpack.c.0.s8 %v4948
      %v4950 = vlaneseq
      %v4951 = vshrl.u32 %v4950, 7
      %v4952 = vsub.s32 %v4949, %v4951
      %v4953 = vrot.slane %v4918, %v4952
      %v4954 = vcombine.high %v4953, %v4953
      %v4956 = vshrl.u32 %v4929, 16
      %v4958 = vrot.slane %v4956, 6
      %v4959 = vshll.u32 %v4929, 16
      %v4961 = vrot.slane %v4959, 7
      %v4962 = vor.u32 %v4958, %v4961
      %v4963 = vrot.slane %v4962, 2
      %v4965 = vshll.u32 %v4930, 16
      %v4967 = vrot.slane %v4965, 7
      %v4968 = vsel %vm4791, %v4963, %v4967
      %v4970 = vshrl.u32 %v4937, 16
      %v4972 = vrot.slane %v4970, 6
      %v4973 = vshll.u32 %v4937, 16
      %v4975 = vrot.slane %v4973, 7
      %v4976 = vor.u32 %v4972, %v4975
      %v4977 = vrot.slane %v4976, 2
      %v4979 = vshll.u32 %v4938, 16
      %v4981 = vrot.slane %v4979, 7
      %v4982 = vsel %vm4791, %v4977, %v4981
      %v4984 = vshrl.u32 %v4945, 16
      %v4986 = vrot.slane %v4984, 6
      %v4987 = vshll.u32 %v4945, 16
      %v4989 = vrot.slane %v4987, 7
      %v4990 = vor.u32 %v4986, %v4989
      %v4991 = vrot.slane %v4990, 2
      %v4993 = vshll.u32 %v4946, 16
      %v4995 = vrot.slane %v4993, 7
      %v4996 = vsel %vm4791, %v4991, %v4995
      %v4998 = vshrl.u32 %v4953, 16
      %v5000 = vrot.slane %v4998, 6
      %v5001 = vshll.u32 %v4953, 16
      %v5003 = vrot.slane %v5001, 7
      %v5004 = vor.u32 %v5000, %v5003
      %v5005 = vrot.slane %v5004, 2
      %v5007 = vshll.u32 %v4954, 16
      %v5009 = vrot.slane %v5007, 7
      %v5010 = vsel %vm4791, %v5005, %v5009
      %v5011 = vld [vmem:[%s4726] sm:$0x6]
      %v5012 = vld [vmem:[%s4726 + $0x4] sm:$0x6]
      %v5013 = vld [vmem:[%s4726 + $0x8] sm:$0x6]
      %v5014 = vld [vmem:[%s4726 + $0xc] sm:$0x6]
      %v5020 = vunpack.c.l.s4 1983009808
      %v5021 = vunpack.c.0.s8 %v5020
      %v5022 = vlaneseq
      %v5023 = vshrl.u32 %v5022, 7
      %v5024 = vsub.s32 %v5021, %v5023
      %v5025 = vrot.slane %v5011, %v5024
      %v5026 = vcombine.high %v5025, %v5025
      %v5028 = vunpack.c.l.s4 1983009808
      %v5029 = vunpack.c.0.s8 %v5028
      %v5030 = vlaneseq
      %v5031 = vshrl.u32 %v5030, 7
      %v5032 = vsub.s32 %v5029, %v5031
      %v5033 = vrot.slane %v5012, %v5032
      %v5034 = vcombine.high %v5033, %v5033
      %v5036 = vunpack.c.l.s4 1983009808
      %v5037 = vunpack.c.0.s8 %v5036
      %v5038 = vlaneseq
      %v5039 = vshrl.u32 %v5038, 7
      %v5040 = vsub.s32 %v5037, %v5039
      %v5041 = vrot.slane %v5013, %v5040
      %v5042 = vcombine.high %v5041, %v5041
      %v5044 = vunpack.c.l.s4 1983009808
      %v5045 = vunpack.c.0.s8 %v5044
      %v5046 = vlaneseq
      %v5047 = vshrl.u32 %v5046, 7
      %v5048 = vsub.s32 %v5045, %v5047
      %v5049 = vrot.slane %v5014, %v5048
      %v5050 = vcombine.high %v5049, %v5049
      %v5051 = vrot.slane %v5025, 7
      %v5052 = vrot.slane %v5051, 2
      %v5053 = vrot.slane %v5026, 7
      %v5054 = vsel %vm4894, %v5052, %v5053
      %v5055 = vrot.slane %v5033, 7
      %v5056 = vrot.slane %v5055, 2
      %v5057 = vrot.slane %v5034, 7
      %v5058 = vsel %vm4894, %v5056, %v5057
      %v5059 = vrot.slane %v5041, 7
      %v5060 = vrot.slane %v5059, 2
      %v5061 = vrot.slane %v5042, 7
      %v5062 = vsel %vm4894, %v5060, %v5061
      %v5063 = vrot.slane %v5049, 7
      %v5064 = vrot.slane %v5063, 2
      %v5065 = vrot.slane %v5050, 7
      %v5066 = vsel %vm4894, %v5064, %v5065
      %s5067 = scalar_lea.vmem [#allocation3], 8
      %v5068 = vld [vmem:[%s5067] sm:$0x3]
      %v5069 = vld [vmem:[%s5067 + $0x4] sm:$0x3]
      %v5070 = vld [vmem:[%s5067 + $0x8] sm:$0x3]
      %v5071 = vld [vmem:[%s5067 + $0xc] sm:$0x3]
      %v5072 = vld [vmem:[%s5067] sm:$0x7]
      %v5073 = vld [vmem:[%s5067 + $0x4] sm:$0x7]
      %v5074 = vld [vmem:[%s5067 + $0x8] sm:$0x7]
      %v5075 = vld [vmem:[%s5067 + $0xc] sm:$0x7]
      %v5081 = vunpack.c.l.s4 1983009808
      %v5082 = vunpack.c.0.s8 %v5081
      %v5083 = vlaneseq
      %v5084 = vshrl.u32 %v5083, 7
      %v5085 = vsub.s32 %v5082, %v5084
      %v5086 = vrot.slane %v5072, %v5085
      %v5087 = vcombine.high %v5086, %v5086
      %v5089 = vunpack.c.l.s4 1983009808
      %v5090 = vunpack.c.0.s8 %v5089
      %v5091 = vlaneseq
      %v5092 = vshrl.u32 %v5091, 7
      %v5093 = vsub.s32 %v5090, %v5092
      %v5094 = vrot.slane %v5073, %v5093
      %v5095 = vcombine.high %v5094, %v5094
      %v5097 = vunpack.c.l.s4 1983009808
      %v5098 = vunpack.c.0.s8 %v5097
      %v5099 = vlaneseq
      %v5100 = vshrl.u32 %v5099, 7
      %v5101 = vsub.s32 %v5098, %v5100
      %v5102 = vrot.slane %v5074, %v5101
      %v5103 = vcombine.high %v5102, %v5102
      %v5105 = vunpack.c.l.s4 1983009808
      %v5106 = vunpack.c.0.s8 %v5105
      %v5107 = vlaneseq
      %v5108 = vshrl.u32 %v5107, 7
      %v5109 = vsub.s32 %v5106, %v5108
      %v5110 = vrot.slane %v5075, %v5109
      %v5111 = vcombine.high %v5110, %v5110
      %v5113 = vshrl.u32 %v5086, 16
      %v5115 = vrot.slane %v5113, 6
      %v5116 = vshll.u32 %v5086, 16
      %v5118 = vrot.slane %v5116, 7
      %v5119 = vor.u32 %v5115, %v5118
      %v5120 = vrot.slane %v5119, 2
      %v5122 = vshll.u32 %v5087, 16
      %v5124 = vrot.slane %v5122, 7
      %v5125 = vsel %vm4791, %v5120, %v5124
      %v5127 = vshrl.u32 %v5094, 16
      %v5129 = vrot.slane %v5127, 6
      %v5130 = vshll.u32 %v5094, 16
      %v5132 = vrot.slane %v5130, 7
      %v5133 = vor.u32 %v5129, %v5132
      %v5134 = vrot.slane %v5133, 2
      %v5136 = vshll.u32 %v5095, 16
      %v5138 = vrot.slane %v5136, 7
      %v5139 = vsel %vm4791, %v5134, %v5138
      %v5141 = vshrl.u32 %v5102, 16
      %v5143 = vrot.slane %v5141, 6
      %v5144 = vshll.u32 %v5102, 16
      %v5146 = vrot.slane %v5144, 7
      %v5147 = vor.u32 %v5143, %v5146
      %v5148 = vrot.slane %v5147, 2
      %v5150 = vshll.u32 %v5103, 16
      %v5152 = vrot.slane %v5150, 7
      %v5153 = vsel %vm4791, %v5148, %v5152
      %v5155 = vshrl.u32 %v5110, 16
      %v5157 = vrot.slane %v5155, 6
      %v5158 = vshll.u32 %v5110, 16
      %v5160 = vrot.slane %v5158, 7
      %v5161 = vor.u32 %v5157, %v5160
      %v5162 = vrot.slane %v5161, 2
      %v5164 = vshll.u32 %v5111, 16
      %v5166 = vrot.slane %v5164, 7
      %v5167 = vsel %vm4791, %v5162, %v5166
      %v5168 = vld [vmem:[%s5067] sm:$0x6]
      %v5169 = vld [vmem:[%s5067 + $0x4] sm:$0x6]
      %v5170 = vld [vmem:[%s5067 + $0x8] sm:$0x6]
      %v5171 = vld [vmem:[%s5067 + $0xc] sm:$0x6]
      %v5177 = vunpack.c.l.s4 1983009808
      %v5178 = vunpack.c.0.s8 %v5177
      %v5179 = vlaneseq
      %v5180 = vshrl.u32 %v5179, 7
      %v5181 = vsub.s32 %v5178, %v5180
      %v5182 = vrot.slane %v5168, %v5181
      %v5183 = vcombine.high %v5182, %v5182
      %v5185 = vunpack.c.l.s4 1983009808
      %v5186 = vunpack.c.0.s8 %v5185
      %v5187 = vlaneseq
      %v5188 = vshrl.u32 %v5187, 7
      %v5189 = vsub.s32 %v5186, %v5188
      %v5190 = vrot.slane %v5169, %v5189
      %v5191 = vcombine.high %v5190, %v5190
      %v5193 = vunpack.c.l.s4 1983009808
      %v5194 = vunpack.c.0.s8 %v5193
      %v5195 = vlaneseq
      %v5196 = vshrl.u32 %v5195, 7
      %v5197 = vsub.s32 %v5194, %v5196
      %v5198 = vrot.slane %v5170, %v5197
      %v5199 = vcombine.high %v5198, %v5198
      %v5201 = vunpack.c.l.s4 1983009808
      %v5202 = vunpack.c.0.s8 %v5201
      %v5203 = vlaneseq
      %v5204 = vshrl.u32 %v5203, 7
      %v5205 = vsub.s32 %v5202, %v5204
      %v5206 = vrot.slane %v5171, %v5205
      %v5207 = vcombine.high %v5206, %v5206
      %v5208 = vrot.slane %v5182, 7
      %v5209 = vrot.slane %v5208, 2
      %v5210 = vrot.slane %v5183, 7
      %v5211 = vsel %vm4894, %v5209, %v5210
      %v5212 = vrot.slane %v5190, 7
      %v5213 = vrot.slane %v5212, 2
      %v5214 = vrot.slane %v5191, 7
      %v5215 = vsel %vm4894, %v5213, %v5214
      %v5216 = vrot.slane %v5198, 7
      %v5217 = vrot.slane %v5216, 2
      %v5218 = vrot.slane %v5199, 7
      %v5219 = vsel %vm4894, %v5217, %v5218
      %v5220 = vrot.slane %v5206, 7
      %v5221 = vrot.slane %v5220, 2
      %v5222 = vrot.slane %v5207, 7
      %v5223 = vsel %vm4894, %v5221, %v5222
      %v5228 = vcombine.low %v4741, %v4742
      %v5229 = vcombine.low %v4743, %v4744
      %v5231 = vunpack.c.l.s4 1983009808
      %v5232 = vunpack.c.0.s8 %v5231
      %v5233 = vlaneseq
      %v5234 = vshrl.u32 %v5233, 7
      %v5235 = vsub.s32 %v5232, %v5234
      %v5236 = vrot.slane %v5228, %v5235
      %v5238 = vunpack.c.l.s4 1983009808
      %v5239 = vunpack.c.0.s8 %v5238
      %v5240 = vlaneseq
      %v5241 = vshrl.u32 %v5240, 7
      %v5242 = vsub.s32 %v5239, %v5241
      %v5243 = vrot.slane %v5229, %v5242
      %v5244 = vcombine.low %v5236, %v5243
      %v5246 = vcombine.low %v4805, %v4819
      %v5247 = vcombine.low %v4833, %v4847
      %v5249 = vunpack.c.l.s4 1983009808
      %v5250 = vunpack.c.0.s8 %v5249
      %v5251 = vlaneseq
      %v5252 = vshrl.u32 %v5251, 7
      %v5253 = vsub.s32 %v5250, %v5252
      %v5254 = vrot.slane %v5246, %v5253
      %v5256 = vunpack.c.l.s4 1983009808
      %v5257 = vunpack.c.0.s8 %v5256
      %v5258 = vlaneseq
      %v5259 = vshrl.u32 %v5258, 7
      %v5260 = vsub.s32 %v5257, %v5259
      %v5261 = vrot.slane %v5247, %v5260
      %v5262 = vcombine.low %v5254, %v5261
      %v5264 = vcombine.low %v4898, %v4902
      %v5265 = vcombine.low %v4906, %v4910
      %v5267 = vunpack.c.l.s4 1983009808
      %v5268 = vunpack.c.0.s8 %v5267
      %v5269 = vlaneseq
      %v5270 = vshrl.u32 %v5269, 7
      %v5271 = vsub.s32 %v5268, %v5270
      %v5272 = vrot.slane %v5264, %v5271
      %v5274 = vunpack.c.l.s4 1983009808
      %v5275 = vunpack.c.0.s8 %v5274
      %v5276 = vlaneseq
      %v5277 = vshrl.u32 %v5276, 7
      %v5278 = vsub.s32 %v5275, %v5277
      %v5279 = vrot.slane %v5265, %v5278
      %v5280 = vcombine.low %v5272, %v5279
      %v5286 = vcombine.low %v4911, %v4912
      %v5287 = vcombine.low %v4913, %v4914
      %v5289 = vunpack.c.l.s4 1983009808
      %v5290 = vunpack.c.0.s8 %v5289
      %v5291 = vlaneseq
      %v5292 = vshrl.u32 %v5291, 7
      %v5293 = vsub.s32 %v5290, %v5292
      %v5294 = vrot.slane %v5286, %v5293
      %v5296 = vunpack.c.l.s4 1983009808
      %v5297 = vunpack.c.0.s8 %v5296
      %v5298 = vlaneseq
      %v5299 = vshrl.u32 %v5298, 7
      %v5300 = vsub.s32 %v5297, %v5299
      %v5301 = vrot.slane %v5287, %v5300
      %v5302 = vcombine.low %v5294, %v5301
      %v5304 = vcombine.low %v4968, %v4982
      %v5305 = vcombine.low %v4996, %v5010
      %v5307 = vunpack.c.l.s4 1983009808
      %v5308 = vunpack.c.0.s8 %v5307
      %v5309 = vlaneseq
      %v5310 = vshrl.u32 %v5309, 7
      %v5311 = vsub.s32 %v5308, %v5310
      %v5312 = vrot.slane %v5304, %v5311
      %v5314 = vunpack.c.l.s4 1983009808
      %v5315 = vunpack.c.0.s8 %v5314
      %v5316 = vlaneseq
      %v5317 = vshrl.u32 %v5316, 7
      %v5318 = vsub.s32 %v5315, %v5317
      %v5319 = vrot.slane %v5305, %v5318
      %v5320 = vcombine.low %v5312, %v5319
      %v5322 = vcombine.low %v5054, %v5058
      %v5323 = vcombine.low %v5062, %v5066
      %v5325 = vunpack.c.l.s4 1983009808
      %v5326 = vunpack.c.0.s8 %v5325
      %v5327 = vlaneseq
      %v5328 = vshrl.u32 %v5327, 7
      %v5329 = vsub.s32 %v5326, %v5328
      %v5330 = vrot.slane %v5322, %v5329
      %v5332 = vunpack.c.l.s4 1983009808
      %v5333 = vunpack.c.0.s8 %v5332
      %v5334 = vlaneseq
      %v5335 = vshrl.u32 %v5334, 7
      %v5336 = vsub.s32 %v5333, %v5335
      %v5337 = vrot.slane %v5323, %v5336
      %v5338 = vcombine.low %v5330, %v5337
      %v5344 = vcombine.low %v5068, %v5069
      %v5345 = vcombine.low %v5070, %v5071
      %v5347 = vunpack.c.l.s4 1983009808
      %v5348 = vunpack.c.0.s8 %v5347
      %v5349 = vlaneseq
      %v5350 = vshrl.u32 %v5349, 7
      %v5351 = vsub.s32 %v5348, %v5350
      %v5352 = vrot.slane %v5344, %v5351
      %v5354 = vunpack.c.l.s4 1983009808
      %v5355 = vunpack.c.0.s8 %v5354
      %v5356 = vlaneseq
      %v5357 = vshrl.u32 %v5356, 7
      %v5358 = vsub.s32 %v5355, %v5357
      %v5359 = vrot.slane %v5345, %v5358
      %v5360 = vcombine.low %v5352, %v5359
      %v5362 = vcombine.low %v5125, %v5139
      %v5363 = vcombine.low %v5153, %v5167
      %v5365 = vunpack.c.l.s4 1983009808
      %v5366 = vunpack.c.0.s8 %v5365
      %v5367 = vlaneseq
      %v5368 = vshrl.u32 %v5367, 7
      %v5369 = vsub.s32 %v5366, %v5368
      %v5370 = vrot.slane %v5362, %v5369
      %v5372 = vunpack.c.l.s4 1983009808
      %v5373 = vunpack.c.0.s8 %v5372
      %v5374 = vlaneseq
      %v5375 = vshrl.u32 %v5374, 7
      %v5376 = vsub.s32 %v5373, %v5375
      %v5377 = vrot.slane %v5363, %v5376
      %v5378 = vcombine.low %v5370, %v5377
      %v5380 = vcombine.low %v5211, %v5215
      %v5381 = vcombine.low %v5219, %v5223
      %v5383 = vunpack.c.l.s4 1983009808
      %v5384 = vunpack.c.0.s8 %v5383
      %v5385 = vlaneseq
      %v5386 = vshrl.u32 %v5385, 7
      %v5387 = vsub.s32 %v5384, %v5386
      %v5388 = vrot.slane %v5380, %v5387
      %v5390 = vunpack.c.l.s4 1983009808
      %v5391 = vunpack.c.0.s8 %v5390
      %v5392 = vlaneseq
      %v5393 = vshrl.u32 %v5392, 7
      %v5394 = vsub.s32 %v5391, %v5393
      %v5395 = vrot.slane %v5381, %v5394
      %v5396 = vcombine.low %v5388, %v5395
      %v5398 = vld [vmem:[%s8] sm:$0xf]
      %v5399 = vld [vmem:[%s8 + $0x4] sm:$0xf]
      %v5400 = vld [vmem:[%s8 + $0x8] sm:$0xf]
      %v5401 = vld [vmem:[%s8 + $0xc] sm:$0xf]
      %v5402 = vld [vmem:[%s8 + $0x10] sm:$0xf]
      %v5403 = vld [vmem:[%s8 + $0x14] sm:$0xf]
      %v5404 = vld [vmem:[%s8 + $0x18] sm:$0xf]
      %v5405 = vld [vmem:[%s8 + $0x1c] sm:$0xf]
      %v5406 = vld [vmem:[%s8 + $0x20] sm:$0xf]
      %v5407 = vld [vmem:[%s8 + $0x24] sm:$0xf]
      %v5408 = vld [vmem:[%s8 + $0x28] sm:$0xf]
      %v5409 = vld [vmem:[%s8 + $0x2c] sm:$0xf]
      %v5410 = vld [vmem:[%s8 + $0x30] sm:$0xf]
      %v5411 = vld [vmem:[%s8 + $0x34] sm:$0xf]
      %v5412 = vld [vmem:[%s8 + $0x38] sm:$0xf]
      %v5413 = vld [vmem:[%s8 + $0x3c] sm:$0xf]
      %v5414 = vld [vmem:[%s8 + $0x40] sm:$0xf]
      %v5415 = vld [vmem:[%s8 + $0x44] sm:$0xf]
      %v5416 = vld [vmem:[%s8 + $0x48] sm:$0xf]
      %v5417 = vld [vmem:[%s8 + $0x4c] sm:$0xf]
      %v5418 = vld [vmem:[%s8 + $0x50] sm:$0xf]
      %v5419 = vld [vmem:[%s8 + $0x54] sm:$0xf]
      %v5420 = vld [vmem:[%s8 + $0x58] sm:$0xf]
      %v5421 = vld [vmem:[%s8 + $0x5c] sm:$0xf]
      %v5422 = vld [vmem:[%s8 + $0x60] sm:$0xf]
      %v5423 = vld [vmem:[%s8 + $0x64] sm:$0xf]
      %v5424 = vld [vmem:[%s8 + $0x68] sm:$0xf]
      %v5425 = vld [vmem:[%s8 + $0x6c] sm:$0xf]
      %v5426 = vld [vmem:[%s8 + $0x70] sm:$0xf]
      %v5427 = vld [vmem:[%s8 + $0x74] sm:$0xf]
      %v5428 = vld [vmem:[%s8 + $0x78] sm:$0xf]
      %v5429 = vld [vmem:[%s8 + $0x7c] sm:$0xf]
      %v5430 = vld [vmem:[%s8 + $0x80] sm:$0xf]
      %v5431 = vld [vmem:[%s8 + $0x84] sm:$0xf]
      %v5432 = vld [vmem:[%s8 + $0x88] sm:$0xf]
      %v5433 = vld [vmem:[%s8 + $0x8c] sm:$0xf]
      %v5434 = vld [vmem:[%s8 + $0x90] sm:$0xf]
      %v5435 = vld [vmem:[%s8 + $0x94] sm:$0xf]
      %v5436 = vld [vmem:[%s8 + $0x98] sm:$0xf]
      %v5437 = vld [vmem:[%s8 + $0x9c] sm:$0xf]
      %v5438 = vld [vmem:[%s8 + $0xa0] sm:$0xf]
      %v5439 = vld [vmem:[%s8 + $0xa4] sm:$0xf]
      %v5440 = vld [vmem:[%s8 + $0xa8] sm:$0xf]
      %v5441 = vld [vmem:[%s8 + $0xac] sm:$0xf]
      %v5442 = vld [vmem:[%s8 + $0xb0] sm:$0xf]
      %v5443 = vld [vmem:[%s8 + $0xb4] sm:$0xf]
      %v5444 = vld [vmem:[%s8 + $0xb8] sm:$0xf]
      %v5445 = vld [vmem:[%s8 + $0xbc] sm:$0xf]
      %v5446 = vld [vmem:[%s8 + $0xc0] sm:$0xf]
      %v5447 = vld [vmem:[%s8 + $0xc4] sm:$0xf]
      %v5448 = vld [vmem:[%s8 + $0xc8] sm:$0xf]
      %v5449 = vld [vmem:[%s8 + $0xcc] sm:$0xf]
      %v5450 = vld [vmem:[%s8 + $0xd0] sm:$0xf]
      %v5451 = vld [vmem:[%s8 + $0xd4] sm:$0xf]
      %v5452 = vld [vmem:[%s8 + $0xd8] sm:$0xf]
      %v5453 = vld [vmem:[%s8 + $0xdc] sm:$0xf]
      %v5454 = vld [vmem:[%s8 + $0xe0] sm:$0xf]
      %v5455 = vld [vmem:[%s8 + $0xe4] sm:$0xf]
      %v5456 = vld [vmem:[%s8 + $0xe8] sm:$0xf]
      %v5457 = vld [vmem:[%s8 + $0xec] sm:$0xf]
      %v5458 = vld [vmem:[%s8 + $0xf0] sm:$0xf]
      %v5459 = vld [vmem:[%s8 + $0xf4] sm:$0xf]
      %v5460 = vld [vmem:[%s8 + $0xf8] sm:$0xf]
      %v5461 = vld [vmem:[%s8 + $0xfc] sm:$0xf]
      %v5462 = vld [vmem:[%s8 + $0x100] sm:$0xf]
      %v5463 = vld [vmem:[%s8 + $0x104] sm:$0xf]
      %v5464 = vld [vmem:[%s8 + $0x108] sm:$0xf]
      %v5465 = vld [vmem:[%s8 + $0x10c] sm:$0xf]
      %v5466 = vld [vmem:[%s8 + $0x110] sm:$0xf]
      %v5467 = vld [vmem:[%s8 + $0x114] sm:$0xf]
      %v5468 = vld [vmem:[%s8 + $0x118] sm:$0xf]
      %v5469 = vld [vmem:[%s8 + $0x11c] sm:$0xf]
      %v5470 = vld [vmem:[%s8 + $0x120] sm:$0xf]
      %v5471 = vld [vmem:[%s8 + $0x124] sm:$0xf]
      %v5472 = vld [vmem:[%s8 + $0x128] sm:$0xf]
      %v5473 = vld [vmem:[%s8 + $0x12c] sm:$0xf]
      %v5474 = vld [vmem:[%s8 + $0x130] sm:$0xf]
      %v5475 = vld [vmem:[%s8 + $0x134] sm:$0xf]
      %v5476 = vld [vmem:[%s8 + $0x138] sm:$0xf]
      %v5477 = vld [vmem:[%s8 + $0x13c] sm:$0xf]
      %v5478 = vld [vmem:[%s8 + $0x140] sm:$0xf]
      %v5479 = vld [vmem:[%s8 + $0x144] sm:$0xf]
      %v5480 = vld [vmem:[%s8 + $0x148] sm:$0xf]
      %v5481 = vld [vmem:[%s8 + $0x14c] sm:$0xf]
      %v5482 = vld [vmem:[%s8 + $0x150] sm:$0xf]
      %v5483 = vld [vmem:[%s8 + $0x154] sm:$0xf]
      %v5484 = vld [vmem:[%s8 + $0x158] sm:$0xf]
      %v5485 = vld [vmem:[%s8 + $0x15c] sm:$0xf]
      %v5486 = vld [vmem:[%s8 + $0x160] sm:$0xf]
      %v5487 = vld [vmem:[%s8 + $0x164] sm:$0xf]
      %v5488 = vld [vmem:[%s8 + $0x168] sm:$0xf]
      %v5489 = vld [vmem:[%s8 + $0x16c] sm:$0xf]
      %v5490 = vld [vmem:[%s8 + $0x170] sm:$0xf]
      %v5491 = vld [vmem:[%s8 + $0x174] sm:$0xf]
      %v5492 = vld [vmem:[%s8 + $0x178] sm:$0xf]
      %v5493 = vld [vmem:[%s8 + $0x17c] sm:$0xf]
      %v5494 = vld [vmem:[%s8 + $0x180] sm:$0xf]
      %v5495 = vld [vmem:[%s8 + $0x184] sm:$0xf]
      %v5496 = vld [vmem:[%s8 + $0x188] sm:$0xf]
      %v5497 = vld [vmem:[%s8 + $0x18c] sm:$0xf]
      %v5498 = vld [vmem:[%s8 + $0x190] sm:$0xf]
      %v5499 = vld [vmem:[%s8 + $0x194] sm:$0xf]
      %v5500 = vld [vmem:[%s8 + $0x198] sm:$0xf]
      %v5501 = vld [vmem:[%s8 + $0x19c] sm:$0xf]
      %v5502 = vld [vmem:[%s8 + $0x1a0] sm:$0xf]
      %v5503 = vld [vmem:[%s8 + $0x1a4] sm:$0xf]
      %v5504 = vld [vmem:[%s8 + $0x1a8] sm:$0xf]
      %v5505 = vld [vmem:[%s8 + $0x1ac] sm:$0xf]
      %v5506 = vld [vmem:[%s8 + $0x1b0] sm:$0xf]
      %v5507 = vld [vmem:[%s8 + $0x1b4] sm:$0xf]
      %v5508 = vld [vmem:[%s8 + $0x1b8] sm:$0xf]
      %v5509 = vld [vmem:[%s8 + $0x1bc] sm:$0xf]
      %v5510 = vld [vmem:[%s8 + $0x1c0] sm:$0xf]
      %v5511 = vld [vmem:[%s8 + $0x1c4] sm:$0xf]
      %v5512 = vld [vmem:[%s8 + $0x1c8] sm:$0xf]
      %v5513 = vld [vmem:[%s8 + $0x1cc] sm:$0xf]
      %v5514 = vld [vmem:[%s8 + $0x1d0] sm:$0xf]
      %v5515 = vld [vmem:[%s8 + $0x1d4] sm:$0xf]
      %v5516 = vld [vmem:[%s8 + $0x1d8] sm:$0xf]
      %v5517 = vld [vmem:[%s8 + $0x1dc] sm:$0xf]
      %v5518 = vld [vmem:[%s8 + $0x1e0] sm:$0xf]
      %v5519 = vld [vmem:[%s8 + $0x1e4] sm:$0xf]
      %v5520 = vld [vmem:[%s8 + $0x1e8] sm:$0xf]
      %v5521 = vld [vmem:[%s8 + $0x1ec] sm:$0xf]
      %v5522 = vld [vmem:[%s8 + $0x1f0] sm:$0xf]
      %v5523 = vld [vmem:[%s8 + $0x1f4] sm:$0xf]
      %v5524 = vld [vmem:[%s8 + $0x1f8] sm:$0xf]
      %v5525 = vld [vmem:[%s8 + $0x1fc] sm:$0xf]
      %v5526 = vld [vmem:[%s8 + $0x200] sm:$0xf]
      %v5527 = vld [vmem:[%s8 + $0x204] sm:$0xf]
      %v5528 = vld [vmem:[%s8 + $0x208] sm:$0xf]
      %v5529 = vld [vmem:[%s8 + $0x20c] sm:$0xf]
      %v5530 = vld [vmem:[%s8 + $0x210] sm:$0xf]
      %v5531 = vld [vmem:[%s8 + $0x214] sm:$0xf]
      %v5532 = vld [vmem:[%s8 + $0x218] sm:$0xf]
      %v5533 = vld [vmem:[%s8 + $0x21c] sm:$0xf]
      %v5534 = vld [vmem:[%s8 + $0x220] sm:$0xf]
      %v5535 = vld [vmem:[%s8 + $0x224] sm:$0xf]
      %v5536 = vld [vmem:[%s8 + $0x228] sm:$0xf]
      %v5537 = vld [vmem:[%s8 + $0x22c] sm:$0xf]
      %v5538 = vld [vmem:[%s8 + $0x230] sm:$0xf]
      %v5539 = vld [vmem:[%s8 + $0x234] sm:$0xf]
      %v5540 = vld [vmem:[%s8 + $0x238] sm:$0xf]
      %v5541 = vld [vmem:[%s8 + $0x23c] sm:$0xf]
      %v5542 = vld [vmem:[%s9] sm:$0x1]
      %v5544 = vlaneseq
      %v5545 = vshrl.u32 %v5544, 7
      %v5546 = vsub.s32 0, %v5545
      %v5547 = vrot.slane %v5542, %v5546
      %v5693 = vunpack.c.l.b16 %v5398
      %v5694 = vunpack.c.l.b16 %v5399
      %v5695 = vunpack.c.l.b16 %v5400
      %v5696 = vunpack.c.l.b16 %v5401
      %v5697 = vunpack.c.l.b16 %v5402
      %v5698 = vunpack.c.l.b16 %v5403
      %v5699 = vunpack.c.l.b16 %v5404
      %v5700 = vunpack.c.l.b16 %v5405
      %v5701 = vunpack.c.l.b16 %v5406
      %v5702 = vunpack.c.l.b16 %v5407
      %v5703 = vunpack.c.l.b16 %v5408
      %v5704 = vunpack.c.l.b16 %v5409
      %v5705 = vunpack.c.l.b16 %v5410
      %v5706 = vunpack.c.l.b16 %v5411
      %v5707 = vunpack.c.l.b16 %v5412
      %v5708 = vunpack.c.l.b16 %v5413
      %v5709 = vunpack.c.l.b16 %v5414
      %v5710 = vunpack.c.l.b16 %v5415
      %v5711 = vunpack.c.l.b16 %v5416
      %v5712 = vunpack.c.l.b16 %v5417
      %v5713 = vunpack.c.l.b16 %v5418
      %v5714 = vunpack.c.l.b16 %v5419
      %v5715 = vunpack.c.l.b16 %v5420
      %v5716 = vunpack.c.l.b16 %v5421
      %v5717 = vunpack.c.l.b16 %v5422
      %v5718 = vunpack.c.l.b16 %v5423
      %v5719 = vunpack.c.l.b16 %v5424
      %v5720 = vunpack.c.l.b16 %v5425
      %v5721 = vunpack.c.l.b16 %v5426
      %v5722 = vunpack.c.l.b16 %v5427
      %v5723 = vunpack.c.l.b16 %v5428
      %v5724 = vunpack.c.l.b16 %v5429
      %v5725 = vunpack.c.l.b16 %v5430
      %v5726 = vunpack.c.l.b16 %v5431
      %v5727 = vunpack.c.l.b16 %v5432
      %v5728 = vunpack.c.l.b16 %v5433
      %v5729 = vunpack.c.l.b16 %v5434
      %v5730 = vunpack.c.l.b16 %v5435
      %v5731 = vunpack.c.l.b16 %v5436
      %v5732 = vunpack.c.l.b16 %v5437
      %v5733 = vunpack.c.l.b16 %v5438
      %v5734 = vunpack.c.l.b16 %v5439
      %v5735 = vunpack.c.l.b16 %v5440
      %v5736 = vunpack.c.l.b16 %v5441
      %v5737 = vunpack.c.l.b16 %v5442
      %v5738 = vunpack.c.l.b16 %v5443
      %v5739 = vunpack.c.l.b16 %v5444
      %v5740 = vunpack.c.l.b16 %v5445
      %v5741 = vunpack.c.l.b16 %v5446
      %v5742 = vunpack.c.l.b16 %v5447
      %v5743 = vunpack.c.l.b16 %v5448
      %v5744 = vunpack.c.l.b16 %v5449
      %v5745 = vunpack.c.l.b16 %v5450
      %v5746 = vunpack.c.l.b16 %v5451
      %v5747 = vunpack.c.l.b16 %v5452
      %v5748 = vunpack.c.l.b16 %v5453
      %v5749 = vunpack.c.l.b16 %v5454
      %v5750 = vunpack.c.l.b16 %v5455
      %v5751 = vunpack.c.l.b16 %v5456
      %v5752 = vunpack.c.l.b16 %v5457
      %v5753 = vunpack.c.l.b16 %v5458
      %v5754 = vunpack.c.l.b16 %v5459
      %v5755 = vunpack.c.l.b16 %v5460
      %v5756 = vunpack.c.l.b16 %v5461
      %v5757 = vunpack.c.l.b16 %v5462
      %v5758 = vunpack.c.l.b16 %v5463
      %v5759 = vunpack.c.l.b16 %v5464
      %v5760 = vunpack.c.l.b16 %v5465
      %v5761 = vunpack.c.l.b16 %v5466
      %v5762 = vunpack.c.l.b16 %v5467
      %v5763 = vunpack.c.l.b16 %v5468
      %v5764 = vunpack.c.l.b16 %v5469
      %v5765 = vunpack.c.l.b16 %v5470
      %v5766 = vunpack.c.l.b16 %v5471
      %v5767 = vunpack.c.l.b16 %v5472
      %v5768 = vunpack.c.l.b16 %v5473
      %v5769 = vunpack.c.l.b16 %v5474
      %v5770 = vunpack.c.l.b16 %v5475
      %v5771 = vunpack.c.l.b16 %v5476
      %v5772 = vunpack.c.l.b16 %v5477
      %v5773 = vunpack.c.l.b16 %v5478
      %v5774 = vunpack.c.l.b16 %v5479
      %v5775 = vunpack.c.l.b16 %v5480
      %v5776 = vunpack.c.l.b16 %v5481
      %v5777 = vunpack.c.l.b16 %v5482
      %v5778 = vunpack.c.l.b16 %v5483
      %v5779 = vunpack.c.l.b16 %v5484
      %v5780 = vunpack.c.l.b16 %v5485
      %v5781 = vunpack.c.l.b16 %v5486
      %v5782 = vunpack.c.l.b16 %v5487
      %v5783 = vunpack.c.l.b16 %v5488
      %v5784 = vunpack.c.l.b16 %v5489
      %v5785 = vunpack.c.l.b16 %v5490
      %v5786 = vunpack.c.l.b16 %v5491
      %v5787 = vunpack.c.l.b16 %v5492
      %v5788 = vunpack.c.l.b16 %v5493
      %v5789 = vunpack.c.l.b16 %v5494
      %v5790 = vunpack.c.l.b16 %v5495
      %v5791 = vunpack.c.l.b16 %v5496
      %v5792 = vunpack.c.l.b16 %v5497
      %v5793 = vunpack.c.l.b16 %v5498
      %v5794 = vunpack.c.l.b16 %v5499
      %v5795 = vunpack.c.l.b16 %v5500
      %v5796 = vunpack.c.l.b16 %v5501
      %v5797 = vunpack.c.l.b16 %v5502
      %v5798 = vunpack.c.l.b16 %v5503
      %v5799 = vunpack.c.l.b16 %v5504
      %v5800 = vunpack.c.l.b16 %v5505
      %v5801 = vunpack.c.l.b16 %v5506
      %v5802 = vunpack.c.l.b16 %v5507
      %v5803 = vunpack.c.l.b16 %v5508
      %v5804 = vunpack.c.l.b16 %v5509
      %v5805 = vunpack.c.l.b16 %v5510
      %v5806 = vunpack.c.l.b16 %v5511
      %v5807 = vunpack.c.l.b16 %v5512
      %v5808 = vunpack.c.l.b16 %v5513
      %v5809 = vunpack.c.l.b16 %v5514
      %v5810 = vunpack.c.l.b16 %v5515
      %v5811 = vunpack.c.l.b16 %v5516
      %v5812 = vunpack.c.l.b16 %v5517
      %v5813 = vunpack.c.l.b16 %v5518
      %v5814 = vunpack.c.l.b16 %v5519
      %v5815 = vunpack.c.l.b16 %v5520
      %v5816 = vunpack.c.l.b16 %v5521
      %v5817 = vunpack.c.l.b16 %v5522
      %v5818 = vunpack.c.l.b16 %v5523
      %v5819 = vunpack.c.l.b16 %v5524
      %v5820 = vunpack.c.l.b16 %v5525
      %v5821 = vunpack.c.l.b16 %v5526
      %v5822 = vunpack.c.l.b16 %v5527
      %v5823 = vunpack.c.l.b16 %v5528
      %v5824 = vunpack.c.l.b16 %v5529
      %v5825 = vunpack.c.l.b16 %v5530
      %v5826 = vunpack.c.l.b16 %v5531
      %v5827 = vunpack.c.l.b16 %v5532
      %v5828 = vunpack.c.l.b16 %v5533
      %v5829 = vunpack.c.l.b16 %v5534
      %v5830 = vunpack.c.l.b16 %v5535
      %v5831 = vunpack.c.l.b16 %v5536
      %v5832 = vunpack.c.l.b16 %v5537
      %v5833 = vunpack.c.l.b16 %v5538
      %v5834 = vunpack.c.l.b16 %v5539
      %v5835 = vunpack.c.l.b16 %v5540
      %v5836 = vunpack.c.l.b16 %v5541
      %v5837 = vpack.c.b16 %v5694, %v5693
      %v5838 = vpack.c.b16 %v5696, %v5695
      %v5839 = vpack.c.b16 %v5698, %v5697
      %v5840 = vpack.c.b16 %v5700, %v5699
      %v5841 = vpack.c.b16 %v5702, %v5701
      %v5842 = vpack.c.b16 %v5704, %v5703
      %v5843 = vpack.c.b16 %v5706, %v5705
      %v5844 = vpack.c.b16 %v5708, %v5707
      %v5845 = vpack.c.b16 %v5710, %v5709
      %v5846 = vpack.c.b16 %v5712, %v5711
      %v5847 = vpack.c.b16 %v5714, %v5713
      %v5848 = vpack.c.b16 %v5716, %v5715
      %v5849 = vpack.c.b16 %v5718, %v5717
      %v5850 = vpack.c.b16 %v5720, %v5719
      %v5851 = vpack.c.b16 %v5722, %v5721
      %v5852 = vpack.c.b16 %v5724, %v5723
      %v5853 = vpack.c.b16 %v5726, %v5725
      %v5854 = vpack.c.b16 %v5728, %v5727
      %v5855 = vpack.c.b16 %v5730, %v5729
      %v5856 = vpack.c.b16 %v5732, %v5731
      %v5857 = vpack.c.b16 %v5734, %v5733
      %v5858 = vpack.c.b16 %v5736, %v5735
      %v5859 = vpack.c.b16 %v5738, %v5737
      %v5860 = vpack.c.b16 %v5740, %v5739
      %v5861 = vpack.c.b16 %v5742, %v5741
      %v5862 = vpack.c.b16 %v5744, %v5743
      %v5863 = vpack.c.b16 %v5746, %v5745
      %v5864 = vpack.c.b16 %v5748, %v5747
      %v5865 = vpack.c.b16 %v5750, %v5749
      %v5866 = vpack.c.b16 %v5752, %v5751
      %v5867 = vpack.c.b16 %v5754, %v5753
      %v5868 = vpack.c.b16 %v5756, %v5755
      %v5869 = vpack.c.b16 %v5758, %v5757
      %v5870 = vpack.c.b16 %v5760, %v5759
      %v5871 = vpack.c.b16 %v5762, %v5761
      %v5872 = vpack.c.b16 %v5764, %v5763
      %v5873 = vpack.c.b16 %v5766, %v5765
      %v5874 = vpack.c.b16 %v5768, %v5767
      %v5875 = vpack.c.b16 %v5770, %v5769
      %v5876 = vpack.c.b16 %v5772, %v5771
      %v5877 = vpack.c.b16 %v5774, %v5773
      %v5878 = vpack.c.b16 %v5776, %v5775
      %v5879 = vpack.c.b16 %v5778, %v5777
      %v5880 = vpack.c.b16 %v5780, %v5779
      %v5881 = vpack.c.b16 %v5782, %v5781
      %v5882 = vpack.c.b16 %v5784, %v5783
      %v5883 = vpack.c.b16 %v5786, %v5785
      %v5884 = vpack.c.b16 %v5788, %v5787
      %v5885 = vpack.c.b16 %v5790, %v5789
      %v5886 = vpack.c.b16 %v5792, %v5791
      %v5887 = vpack.c.b16 %v5794, %v5793
      %v5888 = vpack.c.b16 %v5796, %v5795
      %v5889 = vpack.c.b16 %v5798, %v5797
      %v5890 = vpack.c.b16 %v5800, %v5799
      %v5891 = vpack.c.b16 %v5802, %v5801
      %v5892 = vpack.c.b16 %v5804, %v5803
      %v5893 = vpack.c.b16 %v5806, %v5805
      %v5894 = vpack.c.b16 %v5808, %v5807
      %v5895 = vpack.c.b16 %v5810, %v5809
      %v5896 = vpack.c.b16 %v5812, %v5811
      %v5897 = vpack.c.b16 %v5814, %v5813
      %v5898 = vpack.c.b16 %v5816, %v5815
      %v5899 = vpack.c.b16 %v5818, %v5817
      %v5900 = vpack.c.b16 %v5820, %v5819
      %v5901 = vpack.c.b16 %v5822, %v5821
      %v5902 = vpack.c.b16 %v5824, %v5823
      %v5903 = vpack.c.b16 %v5826, %v5825
      %v5904 = vpack.c.b16 %v5828, %v5827
      %v5905 = vpack.c.b16 %v5830, %v5829
      %v5906 = vpack.c.b16 %v5832, %v5831
      %v5907 = vpack.c.b16 %v5834, %v5833
      %v5908 = vpack.c.b16 %v5836, %v5835
      %5981 = vmatprep.subr.bf16.mxu0 0
      %5982 = vmatpush1.bf16.msra.mxu0 %v5837
      %5983 = vmatprep.subr.bf16.mxu0 0
      %5984 = vmatpush1.bf16.msra.mxu0 %v5838
      %5985 = vmatprep.subr.bf16.mxu0 0
      %5986 = vmatpush1.bf16.msra.mxu0 %v5839
      %5987 = vmatprep.subr.bf16.mxu0 0
      %5988 = vmatpush1.bf16.msra.mxu0 %v5840
      %5989 = vmatprep.subr.bf16.mxu0 0
      %5990 = vmatpush1.bf16.msra.mxu0 %v5841
      %5991 = vmatprep.subr.bf16.mxu0 0
      %5992 = vmatpush1.bf16.msra.mxu0 %v5842
      %5993 = vmatprep.subr.bf16.mxu0 0
      %5994 = vmatpush1.bf16.msra.mxu0 %v5843
      %5995 = vmatprep.subr.bf16.mxu0 0
      %5996 = vmatpush1.bf16.msra.mxu0 %v5844
      %5997 = vmatprep.subr.bf16.mxu0 0
      %5998 = vmatpush1.bf16.msra.mxu0 %v5845
      %5999 = vmatprep.subr.bf16.mxu0 0
      %6000 = vmatpush1.bf16.msra.mxu0 %v5846
      %6001 = vmatprep.subr.bf16.mxu0 0
      %6002 = vmatpush1.bf16.msra.mxu0 %v5847
      %6003 = vmatprep.subr.bf16.mxu0 0
      %6004 = vmatpush1.bf16.msra.mxu0 %v5848
      %6005 = vmatprep.subr.bf16.mxu0 0
      %6006 = vmatpush1.bf16.msra.mxu0 %v5849
      %6007 = vmatprep.subr.bf16.mxu0 0
      %6008 = vmatpush1.bf16.msra.mxu0 %v5850
      %6009 = vmatprep.subr.bf16.mxu0 0
      %6010 = vmatpush1.bf16.msra.mxu0 %v5851
      %6011 = vmatprep.subr.bf16.mxu0 0
      %6012 = vmatpush1.bf16.msra.mxu0 %v5852
      %6013 = vmatprep.mubr.bf16.mxu0 %v5262
      %6014 = vmatmul.mubr.bf16.gmra.mrb[0].mxu0 %v5244
      %v6015 = vpop.f32.mrb[0].mxu0
      %v6016 = vadd.f32 %v5547, %v6015
      %v6017 = vpop.f32.mrb[0].mxu0
      %v6018 = vpop.f32.mrb[0].mxu0
      %v6019 = vadd.f32 %v5547, %v6018
      %v6020 = vpop.f32.mrb[0].mxu0
      %6021 = vdwg.mxu0
      %6022 = vmatprep.subr.bf16.mxu0 0
      %6023 = vmatpush1.bf16.msra.mxu0 %v5853
      %6024 = vmatprep.subr.bf16.mxu0 0
      %6025 = vmatpush1.bf16.msra.mxu0 %v5854
      %6026 = vmatprep.subr.bf16.mxu0 0
      %6027 = vmatpush1.bf16.msra.mxu0 %v5855
      %6028 = vmatprep.subr.bf16.mxu0 0
      %6029 = vmatpush1.bf16.msra.mxu0 %v5856
      %6030 = vmatprep.subr.bf16.mxu0 0
      %6031 = vmatpush1.bf16.msra.mxu0 %v5857
      %6032 = vmatprep.subr.bf16.mxu0 0
      %6033 = vmatpush1.bf16.msra.mxu0 %v5858
      %6034 = vmatprep.subr.bf16.mxu0 0
      %6035 = vmatpush1.bf16.msra.mxu0 %v5859
      %6036 = vmatprep.subr.bf16.mxu0 0
      %6037 = vmatpush1.bf16.msra.mxu0 %v5860
      %6038 = vmatprep.subr.bf16.mxu0 0
      %6039 = vmatpush1.bf16.msra.mxu0 %v5861
      %6040 = vmatprep.subr.bf16.mxu0 0
      %6041 = vmatpush1.bf16.msra.mxu0 %v5862
      %6042 = vmatprep.subr.bf16.mxu0 0
      %6043 = vmatpush1.bf16.msra.mxu0 %v5863
      %6044 = vmatprep.subr.bf16.mxu0 0
      %6045 = vmatpush1.bf16.msra.mxu0 %v5864
      %6046 = vmatprep.subr.bf16.mxu0 0
      %6047 = vmatpush1.bf16.msra.mxu0 %v5865
      %6048 = vmatprep.subr.bf16.mxu0 0
      %6049 = vmatpush1.bf16.msra.mxu0 %v5866
      %6050 = vmatprep.subr.bf16.mxu0 0
      %6051 = vmatpush1.bf16.msra.mxu0 %v5867
      %6052 = vmatprep.subr.bf16.mxu0 0
      %6053 = vmatpush1.bf16.msra.mxu0 %v5868
      %6054 = vmatprep.mubr.bf16.mxu0 %v5302
      %6055 = vmatmul.mubr.bf16.gmra.mrb[0].mxu0 %v5280
      %v6056 = vpop.f32.mrb[0].mxu0
      %v6057 = vadd.f32 %v6016, %v6056
      %v6058 = vpop.f32.mrb[0].mxu0
      %v6059 = vpop.f32.mrb[0].mxu0
      %v6060 = vadd.f32 %v6019, %v6059
      %v6061 = vpop.f32.mrb[0].mxu0
      %6062 = vdwg.mxu0
      %6063 = vmatprep.subr.bf16.mxu0 0
      %6064 = vmatpush1.bf16.msra.mxu0 %v5869
      %6065 = vmatprep.subr.bf16.mxu0 0
      %6066 = vmatpush1.bf16.msra.mxu0 %v5870
      %6067 = vmatprep.subr.bf16.mxu0 0
      %6068 = vmatpush1.bf16.msra.mxu0 %v5871
      %6069 = vmatprep.subr.bf16.mxu0 0
      %6070 = vmatpush1.bf16.msra.mxu0 %v5872
      %6071 = vmatprep.subr.bf16.mxu0 0
      %6072 = vmatpush1.bf16.msra.mxu0 %v5873
      %6073 = vmatprep.subr.bf16.mxu0 0
      %6074 = vmatpush1.bf16.msra.mxu0 %v5874
      %6075 = vmatprep.subr.bf16.mxu0 0
      %6076 = vmatpush1.bf16.msra.mxu0 %v5875
      %6077 = vmatprep.subr.bf16.mxu0 0
      %6078 = vmatpush1.bf16.msra.mxu0 %v5876
      %6079 = vmatprep.subr.bf16.mxu0 0
      %6080 = vmatpush1.bf16.msra.mxu0 %v5877
      %6081 = vmatprep.subr.bf16.mxu0 0
      %6082 = vmatpush1.bf16.msra.mxu0 %v5878
      %6083 = vmatprep.subr.bf16.mxu0 0
      %6084 = vmatpush1.bf16.msra.mxu0 %v5879
      %6085 = vmatprep.subr.bf16.mxu0 0
      %6086 = vmatpush1.bf16.msra.mxu0 %v5880
      %6087 = vmatprep.subr.bf16.mxu0 0
      %6088 = vmatpush1.bf16.msra.mxu0 %v5881
      %6089 = vmatprep.subr.bf16.mxu0 0
      %6090 = vmatpush1.bf16.msra.mxu0 %v5882
      %6091 = vmatprep.subr.bf16.mxu0 0
      %6092 = vmatpush1.bf16.msra.mxu0 %v5883
      %6093 = vmatprep.subr.bf16.mxu0 0
      %6094 = vmatpush1.bf16.msra.mxu0 %v5884
      %6095 = vmatprep.mubr.bf16.mxu0 %v5338
      %6096 = vmatmul.mubr.bf16.gmra.mrb[0].mxu0 %v5320
      %v6097 = vpop.f32.mrb[0].mxu0
      %v6098 = vadd.f32 %v6057, %v6097
      %v6099 = vpop.f32.mrb[0].mxu0
      %v6100 = vpop.f32.mrb[0].mxu0
      %v6101 = vadd.f32 %v6060, %v6100
      %v6102 = vpop.f32.mrb[0].mxu0
      %6103 = vdwg.mxu0
      %6104 = vmatprep.subr.bf16.mxu0 0
      %6105 = vmatpush1.bf16.msra.mxu0 %v5885
      %6106 = vmatprep.subr.bf16.mxu0 0
      %6107 = vmatpush1.bf16.msra.mxu0 %v5886
      %6108 = vmatprep.subr.bf16.mxu0 0
      %6109 = vmatpush1.bf16.msra.mxu0 %v5887
      %6110 = vmatprep.subr.bf16.mxu0 0
      %6111 = vmatpush1.bf16.msra.mxu0 %v5888
      %6112 = vmatprep.subr.bf16.mxu0 0
      %6113 = vmatpush1.bf16.msra.mxu0 %v5889
      %6114 = vmatprep.subr.bf16.mxu0 0
      %6115 = vmatpush1.bf16.msra.mxu0 %v5890
      %6116 = vmatprep.subr.bf16.mxu0 0
      %6117 = vmatpush1.bf16.msra.mxu0 %v5891
      %6118 = vmatprep.subr.bf16.mxu0 0
      %6119 = vmatpush1.bf16.msra.mxu0 %v5892
      %6120 = vmatprep.subr.bf16.mxu0 0
      %6121 = vmatpush1.bf16.msra.mxu0 %v5893
      %6122 = vmatprep.subr.bf16.mxu0 0
      %6123 = vmatpush1.bf16.msra.mxu0 %v5894
      %6124 = vmatprep.subr.bf16.mxu0 0
      %6125 = vmatpush1.bf16.msra.mxu0 %v5895
      %6126 = vmatprep.subr.bf16.mxu0 0
      %6127 = vmatpush1.bf16.msra.mxu0 %v5896
      %6128 = vmatprep.subr.bf16.mxu0 0
      %6129 = vmatpush1.bf16.msra.mxu0 %v5897
      %6130 = vmatprep.subr.bf16.mxu0 0
      %6131 = vmatpush1.bf16.msra.mxu0 %v5898
      %6132 = vmatprep.subr.bf16.mxu0 0
      %6133 = vmatpush1.bf16.msra.mxu0 %v5899
      %6134 = vmatprep.subr.bf16.mxu0 0
      %6135 = vmatpush1.bf16.msra.mxu0 %v5900
      %6136 = vmatprep.mubr.bf16.mxu0 %v5378
      %6137 = vmatmul.mubr.bf16.gmra.mrb[0].mxu0 %v5360
      %v6138 = vpop.f32.mrb[0].mxu0
      %v6139 = vadd.f32 %v6098, %v6138
      %v6140 = vpop.f32.mrb[0].mxu0
      %v6141 = vpop.f32.mrb[0].mxu0
      %v6142 = vadd.f32 %v6101, %v6141
      %v6143 = vpop.f32.mrb[0].mxu0
      %6144 = vdwg.mxu0
      %6145 = vmatprep.subr.bf16.mxu0 0
      %6146 = vmatpush1.bf16.msra.mxu0 %v5901
      %6147 = vmatprep.subr.bf16.mxu0 0
      %6148 = vmatpush1.bf16.msra.mxu0 %v5902
      %6149 = vmatprep.subr.bf16.mxu0 0
      %6150 = vmatpush1.bf16.msra.mxu0 %v5903
      %6151 = vmatprep.subr.bf16.mxu0 0
      %6152 = vmatpush1.bf16.msra.mxu0 %v5904
      %6153 = vmatprep.subr.bf16.mxu0 0
      %6154 = vmatpush1.bf16.msra.mxu0 %v5905
      %6155 = vmatprep.subr.bf16.mxu0 0
      %6156 = vmatpush1.bf16.msra.mxu0 %v5906
      %6157 = vmatprep.subr.bf16.mxu0 0
      %6158 = vmatpush1.bf16.msra.mxu0 %v5907
      %6159 = vmatprep.subr.bf16.mxu0 0
      %6160 = vmatpush1.bf16.msra.mxu0 %v5908
      %6161 = vmatprep.subr.bf16.mxu0 0
      %6162 = vmatpush1.bf16.msra.mxu0 0
      %6163 = vmatprep.subr.bf16.mxu0 0
      %6164 = vmatpush1.bf16.msra.mxu0 0
      %6165 = vmatprep.subr.bf16.mxu0 0
      %6166 = vmatpush1.bf16.msra.mxu0 0
      %6167 = vmatprep.subr.bf16.mxu0 0
      %6168 = vmatpush1.bf16.msra.mxu0 0
      %6169 = vmatprep.subr.bf16.mxu0 0
      %6170 = vmatpush1.bf16.msra.mxu0 0
      %6171 = vmatprep.subr.bf16.mxu0 0
      %6172 = vmatpush1.bf16.msra.mxu0 0
      %6173 = vmatprep.subr.bf16.mxu0 0
      %6174 = vmatpush1.bf16.msra.mxu0 0
      %6175 = vmatprep.subr.bf16.mxu0 0
      %6176 = vmatpush1.bf16.msra.mxu0 0
      %6177 = vmatprep.mubr.bf16.mxu0 0
      %6178 = vmatmul.mubr.bf16.gmra.mrb[0].mxu0 %v5396
      %v6179 = vpop.f32.mrb[0].mxu0
      %v6180 = vadd.f32 %v6139, %v6179
      %v6181 = vpop.f32.mrb[0].mxu0
      %v6182 = vpop.f32.mrb[0].mxu0
      %v6183 = vadd.f32 %v6142, %v6182
      %v6184 = vpop.f32.mrb[0].mxu0
      %6185 = vdwg.mxu0
      %v6186 = vmax.f32 %v6180, 0.0
      %v6187 = vmax.f32 %v6183, 0.0
      %v6188 = vpack.c.bf16 %v3151, %v3150
      %v6189 = vpack.c.bf16 %v3153, %v3152
      %v6190 = vpack.c.bf16 %v3155, %v3154
      %v6191 = vpack.c.bf16 %v3157, %v3156
      %v6192 = vld [vmem:[%s10] sm:$0xf]
      %v6193 = vld [vmem:[%s10 + $0x4] sm:$0xf]
      %v6194 = vld [vmem:[%s10 + $0x8] sm:$0xf]
      %v6195 = vld [vmem:[%s10 + $0xc] sm:$0xf]
      %v6196 = vld [vmem:[%s10 + $0x10] sm:$0xf]
      %v6197 = vld [vmem:[%s10 + $0x14] sm:$0xf]
      %v6198 = vld [vmem:[%s10 + $0x18] sm:$0xf]
      %v6199 = vld [vmem:[%s10 + $0x1c] sm:$0xf]
      %v6200 = vld [vmem:[%s11] sm:$0x1]
      %v6202 = vlaneseq
      %v6203 = vshrl.u32 %v6202, 7
      %v6204 = vsub.s32 0, %v6203
      %v6205 = vrot.slane %v6200, %v6204
      %v6215 = vunpack.c.l.b16 %v6192
      %v6216 = vunpack.c.l.b16 %v6193
      %v6217 = vunpack.c.l.b16 %v6194
      %v6218 = vunpack.c.l.b16 %v6195
      %v6219 = vunpack.c.l.b16 %v6196
      %v6220 = vunpack.c.l.b16 %v6197
      %v6221 = vunpack.c.l.b16 %v6198
      %v6222 = vunpack.c.l.b16 %v6199
      %v6223 = vpack.c.b16 %v6216, %v6215
      %v6224 = vpack.c.b16 %v6218, %v6217
      %v6225 = vpack.c.b16 %v6220, %v6219
      %v6226 = vpack.c.b16 %v6222, %v6221
      %v6232 = vsel %vm1100, %v6188, 0
      %v6235 = vsel %vm1100, %v6189, 0
      %v6238 = vsel %vm1100, %v6190, 0
      %v6241 = vsel %vm1100, %v6191, 0
      %6243 = vmatprep.subr.bf16.mxu0 0
      %6244 = vmatpush1.bf16.msra.mxu0 %v6223
      %6245 = vmatprep.subr.bf16.mxu0 0
      %6246 = vmatpush1.bf16.msra.mxu0 %v6224
      %6247 = vmatprep.subr.bf16.mxu0 0
      %6248 = vmatpush1.bf16.msra.mxu0 %v6225
      %6249 = vmatprep.subr.bf16.mxu0 0
      %6250 = vmatpush1.bf16.msra.mxu0 %v6226
      %6251 = vmatprep.subr.bf16.mxu0 0
      %6252 = vmatpush1.bf16.msra.mxu0 0
      %6253 = vmatprep.subr.bf16.mxu0 0
      %6254 = vmatpush1.bf16.msra.mxu0 0
      %6255 = vmatprep.subr.bf16.mxu0 0
      %6256 = vmatpush1.bf16.msra.mxu0 0
      %6257 = vmatprep.subr.bf16.mxu0 0
      %6258 = vmatpush1.bf16.msra.mxu0 0
      %6259 = vmatprep.subr.bf16.mxu0 0
      %6260 = vmatpush1.bf16.msra.mxu0 0
      %6261 = vmatprep.subr.bf16.mxu0 0
      %6262 = vmatpush1.bf16.msra.mxu0 0
      %6263 = vmatprep.subr.bf16.mxu0 0
      %6264 = vmatpush1.bf16.msra.mxu0 0
      %6265 = vmatprep.subr.bf16.mxu0 0
      %6266 = vmatpush1.bf16.msra.mxu0 0
      %6267 = vmatprep.subr.bf16.mxu0 0
      %6268 = vmatpush1.bf16.msra.mxu0 0
      %6269 = vmatprep.subr.bf16.mxu0 0
      %6270 = vmatpush1.bf16.msra.mxu0 0
      %6271 = vmatprep.subr.bf16.mxu0 0
      %6272 = vmatpush1.bf16.msra.mxu0 0
      %6273 = vmatprep.subr.bf16.mxu0 0
      %6274 = vmatpush1.bf16.msra.mxu0 0
      %6275 = vmatprep.mubr.bf16.mxu0 0
      %6276 = vmatmul.mubr.bf16.gmra.mrb[0].mxu0 %v6232
      %v6277 = vpop.f32.mrb[0].mxu0
      %v6278 = vadd.f32 %v6205, %v6277
      %v6279 = vpop.f32.mrb[0].mxu0
      %v6280 = vpop.f32.mrb[0].mxu0
      %v6281 = vadd.f32 %v6205, %v6280
      %v6282 = vpop.f32.mrb[0].mxu0
      %6283 = vmatprep.mubr.bf16.mxu0 0
      %6284 = vmatmul.mubr.bf16.gmra.mrb[0].mxu0 %v6235
      %v6285 = vpop.f32.mrb[0].mxu0
      %v6286 = vadd.f32 %v6205, %v6285
      %v6287 = vpop.f32.mrb[0].mxu0
      %v6288 = vpop.f32.mrb[0].mxu0
      %v6289 = vadd.f32 %v6205, %v6288
      %v6290 = vpop.f32.mrb[0].mxu0
      %6291 = vmatprep.mubr.bf16.mxu0 0
      %6292 = vmatmul.mubr.bf16.gmra.mrb[0].mxu0 %v6238
      %v6293 = vpop.f32.mrb[0].mxu0
      %v6294 = vadd.f32 %v6205, %v6293
      %v6295 = vpop.f32.mrb[0].mxu0
      %v6296 = vpop.f32.mrb[0].mxu0
      %v6297 = vadd.f32 %v6205, %v6296
      %v6298 = vpop.f32.mrb[0].mxu0
      %6299 = vmatprep.mubr.bf16.mxu0 0
      %6300 = vmatmul.mubr.bf16.gmra.mrb[0].mxu0 %v6241
      %v6301 = vpop.f32.mrb[0].mxu0
      %v6302 = vadd.f32 %v6205, %v6301
      %v6303 = vpop.f32.mrb[0].mxu0
      %v6304 = vpop.f32.mrb[0].mxu0
      %v6305 = vadd.f32 %v6205, %v6304
      %v6306 = vpop.f32.mrb[0].mxu0
      %6307 = vdwg.mxu0
      %v6308 = vmax.f32 %v6278, 0.0
      %v6309 = vmax.f32 %v6281, 0.0
      %v6310 = vmax.f32 %v6286, 0.0
      %v6311 = vmax.f32 %v6289, 0.0
      %v6312 = vmax.f32 %v6294, 0.0
      %v6313 = vmax.f32 %v6297, 0.0
      %v6314 = vmax.f32 %v6302, 0.0
      %v6315 = vmax.f32 %v6305, 0.0
      %v6316 = vpack.c.bf16 %v6187, %v6186
      %v6317 = vld [vmem:[%s12] sm:$0xff]
      %v6318 = vld [vmem:[%s12 + $0x8] sm:$0xff]
      %v6319 = vld [vmem:[%s12 + $0x10] sm:$0xff]
      %v6320 = vld [vmem:[%s12 + $0x18] sm:$0xff]
      %v6321 = vld [vmem:[%s12 + $0x20] sm:$0xff]
      %v6322 = vld [vmem:[%s12 + $0x28] sm:$0xff]
      %v6323 = vld [vmem:[%s12 + $0x30] sm:$0xff]
      %v6324 = vld [vmem:[%s12 + $0x38] sm:$0xff]
      %v6325 = vld [vmem:[%s12 + $0x40] sm:$0xff]
      %v6326 = vld [vmem:[%s12 + $0x48] sm:$0xff]
      %v6327 = vld [vmem:[%s12 + $0x50] sm:$0xff]
      %v6328 = vld [vmem:[%s12 + $0x58] sm:$0xff]
      %v6329 = vld [vmem:[%s12 + $0x60] sm:$0xff]
      %v6330 = vld [vmem:[%s12 + $0x68] sm:$0xff]
      %v6331 = vld [vmem:[%s12 + $0x70] sm:$0xff]
      %v6332 = vld [vmem:[%s12 + $0x78] sm:$0xff]
      %v6333 = vld [vmem:[%s12 + $0x80] sm:$0xff]
      %v6334 = vld [vmem:[%s12 + $0x88] sm:$0xff]
      %v6335 = vld [vmem:[%s12 + $0x90] sm:$0xff]
      %v6336 = vld [vmem:[%s12 + $0x98] sm:$0xff]
      %v6337 = vld [vmem:[%s12 + $0xa0] sm:$0xff]
      %v6338 = vld [vmem:[%s12 + $0xa8] sm:$0xff]
      %v6339 = vld [vmem:[%s12 + $0xb0] sm:$0xff]
      %v6340 = vld [vmem:[%s12 + $0xb8] sm:$0xff]
      %v6341 = vld [vmem:[%s12 + $0xc0] sm:$0xff]
      %v6342 = vld [vmem:[%s12 + $0xc8] sm:$0xff]
      %v6343 = vld [vmem:[%s12 + $0xd0] sm:$0xff]
      %v6344 = vld [vmem:[%s12 + $0xd8] sm:$0xff]
      %v6345 = vld [vmem:[%s12 + $0xe0] sm:$0xff]
      %v6346 = vld [vmem:[%s12 + $0xe8] sm:$0xff]
      %v6347 = vld [vmem:[%s12 + $0xf0] sm:$0xff]
      %v6348 = vld [vmem:[%s12 + $0xf8] sm:$0xff]
      %v6381 = vunpack.c.l.b16 %v6317
      %v6382 = vunpack.c.h.b16 %v6317
      %v6383 = vunpack.c.l.b16 %v6318
      %v6384 = vunpack.c.h.b16 %v6318
      %v6385 = vunpack.c.l.b16 %v6319
      %v6386 = vunpack.c.h.b16 %v6319
      %v6387 = vunpack.c.l.b16 %v6320
      %v6388 = vunpack.c.h.b16 %v6320
      %v6389 = vunpack.c.l.b16 %v6321
      %v6390 = vunpack.c.h.b16 %v6321
      %v6391 = vunpack.c.l.b16 %v6322
      %v6392 = vunpack.c.h.b16 %v6322
      %v6393 = vunpack.c.l.b16 %v6323
      %v6394 = vunpack.c.h.b16 %v6323
      %v6395 = vunpack.c.l.b16 %v6324
      %v6396 = vunpack.c.h.b16 %v6324
      %v6397 = vunpack.c.l.b16 %v6325
      %v6398 = vunpack.c.h.b16 %v6325
      %v6399 = vunpack.c.l.b16 %v6326
      %v6400 = vunpack.c.h.b16 %v6326
      %v6401 = vunpack.c.l.b16 %v6327
      %v6402 = vunpack.c.h.b16 %v6327
      %v6403 = vunpack.c.l.b16 %v6328
      %v6404 = vunpack.c.h.b16 %v6328
      %v6405 = vunpack.c.l.b16 %v6329
      %v6406 = vunpack.c.h.b16 %v6329
      %v6407 = vunpack.c.l.b16 %v6330
      %v6408 = vunpack.c.h.b16 %v6330
      %v6409 = vunpack.c.l.b16 %v6331
      %v6410 = vunpack.c.h.b16 %v6331
      %v6411 = vunpack.c.l.b16 %v6332
      %v6412 = vunpack.c.h.b16 %v6332
      %v6413 = vunpack.c.l.b16 %v6333
      %v6414 = vunpack.c.h.b16 %v6333
      %v6415 = vunpack.c.l.b16 %v6334
      %v6416 = vunpack.c.h.b16 %v6334
      %v6417 = vunpack.c.l.b16 %v6335
      %v6418 = vunpack.c.h.b16 %v6335
      %v6419 = vunpack.c.l.b16 %v6336
      %v6420 = vunpack.c.h.b16 %v6336
      %v6421 = vunpack.c.l.b16 %v6337
      %v6422 = vunpack.c.h.b16 %v6337
      %v6423 = vunpack.c.l.b16 %v6338
      %v6424 = vunpack.c.h.b16 %v6338
      %v6425 = vunpack.c.l.b16 %v6339
      %v6426 = vunpack.c.h.b16 %v6339
      %v6427 = vunpack.c.l.b16 %v6340
      %v6428 = vunpack.c.h.b16 %v6340
      %v6429 = vunpack.c.l.b16 %v6341
      %v6430 = vunpack.c.h.b16 %v6341
      %v6431 = vunpack.c.l.b16 %v6342
      %v6432 = vunpack.c.h.b16 %v6342
      %v6433 = vunpack.c.l.b16 %v6343
      %v6434 = vunpack.c.h.b16 %v6343
      %v6435 = vunpack.c.l.b16 %v6344
      %v6436 = vunpack.c.h.b16 %v6344
      %v6437 = vunpack.c.l.b16 %v6345
      %v6438 = vunpack.c.h.b16 %v6345
      %v6439 = vunpack.c.l.b16 %v6346
      %v6440 = vunpack.c.h.b16 %v6346
      %v6441 = vunpack.c.l.b16 %v6347
      %v6442 = vunpack.c.h.b16 %v6347
      %v6443 = vunpack.c.l.b16 %v6348
      %v6444 = vunpack.c.h.b16 %v6348
      %v6445 = vpack.c.b16 %v6385, %v6381
      %v6446 = vpack.c.b16 %v6386, %v6382
      %v6447 = vpack.c.b16 %v6387, %v6383
      %v6448 = vpack.c.b16 %v6388, %v6384
      %v6449 = vpack.c.b16 %v6393, %v6389
      %v6450 = vpack.c.b16 %v6394, %v6390
      %v6451 = vpack.c.b16 %v6395, %v6391
      %v6452 = vpack.c.b16 %v6396, %v6392
      %v6453 = vpack.c.b16 %v6401, %v6397
      %v6454 = vpack.c.b16 %v6402, %v6398
      %v6455 = vpack.c.b16 %v6403, %v6399
      %v6456 = vpack.c.b16 %v6404, %v6400
      %v6457 = vpack.c.b16 %v6409, %v6405
      %v6458 = vpack.c.b16 %v6410, %v6406
      %v6459 = vpack.c.b16 %v6411, %v6407
      %v6460 = vpack.c.b16 %v6412, %v6408
      %v6461 = vpack.c.b16 %v6417, %v6413
      %v6462 = vpack.c.b16 %v6418, %v6414
      %v6463 = vpack.c.b16 %v6419, %v6415
      %v6464 = vpack.c.b16 %v6420, %v6416
      %v6465 = vpack.c.b16 %v6425, %v6421
      %v6466 = vpack.c.b16 %v6426, %v6422
      %v6467 = vpack.c.b16 %v6427, %v6423
      %v6468 = vpack.c.b16 %v6428, %v6424
      %v6469 = vpack.c.b16 %v6433, %v6429
      %v6470 = vpack.c.b16 %v6434, %v6430
      %v6471 = vpack.c.b16 %v6435, %v6431
      %v6472 = vpack.c.b16 %v6436, %v6432
      %v6473 = vpack.c.b16 %v6441, %v6437
      %v6474 = vpack.c.b16 %v6442, %v6438
      %v6475 = vpack.c.b16 %v6443, %v6439
      %v6476 = vpack.c.b16 %v6444, %v6440
      %6509 = vmatprep.subr.bf16.mxu0 %v6446
      %6510 = vmatpush1.bf16.msra.mxu0 %v6445
      %6511 = vmatprep.subr.bf16.mxu0 %v6450
      %6512 = vmatpush1.bf16.msra.mxu0 %v6449
      %6513 = vmatprep.subr.bf16.mxu0 %v6454
      %6514 = vmatpush1.bf16.msra.mxu0 %v6453
      %6515 = vmatprep.subr.bf16.mxu0 %v6458
      %6516 = vmatpush1.bf16.msra.mxu0 %v6457
      %6517 = vmatprep.subr.bf16.mxu0 %v6462
      %6518 = vmatpush1.bf16.msra.mxu0 %v6461
      %6519 = vmatprep.subr.bf16.mxu0 %v6466
      %6520 = vmatpush1.bf16.msra.mxu0 %v6465
      %6521 = vmatprep.subr.bf16.mxu0 %v6470
      %6522 = vmatpush1.bf16.msra.mxu0 %v6469
      %6523 = vmatprep.subr.bf16.mxu0 %v6474
      %6524 = vmatpush1.bf16.msra.mxu0 %v6473
      %6525 = vmatprep.subr.bf16.mxu0 0
      %6526 = vmatpush1.bf16.msra.mxu0 0
      %6527 = vmatprep.subr.bf16.mxu0 0
      %6528 = vmatpush1.bf16.msra.mxu0 0
      %6529 = vmatprep.subr.bf16.mxu0 0
      %6530 = vmatpush1.bf16.msra.mxu0 0
      %6531 = vmatprep.subr.bf16.mxu0 0
      %6532 = vmatpush1.bf16.msra.mxu0 0
      %6533 = vmatprep.subr.bf16.mxu0 0
      %6534 = vmatpush1.bf16.msra.mxu0 0
      %6535 = vmatprep.subr.bf16.mxu0 0
      %6536 = vmatpush1.bf16.msra.mxu0 0
      %6537 = vmatprep.subr.bf16.mxu0 0
      %6538 = vmatpush1.bf16.msra.mxu0 0
      %6539 = vmatprep.subr.bf16.mxu0 0
      %6540 = vmatpush1.bf16.msra.mxu0 0
      %6541 = vmatprep.mubr.bf16.mxu0 0
      %6542 = vmatmul.mubr.bf16.gmra.mrb[0].mxu0 %v6316
      %v6543 = vpop.f32.mrb[0].mxu0
      %v6544 = vadd.f32 0.0, %v6543
      %v6545 = vpop.f32.mrb[0].mxu0
      %v6546 = vadd.f32 0.0, %v6545
      %v6547 = vpop.f32.mrb[0].mxu0
      %v6548 = vadd.f32 0.0, %v6547
      %v6549 = vpop.f32.mrb[0].mxu0
      %v6550 = vadd.f32 0.0, %v6549
      %6551 = vdwg.mxu0
      %6552 = vmatprep.subr.bf16.mxu0 %v6448
      %6553 = vmatpush1.bf16.msra.mxu0 %v6447
      %6554 = vmatprep.subr.bf16.mxu0 %v6452
      %6555 = vmatpush1.bf16.msra.mxu0 %v6451
      %6556 = vmatprep.subr.bf16.mxu0 %v6456
      %6557 = vmatpush1.bf16.msra.mxu0 %v6455
      %6558 = vmatprep.subr.bf16.mxu0 %v6460
      %6559 = vmatpush1.bf16.msra.mxu0 %v6459
      %6560 = vmatprep.subr.bf16.mxu0 %v6464
      %6561 = vmatpush1.bf16.msra.mxu0 %v6463
      %6562 = vmatprep.subr.bf16.mxu0 %v6468
      %6563 = vmatpush1.bf16.msra.mxu0 %v6467
      %6564 = vmatprep.subr.bf16.mxu0 %v6472
      %6565 = vmatpush1.bf16.msra.mxu0 %v6471
      %6566 = vmatprep.subr.bf16.mxu0 %v6476
      %6567 = vmatpush1.bf16.msra.mxu0 %v6475
      %6568 = vmatprep.subr.bf16.mxu0 0
      %6569 = vmatpush1.bf16.msra.mxu0 0
      %6570 = vmatprep.subr.bf16.mxu0 0
      %6571 = vmatpush1.bf16.msra.mxu0 0
      %6572 = vmatprep.subr.bf16.mxu0 0
      %6573 = vmatpush1.bf16.msra.mxu0 0
      %6574 = vmatprep.subr.bf16.mxu0 0
      %6575 = vmatpush1.bf16.msra.mxu0 0
      %6576 = vmatprep.subr.bf16.mxu0 0
      %6577 = vmatpush1.bf16.msra.mxu0 0
      %6578 = vmatprep.subr.bf16.mxu0 0
      %6579 = vmatpush1.bf16.msra.mxu0 0
      %6580 = vmatprep.subr.bf16.mxu0 0
      %6581 = vmatpush1.bf16.msra.mxu0 0
      %6582 = vmatprep.subr.bf16.mxu0 0
      %6583 = vmatpush1.bf16.msra.mxu0 0
      %6584 = vmatprep.mubr.bf16.mxu0 0
      %6585 = vmatmul.mubr.bf16.gmra.mrb[0].mxu0 %v6316
      %v6586 = vpop.f32.mrb[0].mxu0
      %v6587 = vadd.f32 0.0, %v6586
      %v6588 = vpop.f32.mrb[0].mxu0
      %v6589 = vadd.f32 0.0, %v6588
      %v6590 = vpop.f32.mrb[0].mxu0
      %v6591 = vadd.f32 0.0, %v6590
      %v6592 = vpop.f32.mrb[0].mxu0
      %v6593 = vadd.f32 0.0, %v6592
      %6594 = vdwg.mxu0
      %v6595 = vld [vmem:[%s14] sm:$0xff]
      %v6596 = vld [vmem:[%s14 + $0x8] sm:$0xff]
      %v6597 = vld [vmem:[%s14 + $0x10] sm:$0xff]
      %v6598 = vld [vmem:[%s14 + $0x18] sm:$0xff]
      %v6599 = vld [vmem:[%s14 + $0x20] sm:$0xff]
      %v6600 = vld [vmem:[%s14 + $0x28] sm:$0xff]
      %v6601 = vld [vmem:[%s14 + $0x30] sm:$0xff]
      %v6602 = vld [vmem:[%s14 + $0x38] sm:$0xff]
      %v6603 = vld [vmem:[%s13] sm:$0x1]
      %v6605 = vlaneseq
      %v6606 = vshrl.u32 %v6605, 7
      %v6607 = vsub.s32 0, %v6606
      %v6608 = vrot.slane %v6603, %v6607
      %v6611 = vsel %vm1100, %v6595, 0
      %v6614 = vsel %vm1100, %v6596, 0
      %v6617 = vsel %vm1100, %v6597, 0
      %v6620 = vsel %vm1100, %v6598, 0
      %v6623 = vsel %vm1100, %v6599, 0
      %v6626 = vsel %vm1100, %v6600, 0
      %v6629 = vsel %vm1100, %v6601, 0
      %v6632 = vsel %vm1100, %v6602, 0
      %6634 = vmatprep.subr.mxu0 0.0
      %6635 = vmatpush1.msra.mxu0 %v6544
      %6636 = vmatprep.subr.mxu0 0.0
      %6637 = vmatpush1.msra.mxu0 %v6548
      %6638 = vmatprep.subr.mxu0 0.0
      %6639 = vmatpush1.msra.mxu0 %v6546
      %6640 = vmatprep.subr.mxu0 0.0
      %6641 = vmatpush1.msra.mxu0 %v6550
      %6642 = vmatprep.subr.mxu0 0.0
      %6643 = vmatpush1.msra.mxu0 %v6587
      %6644 = vmatprep.subr.mxu0 0.0
      %6645 = vmatpush1.msra.mxu0 %v6591
      %6646 = vmatprep.subr.mxu0 0.0
      %6647 = vmatpush1.msra.mxu0 %v6589
      %6648 = vmatprep.subr.mxu0 0.0
      %6649 = vmatpush1.msra.mxu0 %v6593
      %6650 = vmatprep.subr.mxu0 0.0
      %6651 = vmatpush1.msra.mxu0 0.0
      %6652 = vmatprep.subr.mxu0 0.0
      %6653 = vmatpush1.msra.mxu0 0.0
      %6654 = vmatprep.subr.mxu0 0.0
      %6655 = vmatpush1.msra.mxu0 0.0
      %6656 = vmatprep.subr.mxu0 0.0
      %6657 = vmatpush1.msra.mxu0 0.0
      %6658 = vmatprep.subr.mxu0 0.0
      %6659 = vmatpush1.msra.mxu0 0.0
      %6660 = vmatprep.subr.mxu0 0.0
      %6661 = vmatpush1.msra.mxu0 0.0
      %6662 = vmatprep.subr.mxu0 0.0
      %6663 = vmatpush1.msra.mxu0 0.0
      %6664 = vmatprep.subr.mxu0 0.0
      %6665 = vmatpush1.msra.mxu0 0.0
      %6666 = vmatprep.subr.mxu0 0.0
      %6667 = vmatpush1.msra.mxu0 0.0
      %6668 = vmatprep.subr.mxu0 0.0
      %6669 = vmatpush1.msra.mxu0 0.0
      %6670 = vmatprep.subr.mxu0 0.0
      %6671 = vmatpush1.msra.mxu0 0.0
      %6672 = vmatprep.subr.mxu0 0.0
      %6673 = vmatpush1.msra.mxu0 0.0
      %6674 = vmatprep.subr.mxu0 0.0
      %6675 = vmatpush1.msra.mxu0 0.0
      %6676 = vmatprep.subr.mxu0 0.0
      %6677 = vmatpush1.msra.mxu0 0.0
      %6678 = vmatprep.subr.mxu0 0.0
      %6679 = vmatpush1.msra.mxu0 0.0
      %6680 = vmatprep.subr.mxu0 0.0
      %6681 = vmatpush1.msra.mxu0 0.0
      %6682 = vmatprep.subr.mxu0 0.0
      %6683 = vmatpush1.msra.mxu0 0.0
      %6684 = vmatprep.subr.mxu0 0.0
      %6685 = vmatpush1.msra.mxu0 0.0
      %6686 = vmatprep.subr.mxu0 0.0
      %6687 = vmatpush1.msra.mxu0 0.0
      %6688 = vmatprep.subr.mxu0 0.0
      %6689 = vmatpush1.msra.mxu0 0.0
      %6690 = vmatprep.subr.mxu0 0.0
      %6691 = vmatpush1.msra.mxu0 0.0
      %6692 = vmatprep.subr.mxu0 0.0
      %6693 = vmatpush1.msra.mxu0 0.0
      %6694 = vmatprep.subr.mxu0 0.0
      %6695 = vmatpush1.msra.mxu0 0.0
      %6696 = vmatprep.subr.mxu0 0.0
      %6697 = vmatpush1.msra.mxu0 0.0
      %6698 = vmatprep.mubr.f32.mxu0 0.0
      %6699 = vmatmul.mubr.f32.gmra.mrb[0].mxu0 %v6611
      %v6700 = vpop.f32.mrb[0].mxu0
      %v6701 = vadd.f32 %v6608, %v6700
      %v6702 = vpop.f32.mrb[0].mxu0
      %6703 = vmatprep.mubr.f32.mxu0 0.0
      %6704 = vmatmul.mubr.f32.gmra.mrb[0].mxu0 %v6614
      %v6705 = vpop.f32.mrb[0].mxu0
      %v6706 = vadd.f32 %v6608, %v6705
      %v6707 = vpop.f32.mrb[0].mxu0
      %6708 = vmatprep.mubr.f32.mxu0 0.0
      %6709 = vmatmul.mubr.f32.gmra.mrb[0].mxu0 %v6617
      %v6710 = vpop.f32.mrb[0].mxu0
      %v6711 = vadd.f32 %v6608, %v6710
      %v6712 = vpop.f32.mrb[0].mxu0
      %6713 = vmatprep.mubr.f32.mxu0 0.0
      %6714 = vmatmul.mubr.f32.gmra.mrb[0].mxu0 %v6620
      %v6715 = vpop.f32.mrb[0].mxu0
      %v6716 = vadd.f32 %v6608, %v6715
      %v6717 = vpop.f32.mrb[0].mxu0
      %6718 = vmatprep.mubr.f32.mxu0 0.0
      %6719 = vmatmul.mubr.f32.gmra.mrb[0].mxu0 %v6623
      %v6720 = vpop.f32.mrb[0].mxu0
      %v6721 = vadd.f32 %v6608, %v6720
      %v6722 = vpop.f32.mrb[0].mxu0
      %6723 = vmatprep.mubr.f32.mxu0 0.0
      %6724 = vmatmul.mubr.f32.gmra.mrb[0].mxu0 %v6626
      %v6725 = vpop.f32.mrb[0].mxu0
      %v6726 = vadd.f32 %v6608, %v6725
      %v6727 = vpop.f32.mrb[0].mxu0
      %6728 = vmatprep.mubr.f32.mxu0 0.0
      %6729 = vmatmul.mubr.f32.gmra.mrb[0].mxu0 %v6629
      %v6730 = vpop.f32.mrb[0].mxu0
      %v6731 = vadd.f32 %v6608, %v6730
      %v6732 = vpop.f32.mrb[0].mxu0
      %6733 = vmatprep.mubr.f32.mxu0 0.0
      %6734 = vmatmul.mubr.f32.gmra.mrb[0].mxu0 %v6632
      %v6735 = vpop.f32.mrb[0].mxu0
      %v6736 = vadd.f32 %v6608, %v6735
      %v6737 = vpop.f32.mrb[0].mxu0
      %6738 = vdwg.mxu0
      %v6739 = vmax.f32 %v6701, 0.0
      %v6740 = vmax.f32 %v6706, 0.0
      %v6741 = vmax.f32 %v6711, 0.0
      %v6742 = vmax.f32 %v6716, 0.0
      %v6743 = vmax.f32 %v6721, 0.0
      %v6744 = vmax.f32 %v6726, 0.0
      %v6745 = vmax.f32 %v6731, 0.0
      %v6746 = vmax.f32 %v6736, 0.0
      %v6747 = vpack.c.bf16 %v6309, %v6308
      %v6748 = vpack.c.bf16 %v6740, %v6739
      %v6749 = vpack.c.bf16 %v6311, %v6310
      %v6750 = vpack.c.bf16 %v6742, %v6741
      %v6751 = vpack.c.bf16 %v6313, %v6312
      %v6752 = vpack.c.bf16 %v6744, %v6743
      %v6753 = vpack.c.bf16 %v6315, %v6314
      %v6754 = vpack.c.bf16 %v6746, %v6745
      %v6763 = vunpack.c.l.b16 %v6747
      %v6764 = vunpack.c.l.b16 %v6748
      %v6765 = vunpack.c.h.b16 %v6747
      %v6766 = vunpack.c.h.b16 %v6748
      %v6767 = vunpack.c.l.b16 %v6749
      %v6768 = vunpack.c.l.b16 %v6750
      %v6769 = vunpack.c.h.b16 %v6749
      %v6770 = vunpack.c.h.b16 %v6750
      %v6771 = vunpack.c.l.b16 %v6751
      %v6772 = vunpack.c.l.b16 %v6752
      %v6773 = vunpack.c.h.b16 %v6751
      %v6774 = vunpack.c.h.b16 %v6752
      %v6775 = vunpack.c.l.b16 %v6753
      %v6776 = vunpack.c.l.b16 %v6754
      %v6777 = vunpack.c.h.b16 %v6753
      %v6778 = vunpack.c.h.b16 %v6754
      %v6779 = vpack.c.b16 %v6764, %v6763
      %v6780 = vpack.c.b16 %v6766, %v6765
      %v6781 = vpack.c.b16 %v6768, %v6767
      %v6782 = vpack.c.b16 %v6770, %v6769
      %v6783 = vpack.c.b16 %v6772, %v6771
      %v6784 = vpack.c.b16 %v6774, %v6773
      %v6785 = vpack.c.b16 %v6776, %v6775
      %v6786 = vpack.c.b16 %v6778, %v6777
      %6795 = vst [vmem:[%s494] sm:$0xff] %v6779
      %6796 = vst [vmem:[%s494 + $0x8] sm:$0xff] %v6780
      %6797 = vst [vmem:[%s494 + $0x10] sm:$0xff] %v6781
      %6798 = vst [vmem:[%s494 + $0x18] sm:$0xff] %v6782
      %6799 = vst [vmem:[%s494 + $0x20] sm:$0xff] %v6783
      %6800 = vst [vmem:[%s494 + $0x28] sm:$0xff] %v6784
      %6801 = vst [vmem:[%s494 + $0x30] sm:$0xff] %v6785
      %6802 = vst [vmem:[%s494 + $0x38] sm:$0xff] %v6786
      %p6803 = scmp.lt.s32.totalorder %s26, 2
      %s6804 = scalar_select %p6803, %s26, 2
      %s6805 = smul.addr %s6804, 16
      %s6806 = smul.addr %s6805, 4
      %s6807 = scalar_lea.vmem %s15, %s6806
      // Predicated region
      $region81: #{forward.4} parent=79 // pred_check
        %p6808 = pneg %p364
      $region82: #{forward.4} parent=79 // pred_check_branch
        %6810 = sbr.rel (%p6808) target = $region84
      $region83: #{forward.4} parent=79 // pred_region
        _
      $region84: #{forward.4} parent=79 // pred_fallthru
        _
    $region80: #{forward.4} parent=5 // pred_fallthru
      _
    %p6811 = scmp.le.s32.totalorder 2, %s21
    // Predicated region
    $region85: #{forward.4} parent=5 // pred_check
      %p6812 = pneg %p6811
    $region86: #{forward.4} parent=5 // pred_check_branch
      %6814 = sbr.rel (%p6812) target = $region88
    $region87: #{forward.4} parent=5 // pred_region
      %s6815 = ssub.s32 %s21, 2
      // Predicated region
      $region89: #{forward.4} parent=87 // pred_check
        %p6816 = pneg %p370
      $region90: #{forward.4} parent=87 // pred_check_branch
        %6818 = sbr.rel (%p6816) target = $region92
      $region91: #{forward.4} parent=87 // pred_region
        %p6819 = scmp.lt.s32.totalorder %s27, 2
        %s6820 = scalar_select %p6819, %s27, 2
        %s6821 = smul.addr %s6820, 16
        %s6822 = smul.addr %s6821, 4
        %s6823 = scalar_lea.vmem %s15, %s6822
      $region92: #{forward.4} parent=87 // pred_fallthru
        _
    $region88: #{forward.4} parent=5 // pred_fallthru
      _
  $region6: #{forward.4} parent=0 // loop_footer
    %s25 = sadd.s32 1, %s21
  $region7: #{forward.4} parent=0 // loop_footer_branch
    %20 = sbr.rel target = $region3
  $region8: #{forward.4} parent=0 // loop_exit
    _

</llo_original>
